<compile_context>
chip_gen: v7x
topology: tpu7x:2x2x1
jax: 0.10.0
libtpu: 0.0.40
codegen_flags: <defaults>
</compile_context>

<pallas_src>
import functools

import jax
import jax.numpy as jnp
from jax import lax
from jax.experimental import pallas as pl
from jax.experimental.pallas import tpu as pltpu


# ----------------------------------------------------------------------------
# Pallas kernel: fused folded-BN + ReLU + im2col + 3x3x3 conv (single MXU dot)
# (+ optional residual add / final ReLU, optional BN-stat partial sums)
# ----------------------------------------------------------------------------
def _preact_conv3x3x3_kernel(xp_ref, scale_ref, bias_ref, mask_ref, w_ref,
                             *rest, pad_dims, lead, center, l_pad, nb,
                             fuse_residual_relu, emit_stats):
    if fuse_residual_relu:
        res_ref, rest = rest[0], rest[1:]
    out_ref = rest[0]
    stats_ref = rest[1] if emit_stats else None
    cols_ref = rest[-1]

    _, hp, wp = pad_dims
    hw = hp * wp
    cin = xp_ref.shape[1]
    sp = xp_ref.shape[2]
    cout = w_ref.shape[0]
    n_taps = 27

    mask_row = mask_ref[...]                               # (1, Sp) f32
    mask_on = mask_row != 0.0

    # Clear the K-padding rows (taps 27..31): their weights are zero, but stale
    # VMEM could hold NaNs which 0 * NaN would still propagate into the dot.
    pad_rows = cols_ref.shape[0] - n_taps * cin
    cols_ref[n_taps * cin:, :] = jnp.zeros((pad_rows, l_pad), cols_ref.dtype)

    if emit_stats:
        interior = mask_row[:, center:center + l_pad] != 0.0        # (1, L)
        ssum = jnp.zeros((cout, 1), jnp.float32)
        ssq = jnp.zeros((cout, 1), jnp.float32)

    for b in range(nb):                    # static unroll over the batch tile
        # 1) folded BN + ReLU on the VPU (f32), NaN-safe halo re-zeroing, then
        #    ONE cast to bf16 so all im2col relayouts move half-width data.
        x = xp_ref[b].astype(jnp.float32)                            # (Cin, Sp)
        act = jnp.maximum(x * scale_ref[...] + bias_ref[...], 0.0)
        act = jnp.where(mask_on, act, 0.0).astype(jnp.bfloat16)

        # 2) im2col into the bf16 scratch: one base extraction per (kd, kh)
        #    group; kw=1/2 taps are shifted views of the base.  The roll
        #    wrap-around only touches columns >= L0 (never consumed).  Row
        #    order matches _pack_weight (tap-major, channel-minor).
        for g in range(9):                                 # g = kd * 3 + kh
            kd, kh = divmod(g, 3)
            start = lead + kd * hw + kh * wp               # kw = 0 tap offset
            base = act[:, start:start + l_pad]
            r = 3 * g * cin
            cols_ref[r:r + cin, :] = base                              # kw = 0
            cols_ref[r + cin:r + 2 * cin, :] = jnp.roll(base, -1, axis=1)
            cols_ref[r + 2 * cin:r + 3 * cin, :] = jnp.roll(base, -2, axis=1)

        # 3) one lane-dense MXU matmul: (Cout, 32*Cin) @ (32*Cin, L) bf16 with
        #    an f32 accumulator.
        out = jnp.dot(w_ref[...], cols_ref[...],
                      preferred_element_type=jnp.float32)

        # 4) partial batch statistics of the conv output (interior voxels
        #    only) for the *next* BatchNorm -- no extra HBM pass over y1.
        if emit_stats:
            m = jnp.where(interior, out, 0.0)
            ssum = ssum + jnp.sum(m, axis=1, keepdims=True)
            ssq = ssq + jnp.sum(m * out, axis=1, keepdims=True)

        # 5) fused residual add + final ReLU (second conv of the block).
        if fuse_residual_relu:
            res = res_ref[b, :, center:center + l_pad].astype(jnp.float32)
            out = jnp.maximum(out + res, 0.0)

        # 6) lane-aligned stores: interior window + small dense zero stores
        #    for the halo strips (no full-width concatenate temporary).
        out_ref[b, :, center:center + l_pad] = out.astype(out_ref.dtype)
        out_ref[b, :, :center] = jnp.zeros((cout, center), out_ref.dtype)
        if sp > center + l_pad:
            out_ref[b, :, center + l_pad:] = jnp.zeros(
                (cout, sp - center - l_pad), out_ref.dtype)

    if emit_stats:
        # lane-dense (Cout, 128) stats block: col 0 = sum(y), col 1 = sum(y^2).
        fill = jnp.zeros((cout, stats_ref.shape[2] - 2), jnp.float32)
        stats_ref[0] = jnp.concatenate([ssum, ssq, fill], axis=1)


def _fused_bn_relu_conv(xp_flat, scale, shift, mask, w_mat, pad_dims, lead,
                        l_pad, *, residual=None, emit_stats=False,
                        out_dtype=jnp.float32):
    """xp_flat: (N, Cin, Sp) zero-padded, lane-aligned flat activations.
    scale/shift: (Cin, 1) folded BN params.  mask: (1, Sp) interior mask.
    w_mat: (Cout, 32*Cin) bf16 packed weights.  residual: optional (N, Cout, Sp)."""
    n, cin, sp = xp_flat.shape
    cout, k = w_mat.shape
    hp, wp = pad_dims[1], pad_dims[2]
    center = lead + hp * wp + wp + 1
    assert sp % 128 == 0 and center % 128 == 0 and l_pad % 128 == 0

    # Batch tile: merge as many batch elements per grid step as fit a modest
    # VMEM budget (amortizes per-step overhead); cap the static unroll at 8.
    per_batch = (cin * xp_flat.dtype.itemsize
                 + cout * jnp.dtype(out_dtype).itemsize
                 + (cout * residual.dtype.itemsize if residual is not None else 0)
                 ) * sp * 2                            # x2: double buffering
    nb = max(1, min(n, 8, (8 << 20) // max(per_batch, 1)))
    while n % nb:
        nb -= 1
    tiles = n // nb

    kernel = functools.partial(
        _preact_conv3x3x3_kernel, pad_dims=pad_dims, lead=lead, center=center,
        l_pad=l_pad, nb=nb, fuse_residual_relu=residual is not None,
        emit_stats=emit_stats)

    in_specs = [
        pl.BlockSpec((nb, cin, sp), lambda i: (i, 0, 0)),
        pl.BlockSpec((cin, 1), lambda i: (0, 0)),
        pl.BlockSpec((cin, 1), lambda i: (0, 0)),
        pl.BlockSpec((1, sp), lambda i: (0, 0)),
        pl.BlockSpec((cout, k), lambda i: (0, 0)),
    ]
    args = [xp_flat, scale, shift, mask, w_mat]
    if residual is not None:
        in_specs.append(pl.BlockSpec((nb, cout, sp), lambda i: (i, 0, 0)))
        args.append(residual)

    out_shape = [jax.ShapeDtypeStruct((n, cout, sp), out_dtype)]
    out_specs = [pl.BlockSpec((nb, cout, sp), lambda i: (i, 0, 0))]
    cstat = 128
    if emit_stats:
        out_shape.append(jax.ShapeDtypeStruct((tiles, cout, cstat), jnp.float32))
        out_specs.append(pl.BlockSpec((1, cout, cstat), lambda i: (i, 0, 0)))

    # Explicit scoped-VMEM budget with headroom; capped so the same value is
    # safe on v5e (128 MiB), v6e (128 MiB) and v7x (64 MiB physical).
    vmem_bytes = nb * per_batch + k * l_pad * 2 + (2 << 20)
    vmem_bytes = int(min(max(2 * vmem_bytes, 32 << 20), 40 << 20))

    return pl.pallas_call(
        kernel,
        out_shape=tuple(out_shape),
        grid_spec=pltpu.PrefetchScalarGridSpec(
            num_scalar_prefetch=0,
            grid=(tiles,),
            in_specs=in_specs,
            out_specs=tuple(out_specs),
            scratch_shapes=[pltpu.VMEM((k, l_pad), jnp.bfloat16)],
        ),
        compiler_params=pltpu.CompilerParams(
            dimension_semantics=("parallel",),
            vmem_limit_bytes=vmem_bytes),
    )(*args)


# ----------------------------------------------------------------------------
# Glue: weight packing, BN folding, lane-aligned padded flat layout
# ----------------------------------------------------------------------------
def _pack_weight(w_oidhw):
    """OIDHW -> (Cout, 32*Cin) bf16; tap-major (kd,kh,kw) then channel, padded
    from 27 to 32 taps with zeros (full 256-deep MXU pass at Cin=8)."""
    cout, cin = w_oidhw.shape[:2]
    w = jnp.transpose(w_oidhw, (0, 2, 3, 4, 1)).reshape(cout, 27 * cin)
    w = jnp.pad(w, ((0, 0), (0, 5 * cin)))
    return w.astype(jnp.bfloat16)


@jax.jit
def new_block_forward(x_ncdhw, g1, b1, w1_oidhw, g2, b2, w2_oidhw):
    eps = 1e-5
    n, cin, d, h, w = x_ncdhw.shape
    cout = w1_oidhw.shape[0]
    assert cin % 8 == 0 and cout % 8 == 0 and cin == cout
    dp, hp, wp = d + 2, h + 2, w + 2
    hw = hp * wp
    sp_base = dp * hw
    center0 = hw + wp + 1                   # first interior voxel, base layout
    l0 = sp_base - 2 * center0              # valid output window length
    pad_dims = (dp, hp, wp)

    # Lane-aligned flat layout: lead puts `center` on a 128 boundary, L is a
    # multiple of 128 (>= L0 + 2 so the roll wrap stays in unused columns).
    lead = (-center0) % 128
    l_pad = ((l0 + 2 + 127) // 128) * 128
    sp_pad = ((max(lead + sp_base, lead + 2 * center0 + l_pad) + 127)
              // 128) * 128
    trail = sp_pad - lead - sp_base

    x = x_ncdhw.astype(jnp.float32)
    xflat = jnp.pad(x, ((0, 0), (0, 0), (1, 1), (1, 1), (1, 1))
                    ).reshape(n, cin, sp_base)
    xp = jnp.pad(xflat, ((0, 0), (0, 0), (lead, trail)))
    mask = jnp.pad(
        jnp.pad(jnp.ones((d, h, w), jnp.float32),
                ((1, 1), (1, 1), (1, 1))).reshape(sp_base),
        (lead, trail)).reshape(1, sp_pad)

    w1m = _pack_weight(w1_oidhw)
    w2m = _pack_weight(w2_oidhw)

    # BN1: training-mode batch statistics of x (single fused sum / sum^2 pass),
    # folded into scale/shift.
    # TODO(synk): fold this reduction and the pad-to-flat copy into a Pallas
    # pre-pass to avoid the extra HBM passes over x on large volumes.
    cnt = n * d * h * w
    s1 = jnp.sum(x, axis=(0, 2, 3, 4))
    s2 = jnp.sum(x * x, axis=(0, 2, 3, 4))
    mean1 = s1 / cnt
    var1 = jnp.maximum(s2 / cnt - mean1 * mean1, 0.0)     # biased, as torch BN
    inv1 = g1 * lax.rsqrt(var1 + eps)
    scale1 = inv1.reshape(cin, 1).astype(jnp.float32)
    shift1 = (b1 - mean1 * inv1).reshape(cin, 1).astype(jnp.float32)

    # BN1 + ReLU + conv1; also emits per-tile sum / sum^2 of y1 for BN2.
    y1p, stats = _fused_bn_relu_conv(xp, scale1, shift1, mask, w1m, pad_dims,
                                     lead, l_pad, emit_stats=True,
                                     out_dtype=jnp.bfloat16)

    # BN2 statistics folded from the kernel-emitted partial sums.
    mean2 = jnp.sum(stats[:, :, 0], axis=0) / cnt
    var2 = jnp.maximum(jnp.sum(stats[:, :, 1], axis=0) / cnt - mean2 * mean2,
                       0.0)
    inv2 = g2 * lax.rsqrt(var2 + eps)
    scale2 = inv2.reshape(cout, 1).astype(jnp.float32)
    shift2 = (b2 - mean2 * inv2).reshape(cout, 1).astype(jnp.float32)

    # BN2 + ReLU + conv2 + residual + ReLU.
    (outp,) = _fused_bn_relu_conv(y1p, scale2, shift2, mask, w2m, pad_dims,
                                  lead, l_pad, residual=xp, emit_stats=False,
                                  out_dtype=jnp.float32)

    # strip the lead/trail padding and the spatial halo; result is NCDHW.
    out = outp[:, :, lead:lead + sp_base].reshape(n, cout, dp, hp, wp)
    return out[:, :, 1:1 + d, 1:1 + h, 1:1 + w]


# ----------------------------------------------------------------------------
# Pure-JAX reference (f32, HIGHEST precision) for validation
# ----------------------------------------------------------------------------
def _ref_forward(x_ncdhw, g1, b1, w1_oidhw, g2, b2, w2_oidhw):
    xt = jnp.transpose(x_ncdhw, (0, 2, 3, 4, 1))
    w1 = jnp.transpose(w1_oidhw, (2, 3, 4, 1, 0))
    w2 = jnp.transpose(w2_oidhw, (2, 3, 4, 1, 0))

    def bn_relu(v, g, b):
        m = jnp.mean(v, axis=(0, 1, 2, 3))
        var = jnp.mean(jnp.square(v - m), axis=(0, 1, 2, 3))
        return jnp.maximum((v - m) / jnp.sqrt(var + 1e-5) * g + b, 0.0)

    dn = ("NDHWC", "DHWIO", "NDHWC")
    conv = lambda a, wt: lax.conv_general_dilated(
        a, wt, (1, 1, 1), [(1, 1)] * 3, dimension_numbers=dn,
        precision=lax.Precision.HIGHEST)

    y1 = conv(bn_relu(xt, g1, b1), w1)
    y2 = conv(bn_relu(y1, g2, b2), w2)
    out = jnp.maximum(y2 + xt, 0.0)
    return jnp.transpose(out, (0, 4, 1, 2, 3))


# ----------------------------------------------------------------------------
if __name__ == "__main__":
    N, inplanes, planes = 2, 8, 8          # planes == inplanes (no downsample)
    D = H = W = 8

    key = jax.random.PRNGKey(0)
    k = jax.random.split(key, 7)
    x = jax.random.normal(k[0], (N, inplanes, D, H, W), jnp.float32)   # NCDHW
    g1 = 1.0 + 0.1 * jax.random.normal(k[1], (inplanes,), jnp.float32)
    b1 = 0.1 * jax.random.normal(k[2], (inplanes,), jnp.float32)
    w1 = 0.1 * jax.random.normal(k[3], (planes, inplanes, 3, 3, 3), jnp.float32)
    g2 = 1.0 + 0.1 * jax.random.normal(k[4], (planes,), jnp.float32)
    b2 = 0.1 * jax.random.normal(k[5], (planes,), jnp.float32)
    w2 = 0.1 * jax.random.normal(k[6], (planes, planes, 3, 3, 3), jnp.float32)

    out = jax.block_until_ready(new_block_forward(x, g1, b1, w1, g2, b2, w2))
    ref = jax.block_until_ready(_ref_forward(x, g1, b1, w1, g2, b2, w2))

    assert out.shape == (N, planes, D, H, W)
    # bf16 MXU operands + bf16 y1 intermediate vs an f32 HIGHEST reference.
    err = float(jnp.max(jnp.abs(out - ref)))
    assert err < 5e-2, err

    print("KERNEL_OK")
</pallas_src>

<mosaic_0001>
module attributes {stable_mosaic.version = 11 : i64} {
  func.func @_preact_conv3x3x3_kernel(%arg0: i32, %arg1: memref<2x8x1152xf32, #tpu.memory_space<vmem>>, %arg2: memref<8x1xf32, #tpu.memory_space<vmem>>, %arg3: memref<8x1xf32, #tpu.memory_space<vmem>>, %arg4: memref<1x1152xf32, #tpu.memory_space<vmem>>, %arg5: memref<8x256xbf16, #tpu.memory_space<vmem>>, %arg6: memref<2x8x1152xbf16, #tpu.memory_space<vmem>>, %arg7: memref<1x8x128xf32, #tpu.memory_space<vmem>>, %arg8: memref<256x896xbf16, #tpu.memory_space<vmem>>) attributes {dimension_semantics = [#tpu.dimension_semantics<parallel>], iteration_bounds = array<i64: 1>, scalar_prefetch = 0 : i64, scratch_operands = 1 : i64, tpu.core_type = #tpu.core_type<tc>, window_params = [{transform_indices = @transform_0, window_bounds = array<i64: 2, 8, 1152>}, {pipeline_mode = #tpu.pipeline_mode<synchronous>, transform_indices = @transform_1, window_bounds = array<i64: 8, 1>}, {pipeline_mode = #tpu.pipeline_mode<synchronous>, transform_indices = @transform_2, window_bounds = array<i64: 8, 1>}, {pipeline_mode = #tpu.pipeline_mode<synchronous>, transform_indices = @transform_3, window_bounds = array<i64: 1, 1152>}, {pipeline_mode = #tpu.pipeline_mode<synchronous>, transform_indices = @transform_4, window_bounds = array<i64: 8, 256>}, {transform_indices = @transform_5, window_bounds = array<i64: 2, 8, 1152>}, {transform_indices = @transform_6, window_bounds = array<i64: 1, 8, 128>}]} {
    %c0 = arith.constant 0 : index
    %c0_0 = arith.constant 0 : index
    %0 = vector.load %arg4[%c0, %c0_0] : memref<1x1152xf32, #tpu.memory_space<vmem>>, vector<1x1152xf32>
    %cst = arith.constant 0.000000e+00 : f32
    %1 = vector.broadcast %cst : f32 to vector<1x1152xf32>
    %2 = arith.cmpf one, %0, %1 : vector<1x1152xf32>
    %cst_1 = arith.constant 0.000000e+00 : bf16
    %3 = vector.broadcast %cst_1 : bf16 to vector<40x896xbf16>
    %c216 = arith.constant 216 : index
    %c0_2 = arith.constant 0 : index
    %4 = vector.load %arg8[%c216, %c0_2] : memref<256x896xbf16, #tpu.memory_space<vmem>>, vector<40x896xbf16>
    tpu.vector_store %arg8[%c216, %c0_2], %3 {strides = array<i32>} : memref<256x896xbf16, #tpu.memory_space<vmem>>, vector<40x896xbf16>,
    %5 = vector.extract_strided_slice %0 {offsets = [0, 128], sizes = [1, 896], strides = [1, 1]} : vector<1x1152xf32> to vector<1x896xf32>
    %cst_3 = arith.constant 0.000000e+00 : f32
    %6 = vector.broadcast %cst_3 : f32 to vector<1x896xf32>
    %7 = arith.cmpf one, %5, %6 : vector<1x896xf32>
    %cst_4 = arith.constant 0.000000e+00 : f32
    %8 = vector.broadcast %cst_4 : f32 to vector<8x1xf32>
    %cst_5 = arith.constant 0.000000e+00 : f32
    %9 = vector.broadcast %cst_5 : f32 to vector<8x1xf32>
    %c0_6 = arith.constant 0 : index
    %c0_7 = arith.constant 0 : index
    %c0_8 = arith.constant 0 : index
    %10 = vector.load %arg1[%c0_6, %c0_7, %c0_8] : memref<2x8x1152xf32, #tpu.memory_space<vmem>>, vector<1x8x1152xf32>
    %11 = vector.shape_cast %10 : vector<1x8x1152xf32> to vector<8x1152xf32>
    %c0_9 = arith.constant 0 : index
    %c0_10 = arith.constant 0 : index
    %12 = vector.load %arg2[%c0_9, %c0_10] : memref<8x1xf32, #tpu.memory_space<vmem>>, vector<8x1xf32>
    %13 = vector.broadcast %12 : vector<8x1xf32> to vector<8x1152xf32>
    %14 = arith.mulf %11, %13 : vector<8x1152xf32>
    %c0_11 = arith.constant 0 : index
    %c0_12 = arith.constant 0 : index
    %15 = vector.load %arg3[%c0_11, %c0_12] : memref<8x1xf32, #tpu.memory_space<vmem>>, vector<8x1xf32>
    %16 = vector.broadcast %15 : vector<8x1xf32> to vector<8x1152xf32>
    %17 = arith.addf %14, %16 : vector<8x1152xf32>
    %cst_13 = arith.constant 0.000000e+00 : f32
    %18 = vector.broadcast %cst_13 : f32 to vector<8x1152xf32>
    %19 = arith.maximumf %17, %18 : vector<8x1152xf32>
    %cst_14 = arith.constant 0.000000e+00 : f32
    %20 = vector.shape_cast %2 : vector<1x1152xi1> to vector<1x1152xi1>
    %21 = vector.broadcast %20 : vector<1x1152xi1> to vector<8x1152xi1>
    %22 = vector.broadcast %cst_14 : f32 to vector<8x1152xf32>
    %23 = arith.select %21, %19, %22 : vector<8x1152xi1>, vector<8x1152xf32>
    %24 = arith.truncf %23 : vector<8x1152xf32> to vector<8x1152xbf16>
    %25 = vector.extract_strided_slice %24 {offsets = [0, 17], sizes = [8, 896], strides = [1, 1]} : vector<8x1152xbf16> to vector<8x896xbf16>
    %c0_15 = arith.constant 0 : index
    %c0_16 = arith.constant 0 : index
    %26 = vector.load %arg8[%c0_15, %c0_16] : memref<256x896xbf16, #tpu.memory_space<vmem>>, vector<8x896xbf16>
    tpu.vector_store %arg8[%c0_15, %c0_16], %25 {strides = array<i32>} : memref<256x896xbf16, #tpu.memory_space<vmem>>, vector<8x896xbf16>,
    %27 = vector.extract_strided_slice %25 {offsets = [0, 1], sizes = [8, 895], strides = [1, 1]} : vector<8x896xbf16> to vector<8x895xbf16>
    %28 = vector.extract_strided_slice %25 {offsets = [0, 0], sizes = [8, 1], strides = [1, 1]} : vector<8x896xbf16> to vector<8x1xbf16>
    %29 = tpu.concatenate %27, %28 in 1 : vector<8x895xbf16>, vector<8x1xbf16> -> vector<8x896xbf16>
    %c8 = arith.constant 8 : index
    %c0_17 = arith.constant 0 : index
    %30 = vector.load %arg8[%c8, %c0_17] : memref<256x896xbf16, #tpu.memory_space<vmem>>, vector<8x896xbf16>
    tpu.vector_store %arg8[%c8, %c0_17], %29 {strides = array<i32>} : memref<256x896xbf16, #tpu.memory_space<vmem>>, vector<8x896xbf16>,
    %31 = vector.extract_strided_slice %25 {offsets = [0, 2], sizes = [8, 894], strides = [1, 1]} : vector<8x896xbf16> to vector<8x894xbf16>
    %32 = vector.extract_strided_slice %25 {offsets = [0, 0], sizes = [8, 2], strides = [1, 1]} : vector<8x896xbf16> to vector<8x2xbf16>
    %33 = tpu.concatenate %31, %32 in 1 : vector<8x894xbf16>, vector<8x2xbf16> -> vector<8x896xbf16>
    %c16 = arith.constant 16 : index
    %c0_18 = arith.constant 0 : index
    %34 = vector.load %arg8[%c16, %c0_18] : memref<256x896xbf16, #tpu.memory_space<vmem>>, vector<8x896xbf16>
    tpu.vector_store %arg8[%c16, %c0_18], %33 {strides = array<i32>} : memref<256x896xbf16, #tpu.memory_space<vmem>>, vector<8x896xbf16>,
    %35 = vector.extract_strided_slice %24 {offsets = [0, 27], sizes = [8, 896], strides = [1, 1]} : vector<8x1152xbf16> to vector<8x896xbf16>
    %c24 = arith.constant 24 : index
    %c0_19 = arith.constant 0 : index
    %36 = vector.load %arg8[%c24, %c0_19] : memref<256x896xbf16, #tpu.memory_space<vmem>>, vector<8x896xbf16>
    tpu.vector_store %arg8[%c24, %c0_19], %35 {strides = array<i32>} : memref<256x896xbf16, #tpu.memory_space<vmem>>, vector<8x896xbf16>,
    %37 = vector.extract_strided_slice %35 {offsets = [0, 1], sizes = [8, 895], strides = [1, 1]} : vector<8x896xbf16> to vector<8x895xbf16>
    %38 = vector.extract_strided_slice %35 {offsets = [0, 0], sizes = [8, 1], strides = [1, 1]} : vector<8x896xbf16> to vector<8x1xbf16>
    %39 = tpu.concatenate %37, %38 in 1 : vector<8x895xbf16>, vector<8x1xbf16> -> vector<8x896xbf16>
    %c32 = arith.constant 32 : index
    %c0_20 = arith.constant 0 : index
    %40 = vector.load %arg8[%c32, %c0_20] : memref<256x896xbf16, #tpu.memory_space<vmem>>, vector<8x896xbf16>
    tpu.vector_store %arg8[%c32, %c0_20], %39 {strides = array<i32>} : memref<256x896xbf16, #tpu.memory_space<vmem>>, vector<8x896xbf16>,
    %41 = vector.extract_strided_slice %35 {offsets = [0, 2], sizes = [8, 894], strides = [1, 1]} : vector<8x896xbf16> to vector<8x894xbf16>
    %42 = vector.extract_strided_slice %35 {offsets = [0, 0], sizes = [8, 2], strides = [1, 1]} : vector<8x896xbf16> to vector<8x2xbf16>
    %43 = tpu.concatenate %41, %42 in 1 : vector<8x894xbf16>, vector<8x2xbf16> -> vector<8x896xbf16>
    %c40 = arith.constant 40 : index
    %c0_21 = arith.constant 0 : index
    %44 = vector.load %arg8[%c40, %c0_21] : memref<256x896xbf16, #tpu.memory_space<vmem>>, vector<8x896xbf16>
    tpu.vector_store %arg8[%c40, %c0_21], %43 {strides = array<i32>} : memref<256x896xbf16, #tpu.memory_space<vmem>>, vector<8x896xbf16>,
    %45 = vector.extract_strided_slice %24 {offsets = [0, 37], sizes = [8, 896], strides = [1, 1]} : vector<8x1152xbf16> to vector<8x896xbf16>
    %c48 = arith.constant 48 : index
    %c0_22 = arith.constant 0 : index
    %46 = vector.load %arg8[%c48, %c0_22] : memref<256x896xbf16, #tpu.memory_space<vmem>>, vector<8x896xbf16>
    tpu.vector_store %arg8[%c48, %c0_22], %45 {strides = array<i32>} : memref<256x896xbf16, #tpu.memory_space<vmem>>, vector<8x896xbf16>,
    %47 = vector.extract_strided_slice %45 {offsets = [0, 1], sizes = [8, 895], strides = [1, 1]} : vector<8x896xbf16> to vector<8x895xbf16>
    %48 = vector.extract_strided_slice %45 {offsets = [0, 0], sizes = [8, 1], strides = [1, 1]} : vector<8x896xbf16> to vector<8x1xbf16>
    %49 = tpu.concatenate %47, %48 in 1 : vector<8x895xbf16>, vector<8x1xbf16> -> vector<8x896xbf16>
    %c56 = arith.constant 56 : index
    %c0_23 = arith.constant 0 : index
    %50 = vector.load %arg8[%c56, %c0_23] : memref<256x896xbf16, #tpu.memory_space<vmem>>, vector<8x896xbf16>
    tpu.vector_store %arg8[%c56, %c0_23], %49 {strides = array<i32>} : memref<256x896xbf16, #tpu.memory_space<vmem>>, vector<8x896xbf16>,
    %51 = vector.extract_strided_slice %45 {offsets = [0, 2], sizes = [8, 894], strides = [1, 1]} : vector<8x896xbf16> to vector<8x894xbf16>
    %52 = vector.extract_strided_slice %45 {offsets = [0, 0], sizes = [8, 2], strides = [1, 1]} : vector<8x896xbf16> to vector<8x2xbf16>
    %53 = tpu.concatenate %51, %52 in 1 : vector<8x894xbf16>, vector<8x2xbf16> -> vector<8x896xbf16>
    %c64 = arith.constant 64 : index
    %c0_24 = arith.constant 0 : index
    %54 = vector.load %arg8[%c64, %c0_24] : memref<256x896xbf16, #tpu.memory_space<vmem>>, vector<8x896xbf16>
    tpu.vector_store %arg8[%c64, %c0_24], %53 {strides = array<i32>} : memref<256x896xbf16, #tpu.memory_space<vmem>>, vector<8x896xbf16>,
    %55 = vector.extract_strided_slice %24 {offsets = [0, 117], sizes = [8, 896], strides = [1, 1]} : vector<8x1152xbf16> to vector<8x896xbf16>
    %c72 = arith.constant 72 : index
    %c0_25 = arith.constant 0 : index
    %56 = vector.load %arg8[%c72, %c0_25] : memref<256x896xbf16, #tpu.memory_space<vmem>>, vector<8x896xbf16>
    tpu.vector_store %arg8[%c72, %c0_25], %55 {strides = array<i32>} : memref<256x896xbf16, #tpu.memory_space<vmem>>, vector<8x896xbf16>,
    %57 = vector.extract_strided_slice %55 {offsets = [0, 1], sizes = [8, 895], strides = [1, 1]} : vector<8x896xbf16> to vector<8x895xbf16>
    %58 = vector.extract_strided_slice %55 {offsets = [0, 0], sizes = [8, 1], strides = [1, 1]} : vector<8x896xbf16> to vector<8x1xbf16>
    %59 = tpu.concatenate %57, %58 in 1 : vector<8x895xbf16>, vector<8x1xbf16> -> vector<8x896xbf16>
    %c80 = arith.constant 80 : index
    %c0_26 = arith.constant 0 : index
    %60 = vector.load %arg8[%c80, %c0_26] : memref<256x896xbf16, #tpu.memory_space<vmem>>, vector<8x896xbf16>
    tpu.vector_store %arg8[%c80, %c0_26], %59 {strides = array<i32>} : memref<256x896xbf16, #tpu.memory_space<vmem>>, vector<8x896xbf16>,
    %61 = vector.extract_strided_slice %55 {offsets = [0, 2], sizes = [8, 894], strides = [1, 1]} : vector<8x896xbf16> to vector<8x894xbf16>
    %62 = vector.extract_strided_slice %55 {offsets = [0, 0], sizes = [8, 2], strides = [1, 1]} : vector<8x896xbf16> to vector<8x2xbf16>
    %63 = tpu.concatenate %61, %62 in 1 : vector<8x894xbf16>, vector<8x2xbf16> -> vector<8x896xbf16>
    %c88 = arith.constant 88 : index
    %c0_27 = arith.constant 0 : index
    %64 = vector.load %arg8[%c88, %c0_27] : memref<256x896xbf16, #tpu.memory_space<vmem>>, vector<8x896xbf16>
    tpu.vector_store %arg8[%c88, %c0_27], %63 {strides = array<i32>} : memref<256x896xbf16, #tpu.memory_space<vmem>>, vector<8x896xbf16>,
    %65 = vector.extract_strided_slice %24 {offsets = [0, 127], sizes = [8, 896], strides = [1, 1]} : vector<8x1152xbf16> to vector<8x896xbf16>
    %c96 = arith.constant 96 : index
    %c0_28 = arith.constant 0 : index
    %66 = vector.load %arg8[%c96, %c0_28] : memref<256x896xbf16, #tpu.memory_space<vmem>>, vector<8x896xbf16>
    tpu.vector_store %arg8[%c96, %c0_28], %65 {strides = array<i32>} : memref<256x896xbf16, #tpu.memory_space<vmem>>, vector<8x896xbf16>,
    %67 = vector.extract_strided_slice %65 {offsets = [0, 1], sizes = [8, 895], strides = [1, 1]} : vector<8x896xbf16> to vector<8x895xbf16>
    %68 = vector.extract_strided_slice %65 {offsets = [0, 0], sizes = [8, 1], strides = [1, 1]} : vector<8x896xbf16> to vector<8x1xbf16>
    %69 = tpu.concatenate %67, %68 in 1 : vector<8x895xbf16>, vector<8x1xbf16> -> vector<8x896xbf16>
    %c104 = arith.constant 104 : index
    %c0_29 = arith.constant 0 : index
    %70 = vector.load %arg8[%c104, %c0_29] : memref<256x896xbf16, #tpu.memory_space<vmem>>, vector<8x896xbf16>
    tpu.vector_store %arg8[%c104, %c0_29], %69 {strides = array<i32>} : memref<256x896xbf16, #tpu.memory_space<vmem>>, vector<8x896xbf16>,
    %71 = vector.extract_strided_slice %65 {offsets = [0, 2], sizes = [8, 894], strides = [1, 1]} : vector<8x896xbf16> to vector<8x894xbf16>
    %72 = vector.extract_strided_slice %65 {offsets = [0, 0], sizes = [8, 2], strides = [1, 1]} : vector<8x896xbf16> to vector<8x2xbf16>
    %73 = tpu.concatenate %71, %72 in 1 : vector<8x894xbf16>, vector<8x2xbf16> -> vector<8x896xbf16>
    %c112 = arith.constant 112 : index
    %c0_30 = arith.constant 0 : index
    %74 = vector.load %arg8[%c112, %c0_30] : memref<256x896xbf16, #tpu.memory_space<vmem>>, vector<8x896xbf16>
    tpu.vector_store %arg8[%c112, %c0_30], %73 {strides = array<i32>} : memref<256x896xbf16, #tpu.memory_space<vmem>>, vector<8x896xbf16>,
    %75 = vector.extract_strided_slice %24 {offsets = [0, 137], sizes = [8, 896], strides = [1, 1]} : vector<8x1152xbf16> to vector<8x896xbf16>
    %c120 = arith.constant 120 : index
    %c0_31 = arith.constant 0 : index
    %76 = vector.load %arg8[%c120, %c0_31] : memref<256x896xbf16, #tpu.memory_space<vmem>>, vector<8x896xbf16>
    tpu.vector_store %arg8[%c120, %c0_31], %75 {strides = array<i32>} : memref<256x896xbf16, #tpu.memory_space<vmem>>, vector<8x896xbf16>,
    %77 = vector.extract_strided_slice %75 {offsets = [0, 1], sizes = [8, 895], strides = [1, 1]} : vector<8x896xbf16> to vector<8x895xbf16>
    %78 = vector.extract_strided_slice %75 {offsets = [0, 0], sizes = [8, 1], strides = [1, 1]} : vector<8x896xbf16> to vector<8x1xbf16>
    %79 = tpu.concatenate %77, %78 in 1 : vector<8x895xbf16>, vector<8x1xbf16> -> vector<8x896xbf16>
    %c128 = arith.constant 128 : index
    %c0_32 = arith.constant 0 : index
    %80 = vector.load %arg8[%c128, %c0_32] : memref<256x896xbf16, #tpu.memory_space<vmem>>, vector<8x896xbf16>
    tpu.vector_store %arg8[%c128, %c0_32], %79 {strides = array<i32>} : memref<256x896xbf16, #tpu.memory_space<vmem>>, vector<8x896xbf16>,
    %81 = vector.extract_strided_slice %75 {offsets = [0, 2], sizes = [8, 894], strides = [1, 1]} : vector<8x896xbf16> to vector<8x894xbf16>
    %82 = vector.extract_strided_slice %75 {offsets = [0, 0], sizes = [8, 2], strides = [1, 1]} : vector<8x896xbf16> to vector<8x2xbf16>
    %83 = tpu.concatenate %81, %82 in 1 : vector<8x894xbf16>, vector<8x2xbf16> -> vector<8x896xbf16>
    %c136 = arith.constant 136 : index
    %c0_33 = arith.constant 0 : index
    %84 = vector.load %arg8[%c136, %c0_33] : memref<256x896xbf16, #tpu.memory_space<vmem>>, vector<8x896xbf16>
    tpu.vector_store %arg8[%c136, %c0_33], %83 {strides = array<i32>} : memref<256x896xbf16, #tpu.memory_space<vmem>>, vector<8x896xbf16>,
    %85 = vector.extract_strided_slice %24 {offsets = [0, 217], sizes = [8, 896], strides = [1, 1]} : vector<8x1152xbf16> to vector<8x896xbf16>
    %c144 = arith.constant 144 : index
    %c0_34 = arith.constant 0 : index
    %86 = vector.load %arg8[%c144, %c0_34] : memref<256x896xbf16, #tpu.memory_space<vmem>>, vector<8x896xbf16>
    tpu.vector_store %arg8[%c144, %c0_34], %85 {strides = array<i32>} : memref<256x896xbf16, #tpu.memory_space<vmem>>, vector<8x896xbf16>,
    %87 = vector.extract_strided_slice %85 {offsets = [0, 1], sizes = [8, 895], strides = [1, 1]} : vector<8x896xbf16> to vector<8x895xbf16>
    %88 = vector.extract_strided_slice %85 {offsets = [0, 0], sizes = [8, 1], strides = [1, 1]} : vector<8x896xbf16> to vector<8x1xbf16>
    %89 = tpu.concatenate %87, %88 in 1 : vector<8x895xbf16>, vector<8x1xbf16> -> vector<8x896xbf16>
    %c152 = arith.constant 152 : index
    %c0_35 = arith.constant 0 : index
    %90 = vector.load %arg8[%c152, %c0_35] : memref<256x896xbf16, #tpu.memory_space<vmem>>, vector<8x896xbf16>
    tpu.vector_store %arg8[%c152, %c0_35], %89 {strides = array<i32>} : memref<256x896xbf16, #tpu.memory_space<vmem>>, vector<8x896xbf16>,
    %91 = vector.extract_strided_slice %85 {offsets = [0, 2], sizes = [8, 894], strides = [1, 1]} : vector<8x896xbf16> to vector<8x894xbf16>
    %92 = vector.extract_strided_slice %85 {offsets = [0, 0], sizes = [8, 2], strides = [1, 1]} : vector<8x896xbf16> to vector<8x2xbf16>
    %93 = tpu.concatenate %91, %92 in 1 : vector<8x894xbf16>, vector<8x2xbf16> -> vector<8x896xbf16>
    %c160 = arith.constant 160 : index
    %c0_36 = arith.constant 0 : index
    %94 = vector.load %arg8[%c160, %c0_36] : memref<256x896xbf16, #tpu.memory_space<vmem>>, vector<8x896xbf16>
    tpu.vector_store %arg8[%c160, %c0_36], %93 {strides = array<i32>} : memref<256x896xbf16, #tpu.memory_space<vmem>>, vector<8x896xbf16>,
    %95 = vector.extract_strided_slice %24 {offsets = [0, 227], sizes = [8, 896], strides = [1, 1]} : vector<8x1152xbf16> to vector<8x896xbf16>
    %c168 = arith.constant 168 : index
    %c0_37 = arith.constant 0 : index
    %96 = vector.load %arg8[%c168, %c0_37] : memref<256x896xbf16, #tpu.memory_space<vmem>>, vector<8x896xbf16>
    tpu.vector_store %arg8[%c168, %c0_37], %95 {strides = array<i32>} : memref<256x896xbf16, #tpu.memory_space<vmem>>, vector<8x896xbf16>,
    %97 = vector.extract_strided_slice %95 {offsets = [0, 1], sizes = [8, 895], strides = [1, 1]} : vector<8x896xbf16> to vector<8x895xbf16>
    %98 = vector.extract_strided_slice %95 {offsets = [0, 0], sizes = [8, 1], strides = [1, 1]} : vector<8x896xbf16> to vector<8x1xbf16>
    %99 = tpu.concatenate %97, %98 in 1 : vector<8x895xbf16>, vector<8x1xbf16> -> vector<8x896xbf16>
    %c176 = arith.constant 176 : index
    %c0_38 = arith.constant 0 : index
    %100 = vector.load %arg8[%c176, %c0_38] : memref<256x896xbf16, #tpu.memory_space<vmem>>, vector<8x896xbf16>
    tpu.vector_store %arg8[%c176, %c0_38], %99 {strides = array<i32>} : memref<256x896xbf16, #tpu.memory_space<vmem>>, vector<8x896xbf16>,
    %101 = vector.extract_strided_slice %95 {offsets = [0, 2], sizes = [8, 894], strides = [1, 1]} : vector<8x896xbf16> to vector<8x894xbf16>
    %102 = vector.extract_strided_slice %95 {offsets = [0, 0], sizes = [8, 2], strides = [1, 1]} : vector<8x896xbf16> to vector<8x2xbf16>
    %103 = tpu.concatenate %101, %102 in 1 : vector<8x894xbf16>, vector<8x2xbf16> -> vector<8x896xbf16>
    %c184 = arith.constant 184 : index
    %c0_39 = arith.constant 0 : index
    %104 = vector.load %arg8[%c184, %c0_39] : memref<256x896xbf16, #tpu.memory_space<vmem>>, vector<8x896xbf16>
    tpu.vector_store %arg8[%c184, %c0_39], %103 {strides = array<i32>} : memref<256x896xbf16, #tpu.memory_space<vmem>>, vector<8x896xbf16>,
    %105 = vector.extract_strided_slice %24 {offsets = [0, 237], sizes = [8, 896], strides = [1, 1]} : vector<8x1152xbf16> to vector<8x896xbf16>
    %c192 = arith.constant 192 : index
    %c0_40 = arith.constant 0 : index
    %106 = vector.load %arg8[%c192, %c0_40] : memref<256x896xbf16, #tpu.memory_space<vmem>>, vector<8x896xbf16>
    tpu.vector_store %arg8[%c192, %c0_40], %105 {strides = array<i32>} : memref<256x896xbf16, #tpu.memory_space<vmem>>, vector<8x896xbf16>,
    %107 = vector.extract_strided_slice %105 {offsets = [0, 1], sizes = [8, 895], strides = [1, 1]} : vector<8x896xbf16> to vector<8x895xbf16>
    %108 = vector.extract_strided_slice %105 {offsets = [0, 0], sizes = [8, 1], strides = [1, 1]} : vector<8x896xbf16> to vector<8x1xbf16>
    %109 = tpu.concatenate %107, %108 in 1 : vector<8x895xbf16>, vector<8x1xbf16> -> vector<8x896xbf16>
    %c200 = arith.constant 200 : index
    %c0_41 = arith.constant 0 : index
    %110 = vector.load %arg8[%c200, %c0_41] : memref<256x896xbf16, #tpu.memory_space<vmem>>, vector<8x896xbf16>
    tpu.vector_store %arg8[%c200, %c0_41], %109 {strides = array<i32>} : memref<256x896xbf16, #tpu.memory_space<vmem>>, vector<8x896xbf16>,
    %111 = vector.extract_strided_slice %105 {offsets = [0, 2], sizes = [8, 894], strides = [1, 1]} : vector<8x896xbf16> to vector<8x894xbf16>
    %112 = vector.extract_strided_slice %105 {offsets = [0, 0], sizes = [8, 2], strides = [1, 1]} : vector<8x896xbf16> to vector<8x2xbf16>
    %113 = tpu.concatenate %111, %112 in 1 : vector<8x894xbf16>, vector<8x2xbf16> -> vector<8x896xbf16>
    %c208 = arith.constant 208 : index
    %c0_42 = arith.constant 0 : index
    %114 = vector.load %arg8[%c208, %c0_42] : memref<256x896xbf16, #tpu.memory_space<vmem>>, vector<8x896xbf16>
    tpu.vector_store %arg8[%c208, %c0_42], %113 {strides = array<i32>} : memref<256x896xbf16, #tpu.memory_space<vmem>>, vector<8x896xbf16>,
    %c0_43 = arith.constant 0 : index
    %c0_44 = arith.constant 0 : index
    %115 = vector.load %arg5[%c0_43, %c0_44] : memref<8x256xbf16, #tpu.memory_space<vmem>>, vector<8x256xbf16>
    %c0_45 = arith.constant 0 : index
    %c0_46 = arith.constant 0 : index
    %116 = vector.load %arg8[%c0_45, %c0_46] : memref<256x896xbf16, #tpu.memory_space<vmem>>, vector<256x896xbf16>
    %cst_47 = arith.constant dense<0.000000e+00> : vector<8x896xf32>
    %117 = tpu.matmul %115, %116, %cst_47 {dimension_numbers = #tpu.dot_dimension_numbers<[1], [0], [0], [1], [0, 0, 1, 1], [], []>} : vector<8x256xbf16>, vector<256x896xbf16>, vector<8x896xf32> -> vector<8x896xf32>
    %cst_48 = arith.constant 0.000000e+00 : f32
    %118 = vector.shape_cast %7 : vector<1x896xi1> to vector<1x896xi1>
    %119 = vector.broadcast %118 : vector<1x896xi1> to vector<8x896xi1>
    %120 = vector.broadcast %cst_48 : f32 to vector<8x896xf32>
    %121 = arith.select %119, %117, %120 : vector<8x896xi1>, vector<8x896xf32>
    %cst_49 = arith.constant dense<0.000000e+00> : vector<8xf32>
    %122 = vector.multi_reduction <add>, %121, %cst_49 [1] : vector<8x896xf32> to vector<8xf32>
    %123 = vector.shape_cast %122 : vector<8xf32> to vector<8x1xf32>
    %124 = arith.addf %8, %123 : vector<8x1xf32>
    %125 = arith.mulf %121, %117 : vector<8x896xf32>
    %cst_50 = arith.constant dense<0.000000e+00> : vector<8xf32>
    %126 = vector.multi_reduction <add>, %125, %cst_50 [1] : vector<8x896xf32> to vector<8xf32>
    %127 = vector.shape_cast %126 : vector<8xf32> to vector<8x1xf32>
    %128 = arith.addf %9, %127 : vector<8x1xf32>
    %129 = arith.truncf %117 : vector<8x896xf32> to vector<8x896xbf16>
    %c0_51 = arith.constant 0 : index
    %c0_52 = arith.constant 0 : index
    %c128_53 = arith.constant 128 : index
    %130 = vector.load %arg6[%c0_51, %c0_52, %c128_53] : memref<2x8x1152xbf16, #tpu.memory_space<vmem>>, vector<1x8x896xbf16>
    %131 = vector.shape_cast %130 : vector<1x8x896xbf16> to vector<8x896xbf16>
    %132 = vector.shape_cast %129 : vector<8x896xbf16> to vector<1x8x896xbf16>
    tpu.vector_store %arg6[%c0_51, %c0_52, %c128_53], %132 {strides = array<i32>} : memref<2x8x1152xbf16, #tpu.memory_space<vmem>>, vector<1x8x896xbf16>,
    %cst_54 = arith.constant 0.000000e+00 : bf16
    %133 = vector.broadcast %cst_54 : bf16 to vector<8x128xbf16>
    %c0_55 = arith.constant 0 : index
    %c0_56 = arith.constant 0 : index
    %c0_57 = arith.constant 0 : index
    %134 = vector.load %arg6[%c0_55, %c0_56, %c0_57] : memref<2x8x1152xbf16, #tpu.memory_space<vmem>>, vector<1x8x128xbf16>
    %135 = vector.shape_cast %134 : vector<1x8x128xbf16> to vector<8x128xbf16>
    %136 = vector.shape_cast %133 : vector<8x128xbf16> to vector<1x8x128xbf16>
    tpu.vector_store %arg6[%c0_55, %c0_56, %c0_57], %136 {strides = array<i32>} : memref<2x8x1152xbf16, #tpu.memory_space<vmem>>, vector<1x8x128xbf16>,
    %cst_58 = arith.constant 0.000000e+00 : bf16
    %137 = vector.broadcast %cst_58 : bf16 to vector<8x128xbf16>
    %c0_59 = arith.constant 0 : index
    %c0_60 = arith.constant 0 : index
    %c1024 = arith.constant 1024 : index
    %138 = vector.load %arg6[%c0_59, %c0_60, %c1024] : memref<2x8x1152xbf16, #tpu.memory_space<vmem>>, vector<1x8x128xbf16>
    %139 = vector.shape_cast %138 : vector<1x8x128xbf16> to vector<8x128xbf16>
    %140 = vector.shape_cast %137 : vector<8x128xbf16> to vector<1x8x128xbf16>
    tpu.vector_store %arg6[%c0_59, %c0_60, %c1024], %140 {strides = array<i32>} : memref<2x8x1152xbf16, #tpu.memory_space<vmem>>, vector<1x8x128xbf16>,
    %c1 = arith.constant 1 : index
    %c0_61 = arith.constant 0 : index
    %c0_62 = arith.constant 0 : index
    %141 = vector.load %arg1[%c1, %c0_61, %c0_62] : memref<2x8x1152xf32, #tpu.memory_space<vmem>>, vector<1x8x1152xf32>
    %142 = vector.shape_cast %141 : vector<1x8x1152xf32> to vector<8x1152xf32>
    %c0_63 = arith.constant 0 : index
    %c0_64 = arith.constant 0 : index
    %143 = vector.load %arg2[%c0_63, %c0_64] : memref<8x1xf32, #tpu.memory_space<vmem>>, vector<8x1xf32>
    %144 = vector.broadcast %143 : vector<8x1xf32> to vector<8x1152xf32>
    %145 = arith.mulf %142, %144 : vector<8x1152xf32>
    %c0_65 = arith.constant 0 : index
    %c0_66 = arith.constant 0 : index
    %146 = vector.load %arg3[%c0_65, %c0_66] : memref<8x1xf32, #tpu.memory_space<vmem>>, vector<8x1xf32>
    %147 = vector.broadcast %146 : vector<8x1xf32> to vector<8x1152xf32>
    %148 = arith.addf %145, %147 : vector<8x1152xf32>
    %cst_67 = arith.constant 0.000000e+00 : f32
    %149 = vector.broadcast %cst_67 : f32 to vector<8x1152xf32>
    %150 = arith.maximumf %148, %149 : vector<8x1152xf32>
    %cst_68 = arith.constant 0.000000e+00 : f32
    %151 = vector.shape_cast %2 : vector<1x1152xi1> to vector<1x1152xi1>
    %152 = vector.broadcast %151 : vector<1x1152xi1> to vector<8x1152xi1>
    %153 = vector.broadcast %cst_68 : f32 to vector<8x1152xf32>
    %154 = arith.select %152, %150, %153 : vector<8x1152xi1>, vector<8x1152xf32>
    %155 = arith.truncf %154 : vector<8x1152xf32> to vector<8x1152xbf16>
    %156 = vector.extract_strided_slice %155 {offsets = [0, 17], sizes = [8, 896], strides = [1, 1]} : vector<8x1152xbf16> to vector<8x896xbf16>
    %c0_69 = arith.constant 0 : index
    %c0_70 = arith.constant 0 : index
    %157 = vector.load %arg8[%c0_69, %c0_70] : memref<256x896xbf16, #tpu.memory_space<vmem>>, vector<8x896xbf16>
    tpu.vector_store %arg8[%c0_69, %c0_70], %156 {strides = array<i32>} : memref<256x896xbf16, #tpu.memory_space<vmem>>, vector<8x896xbf16>,
    %158 = vector.extract_strided_slice %156 {offsets = [0, 1], sizes = [8, 895], strides = [1, 1]} : vector<8x896xbf16> to vector<8x895xbf16>
    %159 = vector.extract_strided_slice %156 {offsets = [0, 0], sizes = [8, 1], strides = [1, 1]} : vector<8x896xbf16> to vector<8x1xbf16>
    %160 = tpu.concatenate %158, %159 in 1 : vector<8x895xbf16>, vector<8x1xbf16> -> vector<8x896xbf16>
    %c8_71 = arith.constant 8 : index
    %c0_72 = arith.constant 0 : index
    %161 = vector.load %arg8[%c8_71, %c0_72] : memref<256x896xbf16, #tpu.memory_space<vmem>>, vector<8x896xbf16>
    tpu.vector_store %arg8[%c8_71, %c0_72], %160 {strides = array<i32>} : memref<256x896xbf16, #tpu.memory_space<vmem>>, vector<8x896xbf16>,
    %162 = vector.extract_strided_slice %156 {offsets = [0, 2], sizes = [8, 894], strides = [1, 1]} : vector<8x896xbf16> to vector<8x894xbf16>
    %163 = vector.extract_strided_slice %156 {offsets = [0, 0], sizes = [8, 2], strides = [1, 1]} : vector<8x896xbf16> to vector<8x2xbf16>
    %164 = tpu.concatenate %162, %163 in 1 : vector<8x894xbf16>, vector<8x2xbf16> -> vector<8x896xbf16>
    %c16_73 = arith.constant 16 : index
    %c0_74 = arith.constant 0 : index
    %165 = vector.load %arg8[%c16_73, %c0_74] : memref<256x896xbf16, #tpu.memory_space<vmem>>, vector<8x896xbf16>
    tpu.vector_store %arg8[%c16_73, %c0_74], %164 {strides = array<i32>} : memref<256x896xbf16, #tpu.memory_space<vmem>>, vector<8x896xbf16>,
    %166 = vector.extract_strided_slice %155 {offsets = [0, 27], sizes = [8, 896], strides = [1, 1]} : vector<8x1152xbf16> to vector<8x896xbf16>
    %c24_75 = arith.constant 24 : index
    %c0_76 = arith.constant 0 : index
    %167 = vector.load %arg8[%c24_75, %c0_76] : memref<256x896xbf16, #tpu.memory_space<vmem>>, vector<8x896xbf16>
    tpu.vector_store %arg8[%c24_75, %c0_76], %166 {strides = array<i32>} : memref<256x896xbf16, #tpu.memory_space<vmem>>, vector<8x896xbf16>,
    %168 = vector.extract_strided_slice %166 {offsets = [0, 1], sizes = [8, 895], strides = [1, 1]} : vector<8x896xbf16> to vector<8x895xbf16>
    %169 = vector.extract_strided_slice %166 {offsets = [0, 0], sizes = [8, 1], strides = [1, 1]} : vector<8x896xbf16> to vector<8x1xbf16>
    %170 = tpu.concatenate %168, %169 in 1 : vector<8x895xbf16>, vector<8x1xbf16> -> vector<8x896xbf16>
    %c32_77 = arith.constant 32 : index
    %c0_78 = arith.constant 0 : index
    %171 = vector.load %arg8[%c32_77, %c0_78] : memref<256x896xbf16, #tpu.memory_space<vmem>>, vector<8x896xbf16>
    tpu.vector_store %arg8[%c32_77, %c0_78], %170 {strides = array<i32>} : memref<256x896xbf16, #tpu.memory_space<vmem>>, vector<8x896xbf16>,
    %172 = vector.extract_strided_slice %166 {offsets = [0, 2], sizes = [8, 894], strides = [1, 1]} : vector<8x896xbf16> to vector<8x894xbf16>
    %173 = vector.extract_strided_slice %166 {offsets = [0, 0], sizes = [8, 2], strides = [1, 1]} : vector<8x896xbf16> to vector<8x2xbf16>
    %174 = tpu.concatenate %172, %173 in 1 : vector<8x894xbf16>, vector<8x2xbf16> -> vector<8x896xbf16>
    %c40_79 = arith.constant 40 : index
    %c0_80 = arith.constant 0 : index
    %175 = vector.load %arg8[%c40_79, %c0_80] : memref<256x896xbf16, #tpu.memory_space<vmem>>, vector<8x896xbf16>
    tpu.vector_store %arg8[%c40_79, %c0_80], %174 {strides = array<i32>} : memref<256x896xbf16, #tpu.memory_space<vmem>>, vector<8x896xbf16>,
    %176 = vector.extract_strided_slice %155 {offsets = [0, 37], sizes = [8, 896], strides = [1, 1]} : vector<8x1152xbf16> to vector<8x896xbf16>
    %c48_81 = arith.constant 48 : index
    %c0_82 = arith.constant 0 : index
    %177 = vector.load %arg8[%c48_81, %c0_82] : memref<256x896xbf16, #tpu.memory_space<vmem>>, vector<8x896xbf16>
    tpu.vector_store %arg8[%c48_81, %c0_82], %176 {strides = array<i32>} : memref<256x896xbf16, #tpu.memory_space<vmem>>, vector<8x896xbf16>,
    %178 = vector.extract_strided_slice %176 {offsets = [0, 1], sizes = [8, 895], strides = [1, 1]} : vector<8x896xbf16> to vector<8x895xbf16>
    %179 = vector.extract_strided_slice %176 {offsets = [0, 0], sizes = [8, 1], strides = [1, 1]} : vector<8x896xbf16> to vector<8x1xbf16>
    %180 = tpu.concatenate %178, %179 in 1 : vector<8x895xbf16>, vector<8x1xbf16> -> vector<8x896xbf16>
    %c56_83 = arith.constant 56 : index
    %c0_84 = arith.constant 0 : index
    %181 = vector.load %arg8[%c56_83, %c0_84] : memref<256x896xbf16, #tpu.memory_space<vmem>>, vector<8x896xbf16>
    tpu.vector_store %arg8[%c56_83, %c0_84], %180 {strides = array<i32>} : memref<256x896xbf16, #tpu.memory_space<vmem>>, vector<8x896xbf16>,
    %182 = vector.extract_strided_slice %176 {offsets = [0, 2], sizes = [8, 894], strides = [1, 1]} : vector<8x896xbf16> to vector<8x894xbf16>
    %183 = vector.extract_strided_slice %176 {offsets = [0, 0], sizes = [8, 2], strides = [1, 1]} : vector<8x896xbf16> to vector<8x2xbf16>
    %184 = tpu.concatenate %182, %183 in 1 : vector<8x894xbf16>, vector<8x2xbf16> -> vector<8x896xbf16>
    %c64_85 = arith.constant 64 : index
    %c0_86 = arith.constant 0 : index
    %185 = vector.load %arg8[%c64_85, %c0_86] : memref<256x896xbf16, #tpu.memory_space<vmem>>, vector<8x896xbf16>
    tpu.vector_store %arg8[%c64_85, %c0_86], %184 {strides = array<i32>} : memref<256x896xbf16, #tpu.memory_space<vmem>>, vector<8x896xbf16>,
    %186 = vector.extract_strided_slice %155 {offsets = [0, 117], sizes = [8, 896], strides = [1, 1]} : vector<8x1152xbf16> to vector<8x896xbf16>
    %c72_87 = arith.constant 72 : index
    %c0_88 = arith.constant 0 : index
    %187 = vector.load %arg8[%c72_87, %c0_88] : memref<256x896xbf16, #tpu.memory_space<vmem>>, vector<8x896xbf16>
    tpu.vector_store %arg8[%c72_87, %c0_88], %186 {strides = array<i32>} : memref<256x896xbf16, #tpu.memory_space<vmem>>, vector<8x896xbf16>,
    %188 = vector.extract_strided_slice %186 {offsets = [0, 1], sizes = [8, 895], strides = [1, 1]} : vector<8x896xbf16> to vector<8x895xbf16>
    %189 = vector.extract_strided_slice %186 {offsets = [0, 0], sizes = [8, 1], strides = [1, 1]} : vector<8x896xbf16> to vector<8x1xbf16>
    %190 = tpu.concatenate %188, %189 in 1 : vector<8x895xbf16>, vector<8x1xbf16> -> vector<8x896xbf16>
    %c80_89 = arith.constant 80 : index
    %c0_90 = arith.constant 0 : index
    %191 = vector.load %arg8[%c80_89, %c0_90] : memref<256x896xbf16, #tpu.memory_space<vmem>>, vector<8x896xbf16>
    tpu.vector_store %arg8[%c80_89, %c0_90], %190 {strides = array<i32>} : memref<256x896xbf16, #tpu.memory_space<vmem>>, vector<8x896xbf16>,
    %192 = vector.extract_strided_slice %186 {offsets = [0, 2], sizes = [8, 894], strides = [1, 1]} : vector<8x896xbf16> to vector<8x894xbf16>
    %193 = vector.extract_strided_slice %186 {offsets = [0, 0], sizes = [8, 2], strides = [1, 1]} : vector<8x896xbf16> to vector<8x2xbf16>
    %194 = tpu.concatenate %192, %193 in 1 : vector<8x894xbf16>, vector<8x2xbf16> -> vector<8x896xbf16>
    %c88_91 = arith.constant 88 : index
    %c0_92 = arith.constant 0 : index
    %195 = vector.load %arg8[%c88_91, %c0_92] : memref<256x896xbf16, #tpu.memory_space<vmem>>, vector<8x896xbf16>
    tpu.vector_store %arg8[%c88_91, %c0_92], %194 {strides = array<i32>} : memref<256x896xbf16, #tpu.memory_space<vmem>>, vector<8x896xbf16>,
    %196 = vector.extract_strided_slice %155 {offsets = [0, 127], sizes = [8, 896], strides = [1, 1]} : vector<8x1152xbf16> to vector<8x896xbf16>
    %c96_93 = arith.constant 96 : index
    %c0_94 = arith.constant 0 : index
    %197 = vector.load %arg8[%c96_93, %c0_94] : memref<256x896xbf16, #tpu.memory_space<vmem>>, vector<8x896xbf16>
    tpu.vector_store %arg8[%c96_93, %c0_94], %196 {strides = array<i32>} : memref<256x896xbf16, #tpu.memory_space<vmem>>, vector<8x896xbf16>,
    %198 = vector.extract_strided_slice %196 {offsets = [0, 1], sizes = [8, 895], strides = [1, 1]} : vector<8x896xbf16> to vector<8x895xbf16>
    %199 = vector.extract_strided_slice %196 {offsets = [0, 0], sizes = [8, 1], strides = [1, 1]} : vector<8x896xbf16> to vector<8x1xbf16>
    %200 = tpu.concatenate %198, %199 in 1 : vector<8x895xbf16>, vector<8x1xbf16> -> vector<8x896xbf16>
    %c104_95 = arith.constant 104 : index
    %c0_96 = arith.constant 0 : index
    %201 = vector.load %arg8[%c104_95, %c0_96] : memref<256x896xbf16, #tpu.memory_space<vmem>>, vector<8x896xbf16>
    tpu.vector_store %arg8[%c104_95, %c0_96], %200 {strides = array<i32>} : memref<256x896xbf16, #tpu.memory_space<vmem>>, vector<8x896xbf16>,
    %202 = vector.extract_strided_slice %196 {offsets = [0, 2], sizes = [8, 894], strides = [1, 1]} : vector<8x896xbf16> to vector<8x894xbf16>
    %203 = vector.extract_strided_slice %196 {offsets = [0, 0], sizes = [8, 2], strides = [1, 1]} : vector<8x896xbf16> to vector<8x2xbf16>
    %204 = tpu.concatenate %202, %203 in 1 : vector<8x894xbf16>, vector<8x2xbf16> -> vector<8x896xbf16>
    %c112_97 = arith.constant 112 : index
    %c0_98 = arith.constant 0 : index
    %205 = vector.load %arg8[%c112_97, %c0_98] : memref<256x896xbf16, #tpu.memory_space<vmem>>, vector<8x896xbf16>
    tpu.vector_store %arg8[%c112_97, %c0_98], %204 {strides = array<i32>} : memref<256x896xbf16, #tpu.memory_space<vmem>>, vector<8x896xbf16>,
    %206 = vector.extract_strided_slice %155 {offsets = [0, 137], sizes = [8, 896], strides = [1, 1]} : vector<8x1152xbf16> to vector<8x896xbf16>
    %c120_99 = arith.constant 120 : index
    %c0_100 = arith.constant 0 : index
    %207 = vector.load %arg8[%c120_99, %c0_100] : memref<256x896xbf16, #tpu.memory_space<vmem>>, vector<8x896xbf16>
    tpu.vector_store %arg8[%c120_99, %c0_100], %206 {strides = array<i32>} : memref<256x896xbf16, #tpu.memory_space<vmem>>, vector<8x896xbf16>,
    %208 = vector.extract_strided_slice %206 {offsets = [0, 1], sizes = [8, 895], strides = [1, 1]} : vector<8x896xbf16> to vector<8x895xbf16>
    %209 = vector.extract_strided_slice %206 {offsets = [0, 0], sizes = [8, 1], strides = [1, 1]} : vector<8x896xbf16> to vector<8x1xbf16>
    %210 = tpu.concatenate %208, %209 in 1 : vector<8x895xbf16>, vector<8x1xbf16> -> vector<8x896xbf16>
    %c128_101 = arith.constant 128 : index
    %c0_102 = arith.constant 0 : index
    %211 = vector.load %arg8[%c128_101, %c0_102] : memref<256x896xbf16, #tpu.memory_space<vmem>>, vector<8x896xbf16>
    tpu.vector_store %arg8[%c128_101, %c0_102], %210 {strides = array<i32>} : memref<256x896xbf16, #tpu.memory_space<vmem>>, vector<8x896xbf16>,
    %212 = vector.extract_strided_slice %206 {offsets = [0, 2], sizes = [8, 894], strides = [1, 1]} : vector<8x896xbf16> to vector<8x894xbf16>
    %213 = vector.extract_strided_slice %206 {offsets = [0, 0], sizes = [8, 2], strides = [1, 1]} : vector<8x896xbf16> to vector<8x2xbf16>
    %214 = tpu.concatenate %212, %213 in 1 : vector<8x894xbf16>, vector<8x2xbf16> -> vector<8x896xbf16>
    %c136_103 = arith.constant 136 : index
    %c0_104 = arith.constant 0 : index
    %215 = vector.load %arg8[%c136_103, %c0_104] : memref<256x896xbf16, #tpu.memory_space<vmem>>, vector<8x896xbf16>
    tpu.vector_store %arg8[%c136_103, %c0_104], %214 {strides = array<i32>} : memref<256x896xbf16, #tpu.memory_space<vmem>>, vector<8x896xbf16>,
    %216 = vector.extract_strided_slice %155 {offsets = [0, 217], sizes = [8, 896], strides = [1, 1]} : vector<8x1152xbf16> to vector<8x896xbf16>
    %c144_105 = arith.constant 144 : index
    %c0_106 = arith.constant 0 : index
    %217 = vector.load %arg8[%c144_105, %c0_106] : memref<256x896xbf16, #tpu.memory_space<vmem>>, vector<8x896xbf16>
    tpu.vector_store %arg8[%c144_105, %c0_106], %216 {strides = array<i32>} : memref<256x896xbf16, #tpu.memory_space<vmem>>, vector<8x896xbf16>,
    %218 = vector.extract_strided_slice %216 {offsets = [0, 1], sizes = [8, 895], strides = [1, 1]} : vector<8x896xbf16> to vector<8x895xbf16>
    %219 = vector.extract_strided_slice %216 {offsets = [0, 0], sizes = [8, 1], strides = [1, 1]} : vector<8x896xbf16> to vector<8x1xbf16>
    %220 = tpu.concatenate %218, %219 in 1 : vector<8x895xbf16>, vector<8x1xbf16> -> vector<8x896xbf16>
    %c152_107 = arith.constant 152 : index
    %c0_108 = arith.constant 0 : index
    %221 = vector.load %arg8[%c152_107, %c0_108] : memref<256x896xbf16, #tpu.memory_space<vmem>>, vector<8x896xbf16>
    tpu.vector_store %arg8[%c152_107, %c0_108], %220 {strides = array<i32>} : memref<256x896xbf16, #tpu.memory_space<vmem>>, vector<8x896xbf16>,
    %222 = vector.extract_strided_slice %216 {offsets = [0, 2], sizes = [8, 894], strides = [1, 1]} : vector<8x896xbf16> to vector<8x894xbf16>
    %223 = vector.extract_strided_slice %216 {offsets = [0, 0], sizes = [8, 2], strides = [1, 1]} : vector<8x896xbf16> to vector<8x2xbf16>
    %224 = tpu.concatenate %222, %223 in 1 : vector<8x894xbf16>, vector<8x2xbf16> -> vector<8x896xbf16>
    %c160_109 = arith.constant 160 : index
    %c0_110 = arith.constant 0 : index
    %225 = vector.load %arg8[%c160_109, %c0_110] : memref<256x896xbf16, #tpu.memory_space<vmem>>, vector<8x896xbf16>
    tpu.vector_store %arg8[%c160_109, %c0_110], %224 {strides = array<i32>} : memref<256x896xbf16, #tpu.memory_space<vmem>>, vector<8x896xbf16>,
    %226 = vector.extract_strided_slice %155 {offsets = [0, 227], sizes = [8, 896], strides = [1, 1]} : vector<8x1152xbf16> to vector<8x896xbf16>
    %c168_111 = arith.constant 168 : index
    %c0_112 = arith.constant 0 : index
    %227 = vector.load %arg8[%c168_111, %c0_112] : memref<256x896xbf16, #tpu.memory_space<vmem>>, vector<8x896xbf16>
    tpu.vector_store %arg8[%c168_111, %c0_112], %226 {strides = array<i32>} : memref<256x896xbf16, #tpu.memory_space<vmem>>, vector<8x896xbf16>,
    %228 = vector.extract_strided_slice %226 {offsets = [0, 1], sizes = [8, 895], strides = [1, 1]} : vector<8x896xbf16> to vector<8x895xbf16>
    %229 = vector.extract_strided_slice %226 {offsets = [0, 0], sizes = [8, 1], strides = [1, 1]} : vector<8x896xbf16> to vector<8x1xbf16>
    %230 = tpu.concatenate %228, %229 in 1 : vector<8x895xbf16>, vector<8x1xbf16> -> vector<8x896xbf16>
    %c176_113 = arith.constant 176 : index
    %c0_114 = arith.constant 0 : index
    %231 = vector.load %arg8[%c176_113, %c0_114] : memref<256x896xbf16, #tpu.memory_space<vmem>>, vector<8x896xbf16>
    tpu.vector_store %arg8[%c176_113, %c0_114], %230 {strides = array<i32>} : memref<256x896xbf16, #tpu.memory_space<vmem>>, vector<8x896xbf16>,
    %232 = vector.extract_strided_slice %226 {offsets = [0, 2], sizes = [8, 894], strides = [1, 1]} : vector<8x896xbf16> to vector<8x894xbf16>
    %233 = vector.extract_strided_slice %226 {offsets = [0, 0], sizes = [8, 2], strides = [1, 1]} : vector<8x896xbf16> to vector<8x2xbf16>
    %234 = tpu.concatenate %232, %233 in 1 : vector<8x894xbf16>, vector<8x2xbf16> -> vector<8x896xbf16>
    %c184_115 = arith.constant 184 : index
    %c0_116 = arith.constant 0 : index
    %235 = vector.load %arg8[%c184_115, %c0_116] : memref<256x896xbf16, #tpu.memory_space<vmem>>, vector<8x896xbf16>
    tpu.vector_store %arg8[%c184_115, %c0_116], %234 {strides = array<i32>} : memref<256x896xbf16, #tpu.memory_space<vmem>>, vector<8x896xbf16>,
    %236 = vector.extract_strided_slice %155 {offsets = [0, 237], sizes = [8, 896], strides = [1, 1]} : vector<8x1152xbf16> to vector<8x896xbf16>
    %c192_117 = arith.constant 192 : index
    %c0_118 = arith.constant 0 : index
    %237 = vector.load %arg8[%c192_117, %c0_118] : memref<256x896xbf16, #tpu.memory_space<vmem>>, vector<8x896xbf16>
    tpu.vector_store %arg8[%c192_117, %c0_118], %236 {strides = array<i32>} : memref<256x896xbf16, #tpu.memory_space<vmem>>, vector<8x896xbf16>,
    %238 = vector.extract_strided_slice %236 {offsets = [0, 1], sizes = [8, 895], strides = [1, 1]} : vector<8x896xbf16> to vector<8x895xbf16>
    %239 = vector.extract_strided_slice %236 {offsets = [0, 0], sizes = [8, 1], strides = [1, 1]} : vector<8x896xbf16> to vector<8x1xbf16>
    %240 = tpu.concatenate %238, %239 in 1 : vector<8x895xbf16>, vector<8x1xbf16> -> vector<8x896xbf16>
    %c200_119 = arith.constant 200 : index
    %c0_120 = arith.constant 0 : index
    %241 = vector.load %arg8[%c200_119, %c0_120] : memref<256x896xbf16, #tpu.memory_space<vmem>>, vector<8x896xbf16>
    tpu.vector_store %arg8[%c200_119, %c0_120], %240 {strides = array<i32>} : memref<256x896xbf16, #tpu.memory_space<vmem>>, vector<8x896xbf16>,
    %242 = vector.extract_strided_slice %236 {offsets = [0, 2], sizes = [8, 894], strides = [1, 1]} : vector<8x896xbf16> to vector<8x894xbf16>
    %243 = vector.extract_strided_slice %236 {offsets = [0, 0], sizes = [8, 2], strides = [1, 1]} : vector<8x896xbf16> to vector<8x2xbf16>
    %244 = tpu.concatenate %242, %243 in 1 : vector<8x894xbf16>, vector<8x2xbf16> -> vector<8x896xbf16>
    %c208_121 = arith.constant 208 : index
    %c0_122 = arith.constant 0 : index
    %245 = vector.load %arg8[%c208_121, %c0_122] : memref<256x896xbf16, #tpu.memory_space<vmem>>, vector<8x896xbf16>
    tpu.vector_store %arg8[%c208_121, %c0_122], %244 {strides = array<i32>} : memref<256x896xbf16, #tpu.memory_space<vmem>>, vector<8x896xbf16>,
    %c0_123 = arith.constant 0 : index
    %c0_124 = arith.constant 0 : index
    %246 = vector.load %arg5[%c0_123, %c0_124] : memref<8x256xbf16, #tpu.memory_space<vmem>>, vector<8x256xbf16>
    %c0_125 = arith.constant 0 : index
    %c0_126 = arith.constant 0 : index
    %247 = vector.load %arg8[%c0_125, %c0_126] : memref<256x896xbf16, #tpu.memory_space<vmem>>, vector<256x896xbf16>
    %cst_127 = arith.constant dense<0.000000e+00> : vector<8x896xf32>
    %248 = tpu.matmul %246, %247, %cst_127 {dimension_numbers = #tpu.dot_dimension_numbers<[1], [0], [0], [1], [0, 0, 1, 1], [], []>} : vector<8x256xbf16>, vector<256x896xbf16>, vector<8x896xf32> -> vector<8x896xf32>
    %cst_128 = arith.constant 0.000000e+00 : f32
    %249 = vector.shape_cast %7 : vector<1x896xi1> to vector<1x896xi1>
    %250 = vector.broadcast %249 : vector<1x896xi1> to vector<8x896xi1>
    %251 = vector.broadcast %cst_128 : f32 to vector<8x896xf32>
    %252 = arith.select %250, %248, %251 : vector<8x896xi1>, vector<8x896xf32>
    %cst_129 = arith.constant dense<0.000000e+00> : vector<8xf32>
    %253 = vector.multi_reduction <add>, %252, %cst_129 [1] : vector<8x896xf32> to vector<8xf32>
    %254 = vector.shape_cast %253 : vector<8xf32> to vector<8x1xf32>
    %255 = arith.addf %124, %254 : vector<8x1xf32>
    %256 = arith.mulf %252, %248 : vector<8x896xf32>
    %cst_130 = arith.constant dense<0.000000e+00> : vector<8xf32>
    %257 = vector.multi_reduction <add>, %256, %cst_130 [1] : vector<8x896xf32> to vector<8xf32>
    %258 = vector.shape_cast %257 : vector<8xf32> to vector<8x1xf32>
    %259 = arith.addf %128, %258 : vector<8x1xf32>
    %260 = arith.truncf %248 : vector<8x896xf32> to vector<8x896xbf16>
    %c1_131 = arith.constant 1 : index
    %c0_132 = arith.constant 0 : index
    %c128_133 = arith.constant 128 : index
    %261 = vector.load %arg6[%c1_131, %c0_132, %c128_133] : memref<2x8x1152xbf16, #tpu.memory_space<vmem>>, vector<1x8x896xbf16>
    %262 = vector.shape_cast %261 : vector<1x8x896xbf16> to vector<8x896xbf16>
    %263 = vector.shape_cast %260 : vector<8x896xbf16> to vector<1x8x896xbf16>
    tpu.vector_store %arg6[%c1_131, %c0_132, %c128_133], %263 {strides = array<i32>} : memref<2x8x1152xbf16, #tpu.memory_space<vmem>>, vector<1x8x896xbf16>,
    %cst_134 = arith.constant 0.000000e+00 : bf16
    %264 = vector.broadcast %cst_134 : bf16 to vector<8x128xbf16>
    %c1_135 = arith.constant 1 : index
    %c0_136 = arith.constant 0 : index
    %c0_137 = arith.constant 0 : index
    %265 = vector.load %arg6[%c1_135, %c0_136, %c0_137] : memref<2x8x1152xbf16, #tpu.memory_space<vmem>>, vector<1x8x128xbf16>
    %266 = vector.shape_cast %265 : vector<1x8x128xbf16> to vector<8x128xbf16>
    %267 = vector.shape_cast %264 : vector<8x128xbf16> to vector<1x8x128xbf16>
    tpu.vector_store %arg6[%c1_135, %c0_136, %c0_137], %267 {strides = array<i32>} : memref<2x8x1152xbf16, #tpu.memory_space<vmem>>, vector<1x8x128xbf16>,
    %cst_138 = arith.constant 0.000000e+00 : bf16
    %268 = vector.broadcast %cst_138 : bf16 to vector<8x128xbf16>
    %c1_139 = arith.constant 1 : index
    %c0_140 = arith.constant 0 : index
    %c1024_141 = arith.constant 1024 : index
    %269 = vector.load %arg6[%c1_139, %c0_140, %c1024_141] : memref<2x8x1152xbf16, #tpu.memory_space<vmem>>, vector<1x8x128xbf16>
    %270 = vector.shape_cast %269 : vector<1x8x128xbf16> to vector<8x128xbf16>
    %271 = vector.shape_cast %268 : vector<8x128xbf16> to vector<1x8x128xbf16>
    tpu.vector_store %arg6[%c1_139, %c0_140, %c1024_141], %271 {strides = array<i32>} : memref<2x8x1152xbf16, #tpu.memory_space<vmem>>, vector<1x8x128xbf16>,
    %cst_142 = arith.constant 0.000000e+00 : f32
    %272 = vector.broadcast %cst_142 : f32 to vector<8x126xf32>
    %273 = tpu.concatenate %255, %259, %272 in 1 : vector<8x1xf32>, vector<8x1xf32>, vector<8x126xf32> -> vector<8x128xf32>
    %c0_143 = arith.constant 0 : index
    %c0_144 = arith.constant 0 : index
    %c0_145 = arith.constant 0 : index
    %274 = vector.load %arg7[%c0_143, %c0_144, %c0_145] : memref<1x8x128xf32, #tpu.memory_space<vmem>>, vector<1x8x128xf32>
    %275 = vector.shape_cast %274 : vector<1x8x128xf32> to vector<8x128xf32>
    %276 = vector.shape_cast %273 : vector<8x128xf32> to vector<1x8x128xf32>
    tpu.vector_store %arg7[%c0_143, %c0_144, %c0_145], %276 {strides = array<i32>} : memref<1x8x128xf32, #tpu.memory_space<vmem>>, vector<1x8x128xf32>,
    return
  }
  func.func @transform_0(%arg0: i32) -> (i32, i32, i32) {
    %c0_i32 = arith.constant 0 : i32
    %c0_i32_0 = arith.constant 0 : i32
    %c0_i32_1 = arith.constant 0 : i32
    return %arg0, %c0_i32, %c0_i32_0 : i32, i32, i32
  }
  func.func @transform_1(%arg0: i32) -> (i32, i32) {
    %c0_i32 = arith.constant 0 : i32
    %c0_i32_0 = arith.constant 0 : i32
    %c0_i32_1 = arith.constant 0 : i32
    return %c0_i32, %c0_i32_0 : i32, i32
  }
  func.func @transform_2(%arg0: i32) -> (i32, i32) {
    %c0_i32 = arith.constant 0 : i32
    %c0_i32_0 = arith.constant 0 : i32
    %c0_i32_1 = arith.constant 0 : i32
    return %c0_i32, %c0_i32_0 : i32, i32
  }
  func.func @transform_3(%arg0: i32) -> (i32, i32) {
    %c0_i32 = arith.constant 0 : i32
    %c0_i32_0 = arith.constant 0 : i32
    %c0_i32_1 = arith.constant 0 : i32
    return %c0_i32, %c0_i32_0 : i32, i32
  }
  func.func @transform_4(%arg0: i32) -> (i32, i32) {
    %c0_i32 = arith.constant 0 : i32
    %c0_i32_0 = arith.constant 0 : i32
    %c0_i32_1 = arith.constant 0 : i32
    return %c0_i32, %c0_i32_0 : i32, i32
  }
  func.func @transform_5(%arg0: i32) -> (i32, i32, i32) {
    %c0_i32 = arith.constant 0 : i32
    %c0_i32_0 = arith.constant 0 : i32
    %c0_i32_1 = arith.constant 0 : i32
    return %arg0, %c0_i32, %c0_i32_0 : i32, i32, i32
  }
  func.func @transform_6(%arg0: i32) -> (i32, i32, i32) {
    %c0_i32 = arith.constant 0 : i32
    %c0_i32_0 = arith.constant 0 : i32
    %c0_i32_1 = arith.constant 0 : i32
    return %arg0, %c0_i32, %c0_i32_0 : i32, i32, i32
  }
}

module attributes {stable_mosaic.version = 11 : i64} {
  func.func @_preact_conv3x3x3_kernel(%arg0: i32, %arg1: memref<2x8x1152xbf16, #tpu.memory_space<vmem>>, %arg2: memref<8x1xf32, #tpu.memory_space<vmem>>, %arg3: memref<8x1xf32, #tpu.memory_space<vmem>>, %arg4: memref<1x1152xf32, #tpu.memory_space<vmem>>, %arg5: memref<8x256xbf16, #tpu.memory_space<vmem>>, %arg6: memref<2x8x1152xf32, #tpu.memory_space<vmem>>, %arg7: memref<2x8x1152xf32, #tpu.memory_space<vmem>>, %arg8: memref<256x896xbf16, #tpu.memory_space<vmem>>) attributes {dimension_semantics = [#tpu.dimension_semantics<parallel>], iteration_bounds = array<i64: 1>, scalar_prefetch = 0 : i64, scratch_operands = 1 : i64, tpu.core_type = #tpu.core_type<tc>, window_params = [{transform_indices = @transform_0, window_bounds = array<i64: 2, 8, 1152>}, {pipeline_mode = #tpu.pipeline_mode<synchronous>, transform_indices = @transform_1, window_bounds = array<i64: 8, 1>}, {pipeline_mode = #tpu.pipeline_mode<synchronous>, transform_indices = @transform_2, window_bounds = array<i64: 8, 1>}, {pipeline_mode = #tpu.pipeline_mode<synchronous>, transform_indices = @transform_3, window_bounds = array<i64: 1, 1152>}, {pipeline_mode = #tpu.pipeline_mode<synchronous>, transform_indices = @transform_4, window_bounds = array<i64: 8, 256>}, {transform_indices = @transform_5, window_bounds = array<i64: 2, 8, 1152>}, {transform_indices = @transform_6, window_bounds = array<i64: 2, 8, 1152>}]} {
    %c0 = arith.constant 0 : index
    %c0_0 = arith.constant 0 : index
    %0 = vector.load %arg4[%c0, %c0_0] : memref<1x1152xf32, #tpu.memory_space<vmem>>, vector<1x1152xf32>
    %cst = arith.constant 0.000000e+00 : f32
    %1 = vector.broadcast %cst : f32 to vector<1x1152xf32>
    %2 = arith.cmpf one, %0, %1 : vector<1x1152xf32>
    %cst_1 = arith.constant 0.000000e+00 : bf16
    %3 = vector.broadcast %cst_1 : bf16 to vector<40x896xbf16>
    %c216 = arith.constant 216 : index
    %c0_2 = arith.constant 0 : index
    %4 = vector.load %arg8[%c216, %c0_2] : memref<256x896xbf16, #tpu.memory_space<vmem>>, vector<40x896xbf16>
    tpu.vector_store %arg8[%c216, %c0_2], %3 {strides = array<i32>} : memref<256x896xbf16, #tpu.memory_space<vmem>>, vector<40x896xbf16>,
    %c0_3 = arith.constant 0 : index
    %c0_4 = arith.constant 0 : index
    %c0_5 = arith.constant 0 : index
    %5 = vector.load %arg1[%c0_3, %c0_4, %c0_5] : memref<2x8x1152xbf16, #tpu.memory_space<vmem>>, vector<1x8x1152xbf16>
    %6 = vector.shape_cast %5 : vector<1x8x1152xbf16> to vector<8x1152xbf16>
    %7 = arith.extf %6 : vector<8x1152xbf16> to vector<8x1152xf32>
    %c0_6 = arith.constant 0 : index
    %c0_7 = arith.constant 0 : index
    %8 = vector.load %arg2[%c0_6, %c0_7] : memref<8x1xf32, #tpu.memory_space<vmem>>, vector<8x1xf32>
    %9 = vector.broadcast %8 : vector<8x1xf32> to vector<8x1152xf32>
    %10 = arith.mulf %7, %9 : vector<8x1152xf32>
    %c0_8 = arith.constant 0 : index
    %c0_9 = arith.constant 0 : index
    %11 = vector.load %arg3[%c0_8, %c0_9] : memref<8x1xf32, #tpu.memory_space<vmem>>, vector<8x1xf32>
    %12 = vector.broadcast %11 : vector<8x1xf32> to vector<8x1152xf32>
    %13 = arith.addf %10, %12 : vector<8x1152xf32>
    %cst_10 = arith.constant 0.000000e+00 : f32
    %14 = vector.broadcast %cst_10 : f32 to vector<8x1152xf32>
    %15 = arith.maximumf %13, %14 : vector<8x1152xf32>
    %cst_11 = arith.constant 0.000000e+00 : f32
    %16 = vector.shape_cast %2 : vector<1x1152xi1> to vector<1x1152xi1>
    %17 = vector.broadcast %16 : vector<1x1152xi1> to vector<8x1152xi1>
    %18 = vector.broadcast %cst_11 : f32 to vector<8x1152xf32>
    %19 = arith.select %17, %15, %18 : vector<8x1152xi1>, vector<8x1152xf32>
    %20 = arith.truncf %19 : vector<8x1152xf32> to vector<8x1152xbf16>
    %21 = vector.extract_strided_slice %20 {offsets = [0, 17], sizes = [8, 896], strides = [1, 1]} : vector<8x1152xbf16> to vector<8x896xbf16>
    %c0_12 = arith.constant 0 : index
    %c0_13 = arith.constant 0 : index
    %22 = vector.load %arg8[%c0_12, %c0_13] : memref<256x896xbf16, #tpu.memory_space<vmem>>, vector<8x896xbf16>
    tpu.vector_store %arg8[%c0_12, %c0_13], %21 {strides = array<i32>} : memref<256x896xbf16, #tpu.memory_space<vmem>>, vector<8x896xbf16>,
    %23 = vector.extract_strided_slice %21 {offsets = [0, 1], sizes = [8, 895], strides = [1, 1]} : vector<8x896xbf16> to vector<8x895xbf16>
    %24 = vector.extract_strided_slice %21 {offsets = [0, 0], sizes = [8, 1], strides = [1, 1]} : vector<8x896xbf16> to vector<8x1xbf16>
    %25 = tpu.concatenate %23, %24 in 1 : vector<8x895xbf16>, vector<8x1xbf16> -> vector<8x896xbf16>
    %c8 = arith.constant 8 : index
    %c0_14 = arith.constant 0 : index
    %26 = vector.load %arg8[%c8, %c0_14] : memref<256x896xbf16, #tpu.memory_space<vmem>>, vector<8x896xbf16>
    tpu.vector_store %arg8[%c8, %c0_14], %25 {strides = array<i32>} : memref<256x896xbf16, #tpu.memory_space<vmem>>, vector<8x896xbf16>,
    %27 = vector.extract_strided_slice %21 {offsets = [0, 2], sizes = [8, 894], strides = [1, 1]} : vector<8x896xbf16> to vector<8x894xbf16>
    %28 = vector.extract_strided_slice %21 {offsets = [0, 0], sizes = [8, 2], strides = [1, 1]} : vector<8x896xbf16> to vector<8x2xbf16>
    %29 = tpu.concatenate %27, %28 in 1 : vector<8x894xbf16>, vector<8x2xbf16> -> vector<8x896xbf16>
    %c16 = arith.constant 16 : index
    %c0_15 = arith.constant 0 : index
    %30 = vector.load %arg8[%c16, %c0_15] : memref<256x896xbf16, #tpu.memory_space<vmem>>, vector<8x896xbf16>
    tpu.vector_store %arg8[%c16, %c0_15], %29 {strides = array<i32>} : memref<256x896xbf16, #tpu.memory_space<vmem>>, vector<8x896xbf16>,
    %31 = vector.extract_strided_slice %20 {offsets = [0, 27], sizes = [8, 896], strides = [1, 1]} : vector<8x1152xbf16> to vector<8x896xbf16>
    %c24 = arith.constant 24 : index
    %c0_16 = arith.constant 0 : index
    %32 = vector.load %arg8[%c24, %c0_16] : memref<256x896xbf16, #tpu.memory_space<vmem>>, vector<8x896xbf16>
    tpu.vector_store %arg8[%c24, %c0_16], %31 {strides = array<i32>} : memref<256x896xbf16, #tpu.memory_space<vmem>>, vector<8x896xbf16>,
    %33 = vector.extract_strided_slice %31 {offsets = [0, 1], sizes = [8, 895], strides = [1, 1]} : vector<8x896xbf16> to vector<8x895xbf16>
    %34 = vector.extract_strided_slice %31 {offsets = [0, 0], sizes = [8, 1], strides = [1, 1]} : vector<8x896xbf16> to vector<8x1xbf16>
    %35 = tpu.concatenate %33, %34 in 1 : vector<8x895xbf16>, vector<8x1xbf16> -> vector<8x896xbf16>
    %c32 = arith.constant 32 : index
    %c0_17 = arith.constant 0 : index
    %36 = vector.load %arg8[%c32, %c0_17] : memref<256x896xbf16, #tpu.memory_space<vmem>>, vector<8x896xbf16>
    tpu.vector_store %arg8[%c32, %c0_17], %35 {strides = array<i32>} : memref<256x896xbf16, #tpu.memory_space<vmem>>, vector<8x896xbf16>,
    %37 = vector.extract_strided_slice %31 {offsets = [0, 2], sizes = [8, 894], strides = [1, 1]} : vector<8x896xbf16> to vector<8x894xbf16>
    %38 = vector.extract_strided_slice %31 {offsets = [0, 0], sizes = [8, 2], strides = [1, 1]} : vector<8x896xbf16> to vector<8x2xbf16>
    %39 = tpu.concatenate %37, %38 in 1 : vector<8x894xbf16>, vector<8x2xbf16> -> vector<8x896xbf16>
    %c40 = arith.constant 40 : index
    %c0_18 = arith.constant 0 : index
    %40 = vector.load %arg8[%c40, %c0_18] : memref<256x896xbf16, #tpu.memory_space<vmem>>, vector<8x896xbf16>
    tpu.vector_store %arg8[%c40, %c0_18], %39 {strides = array<i32>} : memref<256x896xbf16, #tpu.memory_space<vmem>>, vector<8x896xbf16>,
    %41 = vector.extract_strided_slice %20 {offsets = [0, 37], sizes = [8, 896], strides = [1, 1]} : vector<8x1152xbf16> to vector<8x896xbf16>
    %c48 = arith.constant 48 : index
    %c0_19 = arith.constant 0 : index
    %42 = vector.load %arg8[%c48, %c0_19] : memref<256x896xbf16, #tpu.memory_space<vmem>>, vector<8x896xbf16>
    tpu.vector_store %arg8[%c48, %c0_19], %41 {strides = array<i32>} : memref<256x896xbf16, #tpu.memory_space<vmem>>, vector<8x896xbf16>,
    %43 = vector.extract_strided_slice %41 {offsets = [0, 1], sizes = [8, 895], strides = [1, 1]} : vector<8x896xbf16> to vector<8x895xbf16>
    %44 = vector.extract_strided_slice %41 {offsets = [0, 0], sizes = [8, 1], strides = [1, 1]} : vector<8x896xbf16> to vector<8x1xbf16>
    %45 = tpu.concatenate %43, %44 in 1 : vector<8x895xbf16>, vector<8x1xbf16> -> vector<8x896xbf16>
    %c56 = arith.constant 56 : index
    %c0_20 = arith.constant 0 : index
    %46 = vector.load %arg8[%c56, %c0_20] : memref<256x896xbf16, #tpu.memory_space<vmem>>, vector<8x896xbf16>
    tpu.vector_store %arg8[%c56, %c0_20], %45 {strides = array<i32>} : memref<256x896xbf16, #tpu.memory_space<vmem>>, vector<8x896xbf16>,
    %47 = vector.extract_strided_slice %41 {offsets = [0, 2], sizes = [8, 894], strides = [1, 1]} : vector<8x896xbf16> to vector<8x894xbf16>
    %48 = vector.extract_strided_slice %41 {offsets = [0, 0], sizes = [8, 2], strides = [1, 1]} : vector<8x896xbf16> to vector<8x2xbf16>
    %49 = tpu.concatenate %47, %48 in 1 : vector<8x894xbf16>, vector<8x2xbf16> -> vector<8x896xbf16>
    %c64 = arith.constant 64 : index
    %c0_21 = arith.constant 0 : index
    %50 = vector.load %arg8[%c64, %c0_21] : memref<256x896xbf16, #tpu.memory_space<vmem>>, vector<8x896xbf16>
    tpu.vector_store %arg8[%c64, %c0_21], %49 {strides = array<i32>} : memref<256x896xbf16, #tpu.memory_space<vmem>>, vector<8x896xbf16>,
    %51 = vector.extract_strided_slice %20 {offsets = [0, 117], sizes = [8, 896], strides = [1, 1]} : vector<8x1152xbf16> to vector<8x896xbf16>
    %c72 = arith.constant 72 : index
    %c0_22 = arith.constant 0 : index
    %52 = vector.load %arg8[%c72, %c0_22] : memref<256x896xbf16, #tpu.memory_space<vmem>>, vector<8x896xbf16>
    tpu.vector_store %arg8[%c72, %c0_22], %51 {strides = array<i32>} : memref<256x896xbf16, #tpu.memory_space<vmem>>, vector<8x896xbf16>,
    %53 = vector.extract_strided_slice %51 {offsets = [0, 1], sizes = [8, 895], strides = [1, 1]} : vector<8x896xbf16> to vector<8x895xbf16>
    %54 = vector.extract_strided_slice %51 {offsets = [0, 0], sizes = [8, 1], strides = [1, 1]} : vector<8x896xbf16> to vector<8x1xbf16>
    %55 = tpu.concatenate %53, %54 in 1 : vector<8x895xbf16>, vector<8x1xbf16> -> vector<8x896xbf16>
    %c80 = arith.constant 80 : index
    %c0_23 = arith.constant 0 : index
    %56 = vector.load %arg8[%c80, %c0_23] : memref<256x896xbf16, #tpu.memory_space<vmem>>, vector<8x896xbf16>
    tpu.vector_store %arg8[%c80, %c0_23], %55 {strides = array<i32>} : memref<256x896xbf16, #tpu.memory_space<vmem>>, vector<8x896xbf16>,
    %57 = vector.extract_strided_slice %51 {offsets = [0, 2], sizes = [8, 894], strides = [1, 1]} : vector<8x896xbf16> to vector<8x894xbf16>
    %58 = vector.extract_strided_slice %51 {offsets = [0, 0], sizes = [8, 2], strides = [1, 1]} : vector<8x896xbf16> to vector<8x2xbf16>
    %59 = tpu.concatenate %57, %58 in 1 : vector<8x894xbf16>, vector<8x2xbf16> -> vector<8x896xbf16>
    %c88 = arith.constant 88 : index
    %c0_24 = arith.constant 0 : index
    %60 = vector.load %arg8[%c88, %c0_24] : memref<256x896xbf16, #tpu.memory_space<vmem>>, vector<8x896xbf16>
    tpu.vector_store %arg8[%c88, %c0_24], %59 {strides = array<i32>} : memref<256x896xbf16, #tpu.memory_space<vmem>>, vector<8x896xbf16>,
    %61 = vector.extract_strided_slice %20 {offsets = [0, 127], sizes = [8, 896], strides = [1, 1]} : vector<8x1152xbf16> to vector<8x896xbf16>
    %c96 = arith.constant 96 : index
    %c0_25 = arith.constant 0 : index
    %62 = vector.load %arg8[%c96, %c0_25] : memref<256x896xbf16, #tpu.memory_space<vmem>>, vector<8x896xbf16>
    tpu.vector_store %arg8[%c96, %c0_25], %61 {strides = array<i32>} : memref<256x896xbf16, #tpu.memory_space<vmem>>, vector<8x896xbf16>,
    %63 = vector.extract_strided_slice %61 {offsets = [0, 1], sizes = [8, 895], strides = [1, 1]} : vector<8x896xbf16> to vector<8x895xbf16>
    %64 = vector.extract_strided_slice %61 {offsets = [0, 0], sizes = [8, 1], strides = [1, 1]} : vector<8x896xbf16> to vector<8x1xbf16>
    %65 = tpu.concatenate %63, %64 in 1 : vector<8x895xbf16>, vector<8x1xbf16> -> vector<8x896xbf16>
    %c104 = arith.constant 104 : index
    %c0_26 = arith.constant 0 : index
    %66 = vector.load %arg8[%c104, %c0_26] : memref<256x896xbf16, #tpu.memory_space<vmem>>, vector<8x896xbf16>
    tpu.vector_store %arg8[%c104, %c0_26], %65 {strides = array<i32>} : memref<256x896xbf16, #tpu.memory_space<vmem>>, vector<8x896xbf16>,
    %67 = vector.extract_strided_slice %61 {offsets = [0, 2], sizes = [8, 894], strides = [1, 1]} : vector<8x896xbf16> to vector<8x894xbf16>
    %68 = vector.extract_strided_slice %61 {offsets = [0, 0], sizes = [8, 2], strides = [1, 1]} : vector<8x896xbf16> to vector<8x2xbf16>
    %69 = tpu.concatenate %67, %68 in 1 : vector<8x894xbf16>, vector<8x2xbf16> -> vector<8x896xbf16>
    %c112 = arith.constant 112 : index
    %c0_27 = arith.constant 0 : index
    %70 = vector.load %arg8[%c112, %c0_27] : memref<256x896xbf16, #tpu.memory_space<vmem>>, vector<8x896xbf16>
    tpu.vector_store %arg8[%c112, %c0_27], %69 {strides = array<i32>} : memref<256x896xbf16, #tpu.memory_space<vmem>>, vector<8x896xbf16>,
    %71 = vector.extract_strided_slice %20 {offsets = [0, 137], sizes = [8, 896], strides = [1, 1]} : vector<8x1152xbf16> to vector<8x896xbf16>
    %c120 = arith.constant 120 : index
    %c0_28 = arith.constant 0 : index
    %72 = vector.load %arg8[%c120, %c0_28] : memref<256x896xbf16, #tpu.memory_space<vmem>>, vector<8x896xbf16>
    tpu.vector_store %arg8[%c120, %c0_28], %71 {strides = array<i32>} : memref<256x896xbf16, #tpu.memory_space<vmem>>, vector<8x896xbf16>,
    %73 = vector.extract_strided_slice %71 {offsets = [0, 1], sizes = [8, 895], strides = [1, 1]} : vector<8x896xbf16> to vector<8x895xbf16>
    %74 = vector.extract_strided_slice %71 {offsets = [0, 0], sizes = [8, 1], strides = [1, 1]} : vector<8x896xbf16> to vector<8x1xbf16>
    %75 = tpu.concatenate %73, %74 in 1 : vector<8x895xbf16>, vector<8x1xbf16> -> vector<8x896xbf16>
    %c128 = arith.constant 128 : index
    %c0_29 = arith.constant 0 : index
    %76 = vector.load %arg8[%c128, %c0_29] : memref<256x896xbf16, #tpu.memory_space<vmem>>, vector<8x896xbf16>
    tpu.vector_store %arg8[%c128, %c0_29], %75 {strides = array<i32>} : memref<256x896xbf16, #tpu.memory_space<vmem>>, vector<8x896xbf16>,
    %77 = vector.extract_strided_slice %71 {offsets = [0, 2], sizes = [8, 894], strides = [1, 1]} : vector<8x896xbf16> to vector<8x894xbf16>
    %78 = vector.extract_strided_slice %71 {offsets = [0, 0], sizes = [8, 2], strides = [1, 1]} : vector<8x896xbf16> to vector<8x2xbf16>
    %79 = tpu.concatenate %77, %78 in 1 : vector<8x894xbf16>, vector<8x2xbf16> -> vector<8x896xbf16>
    %c136 = arith.constant 136 : index
    %c0_30 = arith.constant 0 : index
    %80 = vector.load %arg8[%c136, %c0_30] : memref<256x896xbf16, #tpu.memory_space<vmem>>, vector<8x896xbf16>
    tpu.vector_store %arg8[%c136, %c0_30], %79 {strides = array<i32>} : memref<256x896xbf16, #tpu.memory_space<vmem>>, vector<8x896xbf16>,
    %81 = vector.extract_strided_slice %20 {offsets = [0, 217], sizes = [8, 896], strides = [1, 1]} : vector<8x1152xbf16> to vector<8x896xbf16>
    %c144 = arith.constant 144 : index
    %c0_31 = arith.constant 0 : index
    %82 = vector.load %arg8[%c144, %c0_31] : memref<256x896xbf16, #tpu.memory_space<vmem>>, vector<8x896xbf16>
    tpu.vector_store %arg8[%c144, %c0_31], %81 {strides = array<i32>} : memref<256x896xbf16, #tpu.memory_space<vmem>>, vector<8x896xbf16>,
    %83 = vector.extract_strided_slice %81 {offsets = [0, 1], sizes = [8, 895], strides = [1, 1]} : vector<8x896xbf16> to vector<8x895xbf16>
    %84 = vector.extract_strided_slice %81 {offsets = [0, 0], sizes = [8, 1], strides = [1, 1]} : vector<8x896xbf16> to vector<8x1xbf16>
    %85 = tpu.concatenate %83, %84 in 1 : vector<8x895xbf16>, vector<8x1xbf16> -> vector<8x896xbf16>
    %c152 = arith.constant 152 : index
    %c0_32 = arith.constant 0 : index
    %86 = vector.load %arg8[%c152, %c0_32] : memref<256x896xbf16, #tpu.memory_space<vmem>>, vector<8x896xbf16>
    tpu.vector_store %arg8[%c152, %c0_32], %85 {strides = array<i32>} : memref<256x896xbf16, #tpu.memory_space<vmem>>, vector<8x896xbf16>,
    %87 = vector.extract_strided_slice %81 {offsets = [0, 2], sizes = [8, 894], strides = [1, 1]} : vector<8x896xbf16> to vector<8x894xbf16>
    %88 = vector.extract_strided_slice %81 {offsets = [0, 0], sizes = [8, 2], strides = [1, 1]} : vector<8x896xbf16> to vector<8x2xbf16>
    %89 = tpu.concatenate %87, %88 in 1 : vector<8x894xbf16>, vector<8x2xbf16> -> vector<8x896xbf16>
    %c160 = arith.constant 160 : index
    %c0_33 = arith.constant 0 : index
    %90 = vector.load %arg8[%c160, %c0_33] : memref<256x896xbf16, #tpu.memory_space<vmem>>, vector<8x896xbf16>
    tpu.vector_store %arg8[%c160, %c0_33], %89 {strides = array<i32>} : memref<256x896xbf16, #tpu.memory_space<vmem>>, vector<8x896xbf16>,
    %91 = vector.extract_strided_slice %20 {offsets = [0, 227], sizes = [8, 896], strides = [1, 1]} : vector<8x1152xbf16> to vector<8x896xbf16>
    %c168 = arith.constant 168 : index
    %c0_34 = arith.constant 0 : index
    %92 = vector.load %arg8[%c168, %c0_34] : memref<256x896xbf16, #tpu.memory_space<vmem>>, vector<8x896xbf16>
    tpu.vector_store %arg8[%c168, %c0_34], %91 {strides = array<i32>} : memref<256x896xbf16, #tpu.memory_space<vmem>>, vector<8x896xbf16>,
    %93 = vector.extract_strided_slice %91 {offsets = [0, 1], sizes = [8, 895], strides = [1, 1]} : vector<8x896xbf16> to vector<8x895xbf16>
    %94 = vector.extract_strided_slice %91 {offsets = [0, 0], sizes = [8, 1], strides = [1, 1]} : vector<8x896xbf16> to vector<8x1xbf16>
    %95 = tpu.concatenate %93, %94 in 1 : vector<8x895xbf16>, vector<8x1xbf16> -> vector<8x896xbf16>
    %c176 = arith.constant 176 : index
    %c0_35 = arith.constant 0 : index
    %96 = vector.load %arg8[%c176, %c0_35] : memref<256x896xbf16, #tpu.memory_space<vmem>>, vector<8x896xbf16>
    tpu.vector_store %arg8[%c176, %c0_35], %95 {strides = array<i32>} : memref<256x896xbf16, #tpu.memory_space<vmem>>, vector<8x896xbf16>,
    %97 = vector.extract_strided_slice %91 {offsets = [0, 2], sizes = [8, 894], strides = [1, 1]} : vector<8x896xbf16> to vector<8x894xbf16>
    %98 = vector.extract_strided_slice %91 {offsets = [0, 0], sizes = [8, 2], strides = [1, 1]} : vector<8x896xbf16> to vector<8x2xbf16>
    %99 = tpu.concatenate %97, %98 in 1 : vector<8x894xbf16>, vector<8x2xbf16> -> vector<8x896xbf16>
    %c184 = arith.constant 184 : index
    %c0_36 = arith.constant 0 : index
    %100 = vector.load %arg8[%c184, %c0_36] : memref<256x896xbf16, #tpu.memory_space<vmem>>, vector<8x896xbf16>
    tpu.vector_store %arg8[%c184, %c0_36], %99 {strides = array<i32>} : memref<256x896xbf16, #tpu.memory_space<vmem>>, vector<8x896xbf16>,
    %101 = vector.extract_strided_slice %20 {offsets = [0, 237], sizes = [8, 896], strides = [1, 1]} : vector<8x1152xbf16> to vector<8x896xbf16>
    %c192 = arith.constant 192 : index
    %c0_37 = arith.constant 0 : index
    %102 = vector.load %arg8[%c192, %c0_37] : memref<256x896xbf16, #tpu.memory_space<vmem>>, vector<8x896xbf16>
    tpu.vector_store %arg8[%c192, %c0_37], %101 {strides = array<i32>} : memref<256x896xbf16, #tpu.memory_space<vmem>>, vector<8x896xbf16>,
    %103 = vector.extract_strided_slice %101 {offsets = [0, 1], sizes = [8, 895], strides = [1, 1]} : vector<8x896xbf16> to vector<8x895xbf16>
    %104 = vector.extract_strided_slice %101 {offsets = [0, 0], sizes = [8, 1], strides = [1, 1]} : vector<8x896xbf16> to vector<8x1xbf16>
    %105 = tpu.concatenate %103, %104 in 1 : vector<8x895xbf16>, vector<8x1xbf16> -> vector<8x896xbf16>
    %c200 = arith.constant 200 : index
    %c0_38 = arith.constant 0 : index
    %106 = vector.load %arg8[%c200, %c0_38] : memref<256x896xbf16, #tpu.memory_space<vmem>>, vector<8x896xbf16>
    tpu.vector_store %arg8[%c200, %c0_38], %105 {strides = array<i32>} : memref<256x896xbf16, #tpu.memory_space<vmem>>, vector<8x896xbf16>,
    %107 = vector.extract_strided_slice %101 {offsets = [0, 2], sizes = [8, 894], strides = [1, 1]} : vector<8x896xbf16> to vector<8x894xbf16>
    %108 = vector.extract_strided_slice %101 {offsets = [0, 0], sizes = [8, 2], strides = [1, 1]} : vector<8x896xbf16> to vector<8x2xbf16>
    %109 = tpu.concatenate %107, %108 in 1 : vector<8x894xbf16>, vector<8x2xbf16> -> vector<8x896xbf16>
    %c208 = arith.constant 208 : index
    %c0_39 = arith.constant 0 : index
    %110 = vector.load %arg8[%c208, %c0_39] : memref<256x896xbf16, #tpu.memory_space<vmem>>, vector<8x896xbf16>
    tpu.vector_store %arg8[%c208, %c0_39], %109 {strides = array<i32>} : memref<256x896xbf16, #tpu.memory_space<vmem>>, vector<8x896xbf16>,
    %c0_40 = arith.constant 0 : index
    %c0_41 = arith.constant 0 : index
    %111 = vector.load %arg5[%c0_40, %c0_41] : memref<8x256xbf16, #tpu.memory_space<vmem>>, vector<8x256xbf16>
    %c0_42 = arith.constant 0 : index
    %c0_43 = arith.constant 0 : index
    %112 = vector.load %arg8[%c0_42, %c0_43] : memref<256x896xbf16, #tpu.memory_space<vmem>>, vector<256x896xbf16>
    %cst_44 = arith.constant dense<0.000000e+00> : vector<8x896xf32>
    %113 = tpu.matmul %111, %112, %cst_44 {dimension_numbers = #tpu.dot_dimension_numbers<[1], [0], [0], [1], [0, 0, 1, 1], [], []>} : vector<8x256xbf16>, vector<256x896xbf16>, vector<8x896xf32> -> vector<8x896xf32>
    %c0_45 = arith.constant 0 : index
    %c0_46 = arith.constant 0 : index
    %c128_47 = arith.constant 128 : index
    %114 = vector.load %arg6[%c0_45, %c0_46, %c128_47] : memref<2x8x1152xf32, #tpu.memory_space<vmem>>, vector<1x8x896xf32>
    %115 = vector.shape_cast %114 : vector<1x8x896xf32> to vector<8x896xf32>
    %116 = arith.addf %113, %115 : vector<8x896xf32>
    %cst_48 = arith.constant 0.000000e+00 : f32
    %117 = vector.broadcast %cst_48 : f32 to vector<8x896xf32>
    %118 = arith.maximumf %116, %117 : vector<8x896xf32>
    %c0_49 = arith.constant 0 : index
    %c0_50 = arith.constant 0 : index
    %c128_51 = arith.constant 128 : index
    %119 = vector.load %arg7[%c0_49, %c0_50, %c128_51] : memref<2x8x1152xf32, #tpu.memory_space<vmem>>, vector<1x8x896xf32>
    %120 = vector.shape_cast %119 : vector<1x8x896xf32> to vector<8x896xf32>
    %121 = vector.shape_cast %118 : vector<8x896xf32> to vector<1x8x896xf32>
    tpu.vector_store %arg7[%c0_49, %c0_50, %c128_51], %121 {strides = array<i32>} : memref<2x8x1152xf32, #tpu.memory_space<vmem>>, vector<1x8x896xf32>,
    %cst_52 = arith.constant 0.000000e+00 : f32
    %122 = vector.broadcast %cst_52 : f32 to vector<8x128xf32>
    %c0_53 = arith.constant 0 : index
    %c0_54 = arith.constant 0 : index
    %c0_55 = arith.constant 0 : index
    %123 = vector.load %arg7[%c0_53, %c0_54, %c0_55] : memref<2x8x1152xf32, #tpu.memory_space<vmem>>, vector<1x8x128xf32>
    %124 = vector.shape_cast %123 : vector<1x8x128xf32> to vector<8x128xf32>
    %125 = vector.shape_cast %122 : vector<8x128xf32> to vector<1x8x128xf32>
    tpu.vector_store %arg7[%c0_53, %c0_54, %c0_55], %125 {strides = array<i32>} : memref<2x8x1152xf32, #tpu.memory_space<vmem>>, vector<1x8x128xf32>,
    %cst_56 = arith.constant 0.000000e+00 : f32
    %126 = vector.broadcast %cst_56 : f32 to vector<8x128xf32>
    %c0_57 = arith.constant 0 : index
    %c0_58 = arith.constant 0 : index
    %c1024 = arith.constant 1024 : index
    %127 = vector.load %arg7[%c0_57, %c0_58, %c1024] : memref<2x8x1152xf32, #tpu.memory_space<vmem>>, vector<1x8x128xf32>
    %128 = vector.shape_cast %127 : vector<1x8x128xf32> to vector<8x128xf32>
    %129 = vector.shape_cast %126 : vector<8x128xf32> to vector<1x8x128xf32>
    tpu.vector_store %arg7[%c0_57, %c0_58, %c1024], %129 {strides = array<i32>} : memref<2x8x1152xf32, #tpu.memory_space<vmem>>, vector<1x8x128xf32>,
    %c1 = arith.constant 1 : index
    %c0_59 = arith.constant 0 : index
    %c0_60 = arith.constant 0 : index
    %130 = vector.load %arg1[%c1, %c0_59, %c0_60] : memref<2x8x1152xbf16, #tpu.memory_space<vmem>>, vector<1x8x1152xbf16>
    %131 = vector.shape_cast %130 : vector<1x8x1152xbf16> to vector<8x1152xbf16>
    %132 = arith.extf %131 : vector<8x1152xbf16> to vector<8x1152xf32>
    %c0_61 = arith.constant 0 : index
    %c0_62 = arith.constant 0 : index
    %133 = vector.load %arg2[%c0_61, %c0_62] : memref<8x1xf32, #tpu.memory_space<vmem>>, vector<8x1xf32>
    %134 = vector.broadcast %133 : vector<8x1xf32> to vector<8x1152xf32>
    %135 = arith.mulf %132, %134 : vector<8x1152xf32>
    %c0_63 = arith.constant 0 : index
    %c0_64 = arith.constant 0 : index
    %136 = vector.load %arg3[%c0_63, %c0_64] : memref<8x1xf32, #tpu.memory_space<vmem>>, vector<8x1xf32>
    %137 = vector.broadcast %136 : vector<8x1xf32> to vector<8x1152xf32>
    %138 = arith.addf %135, %137 : vector<8x1152xf32>
    %cst_65 = arith.constant 0.000000e+00 : f32
    %139 = vector.broadcast %cst_65 : f32 to vector<8x1152xf32>
    %140 = arith.maximumf %138, %139 : vector<8x1152xf32>
    %cst_66 = arith.constant 0.000000e+00 : f32
    %141 = vector.shape_cast %2 : vector<1x1152xi1> to vector<1x1152xi1>
    %142 = vector.broadcast %141 : vector<1x1152xi1> to vector<8x1152xi1>
    %143 = vector.broadcast %cst_66 : f32 to vector<8x1152xf32>
    %144 = arith.select %142, %140, %143 : vector<8x1152xi1>, vector<8x1152xf32>
    %145 = arith.truncf %144 : vector<8x1152xf32> to vector<8x1152xbf16>
    %146 = vector.extract_strided_slice %145 {offsets = [0, 17], sizes = [8, 896], strides = [1, 1]} : vector<8x1152xbf16> to vector<8x896xbf16>
    %c0_67 = arith.constant 0 : index
    %c0_68 = arith.constant 0 : index
    %147 = vector.load %arg8[%c0_67, %c0_68] : memref<256x896xbf16, #tpu.memory_space<vmem>>, vector<8x896xbf16>
    tpu.vector_store %arg8[%c0_67, %c0_68], %146 {strides = array<i32>} : memref<256x896xbf16, #tpu.memory_space<vmem>>, vector<8x896xbf16>,
    %148 = vector.extract_strided_slice %146 {offsets = [0, 1], sizes = [8, 895], strides = [1, 1]} : vector<8x896xbf16> to vector<8x895xbf16>
    %149 = vector.extract_strided_slice %146 {offsets = [0, 0], sizes = [8, 1], strides = [1, 1]} : vector<8x896xbf16> to vector<8x1xbf16>
    %150 = tpu.concatenate %148, %149 in 1 : vector<8x895xbf16>, vector<8x1xbf16> -> vector<8x896xbf16>
    %c8_69 = arith.constant 8 : index
    %c0_70 = arith.constant 0 : index
    %151 = vector.load %arg8[%c8_69, %c0_70] : memref<256x896xbf16, #tpu.memory_space<vmem>>, vector<8x896xbf16>
    tpu.vector_store %arg8[%c8_69, %c0_70], %150 {strides = array<i32>} : memref<256x896xbf16, #tpu.memory_space<vmem>>, vector<8x896xbf16>,
    %152 = vector.extract_strided_slice %146 {offsets = [0, 2], sizes = [8, 894], strides = [1, 1]} : vector<8x896xbf16> to vector<8x894xbf16>
    %153 = vector.extract_strided_slice %146 {offsets = [0, 0], sizes = [8, 2], strides = [1, 1]} : vector<8x896xbf16> to vector<8x2xbf16>
    %154 = tpu.concatenate %152, %153 in 1 : vector<8x894xbf16>, vector<8x2xbf16> -> vector<8x896xbf16>
    %c16_71 = arith.constant 16 : index
    %c0_72 = arith.constant 0 : index
    %155 = vector.load %arg8[%c16_71, %c0_72] : memref<256x896xbf16, #tpu.memory_space<vmem>>, vector<8x896xbf16>
    tpu.vector_store %arg8[%c16_71, %c0_72], %154 {strides = array<i32>} : memref<256x896xbf16, #tpu.memory_space<vmem>>, vector<8x896xbf16>,
    %156 = vector.extract_strided_slice %145 {offsets = [0, 27], sizes = [8, 896], strides = [1, 1]} : vector<8x1152xbf16> to vector<8x896xbf16>
    %c24_73 = arith.constant 24 : index
    %c0_74 = arith.constant 0 : index
    %157 = vector.load %arg8[%c24_73, %c0_74] : memref<256x896xbf16, #tpu.memory_space<vmem>>, vector<8x896xbf16>
    tpu.vector_store %arg8[%c24_73, %c0_74], %156 {strides = array<i32>} : memref<256x896xbf16, #tpu.memory_space<vmem>>, vector<8x896xbf16>,
    %158 = vector.extract_strided_slice %156 {offsets = [0, 1], sizes = [8, 895], strides = [1, 1]} : vector<8x896xbf16> to vector<8x895xbf16>
    %159 = vector.extract_strided_slice %156 {offsets = [0, 0], sizes = [8, 1], strides = [1, 1]} : vector<8x896xbf16> to vector<8x1xbf16>
    %160 = tpu.concatenate %158, %159 in 1 : vector<8x895xbf16>, vector<8x1xbf16> -> vector<8x896xbf16>
    %c32_75 = arith.constant 32 : index
    %c0_76 = arith.constant 0 : index
    %161 = vector.load %arg8[%c32_75, %c0_76] : memref<256x896xbf16, #tpu.memory_space<vmem>>, vector<8x896xbf16>
    tpu.vector_store %arg8[%c32_75, %c0_76], %160 {strides = array<i32>} : memref<256x896xbf16, #tpu.memory_space<vmem>>, vector<8x896xbf16>,
    %162 = vector.extract_strided_slice %156 {offsets = [0, 2], sizes = [8, 894], strides = [1, 1]} : vector<8x896xbf16> to vector<8x894xbf16>
    %163 = vector.extract_strided_slice %156 {offsets = [0, 0], sizes = [8, 2], strides = [1, 1]} : vector<8x896xbf16> to vector<8x2xbf16>
    %164 = tpu.concatenate %162, %163 in 1 : vector<8x894xbf16>, vector<8x2xbf16> -> vector<8x896xbf16>
    %c40_77 = arith.constant 40 : index
    %c0_78 = arith.constant 0 : index
    %165 = vector.load %arg8[%c40_77, %c0_78] : memref<256x896xbf16, #tpu.memory_space<vmem>>, vector<8x896xbf16>
    tpu.vector_store %arg8[%c40_77, %c0_78], %164 {strides = array<i32>} : memref<256x896xbf16, #tpu.memory_space<vmem>>, vector<8x896xbf16>,
    %166 = vector.extract_strided_slice %145 {offsets = [0, 37], sizes = [8, 896], strides = [1, 1]} : vector<8x1152xbf16> to vector<8x896xbf16>
    %c48_79 = arith.constant 48 : index
    %c0_80 = arith.constant 0 : index
    %167 = vector.load %arg8[%c48_79, %c0_80] : memref<256x896xbf16, #tpu.memory_space<vmem>>, vector<8x896xbf16>
    tpu.vector_store %arg8[%c48_79, %c0_80], %166 {strides = array<i32>} : memref<256x896xbf16, #tpu.memory_space<vmem>>, vector<8x896xbf16>,
    %168 = vector.extract_strided_slice %166 {offsets = [0, 1], sizes = [8, 895], strides = [1, 1]} : vector<8x896xbf16> to vector<8x895xbf16>
    %169 = vector.extract_strided_slice %166 {offsets = [0, 0], sizes = [8, 1], strides = [1, 1]} : vector<8x896xbf16> to vector<8x1xbf16>
    %170 = tpu.concatenate %168, %169 in 1 : vector<8x895xbf16>, vector<8x1xbf16> -> vector<8x896xbf16>
    %c56_81 = arith.constant 56 : index
    %c0_82 = arith.constant 0 : index
    %171 = vector.load %arg8[%c56_81, %c0_82] : memref<256x896xbf16, #tpu.memory_space<vmem>>, vector<8x896xbf16>
    tpu.vector_store %arg8[%c56_81, %c0_82], %170 {strides = array<i32>} : memref<256x896xbf16, #tpu.memory_space<vmem>>, vector<8x896xbf16>,
    %172 = vector.extract_strided_slice %166 {offsets = [0, 2], sizes = [8, 894], strides = [1, 1]} : vector<8x896xbf16> to vector<8x894xbf16>
    %173 = vector.extract_strided_slice %166 {offsets = [0, 0], sizes = [8, 2], strides = [1, 1]} : vector<8x896xbf16> to vector<8x2xbf16>
    %174 = tpu.concatenate %172, %173 in 1 : vector<8x894xbf16>, vector<8x2xbf16> -> vector<8x896xbf16>
    %c64_83 = arith.constant 64 : index
    %c0_84 = arith.constant 0 : index
    %175 = vector.load %arg8[%c64_83, %c0_84] : memref<256x896xbf16, #tpu.memory_space<vmem>>, vector<8x896xbf16>
    tpu.vector_store %arg8[%c64_83, %c0_84], %174 {strides = array<i32>} : memref<256x896xbf16, #tpu.memory_space<vmem>>, vector<8x896xbf16>,
    %176 = vector.extract_strided_slice %145 {offsets = [0, 117], sizes = [8, 896], strides = [1, 1]} : vector<8x1152xbf16> to vector<8x896xbf16>
    %c72_85 = arith.constant 72 : index
    %c0_86 = arith.constant 0 : index
    %177 = vector.load %arg8[%c72_85, %c0_86] : memref<256x896xbf16, #tpu.memory_space<vmem>>, vector<8x896xbf16>
    tpu.vector_store %arg8[%c72_85, %c0_86], %176 {strides = array<i32>} : memref<256x896xbf16, #tpu.memory_space<vmem>>, vector<8x896xbf16>,
    %178 = vector.extract_strided_slice %176 {offsets = [0, 1], sizes = [8, 895], strides = [1, 1]} : vector<8x896xbf16> to vector<8x895xbf16>
    %179 = vector.extract_strided_slice %176 {offsets = [0, 0], sizes = [8, 1], strides = [1, 1]} : vector<8x896xbf16> to vector<8x1xbf16>
    %180 = tpu.concatenate %178, %179 in 1 : vector<8x895xbf16>, vector<8x1xbf16> -> vector<8x896xbf16>
    %c80_87 = arith.constant 80 : index
    %c0_88 = arith.constant 0 : index
    %181 = vector.load %arg8[%c80_87, %c0_88] : memref<256x896xbf16, #tpu.memory_space<vmem>>, vector<8x896xbf16>
    tpu.vector_store %arg8[%c80_87, %c0_88], %180 {strides = array<i32>} : memref<256x896xbf16, #tpu.memory_space<vmem>>, vector<8x896xbf16>,
    %182 = vector.extract_strided_slice %176 {offsets = [0, 2], sizes = [8, 894], strides = [1, 1]} : vector<8x896xbf16> to vector<8x894xbf16>
    %183 = vector.extract_strided_slice %176 {offsets = [0, 0], sizes = [8, 2], strides = [1, 1]} : vector<8x896xbf16> to vector<8x2xbf16>
    %184 = tpu.concatenate %182, %183 in 1 : vector<8x894xbf16>, vector<8x2xbf16> -> vector<8x896xbf16>
    %c88_89 = arith.constant 88 : index
    %c0_90 = arith.constant 0 : index
    %185 = vector.load %arg8[%c88_89, %c0_90] : memref<256x896xbf16, #tpu.memory_space<vmem>>, vector<8x896xbf16>
    tpu.vector_store %arg8[%c88_89, %c0_90], %184 {strides = array<i32>} : memref<256x896xbf16, #tpu.memory_space<vmem>>, vector<8x896xbf16>,
    %186 = vector.extract_strided_slice %145 {offsets = [0, 127], sizes = [8, 896], strides = [1, 1]} : vector<8x1152xbf16> to vector<8x896xbf16>
    %c96_91 = arith.constant 96 : index
    %c0_92 = arith.constant 0 : index
    %187 = vector.load %arg8[%c96_91, %c0_92] : memref<256x896xbf16, #tpu.memory_space<vmem>>, vector<8x896xbf16>
    tpu.vector_store %arg8[%c96_91, %c0_92], %186 {strides = array<i32>} : memref<256x896xbf16, #tpu.memory_space<vmem>>, vector<8x896xbf16>,
    %188 = vector.extract_strided_slice %186 {offsets = [0, 1], sizes = [8, 895], strides = [1, 1]} : vector<8x896xbf16> to vector<8x895xbf16>
    %189 = vector.extract_strided_slice %186 {offsets = [0, 0], sizes = [8, 1], strides = [1, 1]} : vector<8x896xbf16> to vector<8x1xbf16>
    %190 = tpu.concatenate %188, %189 in 1 : vector<8x895xbf16>, vector<8x1xbf16> -> vector<8x896xbf16>
    %c104_93 = arith.constant 104 : index
    %c0_94 = arith.constant 0 : index
    %191 = vector.load %arg8[%c104_93, %c0_94] : memref<256x896xbf16, #tpu.memory_space<vmem>>, vector<8x896xbf16>
    tpu.vector_store %arg8[%c104_93, %c0_94], %190 {strides = array<i32>} : memref<256x896xbf16, #tpu.memory_space<vmem>>, vector<8x896xbf16>,
    %192 = vector.extract_strided_slice %186 {offsets = [0, 2], sizes = [8, 894], strides = [1, 1]} : vector<8x896xbf16> to vector<8x894xbf16>
    %193 = vector.extract_strided_slice %186 {offsets = [0, 0], sizes = [8, 2], strides = [1, 1]} : vector<8x896xbf16> to vector<8x2xbf16>
    %194 = tpu.concatenate %192, %193 in 1 : vector<8x894xbf16>, vector<8x2xbf16> -> vector<8x896xbf16>
    %c112_95 = arith.constant 112 : index
    %c0_96 = arith.constant 0 : index
    %195 = vector.load %arg8[%c112_95, %c0_96] : memref<256x896xbf16, #tpu.memory_space<vmem>>, vector<8x896xbf16>
    tpu.vector_store %arg8[%c112_95, %c0_96], %194 {strides = array<i32>} : memref<256x896xbf16, #tpu.memory_space<vmem>>, vector<8x896xbf16>,
    %196 = vector.extract_strided_slice %145 {offsets = [0, 137], sizes = [8, 896], strides = [1, 1]} : vector<8x1152xbf16> to vector<8x896xbf16>
    %c120_97 = arith.constant 120 : index
    %c0_98 = arith.constant 0 : index
    %197 = vector.load %arg8[%c120_97, %c0_98] : memref<256x896xbf16, #tpu.memory_space<vmem>>, vector<8x896xbf16>
    tpu.vector_store %arg8[%c120_97, %c0_98], %196 {strides = array<i32>} : memref<256x896xbf16, #tpu.memory_space<vmem>>, vector<8x896xbf16>,
    %198 = vector.extract_strided_slice %196 {offsets = [0, 1], sizes = [8, 895], strides = [1, 1]} : vector<8x896xbf16> to vector<8x895xbf16>
    %199 = vector.extract_strided_slice %196 {offsets = [0, 0], sizes = [8, 1], strides = [1, 1]} : vector<8x896xbf16> to vector<8x1xbf16>
    %200 = tpu.concatenate %198, %199 in 1 : vector<8x895xbf16>, vector<8x1xbf16> -> vector<8x896xbf16>
    %c128_99 = arith.constant 128 : index
    %c0_100 = arith.constant 0 : index
    %201 = vector.load %arg8[%c128_99, %c0_100] : memref<256x896xbf16, #tpu.memory_space<vmem>>, vector<8x896xbf16>
    tpu.vector_store %arg8[%c128_99, %c0_100], %200 {strides = array<i32>} : memref<256x896xbf16, #tpu.memory_space<vmem>>, vector<8x896xbf16>,
    %202 = vector.extract_strided_slice %196 {offsets = [0, 2], sizes = [8, 894], strides = [1, 1]} : vector<8x896xbf16> to vector<8x894xbf16>
    %203 = vector.extract_strided_slice %196 {offsets = [0, 0], sizes = [8, 2], strides = [1, 1]} : vector<8x896xbf16> to vector<8x2xbf16>
    %204 = tpu.concatenate %202, %203 in 1 : vector<8x894xbf16>, vector<8x2xbf16> -> vector<8x896xbf16>
    %c136_101 = arith.constant 136 : index
    %c0_102 = arith.constant 0 : index
    %205 = vector.load %arg8[%c136_101, %c0_102] : memref<256x896xbf16, #tpu.memory_space<vmem>>, vector<8x896xbf16>
    tpu.vector_store %arg8[%c136_101, %c0_102], %204 {strides = array<i32>} : memref<256x896xbf16, #tpu.memory_space<vmem>>, vector<8x896xbf16>,
    %206 = vector.extract_strided_slice %145 {offsets = [0, 217], sizes = [8, 896], strides = [1, 1]} : vector<8x1152xbf16> to vector<8x896xbf16>
    %c144_103 = arith.constant 144 : index
    %c0_104 = arith.constant 0 : index
    %207 = vector.load %arg8[%c144_103, %c0_104] : memref<256x896xbf16, #tpu.memory_space<vmem>>, vector<8x896xbf16>
    tpu.vector_store %arg8[%c144_103, %c0_104], %206 {strides = array<i32>} : memref<256x896xbf16, #tpu.memory_space<vmem>>, vector<8x896xbf16>,
    %208 = vector.extract_strided_slice %206 {offsets = [0, 1], sizes = [8, 895], strides = [1, 1]} : vector<8x896xbf16> to vector<8x895xbf16>
    %209 = vector.extract_strided_slice %206 {offsets = [0, 0], sizes = [8, 1], strides = [1, 1]} : vector<8x896xbf16> to vector<8x1xbf16>
    %210 = tpu.concatenate %208, %209 in 1 : vector<8x895xbf16>, vector<8x1xbf16> -> vector<8x896xbf16>
    %c152_105 = arith.constant 152 : index
    %c0_106 = arith.constant 0 : index
    %211 = vector.load %arg8[%c152_105, %c0_106] : memref<256x896xbf16, #tpu.memory_space<vmem>>, vector<8x896xbf16>
    tpu.vector_store %arg8[%c152_105, %c0_106], %210 {strides = array<i32>} : memref<256x896xbf16, #tpu.memory_space<vmem>>, vector<8x896xbf16>,
    %212 = vector.extract_strided_slice %206 {offsets = [0, 2], sizes = [8, 894], strides = [1, 1]} : vector<8x896xbf16> to vector<8x894xbf16>
    %213 = vector.extract_strided_slice %206 {offsets = [0, 0], sizes = [8, 2], strides = [1, 1]} : vector<8x896xbf16> to vector<8x2xbf16>
    %214 = tpu.concatenate %212, %213 in 1 : vector<8x894xbf16>, vector<8x2xbf16> -> vector<8x896xbf16>
    %c160_107 = arith.constant 160 : index
    %c0_108 = arith.constant 0 : index
    %215 = vector.load %arg8[%c160_107, %c0_108] : memref<256x896xbf16, #tpu.memory_space<vmem>>, vector<8x896xbf16>
    tpu.vector_store %arg8[%c160_107, %c0_108], %214 {strides = array<i32>} : memref<256x896xbf16, #tpu.memory_space<vmem>>, vector<8x896xbf16>,
    %216 = vector.extract_strided_slice %145 {offsets = [0, 227], sizes = [8, 896], strides = [1, 1]} : vector<8x1152xbf16> to vector<8x896xbf16>
    %c168_109 = arith.constant 168 : index
    %c0_110 = arith.constant 0 : index
    %217 = vector.load %arg8[%c168_109, %c0_110] : memref<256x896xbf16, #tpu.memory_space<vmem>>, vector<8x896xbf16>
    tpu.vector_store %arg8[%c168_109, %c0_110], %216 {strides = array<i32>} : memref<256x896xbf16, #tpu.memory_space<vmem>>, vector<8x896xbf16>,
    %218 = vector.extract_strided_slice %216 {offsets = [0, 1], sizes = [8, 895], strides = [1, 1]} : vector<8x896xbf16> to vector<8x895xbf16>
    %219 = vector.extract_strided_slice %216 {offsets = [0, 0], sizes = [8, 1], strides = [1, 1]} : vector<8x896xbf16> to vector<8x1xbf16>
    %220 = tpu.concatenate %218, %219 in 1 : vector<8x895xbf16>, vector<8x1xbf16> -> vector<8x896xbf16>
    %c176_111 = arith.constant 176 : index
    %c0_112 = arith.constant 0 : index
    %221 = vector.load %arg8[%c176_111, %c0_112] : memref<256x896xbf16, #tpu.memory_space<vmem>>, vector<8x896xbf16>
    tpu.vector_store %arg8[%c176_111, %c0_112], %220 {strides = array<i32>} : memref<256x896xbf16, #tpu.memory_space<vmem>>, vector<8x896xbf16>,
    %222 = vector.extract_strided_slice %216 {offsets = [0, 2], sizes = [8, 894], strides = [1, 1]} : vector<8x896xbf16> to vector<8x894xbf16>
    %223 = vector.extract_strided_slice %216 {offsets = [0, 0], sizes = [8, 2], strides = [1, 1]} : vector<8x896xbf16> to vector<8x2xbf16>
    %224 = tpu.concatenate %222, %223 in 1 : vector<8x894xbf16>, vector<8x2xbf16> -> vector<8x896xbf16>
    %c184_113 = arith.constant 184 : index
    %c0_114 = arith.constant 0 : index
    %225 = vector.load %arg8[%c184_113, %c0_114] : memref<256x896xbf16, #tpu.memory_space<vmem>>, vector<8x896xbf16>
    tpu.vector_store %arg8[%c184_113, %c0_114], %224 {strides = array<i32>} : memref<256x896xbf16, #tpu.memory_space<vmem>>, vector<8x896xbf16>,
    %226 = vector.extract_strided_slice %145 {offsets = [0, 237], sizes = [8, 896], strides = [1, 1]} : vector<8x1152xbf16> to vector<8x896xbf16>
    %c192_115 = arith.constant 192 : index
    %c0_116 = arith.constant 0 : index
    %227 = vector.load %arg8[%c192_115, %c0_116] : memref<256x896xbf16, #tpu.memory_space<vmem>>, vector<8x896xbf16>
    tpu.vector_store %arg8[%c192_115, %c0_116], %226 {strides = array<i32>} : memref<256x896xbf16, #tpu.memory_space<vmem>>, vector<8x896xbf16>,
    %228 = vector.extract_strided_slice %226 {offsets = [0, 1], sizes = [8, 895], strides = [1, 1]} : vector<8x896xbf16> to vector<8x895xbf16>
    %229 = vector.extract_strided_slice %226 {offsets = [0, 0], sizes = [8, 1], strides = [1, 1]} : vector<8x896xbf16> to vector<8x1xbf16>
    %230 = tpu.concatenate %228, %229 in 1 : vector<8x895xbf16>, vector<8x1xbf16> -> vector<8x896xbf16>
    %c200_117 = arith.constant 200 : index
    %c0_118 = arith.constant 0 : index
    %231 = vector.load %arg8[%c200_117, %c0_118] : memref<256x896xbf16, #tpu.memory_space<vmem>>, vector<8x896xbf16>
    tpu.vector_store %arg8[%c200_117, %c0_118], %230 {strides = array<i32>} : memref<256x896xbf16, #tpu.memory_space<vmem>>, vector<8x896xbf16>,
    %232 = vector.extract_strided_slice %226 {offsets = [0, 2], sizes = [8, 894], strides = [1, 1]} : vector<8x896xbf16> to vector<8x894xbf16>
    %233 = vector.extract_strided_slice %226 {offsets = [0, 0], sizes = [8, 2], strides = [1, 1]} : vector<8x896xbf16> to vector<8x2xbf16>
    %234 = tpu.concatenate %232, %233 in 1 : vector<8x894xbf16>, vector<8x2xbf16> -> vector<8x896xbf16>
    %c208_119 = arith.constant 208 : index
    %c0_120 = arith.constant 0 : index
    %235 = vector.load %arg8[%c208_119, %c0_120] : memref<256x896xbf16, #tpu.memory_space<vmem>>, vector<8x896xbf16>
    tpu.vector_store %arg8[%c208_119, %c0_120], %234 {strides = array<i32>} : memref<256x896xbf16, #tpu.memory_space<vmem>>, vector<8x896xbf16>,
    %c0_121 = arith.constant 0 : index
    %c0_122 = arith.constant 0 : index
    %236 = vector.load %arg5[%c0_121, %c0_122] : memref<8x256xbf16, #tpu.memory_space<vmem>>, vector<8x256xbf16>
    %c0_123 = arith.constant 0 : index
    %c0_124 = arith.constant 0 : index
    %237 = vector.load %arg8[%c0_123, %c0_124] : memref<256x896xbf16, #tpu.memory_space<vmem>>, vector<256x896xbf16>
    %cst_125 = arith.constant dense<0.000000e+00> : vector<8x896xf32>
    %238 = tpu.matmul %236, %237, %cst_125 {dimension_numbers = #tpu.dot_dimension_numbers<[1], [0], [0], [1], [0, 0, 1, 1], [], []>} : vector<8x256xbf16>, vector<256x896xbf16>, vector<8x896xf32> -> vector<8x896xf32>
    %c1_126 = arith.constant 1 : index
    %c0_127 = arith.constant 0 : index
    %c128_128 = arith.constant 128 : index
    %239 = vector.load %arg6[%c1_126, %c0_127, %c128_128] : memref<2x8x1152xf32, #tpu.memory_space<vmem>>, vector<1x8x896xf32>
    %240 = vector.shape_cast %239 : vector<1x8x896xf32> to vector<8x896xf32>
    %241 = arith.addf %238, %240 : vector<8x896xf32>
    %cst_129 = arith.constant 0.000000e+00 : f32
    %242 = vector.broadcast %cst_129 : f32 to vector<8x896xf32>
    %243 = arith.maximumf %241, %242 : vector<8x896xf32>
    %c1_130 = arith.constant 1 : index
    %c0_131 = arith.constant 0 : index
    %c128_132 = arith.constant 128 : index
    %244 = vector.load %arg7[%c1_130, %c0_131, %c128_132] : memref<2x8x1152xf32, #tpu.memory_space<vmem>>, vector<1x8x896xf32>
    %245 = vector.shape_cast %244 : vector<1x8x896xf32> to vector<8x896xf32>
    %246 = vector.shape_cast %243 : vector<8x896xf32> to vector<1x8x896xf32>
    tpu.vector_store %arg7[%c1_130, %c0_131, %c128_132], %246 {strides = array<i32>} : memref<2x8x1152xf32, #tpu.memory_space<vmem>>, vector<1x8x896xf32>,
    %cst_133 = arith.constant 0.000000e+00 : f32
    %247 = vector.broadcast %cst_133 : f32 to vector<8x128xf32>
    %c1_134 = arith.constant 1 : index
    %c0_135 = arith.constant 0 : index
    %c0_136 = arith.constant 0 : index
    %248 = vector.load %arg7[%c1_134, %c0_135, %c0_136] : memref<2x8x1152xf32, #tpu.memory_space<vmem>>, vector<1x8x128xf32>
    %249 = vector.shape_cast %248 : vector<1x8x128xf32> to vector<8x128xf32>
    %250 = vector.shape_cast %247 : vector<8x128xf32> to vector<1x8x128xf32>
    tpu.vector_store %arg7[%c1_134, %c0_135, %c0_136], %250 {strides = array<i32>} : memref<2x8x1152xf32, #tpu.memory_space<vmem>>, vector<1x8x128xf32>,
    %cst_137 = arith.constant 0.000000e+00 : f32
    %251 = vector.broadcast %cst_137 : f32 to vector<8x128xf32>
    %c1_138 = arith.constant 1 : index
    %c0_139 = arith.constant 0 : index
    %c1024_140 = arith.constant 1024 : index
    %252 = vector.load %arg7[%c1_138, %c0_139, %c1024_140] : memref<2x8x1152xf32, #tpu.memory_space<vmem>>, vector<1x8x128xf32>
    %253 = vector.shape_cast %252 : vector<1x8x128xf32> to vector<8x128xf32>
    %254 = vector.shape_cast %251 : vector<8x128xf32> to vector<1x8x128xf32>
    tpu.vector_store %arg7[%c1_138, %c0_139, %c1024_140], %254 {strides = array<i32>} : memref<2x8x1152xf32, #tpu.memory_space<vmem>>, vector<1x8x128xf32>,
    return
  }
  func.func @transform_0(%arg0: i32) -> (i32, i32, i32) {
    %c0_i32 = arith.constant 0 : i32
    %c0_i32_0 = arith.constant 0 : i32
    %c0_i32_1 = arith.constant 0 : i32
    return %arg0, %c0_i32, %c0_i32_0 : i32, i32, i32
  }
  func.func @transform_1(%arg0: i32) -> (i32, i32) {
    %c0_i32 = arith.constant 0 : i32
    %c0_i32_0 = arith.constant 0 : i32
    %c0_i32_1 = arith.constant 0 : i32
    return %c0_i32, %c0_i32_0 : i32, i32
  }
  func.func @transform_2(%arg0: i32) -> (i32, i32) {
    %c0_i32 = arith.constant 0 : i32
    %c0_i32_0 = arith.constant 0 : i32
    %c0_i32_1 = arith.constant 0 : i32
    return %c0_i32, %c0_i32_0 : i32, i32
  }
  func.func @transform_3(%arg0: i32) -> (i32, i32) {
    %c0_i32 = arith.constant 0 : i32
    %c0_i32_0 = arith.constant 0 : i32
    %c0_i32_1 = arith.constant 0 : i32
    return %c0_i32, %c0_i32_0 : i32, i32
  }
  func.func @transform_4(%arg0: i32) -> (i32, i32) {
    %c0_i32 = arith.constant 0 : i32
    %c0_i32_0 = arith.constant 0 : i32
    %c0_i32_1 = arith.constant 0 : i32
    return %c0_i32, %c0_i32_0 : i32, i32
  }
  func.func @transform_5(%arg0: i32) -> (i32, i32, i32) {
    %c0_i32 = arith.constant 0 : i32
    %c0_i32_0 = arith.constant 0 : i32
    %c0_i32_1 = arith.constant 0 : i32
    return %arg0, %c0_i32, %c0_i32_0 : i32, i32, i32
  }
  func.func @transform_6(%arg0: i32) -> (i32, i32, i32) {
    %c0_i32 = arith.constant 0 : i32
    %c0_i32_0 = arith.constant 0 : i32
    %c0_i32_1 = arith.constant 0 : i32
    return %arg0, %c0_i32, %c0_i32_0 : i32, i32, i32
  }
}

</mosaic_0001>

<llo_original>
// kernel: new_block_forward.3
$region0: #{new_block_forward.3}
  #allocation0 [shape = 'u32[]', space=smem, size = 0x4, offset = 0x4, fixed_abs, tag = 'smem constant byte address 0x4 - core index']
  #allocation1 [shape = 'u32[144,128]{1,0:T(1,128)}', space=vmem, size = 0x12000, scoped, tag = 'internal scratch']
  #allocation2 [shape = 'bf16[256,896]{1,0:T(16,128)(2,1)}', space=vmem, size = 0x70000, scoped, tag = 'scratch operand']
  %s0 = inlined_call_operand.vmem [shape: bf16[2,8,1152], index: 0, kind: input, shape index: {}]
  %s1 = inlined_call_operand.vmem [shape: f32[8,1], index: 1, kind: input, shape index: {}]
  %s2 = inlined_call_operand.vmem [shape: f32[8,1], index: 2, kind: input, shape index: {}]
  %s3 = inlined_call_operand.vmem [shape: f32[1,1152], index: 3, kind: input, shape index: {}]
  %s4 = inlined_call_operand.vmem [shape: bf16[8,256], index: 4, kind: input, shape index: {}]
  %s5 = inlined_call_operand.vmem [shape: f32[2,8,1152], index: 5, kind: input, shape index: {}]
  %s6 = inlined_call_operand.vmem [shape: f32[2,8,1152], index: 6, kind: output, shape index: {}]
  %s7 = sld [smem:[#allocation0]]
  $region34: #{new_block_forward.3} parent=0
    _
  %s9 = ssub.s32 1, %s7
  %s10 = scalar_select 0, %s9, %s7
  // Predicated region
  $region2: #{new_block_forward.3} parent=0 // pred_check
    _
  $region3: #{new_block_forward.3} parent=0 // pred_check_branch
    %12 = sbr.rel (0) target = $region5
  $region4: #{new_block_forward.3} parent=0 // pred_region
    _
  $region5: #{new_block_forward.3} parent=0 // pred_fallthru
    _
  // Predicated region
  $region6: #{new_block_forward.3} parent=0 // pred_check
    _
  $region7: #{new_block_forward.3} parent=0 // pred_check_branch
    %14 = sbr.rel (0) target = $region9
  $region8: #{new_block_forward.3} parent=0 // pred_region
    _
  $region9: #{new_block_forward.3} parent=0 // pred_fallthru
    _
  // Predicated region
  $region10: #{new_block_forward.3} parent=0 // pred_check
    _
  $region11: #{new_block_forward.3} parent=0 // pred_check_branch
    %16 = sbr.rel (0) target = $region13
  $region12: #{new_block_forward.3} parent=0 // pred_region
    _
  $region13: #{new_block_forward.3} parent=0 // pred_fallthru
    _
  // Predicated region
  $region14: #{new_block_forward.3} parent=0 // pred_check
    _
  $region15: #{new_block_forward.3} parent=0 // pred_check_branch
    %18 = sbr.rel (0) target = $region17
  $region16: #{new_block_forward.3} parent=0 // pred_region
    _
  $region17: #{new_block_forward.3} parent=0 // pred_fallthru
    _
  // Predicated region
  $region18: #{new_block_forward.3} parent=0 // pred_check
    _
  $region19: #{new_block_forward.3} parent=0 // pred_check_branch
    %20 = sbr.rel (0) target = $region21
  $region20: #{new_block_forward.3} parent=0 // pred_region
    _
  $region21: #{new_block_forward.3} parent=0 // pred_fallthru
    _
  // Predicated region
  $region22: #{new_block_forward.3} parent=0 // pred_check
    _
  $region23: #{new_block_forward.3} parent=0 // pred_check_branch
    %22 = sbr.rel (0) target = $region25
  $region24: #{new_block_forward.3} parent=0 // pred_region
    _
  $region25: #{new_block_forward.3} parent=0 // pred_fallthru
    _
  %v24 = vld [vmem:[%s3] sm:$0xff]
  %v25 = vld [vmem:[%s3 + $0x8] sm:$0x1]
  %vm26 = vcmp.ne.f32.partialorder %v24, 0.0
  %vm27 = vcmp.ne.f32.partialorder %v25, 0.0
  %28 = vst [vmem:[#allocation2 + $0x2d8] sm:$0xf0] 0
  %29 = vst [vmem:[#allocation2 + $0x2e0] sm:$0xf0] 0
  %30 = vst [vmem:[#allocation2 + $0x2e8] sm:$0xf0] 0
  %31 = vst [vmem:[#allocation2 + $0x2f0] sm:$0xf0] 0
  %32 = vst [vmem:[#allocation2 + $0x2f8] sm:$0xf0] 0
  %33 = vst [vmem:[#allocation2 + $0x300] sm:$0xf0] 0
  %34 = vst [vmem:[#allocation2 + $0x308] sm:$0xf0] 0
  %35 = vst [vmem:[#allocation2 + $0x310] sm:$0xff] 0
  %36 = vst [vmem:[#allocation2 + $0x318] sm:$0xff] 0
  %37 = vst [vmem:[#allocation2 + $0x320] sm:$0xff] 0
  %38 = vst [vmem:[#allocation2 + $0x328] sm:$0xff] 0
  %39 = vst [vmem:[#allocation2 + $0x330] sm:$0xff] 0
  %40 = vst [vmem:[#allocation2 + $0x338] sm:$0xff] 0
  %41 = vst [vmem:[#allocation2 + $0x340] sm:$0xff] 0
  %42 = vst [vmem:[#allocation2 + $0x348] sm:$0xff] 0
  %43 = vst [vmem:[#allocation2 + $0x350] sm:$0xff] 0
  %44 = vst [vmem:[#allocation2 + $0x358] sm:$0xff] 0
  %45 = vst [vmem:[#allocation2 + $0x360] sm:$0xff] 0
  %46 = vst [vmem:[#allocation2 + $0x368] sm:$0xff] 0
  %47 = vst [vmem:[#allocation2 + $0x370] sm:$0xff] 0
  %48 = vst [vmem:[#allocation2 + $0x378] sm:$0xff] 0
  %v49 = vld [vmem:[%s0] sm:$0xff]
  %v50 = vld [vmem:[%s0 + $0x8] sm:$0xff]
  %v51 = vld [vmem:[%s0 + $0x10] sm:$0xff]
  %v52 = vld [vmem:[%s0 + $0x18] sm:$0xff]
  %v53 = vld [vmem:[%s0 + $0x20] sm:$0xf]
  %v54 = vunpack.c.l.bf16 %v49
  %v55 = vunpack.c.h.bf16 %v49
  %v56 = vunpack.c.l.bf16 %v50
  %v57 = vunpack.c.h.bf16 %v50
  %v58 = vunpack.c.l.bf16 %v51
  %v59 = vunpack.c.h.bf16 %v51
  %v60 = vunpack.c.l.bf16 %v52
  %v61 = vunpack.c.h.bf16 %v52
  %v62 = vunpack.c.l.bf16 %v53
  %v63 = vld [vmem:[%s1] sm:$0xff]
  %65 = vset.pattern.permute.xlu0 0
  %66 = vperm.xlu0 %65, %v63
  %v67 = vpop.permute.xlu0 %66
  %v69 = vmul.f32 %v54, %v67
  %v70 = vmul.f32 %v55, %v67
  %v71 = vmul.f32 %v56, %v67
  %v72 = vmul.f32 %v57, %v67
  %v73 = vmul.f32 %v58, %v67
  %v74 = vmul.f32 %v59, %v67
  %v75 = vmul.f32 %v60, %v67
  %v76 = vmul.f32 %v61, %v67
  %v77 = vmul.f32 %v62, %v67
  %v78 = vld [vmem:[%s2] sm:$0xff]
  %80 = vset.pattern.permute.xlu0 0
  %81 = vperm.xlu0 %80, %v78
  %v82 = vpop.permute.xlu0 %81
  %v84 = vadd.f32 %v69, %v82
  %v85 = vadd.f32 %v70, %v82
  %v86 = vadd.f32 %v71, %v82
  %v87 = vadd.f32 %v72, %v82
  %v88 = vadd.f32 %v73, %v82
  %v89 = vadd.f32 %v74, %v82
  %v90 = vadd.f32 %v75, %v82
  %v91 = vadd.f32 %v76, %v82
  %v92 = vadd.f32 %v77, %v82
  %v93 = vmax.f32 %v84, 0.0
  %v94 = vmax.f32 %v85, 0.0
  %v95 = vmax.f32 %v86, 0.0
  %v96 = vmax.f32 %v87, 0.0
  %v97 = vmax.f32 %v88, 0.0
  %v98 = vmax.f32 %v89, 0.0
  %v99 = vmax.f32 %v90, 0.0
  %v100 = vmax.f32 %v91, 0.0
  %v101 = vmax.f32 %v92, 0.0
  %v102 = vsel %vm26, 1, 0
  %v103 = vsel %vm27, 1, 0
  %v104 = vlaneseq
  %v105 = vshrl.u32 %v104, 7
  %v106 = vsub.s32 0, %v105
  %v107 = vrot.slane %v102, %v106
  %v108 = vlaneseq
  %v109 = vshrl.u32 %v108, 7
  %v110 = vsub.s32 1, %v109
  %v111 = vrot.slane %v102, %v110
  %v112 = vlaneseq
  %v113 = vshrl.u32 %v112, 7
  %v114 = vsub.s32 2, %v113
  %v115 = vrot.slane %v102, %v114
  %v116 = vlaneseq
  %v117 = vshrl.u32 %v116, 7
  %v118 = vsub.s32 3, %v117
  %v119 = vrot.slane %v102, %v118
  %v120 = vlaneseq
  %v121 = vshrl.u32 %v120, 7
  %v122 = vsub.s32 4, %v121
  %v123 = vrot.slane %v102, %v122
  %v124 = vlaneseq
  %v125 = vshrl.u32 %v124, 7
  %v126 = vsub.s32 5, %v125
  %v127 = vrot.slane %v102, %v126
  %v128 = vlaneseq
  %v129 = vshrl.u32 %v128, 7
  %v130 = vsub.s32 6, %v129
  %v131 = vrot.slane %v102, %v130
  %v132 = vlaneseq
  %v133 = vshrl.u32 %v132, 7
  %v134 = vsub.s32 7, %v133
  %v135 = vrot.slane %v102, %v134
  %v136 = vlaneseq
  %v137 = vshrl.u32 %v136, 7
  %v138 = vsub.s32 0, %v137
  %v139 = vrot.slane %v103, %v138
  %vm140 = vcmp.eq.s32.totalorder %v107, 1
  %vm141 = vcmp.eq.s32.totalorder %v111, 1
  %vm142 = vcmp.eq.s32.totalorder %v115, 1
  %vm143 = vcmp.eq.s32.totalorder %v119, 1
  %vm144 = vcmp.eq.s32.totalorder %v123, 1
  %vm145 = vcmp.eq.s32.totalorder %v127, 1
  %vm146 = vcmp.eq.s32.totalorder %v131, 1
  %vm147 = vcmp.eq.s32.totalorder %v135, 1
  %vm148 = vcmp.eq.s32.totalorder %v139, 1
  %v149 = vsel %vm140, %v93, 0.0
  %v150 = vsel %vm141, %v94, 0.0
  %v151 = vsel %vm142, %v95, 0.0
  %v152 = vsel %vm143, %v96, 0.0
  %v153 = vsel %vm144, %v97, 0.0
  %v154 = vsel %vm145, %v98, 0.0
  %v155 = vsel %vm146, %v99, 0.0
  %v156 = vsel %vm147, %v100, 0.0
  %v157 = vsel %vm148, %v101, 0.0
  %v158 = vpack.c.bf16 %v149, %v149
  %v159 = vpack.c.bf16 %v150, %v150
  %v160 = vpack.c.bf16 %v151, %v151
  %v161 = vpack.c.bf16 %v152, %v152
  %v162 = vpack.c.bf16 %v153, %v153
  %v163 = vpack.c.bf16 %v154, %v154
  %v164 = vpack.c.bf16 %v155, %v155
  %v165 = vpack.c.bf16 %v156, %v156
  %v166 = vpack.c.bf16 %v157, %v157
  %175 = vrot.lane.b32.xlu0 %v158, 111
  %v176 = vpop.permute.xlu0 %175
  %177 = vrot.lane.b32.xlu0 %v159, 111
  %v178 = vpop.permute.xlu0 %177
  %179 = vrot.lane.b32.xlu0 %v160, 111
  %v180 = vpop.permute.xlu0 %179
  %181 = vrot.lane.b32.xlu0 %v161, 111
  %v182 = vpop.permute.xlu0 %181
  %183 = vrot.lane.b32.xlu0 %v162, 111
  %v184 = vpop.permute.xlu0 %183
  %185 = vrot.lane.b32.xlu0 %v163, 111
  %v186 = vpop.permute.xlu0 %185
  %187 = vrot.lane.b32.xlu0 %v164, 111
  %v188 = vpop.permute.xlu0 %187
  %189 = vrot.lane.b32.xlu0 %v165, 111
  %v190 = vpop.permute.xlu0 %189
  %vm191 = vcmask 908288
  %v192 = vsel %vm191, %v176, %v178
  %v193 = vsel %vm191, %v178, %v180
  %v194 = vsel %vm191, %v180, %v182
  %v195 = vsel %vm191, %v182, %v184
  %v196 = vsel %vm191, %v184, %v186
  %v197 = vsel %vm191, %v186, %v188
  %v198 = vsel %vm191, %v188, %v190
  %206 = vst [vmem:[#allocation2] sm:$0xf] %v192
  %207 = vst [vmem:[#allocation2 + $0x8] sm:$0xf] %v193
  %208 = vst [vmem:[#allocation2 + $0x10] sm:$0xf] %v194
  %209 = vst [vmem:[#allocation2 + $0x18] sm:$0xf] %v195
  %210 = vst [vmem:[#allocation2 + $0x20] sm:$0xf] %v196
  %211 = vst [vmem:[#allocation2 + $0x28] sm:$0xf] %v197
  %212 = vst [vmem:[#allocation2 + $0x30] sm:$0xf] %v198
  %213 = vrot.lane.b32.xlu0 %v158, 110
  %v214 = vpop.permute.xlu0 %213
  %215 = vrot.lane.b32.xlu0 %v159, 110
  %v216 = vpop.permute.xlu0 %215
  %217 = vrot.lane.b32.xlu0 %v160, 110
  %v218 = vpop.permute.xlu0 %217
  %219 = vrot.lane.b32.xlu0 %v161, 110
  %v220 = vpop.permute.xlu0 %219
  %221 = vrot.lane.b32.xlu0 %v162, 110
  %v222 = vpop.permute.xlu0 %221
  %223 = vrot.lane.b32.xlu0 %v163, 110
  %v224 = vpop.permute.xlu0 %223
  %225 = vrot.lane.b32.xlu0 %v164, 110
  %v226 = vpop.permute.xlu0 %225
  %227 = vrot.lane.b32.xlu0 %v165, 110
  %v228 = vpop.permute.xlu0 %227
  %vm229 = vcmask 900096
  %v230 = vsel %vm229, %v214, %v216
  %v231 = vsel %vm229, %v216, %v218
  %v232 = vsel %vm229, %v218, %v220
  %v233 = vsel %vm229, %v220, %v222
  %v234 = vsel %vm229, %v222, %v224
  %v235 = vsel %vm229, %v224, %v226
  %v236 = vsel %vm229, %v226, %v228
  %vm237 = vcmask 1039360
  %v240 = vsel %vm237, %v236, %v214
  %v242 = vrot.slane %v230, 4
  %v243 = vrot.slane %v231, 4
  %v244 = vrot.slane %v232, 4
  %v245 = vrot.slane %v233, 4
  %v246 = vrot.slane %v234, 4
  %v247 = vrot.slane %v235, 4
  %v248 = vrot.slane %v240, 4
  %256 = vst [vmem:[#allocation2] sm:$0xf0] %v242
  %257 = vst [vmem:[#allocation2 + $0x8] sm:$0xf0] %v243
  %258 = vst [vmem:[#allocation2 + $0x10] sm:$0xf0] %v244
  %259 = vst [vmem:[#allocation2 + $0x18] sm:$0xf0] %v245
  %260 = vst [vmem:[#allocation2 + $0x20] sm:$0xf0] %v246
  %261 = vst [vmem:[#allocation2 + $0x28] sm:$0xf0] %v247
  %262 = vst [vmem:[#allocation2 + $0x30] sm:$0xf0] %v248
  %263 = vrot.lane.b32.xlu0 %v158, 109
  %v264 = vpop.permute.xlu0 %263
  %265 = vrot.lane.b32.xlu0 %v159, 109
  %v266 = vpop.permute.xlu0 %265
  %267 = vrot.lane.b32.xlu0 %v160, 109
  %v268 = vpop.permute.xlu0 %267
  %269 = vrot.lane.b32.xlu0 %v161, 109
  %v270 = vpop.permute.xlu0 %269
  %271 = vrot.lane.b32.xlu0 %v162, 109
  %v272 = vpop.permute.xlu0 %271
  %273 = vrot.lane.b32.xlu0 %v163, 109
  %v274 = vpop.permute.xlu0 %273
  %275 = vrot.lane.b32.xlu0 %v164, 109
  %v276 = vpop.permute.xlu0 %275
  %277 = vrot.lane.b32.xlu0 %v165, 109
  %v278 = vpop.permute.xlu0 %277
  %vm279 = vcmask 891904
  %v280 = vsel %vm279, %v264, %v266
  %v281 = vsel %vm279, %v266, %v268
  %v282 = vsel %vm279, %v268, %v270
  %v283 = vsel %vm279, %v270, %v272
  %v284 = vsel %vm279, %v272, %v274
  %v285 = vsel %vm279, %v274, %v276
  %v286 = vsel %vm279, %v276, %v278
  %vm293 = vcmask 1031168
  %v296 = vsel %vm293, %v286, %v264
  %298 = vst [vmem:[#allocation2 + $0x38] sm:$0xf] %v280
  %299 = vst [vmem:[#allocation2 + $0x40] sm:$0xf] %v281
  %300 = vst [vmem:[#allocation2 + $0x48] sm:$0xf] %v282
  %301 = vst [vmem:[#allocation2 + $0x50] sm:$0xf] %v283
  %302 = vst [vmem:[#allocation2 + $0x58] sm:$0xf] %v284
  %303 = vst [vmem:[#allocation2 + $0x60] sm:$0xf] %v285
  %304 = vst [vmem:[#allocation2 + $0x68] sm:$0xf] %v296
  %v305 = vrot.slane %v158, 4
  %v306 = vrot.slane %v159, 4
  %v307 = vrot.slane %v160, 4
  %v308 = vrot.slane %v161, 4
  %v309 = vrot.slane %v162, 4
  %v310 = vrot.slane %v163, 4
  %v311 = vrot.slane %v164, 4
  %v312 = vrot.slane %v165, 4
  %313 = vrot.lane.b32.xlu0 %v305, 101
  %v314 = vpop.permute.xlu0 %313
  %315 = vrot.lane.b32.xlu0 %v306, 101
  %v316 = vpop.permute.xlu0 %315
  %317 = vrot.lane.b32.xlu0 %v307, 101
  %v318 = vpop.permute.xlu0 %317
  %319 = vrot.lane.b32.xlu0 %v308, 101
  %v320 = vpop.permute.xlu0 %319
  %321 = vrot.lane.b32.xlu0 %v309, 101
  %v322 = vpop.permute.xlu0 %321
  %323 = vrot.lane.b32.xlu0 %v310, 101
  %v324 = vpop.permute.xlu0 %323
  %325 = vrot.lane.b32.xlu0 %v311, 101
  %v326 = vpop.permute.xlu0 %325
  %327 = vrot.lane.b32.xlu0 %v312, 101
  %v328 = vpop.permute.xlu0 %327
  %vm329 = vcmask 826368
  %v330 = vsel %vm329, %v314, %v316
  %v331 = vsel %vm329, %v316, %v318
  %v332 = vsel %vm329, %v318, %v320
  %v333 = vsel %vm329, %v320, %v322
  %v334 = vsel %vm329, %v322, %v324
  %v335 = vsel %vm329, %v324, %v326
  %v336 = vsel %vm329, %v326, %v328
  %344 = vst [vmem:[#allocation2 + $0x38] sm:$0xf0] %v330
  %345 = vst [vmem:[#allocation2 + $0x40] sm:$0xf0] %v331
  %346 = vst [vmem:[#allocation2 + $0x48] sm:$0xf0] %v332
  %347 = vst [vmem:[#allocation2 + $0x50] sm:$0xf0] %v333
  %348 = vst [vmem:[#allocation2 + $0x58] sm:$0xf0] %v334
  %349 = vst [vmem:[#allocation2 + $0x60] sm:$0xf0] %v335
  %350 = vst [vmem:[#allocation2 + $0x68] sm:$0xf0] %v336
  %351 = vrot.lane.b32.xlu0 %v158, 100
  %v352 = vpop.permute.xlu0 %351
  %353 = vrot.lane.b32.xlu0 %v159, 100
  %v354 = vpop.permute.xlu0 %353
  %355 = vrot.lane.b32.xlu0 %v160, 100
  %v356 = vpop.permute.xlu0 %355
  %357 = vrot.lane.b32.xlu0 %v161, 100
  %v358 = vpop.permute.xlu0 %357
  %359 = vrot.lane.b32.xlu0 %v162, 100
  %v360 = vpop.permute.xlu0 %359
  %361 = vrot.lane.b32.xlu0 %v163, 100
  %v362 = vpop.permute.xlu0 %361
  %363 = vrot.lane.b32.xlu0 %v164, 100
  %v364 = vpop.permute.xlu0 %363
  %365 = vrot.lane.b32.xlu0 %v165, 100
  %v366 = vpop.permute.xlu0 %365
  %vm367 = vcmask 818176
  %v368 = vsel %vm367, %v352, %v354
  %v369 = vsel %vm367, %v354, %v356
  %v370 = vsel %vm367, %v356, %v358
  %v371 = vsel %vm367, %v358, %v360
  %v372 = vsel %vm367, %v360, %v362
  %v373 = vsel %vm367, %v362, %v364
  %v374 = vsel %vm367, %v364, %v366
  %v383 = vsel %vm237, %v374, %v352
  %385 = vst [vmem:[#allocation2 + $0x70] sm:$0xf] %v368
  %386 = vst [vmem:[#allocation2 + $0x78] sm:$0xf] %v369
  %387 = vst [vmem:[#allocation2 + $0x80] sm:$0xf] %v370
  %388 = vst [vmem:[#allocation2 + $0x88] sm:$0xf] %v371
  %389 = vst [vmem:[#allocation2 + $0x90] sm:$0xf] %v372
  %390 = vst [vmem:[#allocation2 + $0x98] sm:$0xf] %v373
  %391 = vst [vmem:[#allocation2 + $0xa0] sm:$0xf] %v383
  %392 = vrot.lane.b32.xlu0 %v158, 99
  %v393 = vpop.permute.xlu0 %392
  %394 = vrot.lane.b32.xlu0 %v159, 99
  %v395 = vpop.permute.xlu0 %394
  %396 = vrot.lane.b32.xlu0 %v160, 99
  %v397 = vpop.permute.xlu0 %396
  %398 = vrot.lane.b32.xlu0 %v161, 99
  %v399 = vpop.permute.xlu0 %398
  %400 = vrot.lane.b32.xlu0 %v162, 99
  %v401 = vpop.permute.xlu0 %400
  %402 = vrot.lane.b32.xlu0 %v163, 99
  %v403 = vpop.permute.xlu0 %402
  %404 = vrot.lane.b32.xlu0 %v164, 99
  %v405 = vpop.permute.xlu0 %404
  %406 = vrot.lane.b32.xlu0 %v165, 99
  %v407 = vpop.permute.xlu0 %406
  %vm408 = vcmask 809984
  %v409 = vsel %vm408, %v393, %v395
  %v410 = vsel %vm408, %v395, %v397
  %v411 = vsel %vm408, %v397, %v399
  %v412 = vsel %vm408, %v399, %v401
  %v413 = vsel %vm408, %v401, %v403
  %v414 = vsel %vm408, %v403, %v405
  %v415 = vsel %vm408, %v405, %v407
  %v418 = vsel %vm293, %v415, %v393
  %v420 = vrot.slane %v409, 4
  %v421 = vrot.slane %v410, 4
  %v422 = vrot.slane %v411, 4
  %v423 = vrot.slane %v412, 4
  %v424 = vrot.slane %v413, 4
  %v425 = vrot.slane %v414, 4
  %v426 = vrot.slane %v418, 4
  %434 = vst [vmem:[#allocation2 + $0x70] sm:$0xf0] %v420
  %435 = vst [vmem:[#allocation2 + $0x78] sm:$0xf0] %v421
  %436 = vst [vmem:[#allocation2 + $0x80] sm:$0xf0] %v422
  %437 = vst [vmem:[#allocation2 + $0x88] sm:$0xf0] %v423
  %438 = vst [vmem:[#allocation2 + $0x90] sm:$0xf0] %v424
  %439 = vst [vmem:[#allocation2 + $0x98] sm:$0xf0] %v425
  %440 = vst [vmem:[#allocation2 + $0xa0] sm:$0xf0] %v426
  %441 = vrot.lane.b32.xlu0 %v158, 91
  %v442 = vpop.permute.xlu0 %441
  %443 = vrot.lane.b32.xlu0 %v159, 91
  %v444 = vpop.permute.xlu0 %443
  %445 = vrot.lane.b32.xlu0 %v160, 91
  %v446 = vpop.permute.xlu0 %445
  %447 = vrot.lane.b32.xlu0 %v161, 91
  %v448 = vpop.permute.xlu0 %447
  %449 = vrot.lane.b32.xlu0 %v162, 91
  %v450 = vpop.permute.xlu0 %449
  %451 = vrot.lane.b32.xlu0 %v163, 91
  %v452 = vpop.permute.xlu0 %451
  %453 = vrot.lane.b32.xlu0 %v164, 91
  %v454 = vpop.permute.xlu0 %453
  %455 = vrot.lane.b32.xlu0 %v165, 91
  %v456 = vpop.permute.xlu0 %455
  %vm457 = vcmask 744448
  %v458 = vsel %vm457, %v442, %v444
  %v459 = vsel %vm457, %v444, %v446
  %v460 = vsel %vm457, %v446, %v448
  %v461 = vsel %vm457, %v448, %v450
  %v462 = vsel %vm457, %v450, %v452
  %v463 = vsel %vm457, %v452, %v454
  %v464 = vsel %vm457, %v454, %v456
  %472 = vst [vmem:[#allocation2 + $0xa8] sm:$0xf] %v458
  %473 = vst [vmem:[#allocation2 + $0xb0] sm:$0xf] %v459
  %474 = vst [vmem:[#allocation2 + $0xb8] sm:$0xf] %v460
  %475 = vst [vmem:[#allocation2 + $0xc0] sm:$0xf] %v461
  %476 = vst [vmem:[#allocation2 + $0xc8] sm:$0xf] %v462
  %477 = vst [vmem:[#allocation2 + $0xd0] sm:$0xf] %v463
  %478 = vst [vmem:[#allocation2 + $0xd8] sm:$0xf] %v464
  %479 = vrot.lane.b32.xlu0 %v158, 90
  %v480 = vpop.permute.xlu0 %479
  %481 = vrot.lane.b32.xlu0 %v159, 90
  %v482 = vpop.permute.xlu0 %481
  %483 = vrot.lane.b32.xlu0 %v160, 90
  %v484 = vpop.permute.xlu0 %483
  %485 = vrot.lane.b32.xlu0 %v161, 90
  %v486 = vpop.permute.xlu0 %485
  %487 = vrot.lane.b32.xlu0 %v162, 90
  %v488 = vpop.permute.xlu0 %487
  %489 = vrot.lane.b32.xlu0 %v163, 90
  %v490 = vpop.permute.xlu0 %489
  %491 = vrot.lane.b32.xlu0 %v164, 90
  %v492 = vpop.permute.xlu0 %491
  %493 = vrot.lane.b32.xlu0 %v165, 90
  %v494 = vpop.permute.xlu0 %493
  %vm495 = vcmask 736256
  %v496 = vsel %vm495, %v480, %v482
  %v497 = vsel %vm495, %v482, %v484
  %v498 = vsel %vm495, %v484, %v486
  %v499 = vsel %vm495, %v486, %v488
  %v500 = vsel %vm495, %v488, %v490
  %v501 = vsel %vm495, %v490, %v492
  %v502 = vsel %vm495, %v492, %v494
  %v505 = vsel %vm237, %v502, %v480
  %v507 = vrot.slane %v496, 4
  %v508 = vrot.slane %v497, 4
  %v509 = vrot.slane %v498, 4
  %v510 = vrot.slane %v499, 4
  %v511 = vrot.slane %v500, 4
  %v512 = vrot.slane %v501, 4
  %v513 = vrot.slane %v505, 4
  %521 = vst [vmem:[#allocation2 + $0xa8] sm:$0xf0] %v507
  %522 = vst [vmem:[#allocation2 + $0xb0] sm:$0xf0] %v508
  %523 = vst [vmem:[#allocation2 + $0xb8] sm:$0xf0] %v509
  %524 = vst [vmem:[#allocation2 + $0xc0] sm:$0xf0] %v510
  %525 = vst [vmem:[#allocation2 + $0xc8] sm:$0xf0] %v511
  %526 = vst [vmem:[#allocation2 + $0xd0] sm:$0xf0] %v512
  %527 = vst [vmem:[#allocation2 + $0xd8] sm:$0xf0] %v513
  %528 = vrot.lane.b32.xlu0 %v158, 89
  %v529 = vpop.permute.xlu0 %528
  %530 = vrot.lane.b32.xlu0 %v159, 89
  %v531 = vpop.permute.xlu0 %530
  %532 = vrot.lane.b32.xlu0 %v160, 89
  %v533 = vpop.permute.xlu0 %532
  %534 = vrot.lane.b32.xlu0 %v161, 89
  %v535 = vpop.permute.xlu0 %534
  %536 = vrot.lane.b32.xlu0 %v162, 89
  %v537 = vpop.permute.xlu0 %536
  %538 = vrot.lane.b32.xlu0 %v163, 89
  %v539 = vpop.permute.xlu0 %538
  %540 = vrot.lane.b32.xlu0 %v164, 89
  %v541 = vpop.permute.xlu0 %540
  %542 = vrot.lane.b32.xlu0 %v165, 89
  %v543 = vpop.permute.xlu0 %542
  %vm544 = vcmask 728064
  %v545 = vsel %vm544, %v529, %v531
  %v546 = vsel %vm544, %v531, %v533
  %v547 = vsel %vm544, %v533, %v535
  %v548 = vsel %vm544, %v535, %v537
  %v549 = vsel %vm544, %v537, %v539
  %v550 = vsel %vm544, %v539, %v541
  %v551 = vsel %vm544, %v541, %v543
  %v560 = vsel %vm293, %v551, %v529
  %562 = vst [vmem:[#allocation2 + $0xe0] sm:$0xf] %v545
  %563 = vst [vmem:[#allocation2 + $0xe8] sm:$0xf] %v546
  %564 = vst [vmem:[#allocation2 + $0xf0] sm:$0xf] %v547
  %565 = vst [vmem:[#allocation2 + $0xf8] sm:$0xf] %v548
  %566 = vst [vmem:[#allocation2 + $0x100] sm:$0xf] %v549
  %567 = vst [vmem:[#allocation2 + $0x108] sm:$0xf] %v550
  %568 = vst [vmem:[#allocation2 + $0x110] sm:$0xf] %v560
  %569 = vrot.lane.b32.xlu0 %v305, 11
  %v570 = vpop.permute.xlu0 %569
  %571 = vrot.lane.b32.xlu0 %v306, 11
  %v572 = vpop.permute.xlu0 %571
  %573 = vrot.lane.b32.xlu0 %v307, 11
  %v574 = vpop.permute.xlu0 %573
  %575 = vrot.lane.b32.xlu0 %v308, 11
  %v576 = vpop.permute.xlu0 %575
  %577 = vrot.lane.b32.xlu0 %v309, 11
  %v578 = vpop.permute.xlu0 %577
  %579 = vrot.lane.b32.xlu0 %v310, 11
  %v580 = vpop.permute.xlu0 %579
  %581 = vrot.lane.b32.xlu0 %v311, 11
  %v582 = vpop.permute.xlu0 %581
  %583 = vrot.lane.b32.xlu0 %v312, 11
  %v584 = vpop.permute.xlu0 %583
  %vm585 = vcmask 89088
  %v586 = vsel %vm585, %v570, %v572
  %v587 = vsel %vm585, %v572, %v574
  %v588 = vsel %vm585, %v574, %v576
  %v589 = vsel %vm585, %v576, %v578
  %v590 = vsel %vm585, %v578, %v580
  %v591 = vsel %vm585, %v580, %v582
  %v592 = vsel %vm585, %v582, %v584
  %600 = vst [vmem:[#allocation2 + $0xe0] sm:$0xf0] %v586
  %601 = vst [vmem:[#allocation2 + $0xe8] sm:$0xf0] %v587
  %602 = vst [vmem:[#allocation2 + $0xf0] sm:$0xf0] %v588
  %603 = vst [vmem:[#allocation2 + $0xf8] sm:$0xf0] %v589
  %604 = vst [vmem:[#allocation2 + $0x100] sm:$0xf0] %v590
  %605 = vst [vmem:[#allocation2 + $0x108] sm:$0xf0] %v591
  %606 = vst [vmem:[#allocation2 + $0x110] sm:$0xf0] %v592
  %607 = vrot.lane.b32.xlu0 %v158, 10
  %v608 = vpop.permute.xlu0 %607
  %609 = vrot.lane.b32.xlu0 %v159, 10
  %v610 = vpop.permute.xlu0 %609
  %611 = vrot.lane.b32.xlu0 %v160, 10
  %v612 = vpop.permute.xlu0 %611
  %613 = vrot.lane.b32.xlu0 %v161, 10
  %v614 = vpop.permute.xlu0 %613
  %615 = vrot.lane.b32.xlu0 %v162, 10
  %v616 = vpop.permute.xlu0 %615
  %617 = vrot.lane.b32.xlu0 %v163, 10
  %v618 = vpop.permute.xlu0 %617
  %619 = vrot.lane.b32.xlu0 %v164, 10
  %v620 = vpop.permute.xlu0 %619
  %621 = vrot.lane.b32.xlu0 %v165, 10
  %v622 = vpop.permute.xlu0 %621
  %vm623 = vcmask 80896
  %v624 = vsel %vm623, %v608, %v610
  %v625 = vsel %vm623, %v610, %v612
  %v626 = vsel %vm623, %v612, %v614
  %v627 = vsel %vm623, %v614, %v616
  %v628 = vsel %vm623, %v616, %v618
  %v629 = vsel %vm623, %v618, %v620
  %v630 = vsel %vm623, %v620, %v622
  %v639 = vsel %vm237, %v630, %v608
  %641 = vst [vmem:[#allocation2 + $0x118] sm:$0xf] %v624
  %642 = vst [vmem:[#allocation2 + $0x120] sm:$0xf] %v625
  %643 = vst [vmem:[#allocation2 + $0x128] sm:$0xf] %v626
  %644 = vst [vmem:[#allocation2 + $0x130] sm:$0xf] %v627
  %645 = vst [vmem:[#allocation2 + $0x138] sm:$0xf] %v628
  %646 = vst [vmem:[#allocation2 + $0x140] sm:$0xf] %v629
  %647 = vst [vmem:[#allocation2 + $0x148] sm:$0xf] %v639
  %648 = vrot.lane.b32.xlu0 %v158, 9
  %v649 = vpop.permute.xlu0 %648
  %650 = vrot.lane.b32.xlu0 %v159, 9
  %v651 = vpop.permute.xlu0 %650
  %652 = vrot.lane.b32.xlu0 %v160, 9
  %v653 = vpop.permute.xlu0 %652
  %654 = vrot.lane.b32.xlu0 %v161, 9
  %v655 = vpop.permute.xlu0 %654
  %656 = vrot.lane.b32.xlu0 %v162, 9
  %v657 = vpop.permute.xlu0 %656
  %658 = vrot.lane.b32.xlu0 %v163, 9
  %v659 = vpop.permute.xlu0 %658
  %660 = vrot.lane.b32.xlu0 %v164, 9
  %v661 = vpop.permute.xlu0 %660
  %662 = vrot.lane.b32.xlu0 %v165, 9
  %v663 = vpop.permute.xlu0 %662
  %vm664 = vcmask 72704
  %v665 = vsel %vm664, %v649, %v651
  %v666 = vsel %vm664, %v651, %v653
  %v667 = vsel %vm664, %v653, %v655
  %v668 = vsel %vm664, %v655, %v657
  %v669 = vsel %vm664, %v657, %v659
  %v670 = vsel %vm664, %v659, %v661
  %v671 = vsel %vm664, %v661, %v663
  %v674 = vsel %vm293, %v671, %v649
  %v676 = vrot.slane %v665, 4
  %v677 = vrot.slane %v666, 4
  %v678 = vrot.slane %v667, 4
  %v679 = vrot.slane %v668, 4
  %v680 = vrot.slane %v669, 4
  %v681 = vrot.slane %v670, 4
  %v682 = vrot.slane %v674, 4
  %690 = vst [vmem:[#allocation2 + $0x118] sm:$0xf0] %v676
  %691 = vst [vmem:[#allocation2 + $0x120] sm:$0xf0] %v677
  %692 = vst [vmem:[#allocation2 + $0x128] sm:$0xf0] %v678
  %693 = vst [vmem:[#allocation2 + $0x130] sm:$0xf0] %v679
  %694 = vst [vmem:[#allocation2 + $0x138] sm:$0xf0] %v680
  %695 = vst [vmem:[#allocation2 + $0x140] sm:$0xf0] %v681
  %696 = vst [vmem:[#allocation2 + $0x148] sm:$0xf0] %v682
  %697 = vrot.lane.b32.xlu0 %v158, 1
  %v698 = vpop.permute.xlu0 %697
  %699 = vrot.lane.b32.xlu0 %v159, 1
  %v700 = vpop.permute.xlu0 %699
  %701 = vrot.lane.b32.xlu0 %v160, 1
  %v702 = vpop.permute.xlu0 %701
  %703 = vrot.lane.b32.xlu0 %v161, 1
  %v704 = vpop.permute.xlu0 %703
  %705 = vrot.lane.b32.xlu0 %v162, 1
  %v706 = vpop.permute.xlu0 %705
  %707 = vrot.lane.b32.xlu0 %v163, 1
  %v708 = vpop.permute.xlu0 %707
  %709 = vrot.lane.b32.xlu0 %v164, 1
  %v710 = vpop.permute.xlu0 %709
  %711 = vrot.lane.b32.xlu0 %v165, 1
  %v712 = vpop.permute.xlu0 %711
  %vm713 = vcmask 7168
  %v714 = vsel %vm713, %v698, %v700
  %v715 = vsel %vm713, %v700, %v702
  %v716 = vsel %vm713, %v702, %v704
  %v717 = vsel %vm713, %v704, %v706
  %v718 = vsel %vm713, %v706, %v708
  %v719 = vsel %vm713, %v708, %v710
  %v720 = vsel %vm713, %v710, %v712
  %728 = vst [vmem:[#allocation2 + $0x150] sm:$0xf] %v714
  %729 = vst [vmem:[#allocation2 + $0x158] sm:$0xf] %v715
  %730 = vst [vmem:[#allocation2 + $0x160] sm:$0xf] %v716
  %731 = vst [vmem:[#allocation2 + $0x168] sm:$0xf] %v717
  %732 = vst [vmem:[#allocation2 + $0x170] sm:$0xf] %v718
  %733 = vst [vmem:[#allocation2 + $0x178] sm:$0xf] %v719
  %734 = vst [vmem:[#allocation2 + $0x180] sm:$0xf] %v720
  %v737 = vsel %vm237, %v165, %v158
  %v739 = vrot.slane %v737, 4
  %747 = vst [vmem:[#allocation2 + $0x150] sm:$0xf0] %v306
  %748 = vst [vmem:[#allocation2 + $0x158] sm:$0xf0] %v307
  %749 = vst [vmem:[#allocation2 + $0x160] sm:$0xf0] %v308
  %750 = vst [vmem:[#allocation2 + $0x168] sm:$0xf0] %v309
  %751 = vst [vmem:[#allocation2 + $0x170] sm:$0xf0] %v310
  %752 = vst [vmem:[#allocation2 + $0x178] sm:$0xf0] %v311
  %753 = vst [vmem:[#allocation2 + $0x180] sm:$0xf0] %v739
  %754 = vrot.lane.b32.xlu0 %v159, 127
  %v755 = vpop.permute.xlu0 %754
  %756 = vrot.lane.b32.xlu0 %v160, 127
  %v757 = vpop.permute.xlu0 %756
  %758 = vrot.lane.b32.xlu0 %v161, 127
  %v759 = vpop.permute.xlu0 %758
  %760 = vrot.lane.b32.xlu0 %v162, 127
  %v761 = vpop.permute.xlu0 %760
  %762 = vrot.lane.b32.xlu0 %v163, 127
  %v763 = vpop.permute.xlu0 %762
  %764 = vrot.lane.b32.xlu0 %v164, 127
  %v765 = vpop.permute.xlu0 %764
  %766 = vrot.lane.b32.xlu0 %v165, 127
  %v767 = vpop.permute.xlu0 %766
  %vm768 = vcmask 1039360
  %v769 = vsel %vm768, %v755, %v757
  %v770 = vsel %vm768, %v757, %v759
  %v771 = vsel %vm768, %v759, %v761
  %v772 = vsel %vm768, %v761, %v763
  %v773 = vsel %vm768, %v763, %v765
  %v774 = vsel %vm768, %v765, %v767
  %781 = vrot.lane.b32.xlu0 %v158, 127
  %v782 = vpop.permute.xlu0 %781
  %v783 = vsel %vm768, %v782, %v755
  %v786 = vsel %vm293, %v767, %v783
  %788 = vst [vmem:[#allocation2 + $0x188] sm:$0xf] %v769
  %789 = vst [vmem:[#allocation2 + $0x190] sm:$0xf] %v770
  %790 = vst [vmem:[#allocation2 + $0x198] sm:$0xf] %v771
  %791 = vst [vmem:[#allocation2 + $0x1a0] sm:$0xf] %v772
  %792 = vst [vmem:[#allocation2 + $0x1a8] sm:$0xf] %v773
  %793 = vst [vmem:[#allocation2 + $0x1b0] sm:$0xf] %v774
  %794 = vst [vmem:[#allocation2 + $0x1b8] sm:$0xf] %v786
  %v796 = vrot.slane %v166, 4
  %797 = vrot.lane.b32.xlu0 %v306, 119
  %v798 = vpop.permute.xlu0 %797
  %799 = vrot.lane.b32.xlu0 %v307, 119
  %v800 = vpop.permute.xlu0 %799
  %801 = vrot.lane.b32.xlu0 %v308, 119
  %v802 = vpop.permute.xlu0 %801
  %803 = vrot.lane.b32.xlu0 %v309, 119
  %v804 = vpop.permute.xlu0 %803
  %805 = vrot.lane.b32.xlu0 %v310, 119
  %v806 = vpop.permute.xlu0 %805
  %807 = vrot.lane.b32.xlu0 %v311, 119
  %v808 = vpop.permute.xlu0 %807
  %809 = vrot.lane.b32.xlu0 %v312, 119
  %v810 = vpop.permute.xlu0 %809
  %811 = vrot.lane.b32.xlu0 %v796, 119
  %v812 = vpop.permute.xlu0 %811
  %vm813 = vcmask 973824
  %v814 = vsel %vm813, %v798, %v800
  %v815 = vsel %vm813, %v800, %v802
  %v816 = vsel %vm813, %v802, %v804
  %v817 = vsel %vm813, %v804, %v806
  %v818 = vsel %vm813, %v806, %v808
  %v819 = vsel %vm813, %v808, %v810
  %v820 = vsel %vm813, %v810, %v812
  %828 = vst [vmem:[#allocation2 + $0x188] sm:$0xf0] %v814
  %829 = vst [vmem:[#allocation2 + $0x190] sm:$0xf0] %v815
  %830 = vst [vmem:[#allocation2 + $0x198] sm:$0xf0] %v816
  %831 = vst [vmem:[#allocation2 + $0x1a0] sm:$0xf0] %v817
  %832 = vst [vmem:[#allocation2 + $0x1a8] sm:$0xf0] %v818
  %833 = vst [vmem:[#allocation2 + $0x1b0] sm:$0xf0] %v819
  %834 = vst [vmem:[#allocation2 + $0x1b8] sm:$0xf0] %v820
  %835 = vrot.lane.b32.xlu0 %v159, 118
  %v836 = vpop.permute.xlu0 %835
  %837 = vrot.lane.b32.xlu0 %v160, 118
  %v838 = vpop.permute.xlu0 %837
  %839 = vrot.lane.b32.xlu0 %v161, 118
  %v840 = vpop.permute.xlu0 %839
  %841 = vrot.lane.b32.xlu0 %v162, 118
  %v842 = vpop.permute.xlu0 %841
  %843 = vrot.lane.b32.xlu0 %v163, 118
  %v844 = vpop.permute.xlu0 %843
  %845 = vrot.lane.b32.xlu0 %v164, 118
  %v846 = vpop.permute.xlu0 %845
  %847 = vrot.lane.b32.xlu0 %v165, 118
  %v848 = vpop.permute.xlu0 %847
  %849 = vrot.lane.b32.xlu0 %v166, 118
  %v850 = vpop.permute.xlu0 %849
  %vm851 = vcmask 965632
  %v852 = vsel %vm851, %v836, %v838
  %v853 = vsel %vm851, %v838, %v840
  %v854 = vsel %vm851, %v840, %v842
  %v855 = vsel %vm851, %v842, %v844
  %v856 = vsel %vm851, %v844, %v846
  %v857 = vsel %vm851, %v846, %v848
  %v858 = vsel %vm851, %v848, %v850
  %v867 = vsel %vm237, %v858, %v836
  %869 = vst [vmem:[#allocation2 + $0x1c0] sm:$0xf] %v852
  %870 = vst [vmem:[#allocation2 + $0x1c8] sm:$0xf] %v853
  %871 = vst [vmem:[#allocation2 + $0x1d0] sm:$0xf] %v854
  %872 = vst [vmem:[#allocation2 + $0x1d8] sm:$0xf] %v855
  %873 = vst [vmem:[#allocation2 + $0x1e0] sm:$0xf] %v856
  %874 = vst [vmem:[#allocation2 + $0x1e8] sm:$0xf] %v857
  %875 = vst [vmem:[#allocation2 + $0x1f0] sm:$0xf] %v867
  %876 = vrot.lane.b32.xlu0 %v159, 117
  %v877 = vpop.permute.xlu0 %876
  %878 = vrot.lane.b32.xlu0 %v160, 117
  %v879 = vpop.permute.xlu0 %878
  %880 = vrot.lane.b32.xlu0 %v161, 117
  %v881 = vpop.permute.xlu0 %880
  %882 = vrot.lane.b32.xlu0 %v162, 117
  %v883 = vpop.permute.xlu0 %882
  %884 = vrot.lane.b32.xlu0 %v163, 117
  %v885 = vpop.permute.xlu0 %884
  %886 = vrot.lane.b32.xlu0 %v164, 117
  %v887 = vpop.permute.xlu0 %886
  %888 = vrot.lane.b32.xlu0 %v165, 117
  %v889 = vpop.permute.xlu0 %888
  %890 = vrot.lane.b32.xlu0 %v166, 117
  %v891 = vpop.permute.xlu0 %890
  %vm892 = vcmask 957440
  %v893 = vsel %vm892, %v877, %v879
  %v894 = vsel %vm892, %v879, %v881
  %v895 = vsel %vm892, %v881, %v883
  %v896 = vsel %vm892, %v883, %v885
  %v897 = vsel %vm892, %v885, %v887
  %v898 = vsel %vm892, %v887, %v889
  %v899 = vsel %vm892, %v889, %v891
  %v902 = vsel %vm293, %v899, %v877
  %v904 = vrot.slane %v893, 4
  %v905 = vrot.slane %v894, 4
  %v906 = vrot.slane %v895, 4
  %v907 = vrot.slane %v896, 4
  %v908 = vrot.slane %v897, 4
  %v909 = vrot.slane %v898, 4
  %v910 = vrot.slane %v902, 4
  %918 = vst [vmem:[#allocation2 + $0x1c0] sm:$0xf0] %v904
  %919 = vst [vmem:[#allocation2 + $0x1c8] sm:$0xf0] %v905
  %920 = vst [vmem:[#allocation2 + $0x1d0] sm:$0xf0] %v906
  %921 = vst [vmem:[#allocation2 + $0x1d8] sm:$0xf0] %v907
  %922 = vst [vmem:[#allocation2 + $0x1e0] sm:$0xf0] %v908
  %923 = vst [vmem:[#allocation2 + $0x1e8] sm:$0xf0] %v909
  %924 = vst [vmem:[#allocation2 + $0x1f0] sm:$0xf0] %v910
  %925 = vrot.lane.b32.xlu0 %v159, 39
  %v926 = vpop.permute.xlu0 %925
  %927 = vrot.lane.b32.xlu0 %v160, 39
  %v928 = vpop.permute.xlu0 %927
  %929 = vrot.lane.b32.xlu0 %v161, 39
  %v930 = vpop.permute.xlu0 %929
  %931 = vrot.lane.b32.xlu0 %v162, 39
  %v932 = vpop.permute.xlu0 %931
  %933 = vrot.lane.b32.xlu0 %v163, 39
  %v934 = vpop.permute.xlu0 %933
  %935 = vrot.lane.b32.xlu0 %v164, 39
  %v936 = vpop.permute.xlu0 %935
  %937 = vrot.lane.b32.xlu0 %v165, 39
  %v938 = vpop.permute.xlu0 %937
  %939 = vrot.lane.b32.xlu0 %v166, 39
  %v940 = vpop.permute.xlu0 %939
  %vm941 = vcmask 318464
  %v942 = vsel %vm941, %v926, %v928
  %v943 = vsel %vm941, %v928, %v930
  %v944 = vsel %vm941, %v930, %v932
  %v945 = vsel %vm941, %v932, %v934
  %v946 = vsel %vm941, %v934, %v936
  %v947 = vsel %vm941, %v936, %v938
  %v948 = vsel %vm941, %v938, %v940
  %956 = vst [vmem:[#allocation2 + $0x1f8] sm:$0xf] %v942
  %957 = vst [vmem:[#allocation2 + $0x200] sm:$0xf] %v943
  %958 = vst [vmem:[#allocation2 + $0x208] sm:$0xf] %v944
  %959 = vst [vmem:[#allocation2 + $0x210] sm:$0xf] %v945
  %960 = vst [vmem:[#allocation2 + $0x218] sm:$0xf] %v946
  %961 = vst [vmem:[#allocation2 + $0x220] sm:$0xf] %v947
  %962 = vst [vmem:[#allocation2 + $0x228] sm:$0xf] %v948
  %963 = vrot.lane.b32.xlu0 %v159, 38
  %v964 = vpop.permute.xlu0 %963
  %965 = vrot.lane.b32.xlu0 %v160, 38
  %v966 = vpop.permute.xlu0 %965
  %967 = vrot.lane.b32.xlu0 %v161, 38
  %v968 = vpop.permute.xlu0 %967
  %969 = vrot.lane.b32.xlu0 %v162, 38
  %v970 = vpop.permute.xlu0 %969
  %971 = vrot.lane.b32.xlu0 %v163, 38
  %v972 = vpop.permute.xlu0 %971
  %973 = vrot.lane.b32.xlu0 %v164, 38
  %v974 = vpop.permute.xlu0 %973
  %975 = vrot.lane.b32.xlu0 %v165, 38
  %v976 = vpop.permute.xlu0 %975
  %977 = vrot.lane.b32.xlu0 %v166, 38
  %v978 = vpop.permute.xlu0 %977
  %vm979 = vcmask 310272
  %v980 = vsel %vm979, %v964, %v966
  %v981 = vsel %vm979, %v966, %v968
  %v982 = vsel %vm979, %v968, %v970
  %v983 = vsel %vm979, %v970, %v972
  %v984 = vsel %vm979, %v972, %v974
  %v985 = vsel %vm979, %v974, %v976
  %v986 = vsel %vm979, %v976, %v978
  %v989 = vsel %vm237, %v986, %v964
  %v991 = vrot.slane %v980, 4
  %v992 = vrot.slane %v981, 4
  %v993 = vrot.slane %v982, 4
  %v994 = vrot.slane %v983, 4
  %v995 = vrot.slane %v984, 4
  %v996 = vrot.slane %v985, 4
  %v997 = vrot.slane %v989, 4
  %1005 = vst [vmem:[#allocation2 + $0x1f8] sm:$0xf0] %v991
  %1006 = vst [vmem:[#allocation2 + $0x200] sm:$0xf0] %v992
  %1007 = vst [vmem:[#allocation2 + $0x208] sm:$0xf0] %v993
  %1008 = vst [vmem:[#allocation2 + $0x210] sm:$0xf0] %v994
  %1009 = vst [vmem:[#allocation2 + $0x218] sm:$0xf0] %v995
  %1010 = vst [vmem:[#allocation2 + $0x220] sm:$0xf0] %v996
  %1011 = vst [vmem:[#allocation2 + $0x228] sm:$0xf0] %v997
  %1012 = vrot.lane.b32.xlu0 %v159, 37
  %v1013 = vpop.permute.xlu0 %1012
  %1014 = vrot.lane.b32.xlu0 %v160, 37
  %v1015 = vpop.permute.xlu0 %1014
  %1016 = vrot.lane.b32.xlu0 %v161, 37
  %v1017 = vpop.permute.xlu0 %1016
  %1018 = vrot.lane.b32.xlu0 %v162, 37
  %v1019 = vpop.permute.xlu0 %1018
  %1020 = vrot.lane.b32.xlu0 %v163, 37
  %v1021 = vpop.permute.xlu0 %1020
  %1022 = vrot.lane.b32.xlu0 %v164, 37
  %v1023 = vpop.permute.xlu0 %1022
  %1024 = vrot.lane.b32.xlu0 %v165, 37
  %v1025 = vpop.permute.xlu0 %1024
  %1026 = vrot.lane.b32.xlu0 %v166, 37
  %v1027 = vpop.permute.xlu0 %1026
  %vm1028 = vcmask 302080
  %v1029 = vsel %vm1028, %v1013, %v1015
  %v1030 = vsel %vm1028, %v1015, %v1017
  %v1031 = vsel %vm1028, %v1017, %v1019
  %v1032 = vsel %vm1028, %v1019, %v1021
  %v1033 = vsel %vm1028, %v1021, %v1023
  %v1034 = vsel %vm1028, %v1023, %v1025
  %v1035 = vsel %vm1028, %v1025, %v1027
  %v1044 = vsel %vm293, %v1035, %v1013
  %1046 = vst [vmem:[#allocation2 + $0x230] sm:$0xf] %v1029
  %1047 = vst [vmem:[#allocation2 + $0x238] sm:$0xf] %v1030
  %1048 = vst [vmem:[#allocation2 + $0x240] sm:$0xf] %v1031
  %1049 = vst [vmem:[#allocation2 + $0x248] sm:$0xf] %v1032
  %1050 = vst [vmem:[#allocation2 + $0x250] sm:$0xf] %v1033
  %1051 = vst [vmem:[#allocation2 + $0x258] sm:$0xf] %v1034
  %1052 = vst [vmem:[#allocation2 + $0x260] sm:$0xf] %v1044
  %1053 = vrot.lane.b32.xlu0 %v306, 29
  %v1054 = vpop.permute.xlu0 %1053
  %1055 = vrot.lane.b32.xlu0 %v307, 29
  %v1056 = vpop.permute.xlu0 %1055
  %1057 = vrot.lane.b32.xlu0 %v308, 29
  %v1058 = vpop.permute.xlu0 %1057
  %1059 = vrot.lane.b32.xlu0 %v309, 29
  %v1060 = vpop.permute.xlu0 %1059
  %1061 = vrot.lane.b32.xlu0 %v310, 29
  %v1062 = vpop.permute.xlu0 %1061
  %1063 = vrot.lane.b32.xlu0 %v311, 29
  %v1064 = vpop.permute.xlu0 %1063
  %1065 = vrot.lane.b32.xlu0 %v312, 29
  %v1066 = vpop.permute.xlu0 %1065
  %1067 = vrot.lane.b32.xlu0 %v796, 29
  %v1068 = vpop.permute.xlu0 %1067
  %vm1069 = vcmask 236544
  %v1070 = vsel %vm1069, %v1054, %v1056
  %v1071 = vsel %vm1069, %v1056, %v1058
  %v1072 = vsel %vm1069, %v1058, %v1060
  %v1073 = vsel %vm1069, %v1060, %v1062
  %v1074 = vsel %vm1069, %v1062, %v1064
  %v1075 = vsel %vm1069, %v1064, %v1066
  %v1076 = vsel %vm1069, %v1066, %v1068
  %1084 = vst [vmem:[#allocation2 + $0x230] sm:$0xf0] %v1070
  %1085 = vst [vmem:[#allocation2 + $0x238] sm:$0xf0] %v1071
  %1086 = vst [vmem:[#allocation2 + $0x240] sm:$0xf0] %v1072
  %1087 = vst [vmem:[#allocation2 + $0x248] sm:$0xf0] %v1073
  %1088 = vst [vmem:[#allocation2 + $0x250] sm:$0xf0] %v1074
  %1089 = vst [vmem:[#allocation2 + $0x258] sm:$0xf0] %v1075
  %1090 = vst [vmem:[#allocation2 + $0x260] sm:$0xf0] %v1076
  %1091 = vrot.lane.b32.xlu0 %v159, 28
  %v1092 = vpop.permute.xlu0 %1091
  %1093 = vrot.lane.b32.xlu0 %v160, 28
  %v1094 = vpop.permute.xlu0 %1093
  %1095 = vrot.lane.b32.xlu0 %v161, 28
  %v1096 = vpop.permute.xlu0 %1095
  %1097 = vrot.lane.b32.xlu0 %v162, 28
  %v1098 = vpop.permute.xlu0 %1097
  %1099 = vrot.lane.b32.xlu0 %v163, 28
  %v1100 = vpop.permute.xlu0 %1099
  %1101 = vrot.lane.b32.xlu0 %v164, 28
  %v1102 = vpop.permute.xlu0 %1101
  %1103 = vrot.lane.b32.xlu0 %v165, 28
  %v1104 = vpop.permute.xlu0 %1103
  %1105 = vrot.lane.b32.xlu0 %v166, 28
  %v1106 = vpop.permute.xlu0 %1105
  %vm1107 = vcmask 228352
  %v1108 = vsel %vm1107, %v1092, %v1094
  %v1109 = vsel %vm1107, %v1094, %v1096
  %v1110 = vsel %vm1107, %v1096, %v1098
  %v1111 = vsel %vm1107, %v1098, %v1100
  %v1112 = vsel %vm1107, %v1100, %v1102
  %v1113 = vsel %vm1107, %v1102, %v1104
  %v1114 = vsel %vm1107, %v1104, %v1106
  %v1123 = vsel %vm237, %v1114, %v1092
  %1125 = vst [vmem:[#allocation2 + $0x268] sm:$0xf] %v1108
  %1126 = vst [vmem:[#allocation2 + $0x270] sm:$0xf] %v1109
  %1127 = vst [vmem:[#allocation2 + $0x278] sm:$0xf] %v1110
  %1128 = vst [vmem:[#allocation2 + $0x280] sm:$0xf] %v1111
  %1129 = vst [vmem:[#allocation2 + $0x288] sm:$0xf] %v1112
  %1130 = vst [vmem:[#allocation2 + $0x290] sm:$0xf] %v1113
  %1131 = vst [vmem:[#allocation2 + $0x298] sm:$0xf] %v1123
  %1132 = vrot.lane.b32.xlu0 %v159, 27
  %v1133 = vpop.permute.xlu0 %1132
  %1134 = vrot.lane.b32.xlu0 %v160, 27
  %v1135 = vpop.permute.xlu0 %1134
  %1136 = vrot.lane.b32.xlu0 %v161, 27
  %v1137 = vpop.permute.xlu0 %1136
  %1138 = vrot.lane.b32.xlu0 %v162, 27
  %v1139 = vpop.permute.xlu0 %1138
  %1140 = vrot.lane.b32.xlu0 %v163, 27
  %v1141 = vpop.permute.xlu0 %1140
  %1142 = vrot.lane.b32.xlu0 %v164, 27
  %v1143 = vpop.permute.xlu0 %1142
  %1144 = vrot.lane.b32.xlu0 %v165, 27
  %v1145 = vpop.permute.xlu0 %1144
  %1146 = vrot.lane.b32.xlu0 %v166, 27
  %v1147 = vpop.permute.xlu0 %1146
  %vm1148 = vcmask 220160
  %v1149 = vsel %vm1148, %v1133, %v1135
  %v1150 = vsel %vm1148, %v1135, %v1137
  %v1151 = vsel %vm1148, %v1137, %v1139
  %v1152 = vsel %vm1148, %v1139, %v1141
  %v1153 = vsel %vm1148, %v1141, %v1143
  %v1154 = vsel %vm1148, %v1143, %v1145
  %v1155 = vsel %vm1148, %v1145, %v1147
  %v1158 = vsel %vm293, %v1155, %v1133
  %v1160 = vrot.slane %v1149, 4
  %v1161 = vrot.slane %v1150, 4
  %v1162 = vrot.slane %v1151, 4
  %v1163 = vrot.slane %v1152, 4
  %v1164 = vrot.slane %v1153, 4
  %v1165 = vrot.slane %v1154, 4
  %v1166 = vrot.slane %v1158, 4
  %1174 = vst [vmem:[#allocation2 + $0x268] sm:$0xf0] %v1160
  %1175 = vst [vmem:[#allocation2 + $0x270] sm:$0xf0] %v1161
  %1176 = vst [vmem:[#allocation2 + $0x278] sm:$0xf0] %v1162
  %1177 = vst [vmem:[#allocation2 + $0x280] sm:$0xf0] %v1163
  %1178 = vst [vmem:[#allocation2 + $0x288] sm:$0xf0] %v1164
  %1179 = vst [vmem:[#allocation2 + $0x290] sm:$0xf0] %v1165
  %1180 = vst [vmem:[#allocation2 + $0x298] sm:$0xf0] %v1166
  %1181 = vrot.lane.b32.xlu0 %v159, 19
  %v1182 = vpop.permute.xlu0 %1181
  %1183 = vrot.lane.b32.xlu0 %v160, 19
  %v1184 = vpop.permute.xlu0 %1183
  %1185 = vrot.lane.b32.xlu0 %v161, 19
  %v1186 = vpop.permute.xlu0 %1185
  %1187 = vrot.lane.b32.xlu0 %v162, 19
  %v1188 = vpop.permute.xlu0 %1187
  %1189 = vrot.lane.b32.xlu0 %v163, 19
  %v1190 = vpop.permute.xlu0 %1189
  %1191 = vrot.lane.b32.xlu0 %v164, 19
  %v1192 = vpop.permute.xlu0 %1191
  %1193 = vrot.lane.b32.xlu0 %v165, 19
  %v1194 = vpop.permute.xlu0 %1193
  %1195 = vrot.lane.b32.xlu0 %v166, 19
  %v1196 = vpop.permute.xlu0 %1195
  %vm1197 = vcmask 154624
  %v1198 = vsel %vm1197, %v1182, %v1184
  %v1199 = vsel %vm1197, %v1184, %v1186
  %v1200 = vsel %vm1197, %v1186, %v1188
  %v1201 = vsel %vm1197, %v1188, %v1190
  %v1202 = vsel %vm1197, %v1190, %v1192
  %v1203 = vsel %vm1197, %v1192, %v1194
  %v1204 = vsel %vm1197, %v1194, %v1196
  %1212 = vst [vmem:[#allocation2 + $0x2a0] sm:$0xf] %v1198
  %1213 = vst [vmem:[#allocation2 + $0x2a8] sm:$0xf] %v1199
  %1214 = vst [vmem:[#allocation2 + $0x2b0] sm:$0xf] %v1200
  %1215 = vst [vmem:[#allocation2 + $0x2b8] sm:$0xf] %v1201
  %1216 = vst [vmem:[#allocation2 + $0x2c0] sm:$0xf] %v1202
  %1217 = vst [vmem:[#allocation2 + $0x2c8] sm:$0xf] %v1203
  %1218 = vst [vmem:[#allocation2 + $0x2d0] sm:$0xf] %v1204
  %1219 = vrot.lane.b32.xlu0 %v159, 18
  %v1220 = vpop.permute.xlu0 %1219
  %1221 = vrot.lane.b32.xlu0 %v160, 18
  %v1222 = vpop.permute.xlu0 %1221
  %1223 = vrot.lane.b32.xlu0 %v161, 18
  %v1224 = vpop.permute.xlu0 %1223
  %1225 = vrot.lane.b32.xlu0 %v162, 18
  %v1226 = vpop.permute.xlu0 %1225
  %1227 = vrot.lane.b32.xlu0 %v163, 18
  %v1228 = vpop.permute.xlu0 %1227
  %1229 = vrot.lane.b32.xlu0 %v164, 18
  %v1230 = vpop.permute.xlu0 %1229
  %1231 = vrot.lane.b32.xlu0 %v165, 18
  %v1232 = vpop.permute.xlu0 %1231
  %1233 = vrot.lane.b32.xlu0 %v166, 18
  %v1234 = vpop.permute.xlu0 %1233
  %vm1235 = vcmask 146432
  %v1236 = vsel %vm1235, %v1220, %v1222
  %v1237 = vsel %vm1235, %v1222, %v1224
  %v1238 = vsel %vm1235, %v1224, %v1226
  %v1239 = vsel %vm1235, %v1226, %v1228
  %v1240 = vsel %vm1235, %v1228, %v1230
  %v1241 = vsel %vm1235, %v1230, %v1232
  %v1242 = vsel %vm1235, %v1232, %v1234
  %v1245 = vsel %vm237, %v1242, %v1220
  %v1247 = vrot.slane %v1236, 4
  %v1248 = vrot.slane %v1237, 4
  %v1249 = vrot.slane %v1238, 4
  %v1250 = vrot.slane %v1239, 4
  %v1251 = vrot.slane %v1240, 4
  %v1252 = vrot.slane %v1241, 4
  %v1253 = vrot.slane %v1245, 4
  %1261 = vst [vmem:[#allocation2 + $0x2a0] sm:$0xf0] %v1247
  %1262 = vst [vmem:[#allocation2 + $0x2a8] sm:$0xf0] %v1248
  %1263 = vst [vmem:[#allocation2 + $0x2b0] sm:$0xf0] %v1249
  %1264 = vst [vmem:[#allocation2 + $0x2b8] sm:$0xf0] %v1250
  %1265 = vst [vmem:[#allocation2 + $0x2c0] sm:$0xf0] %v1251
  %1266 = vst [vmem:[#allocation2 + $0x2c8] sm:$0xf0] %v1252
  %1267 = vst [vmem:[#allocation2 + $0x2d0] sm:$0xf0] %v1253
  %1268 = vrot.lane.b32.xlu0 %v159, 17
  %v1269 = vpop.permute.xlu0 %1268
  %1270 = vrot.lane.b32.xlu0 %v160, 17
  %v1271 = vpop.permute.xlu0 %1270
  %1272 = vrot.lane.b32.xlu0 %v161, 17
  %v1273 = vpop.permute.xlu0 %1272
  %1274 = vrot.lane.b32.xlu0 %v162, 17
  %v1275 = vpop.permute.xlu0 %1274
  %1276 = vrot.lane.b32.xlu0 %v163, 17
  %v1277 = vpop.permute.xlu0 %1276
  %1278 = vrot.lane.b32.xlu0 %v164, 17
  %v1279 = vpop.permute.xlu0 %1278
  %1280 = vrot.lane.b32.xlu0 %v165, 17
  %v1281 = vpop.permute.xlu0 %1280
  %1282 = vrot.lane.b32.xlu0 %v166, 17
  %v1283 = vpop.permute.xlu0 %1282
  %vm1284 = vcmask 138240
  %v1285 = vsel %vm1284, %v1269, %v1271
  %v1286 = vsel %vm1284, %v1271, %v1273
  %v1287 = vsel %vm1284, %v1273, %v1275
  %v1288 = vsel %vm1284, %v1275, %v1277
  %v1289 = vsel %vm1284, %v1277, %v1279
  %v1290 = vsel %vm1284, %v1279, %v1281
  %v1291 = vsel %vm1284, %v1281, %v1283
  %v1300 = vsel %vm293, %v1291, %v1269
  %1302 = vst [vmem:[#allocation2 + $0x2d8] sm:$0xf] %v1285
  %1303 = vst [vmem:[#allocation2 + $0x2e0] sm:$0xf] %v1286
  %1304 = vst [vmem:[#allocation2 + $0x2e8] sm:$0xf] %v1287
  %1305 = vst [vmem:[#allocation2 + $0x2f0] sm:$0xf] %v1288
  %1306 = vst [vmem:[#allocation2 + $0x2f8] sm:$0xf] %v1289
  %1307 = vst [vmem:[#allocation2 + $0x300] sm:$0xf] %v1290
  %1308 = vst [vmem:[#allocation2 + $0x308] sm:$0xf] %v1300
  %v1309 = vld [vmem:[%s4] sm:$0xff]
  %v1310 = vld [vmem:[#allocation2] sm:$0xff]
  %v1311 = vld [vmem:[#allocation2 + $0x8] sm:$0xff]
  %v1312 = vld [vmem:[#allocation2 + $0x10] sm:$0xff]
  %v1313 = vld [vmem:[#allocation2 + $0x18] sm:$0xff]
  %v1314 = vld [vmem:[#allocation2 + $0x20] sm:$0xff]
  %v1315 = vld [vmem:[#allocation2 + $0x28] sm:$0xff]
  %v1316 = vld [vmem:[#allocation2 + $0x30] sm:$0xff]
  %v1317 = vld [vmem:[#allocation2 + $0x38] sm:$0xff]
  %v1318 = vld [vmem:[#allocation2 + $0x40] sm:$0xff]
  %v1319 = vld [vmem:[#allocation2 + $0x48] sm:$0xff]
  %v1320 = vld [vmem:[#allocation2 + $0x50] sm:$0xff]
  %v1321 = vld [vmem:[#allocation2 + $0x58] sm:$0xff]
  %v1322 = vld [vmem:[#allocation2 + $0x60] sm:$0xff]
  %v1323 = vld [vmem:[#allocation2 + $0x68] sm:$0xff]
  %v1324 = vld [vmem:[#allocation2 + $0x70] sm:$0xff]
  %v1325 = vld [vmem:[#allocation2 + $0x78] sm:$0xff]
  %v1326 = vld [vmem:[#allocation2 + $0x80] sm:$0xff]
  %v1327 = vld [vmem:[#allocation2 + $0x88] sm:$0xff]
  %v1328 = vld [vmem:[#allocation2 + $0x90] sm:$0xff]
  %v1329 = vld [vmem:[#allocation2 + $0x98] sm:$0xff]
  %v1330 = vld [vmem:[#allocation2 + $0xa0] sm:$0xff]
  %v1331 = vld [vmem:[#allocation2 + $0xa8] sm:$0xff]
  %v1332 = vld [vmem:[#allocation2 + $0xb0] sm:$0xff]
  %v1333 = vld [vmem:[#allocation2 + $0xb8] sm:$0xff]
  %v1334 = vld [vmem:[#allocation2 + $0xc0] sm:$0xff]
  %v1335 = vld [vmem:[#allocation2 + $0xc8] sm:$0xff]
  %v1336 = vld [vmem:[#allocation2 + $0xd0] sm:$0xff]
  %v1337 = vld [vmem:[#allocation2 + $0xd8] sm:$0xff]
  %v1338 = vld [vmem:[#allocation2 + $0xe0] sm:$0xff]
  %v1339 = vld [vmem:[#allocation2 + $0xe8] sm:$0xff]
  %v1340 = vld [vmem:[#allocation2 + $0xf0] sm:$0xff]
  %v1341 = vld [vmem:[#allocation2 + $0xf8] sm:$0xff]
  %v1342 = vld [vmem:[#allocation2 + $0x100] sm:$0xff]
  %v1343 = vld [vmem:[#allocation2 + $0x108] sm:$0xff]
  %v1344 = vld [vmem:[#allocation2 + $0x110] sm:$0xff]
  %v1345 = vld [vmem:[#allocation2 + $0x118] sm:$0xff]
  %v1346 = vld [vmem:[#allocation2 + $0x120] sm:$0xff]
  %v1347 = vld [vmem:[#allocation2 + $0x128] sm:$0xff]
  %v1348 = vld [vmem:[#allocation2 + $0x130] sm:$0xff]
  %v1349 = vld [vmem:[#allocation2 + $0x138] sm:$0xff]
  %v1350 = vld [vmem:[#allocation2 + $0x140] sm:$0xff]
  %v1351 = vld [vmem:[#allocation2 + $0x148] sm:$0xff]
  %v1352 = vld [vmem:[#allocation2 + $0x150] sm:$0xff]
  %v1353 = vld [vmem:[#allocation2 + $0x158] sm:$0xff]
  %v1354 = vld [vmem:[#allocation2 + $0x160] sm:$0xff]
  %v1355 = vld [vmem:[#allocation2 + $0x168] sm:$0xff]
  %v1356 = vld [vmem:[#allocation2 + $0x170] sm:$0xff]
  %v1357 = vld [vmem:[#allocation2 + $0x178] sm:$0xff]
  %v1358 = vld [vmem:[#allocation2 + $0x180] sm:$0xff]
  %v1359 = vld [vmem:[#allocation2 + $0x188] sm:$0xff]
  %v1360 = vld [vmem:[#allocation2 + $0x190] sm:$0xff]
  %v1361 = vld [vmem:[#allocation2 + $0x198] sm:$0xff]
  %v1362 = vld [vmem:[#allocation2 + $0x1a0] sm:$0xff]
  %v1363 = vld [vmem:[#allocation2 + $0x1a8] sm:$0xff]
  %v1364 = vld [vmem:[#allocation2 + $0x1b0] sm:$0xff]
  %v1365 = vld [vmem:[#allocation2 + $0x1b8] sm:$0xff]
  %v1366 = vld [vmem:[#allocation2 + $0x1c0] sm:$0xff]
  %v1367 = vld [vmem:[#allocation2 + $0x1c8] sm:$0xff]
  %v1368 = vld [vmem:[#allocation2 + $0x1d0] sm:$0xff]
  %v1369 = vld [vmem:[#allocation2 + $0x1d8] sm:$0xff]
  %v1370 = vld [vmem:[#allocation2 + $0x1e0] sm:$0xff]
  %v1371 = vld [vmem:[#allocation2 + $0x1e8] sm:$0xff]
  %v1372 = vld [vmem:[#allocation2 + $0x1f0] sm:$0xff]
  %v1373 = vld [vmem:[#allocation2 + $0x1f8] sm:$0xff]
  %v1374 = vld [vmem:[#allocation2 + $0x200] sm:$0xff]
  %v1375 = vld [vmem:[#allocation2 + $0x208] sm:$0xff]
  %v1376 = vld [vmem:[#allocation2 + $0x210] sm:$0xff]
  %v1377 = vld [vmem:[#allocation2 + $0x218] sm:$0xff]
  %v1378 = vld [vmem:[#allocation2 + $0x220] sm:$0xff]
  %v1379 = vld [vmem:[#allocation2 + $0x228] sm:$0xff]
  %v1380 = vld [vmem:[#allocation2 + $0x230] sm:$0xff]
  %v1381 = vld [vmem:[#allocation2 + $0x238] sm:$0xff]
  %v1382 = vld [vmem:[#allocation2 + $0x240] sm:$0xff]
  %v1383 = vld [vmem:[#allocation2 + $0x248] sm:$0xff]
  %v1384 = vld [vmem:[#allocation2 + $0x250] sm:$0xff]
  %v1385 = vld [vmem:[#allocation2 + $0x258] sm:$0xff]
  %v1386 = vld [vmem:[#allocation2 + $0x260] sm:$0xff]
  %v1387 = vld [vmem:[#allocation2 + $0x268] sm:$0xff]
  %v1388 = vld [vmem:[#allocation2 + $0x270] sm:$0xff]
  %v1389 = vld [vmem:[#allocation2 + $0x278] sm:$0xff]
  %v1390 = vld [vmem:[#allocation2 + $0x280] sm:$0xff]
  %v1391 = vld [vmem:[#allocation2 + $0x288] sm:$0xff]
  %v1392 = vld [vmem:[#allocation2 + $0x290] sm:$0xff]
  %v1393 = vld [vmem:[#allocation2 + $0x298] sm:$0xff]
  %v1394 = vld [vmem:[#allocation2 + $0x2a0] sm:$0xff]
  %v1395 = vld [vmem:[#allocation2 + $0x2a8] sm:$0xff]
  %v1396 = vld [vmem:[#allocation2 + $0x2b0] sm:$0xff]
  %v1397 = vld [vmem:[#allocation2 + $0x2b8] sm:$0xff]
  %v1398 = vld [vmem:[#allocation2 + $0x2c0] sm:$0xff]
  %v1399 = vld [vmem:[#allocation2 + $0x2c8] sm:$0xff]
  %v1400 = vld [vmem:[#allocation2 + $0x2d0] sm:$0xff]
  %v1401 = vld [vmem:[#allocation2 + $0x2d8] sm:$0xff]
  %v1402 = vld [vmem:[#allocation2 + $0x2e0] sm:$0xff]
  %v1403 = vld [vmem:[#allocation2 + $0x2e8] sm:$0xff]
  %v1404 = vld [vmem:[#allocation2 + $0x2f0] sm:$0xff]
  %v1405 = vld [vmem:[#allocation2 + $0x2f8] sm:$0xff]
  %v1406 = vld [vmem:[#allocation2 + $0x300] sm:$0xff]
  %v1407 = vld [vmem:[#allocation2 + $0x308] sm:$0xff]
  %v1408 = vld [vmem:[#allocation2 + $0x310] sm:$0xff]
  %v1409 = vld [vmem:[#allocation2 + $0x318] sm:$0xff]
  %v1410 = vld [vmem:[#allocation2 + $0x320] sm:$0xff]
  %v1411 = vld [vmem:[#allocation2 + $0x328] sm:$0xff]
  %v1412 = vld [vmem:[#allocation2 + $0x330] sm:$0xff]
  %v1413 = vld [vmem:[#allocation2 + $0x338] sm:$0xff]
  %v1414 = vld [vmem:[#allocation2 + $0x340] sm:$0xff]
  %v1415 = vld [vmem:[#allocation2 + $0x348] sm:$0xff]
  %v1416 = vld [vmem:[#allocation2 + $0x350] sm:$0xff]
  %v1417 = vld [vmem:[#allocation2 + $0x358] sm:$0xff]
  %v1418 = vld [vmem:[#allocation2 + $0x360] sm:$0xff]
  %v1419 = vld [vmem:[#allocation2 + $0x368] sm:$0xff]
  %v1420 = vld [vmem:[#allocation2 + $0x370] sm:$0xff]
  %v1421 = vld [vmem:[#allocation2 + $0x378] sm:$0xff]
  %v1422 = vld [vmem:[%s5 + $0x8] sm:$0xff]
  %v1423 = vld [vmem:[%s5 + $0x10] sm:$0xff]
  %v1424 = vld [vmem:[%s5 + $0x18] sm:$0xff]
  %v1425 = vld [vmem:[%s5 + $0x20] sm:$0xff]
  %v1426 = vld [vmem:[%s5 + $0x28] sm:$0xff]
  %v1427 = vld [vmem:[%s5 + $0x30] sm:$0xff]
  %v1428 = vld [vmem:[%s5 + $0x38] sm:$0xff]
  %v1430 = vunpack.c.l.b16 %v1309
  %v1431 = vunpack.c.h.b16 %v1309
  %v1432 = vpack.c.b16 %v1430, %v1430
  %v1433 = vpack.c.b16 %v1431, %v1431
  %1436 = vmatprep.subr.bf16.mxu0 %v1311
  %1437 = vmatpush1.bf16.msra.mxu0 %v1310
  %1438 = vmatprep.subr.bf16.mxu0 %v1318
  %1439 = vmatpush1.bf16.msra.mxu0 %v1317
  %1440 = vmatprep.subr.bf16.mxu0 %v1325
  %1441 = vmatpush1.bf16.msra.mxu0 %v1324
  %1442 = vmatprep.subr.bf16.mxu0 %v1332
  %1443 = vmatpush1.bf16.msra.mxu0 %v1331
  %1444 = vmatprep.subr.bf16.mxu0 %v1339
  %1445 = vmatpush1.bf16.msra.mxu0 %v1338
  %1446 = vmatprep.subr.bf16.mxu0 %v1346
  %1447 = vmatpush1.bf16.msra.mxu0 %v1345
  %1448 = vmatprep.subr.bf16.mxu0 %v1353
  %1449 = vmatpush1.bf16.msra.mxu0 %v1352
  %1450 = vmatprep.subr.bf16.mxu0 %v1360
  %1451 = vmatpush1.bf16.msra.mxu0 %v1359
  %1452 = vmatprep.subr.bf16.mxu0 %v1367
  %1453 = vmatpush1.bf16.msra.mxu0 %v1366
  %1454 = vmatprep.subr.bf16.mxu0 %v1374
  %1455 = vmatpush1.bf16.msra.mxu0 %v1373
  %1456 = vmatprep.subr.bf16.mxu0 %v1381
  %1457 = vmatpush1.bf16.msra.mxu0 %v1380
  %1458 = vmatprep.subr.bf16.mxu0 %v1388
  %1459 = vmatpush1.bf16.msra.mxu0 %v1387
  %1460 = vmatprep.subr.bf16.mxu0 %v1395
  %1461 = vmatpush1.bf16.msra.mxu0 %v1394
  %1462 = vmatprep.subr.bf16.mxu0 %v1402
  %1463 = vmatpush1.bf16.msra.mxu0 %v1401
  %1464 = vmatprep.subr.bf16.mxu0 %v1409
  %1465 = vmatpush1.bf16.msra.mxu0 %v1408
  %1466 = vmatprep.subr.bf16.mxu0 %v1416
  %1467 = vmatpush1.bf16.msra.mxu0 %v1415
  %1468 = vmatprep.mubr.bf16.mxu0 %v1433
  %1469 = vmatmul.mubr.bf16.gmra.mrb[0].mxu0 %v1432
  %v1470 = vpop.f32.mrb[0].mxu0
  %v1471 = vadd.f32 %v1422, %v1470
  %v1472 = vpop.f32.mrb[0].mxu0
  %v1473 = vadd.f32 %v1423, %v1472
  %v1474 = vpop.f32.mrb[0].mxu0
  %v1475 = vpop.f32.mrb[0].mxu0
  %1476 = vdwg.mxu0
  %1477 = vmatprep.subr.bf16.mxu0 %v1313
  %1478 = vmatpush1.bf16.msra.mxu0 %v1312
  %1479 = vmatprep.subr.bf16.mxu0 %v1320
  %1480 = vmatpush1.bf16.msra.mxu0 %v1319
  %1481 = vmatprep.subr.bf16.mxu0 %v1327
  %1482 = vmatpush1.bf16.msra.mxu0 %v1326
  %1483 = vmatprep.subr.bf16.mxu0 %v1334
  %1484 = vmatpush1.bf16.msra.mxu0 %v1333
  %1485 = vmatprep.subr.bf16.mxu0 %v1341
  %1486 = vmatpush1.bf16.msra.mxu0 %v1340
  %1487 = vmatprep.subr.bf16.mxu0 %v1348
  %1488 = vmatpush1.bf16.msra.mxu0 %v1347
  %1489 = vmatprep.subr.bf16.mxu0 %v1355
  %1490 = vmatpush1.bf16.msra.mxu0 %v1354
  %1491 = vmatprep.subr.bf16.mxu0 %v1362
  %1492 = vmatpush1.bf16.msra.mxu0 %v1361
  %1493 = vmatprep.subr.bf16.mxu0 %v1369
  %1494 = vmatpush1.bf16.msra.mxu0 %v1368
  %1495 = vmatprep.subr.bf16.mxu0 %v1376
  %1496 = vmatpush1.bf16.msra.mxu0 %v1375
  %1497 = vmatprep.subr.bf16.mxu0 %v1383
  %1498 = vmatpush1.bf16.msra.mxu0 %v1382
  %1499 = vmatprep.subr.bf16.mxu0 %v1390
  %1500 = vmatpush1.bf16.msra.mxu0 %v1389
  %1501 = vmatprep.subr.bf16.mxu0 %v1397
  %1502 = vmatpush1.bf16.msra.mxu0 %v1396
  %1503 = vmatprep.subr.bf16.mxu0 %v1404
  %1504 = vmatpush1.bf16.msra.mxu0 %v1403
  %1505 = vmatprep.subr.bf16.mxu0 %v1411
  %1506 = vmatpush1.bf16.msra.mxu0 %v1410
  %1507 = vmatprep.subr.bf16.mxu0 %v1418
  %1508 = vmatpush1.bf16.msra.mxu0 %v1417
  %1509 = vmatprep.mubr.bf16.mxu0 %v1433
  %1510 = vmatmul.mubr.bf16.gmra.mrb[0].mxu0 %v1432
  %v1511 = vpop.f32.mrb[0].mxu0
  %v1512 = vadd.f32 %v1424, %v1511
  %v1513 = vpop.f32.mrb[0].mxu0
  %v1514 = vadd.f32 %v1425, %v1513
  %v1515 = vpop.f32.mrb[0].mxu0
  %v1516 = vpop.f32.mrb[0].mxu0
  %1517 = vdwg.mxu0
  %1518 = vmatprep.subr.bf16.mxu0 %v1315
  %1519 = vmatpush1.bf16.msra.mxu0 %v1314
  %1520 = vmatprep.subr.bf16.mxu0 %v1322
  %1521 = vmatpush1.bf16.msra.mxu0 %v1321
  %1522 = vmatprep.subr.bf16.mxu0 %v1329
  %1523 = vmatpush1.bf16.msra.mxu0 %v1328
  %1524 = vmatprep.subr.bf16.mxu0 %v1336
  %1525 = vmatpush1.bf16.msra.mxu0 %v1335
  %1526 = vmatprep.subr.bf16.mxu0 %v1343
  %1527 = vmatpush1.bf16.msra.mxu0 %v1342
  %1528 = vmatprep.subr.bf16.mxu0 %v1350
  %1529 = vmatpush1.bf16.msra.mxu0 %v1349
  %1530 = vmatprep.subr.bf16.mxu0 %v1357
  %1531 = vmatpush1.bf16.msra.mxu0 %v1356
  %1532 = vmatprep.subr.bf16.mxu0 %v1364
  %1533 = vmatpush1.bf16.msra.mxu0 %v1363
  %1534 = vmatprep.subr.bf16.mxu0 %v1371
  %1535 = vmatpush1.bf16.msra.mxu0 %v1370
  %1536 = vmatprep.subr.bf16.mxu0 %v1378
  %1537 = vmatpush1.bf16.msra.mxu0 %v1377
  %1538 = vmatprep.subr.bf16.mxu0 %v1385
  %1539 = vmatpush1.bf16.msra.mxu0 %v1384
  %1540 = vmatprep.subr.bf16.mxu0 %v1392
  %1541 = vmatpush1.bf16.msra.mxu0 %v1391
  %1542 = vmatprep.subr.bf16.mxu0 %v1399
  %1543 = vmatpush1.bf16.msra.mxu0 %v1398
  %1544 = vmatprep.subr.bf16.mxu0 %v1406
  %1545 = vmatpush1.bf16.msra.mxu0 %v1405
  %1546 = vmatprep.subr.bf16.mxu0 %v1413
  %1547 = vmatpush1.bf16.msra.mxu0 %v1412
  %1548 = vmatprep.subr.bf16.mxu0 %v1420
  %1549 = vmatpush1.bf16.msra.mxu0 %v1419
  %1550 = vmatprep.mubr.bf16.mxu0 %v1433
  %1551 = vmatmul.mubr.bf16.gmra.mrb[0].mxu0 %v1432
  %v1552 = vpop.f32.mrb[0].mxu0
  %v1553 = vadd.f32 %v1426, %v1552
  %v1554 = vpop.f32.mrb[0].mxu0
  %v1555 = vadd.f32 %v1427, %v1554
  %v1556 = vpop.f32.mrb[0].mxu0
  %v1557 = vpop.f32.mrb[0].mxu0
  %1558 = vdwg.mxu0
  %1559 = vmatprep.subr.bf16.mxu0 0
  %1560 = vmatpush1.bf16.msra.mxu0 %v1316
  %1561 = vmatprep.subr.bf16.mxu0 0
  %1562 = vmatpush1.bf16.msra.mxu0 %v1323
  %1563 = vmatprep.subr.bf16.mxu0 0
  %1564 = vmatpush1.bf16.msra.mxu0 %v1330
  %1565 = vmatprep.subr.bf16.mxu0 0
  %1566 = vmatpush1.bf16.msra.mxu0 %v1337
  %1567 = vmatprep.subr.bf16.mxu0 0
  %1568 = vmatpush1.bf16.msra.mxu0 %v1344
  %1569 = vmatprep.subr.bf16.mxu0 0
  %1570 = vmatpush1.bf16.msra.mxu0 %v1351
  %1571 = vmatprep.subr.bf16.mxu0 0
  %1572 = vmatpush1.bf16.msra.mxu0 %v1358
  %1573 = vmatprep.subr.bf16.mxu0 0
  %1574 = vmatpush1.bf16.msra.mxu0 %v1365
  %1575 = vmatprep.subr.bf16.mxu0 0
  %1576 = vmatpush1.bf16.msra.mxu0 %v1372
  %1577 = vmatprep.subr.bf16.mxu0 0
  %1578 = vmatpush1.bf16.msra.mxu0 %v1379
  %1579 = vmatprep.subr.bf16.mxu0 0
  %1580 = vmatpush1.bf16.msra.mxu0 %v1386
  %1581 = vmatprep.subr.bf16.mxu0 0
  %1582 = vmatpush1.bf16.msra.mxu0 %v1393
  %1583 = vmatprep.subr.bf16.mxu0 0
  %1584 = vmatpush1.bf16.msra.mxu0 %v1400
  %1585 = vmatprep.subr.bf16.mxu0 0
  %1586 = vmatpush1.bf16.msra.mxu0 %v1407
  %1587 = vmatprep.subr.bf16.mxu0 0
  %1588 = vmatpush1.bf16.msra.mxu0 %v1414
  %1589 = vmatprep.subr.bf16.mxu0 0
  %1590 = vmatpush1.bf16.msra.mxu0 %v1421
  %1591 = vmatprep.mubr.bf16.mxu0 %v1433
  %1592 = vmatmul.mubr.bf16.gmra.mrb[0].mxu0 %v1432
  %v1593 = vpop.f32.mrb[0].mxu0
  %v1594 = vadd.f32 %v1428, %v1593
  %v1595 = vpop.f32.mrb[0].mxu0
  %v1596 = vpop.f32.mrb[0].mxu0
  %v1597 = vpop.f32.mrb[0].mxu0
  %1598 = vdwg.mxu0
  %v1599 = vmax.f32 %v1471, 0.0
  %v1600 = vmax.f32 %v1473, 0.0
  %v1601 = vmax.f32 %v1512, 0.0
  %v1602 = vmax.f32 %v1514, 0.0
  %v1603 = vmax.f32 %v1553, 0.0
  %v1604 = vmax.f32 %v1555, 0.0
  %v1605 = vmax.f32 %v1594, 0.0
  %1606 = vst [vmem:[%s6 + $0x8] sm:$0xff] %v1599
  %1607 = vst [vmem:[%s6 + $0x10] sm:$0xff] %v1600
  %1608 = vst [vmem:[%s6 + $0x18] sm:$0xff] %v1601
  %1609 = vst [vmem:[%s6 + $0x20] sm:$0xff] %v1602
  %1610 = vst [vmem:[%s6 + $0x28] sm:$0xff] %v1603
  %1611 = vst [vmem:[%s6 + $0x30] sm:$0xff] %v1604
  %1612 = vst [vmem:[%s6 + $0x38] sm:$0xff] %v1605
  %1613 = vst [vmem:[%s6] sm:$0xff] 0.0
  %1614 = vst [vmem:[%s6 + $0x40] sm:$0xff] 0.0
  %s1615 = scalar_lea.vmem %s0, 36
  %v1616 = vld [vmem:[%s1615] sm:$0xff]
  %v1617 = vld [vmem:[%s1615 + $0x8] sm:$0xff]
  %v1618 = vld [vmem:[%s1615 + $0x10] sm:$0xff]
  %v1619 = vld [vmem:[%s1615 + $0x18] sm:$0xff]
  %v1620 = vld [vmem:[%s1615 + $0x20] sm:$0xf]
  %v1621 = vunpack.c.l.bf16 %v1616
  %v1622 = vunpack.c.h.bf16 %v1616
  %v1623 = vunpack.c.l.bf16 %v1617
  %v1624 = vunpack.c.h.bf16 %v1617
  %v1625 = vunpack.c.l.bf16 %v1618
  %v1626 = vunpack.c.h.bf16 %v1618
  %v1627 = vunpack.c.l.bf16 %v1619
  %v1628 = vunpack.c.h.bf16 %v1619
  %v1629 = vunpack.c.l.bf16 %v1620
  %v1630 = vld [vmem:[%s1] sm:$0xff]
  %1632 = vset.pattern.permute.xlu0 0
  %1633 = vperm.xlu0 %1632, %v1630
  %v1634 = vpop.permute.xlu0 %1633
  %v1636 = vmul.f32 %v1621, %v1634
  %v1637 = vmul.f32 %v1622, %v1634
  %v1638 = vmul.f32 %v1623, %v1634
  %v1639 = vmul.f32 %v1624, %v1634
  %v1640 = vmul.f32 %v1625, %v1634
  %v1641 = vmul.f32 %v1626, %v1634
  %v1642 = vmul.f32 %v1627, %v1634
  %v1643 = vmul.f32 %v1628, %v1634
  %v1644 = vmul.f32 %v1629, %v1634
  %v1645 = vld [vmem:[%s2] sm:$0xff]
  %1647 = vset.pattern.permute.xlu0 0
  %1648 = vperm.xlu0 %1647, %v1645
  %v1649 = vpop.permute.xlu0 %1648
  %v1651 = vadd.f32 %v1636, %v1649
  %v1652 = vadd.f32 %v1637, %v1649
  %v1653 = vadd.f32 %v1638, %v1649
  %v1654 = vadd.f32 %v1639, %v1649
  %v1655 = vadd.f32 %v1640, %v1649
  %v1656 = vadd.f32 %v1641, %v1649
  %v1657 = vadd.f32 %v1642, %v1649
  %v1658 = vadd.f32 %v1643, %v1649
  %v1659 = vadd.f32 %v1644, %v1649
  %v1660 = vmax.f32 %v1651, 0.0
  %v1661 = vmax.f32 %v1652, 0.0
  %v1662 = vmax.f32 %v1653, 0.0
  %v1663 = vmax.f32 %v1654, 0.0
  %v1664 = vmax.f32 %v1655, 0.0
  %v1665 = vmax.f32 %v1656, 0.0
  %v1666 = vmax.f32 %v1657, 0.0
  %v1667 = vmax.f32 %v1658, 0.0
  %v1668 = vmax.f32 %v1659, 0.0
  %v1669 = vsel %vm140, %v1660, 0.0
  %v1670 = vsel %vm141, %v1661, 0.0
  %v1671 = vsel %vm142, %v1662, 0.0
  %v1672 = vsel %vm143, %v1663, 0.0
  %v1673 = vsel %vm144, %v1664, 0.0
  %v1674 = vsel %vm145, %v1665, 0.0
  %v1675 = vsel %vm146, %v1666, 0.0
  %v1676 = vsel %vm147, %v1667, 0.0
  %v1677 = vsel %vm148, %v1668, 0.0
  %v1678 = vpack.c.bf16 %v1669, %v1669
  %v1679 = vpack.c.bf16 %v1670, %v1670
  %v1680 = vpack.c.bf16 %v1671, %v1671
  %v1681 = vpack.c.bf16 %v1672, %v1672
  %v1682 = vpack.c.bf16 %v1673, %v1673
  %v1683 = vpack.c.bf16 %v1674, %v1674
  %v1684 = vpack.c.bf16 %v1675, %v1675
  %v1685 = vpack.c.bf16 %v1676, %v1676
  %v1686 = vpack.c.bf16 %v1677, %v1677
  %1695 = vrot.lane.b32.xlu0 %v1678, 111
  %v1696 = vpop.permute.xlu0 %1695
  %1697 = vrot.lane.b32.xlu0 %v1679, 111
  %v1698 = vpop.permute.xlu0 %1697
  %1699 = vrot.lane.b32.xlu0 %v1680, 111
  %v1700 = vpop.permute.xlu0 %1699
  %1701 = vrot.lane.b32.xlu0 %v1681, 111
  %v1702 = vpop.permute.xlu0 %1701
  %1703 = vrot.lane.b32.xlu0 %v1682, 111
  %v1704 = vpop.permute.xlu0 %1703
  %1705 = vrot.lane.b32.xlu0 %v1683, 111
  %v1706 = vpop.permute.xlu0 %1705
  %1707 = vrot.lane.b32.xlu0 %v1684, 111
  %v1708 = vpop.permute.xlu0 %1707
  %1709 = vrot.lane.b32.xlu0 %v1685, 111
  %v1710 = vpop.permute.xlu0 %1709
  %v1711 = vsel %vm191, %v1696, %v1698
  %v1712 = vsel %vm191, %v1698, %v1700
  %v1713 = vsel %vm191, %v1700, %v1702
  %v1714 = vsel %vm191, %v1702, %v1704
  %v1715 = vsel %vm191, %v1704, %v1706
  %v1716 = vsel %vm191, %v1706, %v1708
  %v1717 = vsel %vm191, %v1708, %v1710
  %1725 = vst [vmem:[#allocation2] sm:$0xf] %v1711
  %1726 = vst [vmem:[#allocation2 + $0x8] sm:$0xf] %v1712
  %1727 = vst [vmem:[#allocation2 + $0x10] sm:$0xf] %v1713
  %1728 = vst [vmem:[#allocation2 + $0x18] sm:$0xf] %v1714
  %1729 = vst [vmem:[#allocation2 + $0x20] sm:$0xf] %v1715
  %1730 = vst [vmem:[#allocation2 + $0x28] sm:$0xf] %v1716
  %1731 = vst [vmem:[#allocation2 + $0x30] sm:$0xf] %v1717
  %1732 = vrot.lane.b32.xlu0 %v1678, 110
  %v1733 = vpop.permute.xlu0 %1732
  %1734 = vrot.lane.b32.xlu0 %v1679, 110
  %v1735 = vpop.permute.xlu0 %1734
  %1736 = vrot.lane.b32.xlu0 %v1680, 110
  %v1737 = vpop.permute.xlu0 %1736
  %1738 = vrot.lane.b32.xlu0 %v1681, 110
  %v1739 = vpop.permute.xlu0 %1738
  %1740 = vrot.lane.b32.xlu0 %v1682, 110
  %v1741 = vpop.permute.xlu0 %1740
  %1742 = vrot.lane.b32.xlu0 %v1683, 110
  %v1743 = vpop.permute.xlu0 %1742
  %1744 = vrot.lane.b32.xlu0 %v1684, 110
  %v1745 = vpop.permute.xlu0 %1744
  %1746 = vrot.lane.b32.xlu0 %v1685, 110
  %v1747 = vpop.permute.xlu0 %1746
  %v1748 = vsel %vm229, %v1733, %v1735
  %v1749 = vsel %vm229, %v1735, %v1737
  %v1750 = vsel %vm229, %v1737, %v1739
  %v1751 = vsel %vm229, %v1739, %v1741
  %v1752 = vsel %vm229, %v1741, %v1743
  %v1753 = vsel %vm229, %v1743, %v1745
  %v1754 = vsel %vm229, %v1745, %v1747
  %v1757 = vsel %vm237, %v1754, %v1733
  %v1759 = vrot.slane %v1748, 4
  %v1760 = vrot.slane %v1749, 4
  %v1761 = vrot.slane %v1750, 4
  %v1762 = vrot.slane %v1751, 4
  %v1763 = vrot.slane %v1752, 4
  %v1764 = vrot.slane %v1753, 4
  %v1765 = vrot.slane %v1757, 4
  %1773 = vst [vmem:[#allocation2] sm:$0xf0] %v1759
  %1774 = vst [vmem:[#allocation2 + $0x8] sm:$0xf0] %v1760
  %1775 = vst [vmem:[#allocation2 + $0x10] sm:$0xf0] %v1761
  %1776 = vst [vmem:[#allocation2 + $0x18] sm:$0xf0] %v1762
  %1777 = vst [vmem:[#allocation2 + $0x20] sm:$0xf0] %v1763
  %1778 = vst [vmem:[#allocation2 + $0x28] sm:$0xf0] %v1764
  %1779 = vst [vmem:[#allocation2 + $0x30] sm:$0xf0] %v1765
  %1780 = vrot.lane.b32.xlu0 %v1678, 109
  %v1781 = vpop.permute.xlu0 %1780
  %1782 = vrot.lane.b32.xlu0 %v1679, 109
  %v1783 = vpop.permute.xlu0 %1782
  %1784 = vrot.lane.b32.xlu0 %v1680, 109
  %v1785 = vpop.permute.xlu0 %1784
  %1786 = vrot.lane.b32.xlu0 %v1681, 109
  %v1787 = vpop.permute.xlu0 %1786
  %1788 = vrot.lane.b32.xlu0 %v1682, 109
  %v1789 = vpop.permute.xlu0 %1788
  %1790 = vrot.lane.b32.xlu0 %v1683, 109
  %v1791 = vpop.permute.xlu0 %1790
  %1792 = vrot.lane.b32.xlu0 %v1684, 109
  %v1793 = vpop.permute.xlu0 %1792
  %1794 = vrot.lane.b32.xlu0 %v1685, 109
  %v1795 = vpop.permute.xlu0 %1794
  %v1796 = vsel %vm279, %v1781, %v1783
  %v1797 = vsel %vm279, %v1783, %v1785
  %v1798 = vsel %vm279, %v1785, %v1787
  %v1799 = vsel %vm279, %v1787, %v1789
  %v1800 = vsel %vm279, %v1789, %v1791
  %v1801 = vsel %vm279, %v1791, %v1793
  %v1802 = vsel %vm279, %v1793, %v1795
  %v1811 = vsel %vm293, %v1802, %v1781
  %1813 = vst [vmem:[#allocation2 + $0x38] sm:$0xf] %v1796
  %1814 = vst [vmem:[#allocation2 + $0x40] sm:$0xf] %v1797
  %1815 = vst [vmem:[#allocation2 + $0x48] sm:$0xf] %v1798
  %1816 = vst [vmem:[#allocation2 + $0x50] sm:$0xf] %v1799
  %1817 = vst [vmem:[#allocation2 + $0x58] sm:$0xf] %v1800
  %1818 = vst [vmem:[#allocation2 + $0x60] sm:$0xf] %v1801
  %1819 = vst [vmem:[#allocation2 + $0x68] sm:$0xf] %v1811
  %v1820 = vrot.slane %v1678, 4
  %v1821 = vrot.slane %v1679, 4
  %v1822 = vrot.slane %v1680, 4
  %v1823 = vrot.slane %v1681, 4
  %v1824 = vrot.slane %v1682, 4
  %v1825 = vrot.slane %v1683, 4
  %v1826 = vrot.slane %v1684, 4
  %v1827 = vrot.slane %v1685, 4
  %1828 = vrot.lane.b32.xlu0 %v1820, 101
  %v1829 = vpop.permute.xlu0 %1828
  %1830 = vrot.lane.b32.xlu0 %v1821, 101
  %v1831 = vpop.permute.xlu0 %1830
  %1832 = vrot.lane.b32.xlu0 %v1822, 101
  %v1833 = vpop.permute.xlu0 %1832
  %1834 = vrot.lane.b32.xlu0 %v1823, 101
  %v1835 = vpop.permute.xlu0 %1834
  %1836 = vrot.lane.b32.xlu0 %v1824, 101
  %v1837 = vpop.permute.xlu0 %1836
  %1838 = vrot.lane.b32.xlu0 %v1825, 101
  %v1839 = vpop.permute.xlu0 %1838
  %1840 = vrot.lane.b32.xlu0 %v1826, 101
  %v1841 = vpop.permute.xlu0 %1840
  %1842 = vrot.lane.b32.xlu0 %v1827, 101
  %v1843 = vpop.permute.xlu0 %1842
  %v1844 = vsel %vm329, %v1829, %v1831
  %v1845 = vsel %vm329, %v1831, %v1833
  %v1846 = vsel %vm329, %v1833, %v1835
  %v1847 = vsel %vm329, %v1835, %v1837
  %v1848 = vsel %vm329, %v1837, %v1839
  %v1849 = vsel %vm329, %v1839, %v1841
  %v1850 = vsel %vm329, %v1841, %v1843
  %1858 = vst [vmem:[#allocation2 + $0x38] sm:$0xf0] %v1844
  %1859 = vst [vmem:[#allocation2 + $0x40] sm:$0xf0] %v1845
  %1860 = vst [vmem:[#allocation2 + $0x48] sm:$0xf0] %v1846
  %1861 = vst [vmem:[#allocation2 + $0x50] sm:$0xf0] %v1847
  %1862 = vst [vmem:[#allocation2 + $0x58] sm:$0xf0] %v1848
  %1863 = vst [vmem:[#allocation2 + $0x60] sm:$0xf0] %v1849
  %1864 = vst [vmem:[#allocation2 + $0x68] sm:$0xf0] %v1850
  %1865 = vrot.lane.b32.xlu0 %v1678, 100
  %v1866 = vpop.permute.xlu0 %1865
  %1867 = vrot.lane.b32.xlu0 %v1679, 100
  %v1868 = vpop.permute.xlu0 %1867
  %1869 = vrot.lane.b32.xlu0 %v1680, 100
  %v1870 = vpop.permute.xlu0 %1869
  %1871 = vrot.lane.b32.xlu0 %v1681, 100
  %v1872 = vpop.permute.xlu0 %1871
  %1873 = vrot.lane.b32.xlu0 %v1682, 100
  %v1874 = vpop.permute.xlu0 %1873
  %1875 = vrot.lane.b32.xlu0 %v1683, 100
  %v1876 = vpop.permute.xlu0 %1875
  %1877 = vrot.lane.b32.xlu0 %v1684, 100
  %v1878 = vpop.permute.xlu0 %1877
  %1879 = vrot.lane.b32.xlu0 %v1685, 100
  %v1880 = vpop.permute.xlu0 %1879
  %v1881 = vsel %vm367, %v1866, %v1868
  %v1882 = vsel %vm367, %v1868, %v1870
  %v1883 = vsel %vm367, %v1870, %v1872
  %v1884 = vsel %vm367, %v1872, %v1874
  %v1885 = vsel %vm367, %v1874, %v1876
  %v1886 = vsel %vm367, %v1876, %v1878
  %v1887 = vsel %vm367, %v1878, %v1880
  %v1896 = vsel %vm237, %v1887, %v1866
  %1898 = vst [vmem:[#allocation2 + $0x70] sm:$0xf] %v1881
  %1899 = vst [vmem:[#allocation2 + $0x78] sm:$0xf] %v1882
  %1900 = vst [vmem:[#allocation2 + $0x80] sm:$0xf] %v1883
  %1901 = vst [vmem:[#allocation2 + $0x88] sm:$0xf] %v1884
  %1902 = vst [vmem:[#allocation2 + $0x90] sm:$0xf] %v1885
  %1903 = vst [vmem:[#allocation2 + $0x98] sm:$0xf] %v1886
  %1904 = vst [vmem:[#allocation2 + $0xa0] sm:$0xf] %v1896
  %1905 = vrot.lane.b32.xlu0 %v1678, 99
  %v1906 = vpop.permute.xlu0 %1905
  %1907 = vrot.lane.b32.xlu0 %v1679, 99
  %v1908 = vpop.permute.xlu0 %1907
  %1909 = vrot.lane.b32.xlu0 %v1680, 99
  %v1910 = vpop.permute.xlu0 %1909
  %1911 = vrot.lane.b32.xlu0 %v1681, 99
  %v1912 = vpop.permute.xlu0 %1911
  %1913 = vrot.lane.b32.xlu0 %v1682, 99
  %v1914 = vpop.permute.xlu0 %1913
  %1915 = vrot.lane.b32.xlu0 %v1683, 99
  %v1916 = vpop.permute.xlu0 %1915
  %1917 = vrot.lane.b32.xlu0 %v1684, 99
  %v1918 = vpop.permute.xlu0 %1917
  %1919 = vrot.lane.b32.xlu0 %v1685, 99
  %v1920 = vpop.permute.xlu0 %1919
  %v1921 = vsel %vm408, %v1906, %v1908
  %v1922 = vsel %vm408, %v1908, %v1910
  %v1923 = vsel %vm408, %v1910, %v1912
  %v1924 = vsel %vm408, %v1912, %v1914
  %v1925 = vsel %vm408, %v1914, %v1916
  %v1926 = vsel %vm408, %v1916, %v1918
  %v1927 = vsel %vm408, %v1918, %v1920
  %v1930 = vsel %vm293, %v1927, %v1906
  %v1932 = vrot.slane %v1921, 4
  %v1933 = vrot.slane %v1922, 4
  %v1934 = vrot.slane %v1923, 4
  %v1935 = vrot.slane %v1924, 4
  %v1936 = vrot.slane %v1925, 4
  %v1937 = vrot.slane %v1926, 4
  %v1938 = vrot.slane %v1930, 4
  %1946 = vst [vmem:[#allocation2 + $0x70] sm:$0xf0] %v1932
  %1947 = vst [vmem:[#allocation2 + $0x78] sm:$0xf0] %v1933
  %1948 = vst [vmem:[#allocation2 + $0x80] sm:$0xf0] %v1934
  %1949 = vst [vmem:[#allocation2 + $0x88] sm:$0xf0] %v1935
  %1950 = vst [vmem:[#allocation2 + $0x90] sm:$0xf0] %v1936
  %1951 = vst [vmem:[#allocation2 + $0x98] sm:$0xf0] %v1937
  %1952 = vst [vmem:[#allocation2 + $0xa0] sm:$0xf0] %v1938
  %1953 = vrot.lane.b32.xlu0 %v1678, 91
  %v1954 = vpop.permute.xlu0 %1953
  %1955 = vrot.lane.b32.xlu0 %v1679, 91
  %v1956 = vpop.permute.xlu0 %1955
  %1957 = vrot.lane.b32.xlu0 %v1680, 91
  %v1958 = vpop.permute.xlu0 %1957
  %1959 = vrot.lane.b32.xlu0 %v1681, 91
  %v1960 = vpop.permute.xlu0 %1959
  %1961 = vrot.lane.b32.xlu0 %v1682, 91
  %v1962 = vpop.permute.xlu0 %1961
  %1963 = vrot.lane.b32.xlu0 %v1683, 91
  %v1964 = vpop.permute.xlu0 %1963
  %1965 = vrot.lane.b32.xlu0 %v1684, 91
  %v1966 = vpop.permute.xlu0 %1965
  %1967 = vrot.lane.b32.xlu0 %v1685, 91
  %v1968 = vpop.permute.xlu0 %1967
  %v1969 = vsel %vm457, %v1954, %v1956
  %v1970 = vsel %vm457, %v1956, %v1958
  %v1971 = vsel %vm457, %v1958, %v1960
  %v1972 = vsel %vm457, %v1960, %v1962
  %v1973 = vsel %vm457, %v1962, %v1964
  %v1974 = vsel %vm457, %v1964, %v1966
  %v1975 = vsel %vm457, %v1966, %v1968
  %1983 = vst [vmem:[#allocation2 + $0xa8] sm:$0xf] %v1969
  %1984 = vst [vmem:[#allocation2 + $0xb0] sm:$0xf] %v1970
  %1985 = vst [vmem:[#allocation2 + $0xb8] sm:$0xf] %v1971
  %1986 = vst [vmem:[#allocation2 + $0xc0] sm:$0xf] %v1972
  %1987 = vst [vmem:[#allocation2 + $0xc8] sm:$0xf] %v1973
  %1988 = vst [vmem:[#allocation2 + $0xd0] sm:$0xf] %v1974
  %1989 = vst [vmem:[#allocation2 + $0xd8] sm:$0xf] %v1975
  %1990 = vrot.lane.b32.xlu0 %v1678, 90
  %v1991 = vpop.permute.xlu0 %1990
  %1992 = vrot.lane.b32.xlu0 %v1679, 90
  %v1993 = vpop.permute.xlu0 %1992
  %1994 = vrot.lane.b32.xlu0 %v1680, 90
  %v1995 = vpop.permute.xlu0 %1994
  %1996 = vrot.lane.b32.xlu0 %v1681, 90
  %v1997 = vpop.permute.xlu0 %1996
  %1998 = vrot.lane.b32.xlu0 %v1682, 90
  %v1999 = vpop.permute.xlu0 %1998
  %2000 = vrot.lane.b32.xlu0 %v1683, 90
  %v2001 = vpop.permute.xlu0 %2000
  %2002 = vrot.lane.b32.xlu0 %v1684, 90
  %v2003 = vpop.permute.xlu0 %2002
  %2004 = vrot.lane.b32.xlu0 %v1685, 90
  %v2005 = vpop.permute.xlu0 %2004
  %v2006 = vsel %vm495, %v1991, %v1993
  %v2007 = vsel %vm495, %v1993, %v1995
  %v2008 = vsel %vm495, %v1995, %v1997
  %v2009 = vsel %vm495, %v1997, %v1999
  %v2010 = vsel %vm495, %v1999, %v2001
  %v2011 = vsel %vm495, %v2001, %v2003
  %v2012 = vsel %vm495, %v2003, %v2005
  %v2015 = vsel %vm237, %v2012, %v1991
  %v2017 = vrot.slane %v2006, 4
  %v2018 = vrot.slane %v2007, 4
  %v2019 = vrot.slane %v2008, 4
  %v2020 = vrot.slane %v2009, 4
  %v2021 = vrot.slane %v2010, 4
  %v2022 = vrot.slane %v2011, 4
  %v2023 = vrot.slane %v2015, 4
  %2031 = vst [vmem:[#allocation2 + $0xa8] sm:$0xf0] %v2017
  %2032 = vst [vmem:[#allocation2 + $0xb0] sm:$0xf0] %v2018
  %2033 = vst [vmem:[#allocation2 + $0xb8] sm:$0xf0] %v2019
  %2034 = vst [vmem:[#allocation2 + $0xc0] sm:$0xf0] %v2020
  %2035 = vst [vmem:[#allocation2 + $0xc8] sm:$0xf0] %v2021
  %2036 = vst [vmem:[#allocation2 + $0xd0] sm:$0xf0] %v2022
  %2037 = vst [vmem:[#allocation2 + $0xd8] sm:$0xf0] %v2023
  %2038 = vrot.lane.b32.xlu0 %v1678, 89
  %v2039 = vpop.permute.xlu0 %2038
  %2040 = vrot.lane.b32.xlu0 %v1679, 89
  %v2041 = vpop.permute.xlu0 %2040
  %2042 = vrot.lane.b32.xlu0 %v1680, 89
  %v2043 = vpop.permute.xlu0 %2042
  %2044 = vrot.lane.b32.xlu0 %v1681, 89
  %v2045 = vpop.permute.xlu0 %2044
  %2046 = vrot.lane.b32.xlu0 %v1682, 89
  %v2047 = vpop.permute.xlu0 %2046
  %2048 = vrot.lane.b32.xlu0 %v1683, 89
  %v2049 = vpop.permute.xlu0 %2048
  %2050 = vrot.lane.b32.xlu0 %v1684, 89
  %v2051 = vpop.permute.xlu0 %2050
  %2052 = vrot.lane.b32.xlu0 %v1685, 89
  %v2053 = vpop.permute.xlu0 %2052
  %v2054 = vsel %vm544, %v2039, %v2041
  %v2055 = vsel %vm544, %v2041, %v2043
  %v2056 = vsel %vm544, %v2043, %v2045
  %v2057 = vsel %vm544, %v2045, %v2047
  %v2058 = vsel %vm544, %v2047, %v2049
  %v2059 = vsel %vm544, %v2049, %v2051
  %v2060 = vsel %vm544, %v2051, %v2053
  %v2069 = vsel %vm293, %v2060, %v2039
  %2071 = vst [vmem:[#allocation2 + $0xe0] sm:$0xf] %v2054
  %2072 = vst [vmem:[#allocation2 + $0xe8] sm:$0xf] %v2055
  %2073 = vst [vmem:[#allocation2 + $0xf0] sm:$0xf] %v2056
  %2074 = vst [vmem:[#allocation2 + $0xf8] sm:$0xf] %v2057
  %2075 = vst [vmem:[#allocation2 + $0x100] sm:$0xf] %v2058
  %2076 = vst [vmem:[#allocation2 + $0x108] sm:$0xf] %v2059
  %2077 = vst [vmem:[#allocation2 + $0x110] sm:$0xf] %v2069
  %2078 = vrot.lane.b32.xlu0 %v1820, 11
  %v2079 = vpop.permute.xlu0 %2078
  %2080 = vrot.lane.b32.xlu0 %v1821, 11
  %v2081 = vpop.permute.xlu0 %2080
  %2082 = vrot.lane.b32.xlu0 %v1822, 11
  %v2083 = vpop.permute.xlu0 %2082
  %2084 = vrot.lane.b32.xlu0 %v1823, 11
  %v2085 = vpop.permute.xlu0 %2084
  %2086 = vrot.lane.b32.xlu0 %v1824, 11
  %v2087 = vpop.permute.xlu0 %2086
  %2088 = vrot.lane.b32.xlu0 %v1825, 11
  %v2089 = vpop.permute.xlu0 %2088
  %2090 = vrot.lane.b32.xlu0 %v1826, 11
  %v2091 = vpop.permute.xlu0 %2090
  %2092 = vrot.lane.b32.xlu0 %v1827, 11
  %v2093 = vpop.permute.xlu0 %2092
  %v2094 = vsel %vm585, %v2079, %v2081
  %v2095 = vsel %vm585, %v2081, %v2083
  %v2096 = vsel %vm585, %v2083, %v2085
  %v2097 = vsel %vm585, %v2085, %v2087
  %v2098 = vsel %vm585, %v2087, %v2089
  %v2099 = vsel %vm585, %v2089, %v2091
  %v2100 = vsel %vm585, %v2091, %v2093
  %2108 = vst [vmem:[#allocation2 + $0xe0] sm:$0xf0] %v2094
  %2109 = vst [vmem:[#allocation2 + $0xe8] sm:$0xf0] %v2095
  %2110 = vst [vmem:[#allocation2 + $0xf0] sm:$0xf0] %v2096
  %2111 = vst [vmem:[#allocation2 + $0xf8] sm:$0xf0] %v2097
  %2112 = vst [vmem:[#allocation2 + $0x100] sm:$0xf0] %v2098
  %2113 = vst [vmem:[#allocation2 + $0x108] sm:$0xf0] %v2099
  %2114 = vst [vmem:[#allocation2 + $0x110] sm:$0xf0] %v2100
  %2115 = vrot.lane.b32.xlu0 %v1678, 10
  %v2116 = vpop.permute.xlu0 %2115
  %2117 = vrot.lane.b32.xlu0 %v1679, 10
  %v2118 = vpop.permute.xlu0 %2117
  %2119 = vrot.lane.b32.xlu0 %v1680, 10
  %v2120 = vpop.permute.xlu0 %2119
  %2121 = vrot.lane.b32.xlu0 %v1681, 10
  %v2122 = vpop.permute.xlu0 %2121
  %2123 = vrot.lane.b32.xlu0 %v1682, 10
  %v2124 = vpop.permute.xlu0 %2123
  %2125 = vrot.lane.b32.xlu0 %v1683, 10
  %v2126 = vpop.permute.xlu0 %2125
  %2127 = vrot.lane.b32.xlu0 %v1684, 10
  %v2128 = vpop.permute.xlu0 %2127
  %2129 = vrot.lane.b32.xlu0 %v1685, 10
  %v2130 = vpop.permute.xlu0 %2129
  %v2131 = vsel %vm623, %v2116, %v2118
  %v2132 = vsel %vm623, %v2118, %v2120
  %v2133 = vsel %vm623, %v2120, %v2122
  %v2134 = vsel %vm623, %v2122, %v2124
  %v2135 = vsel %vm623, %v2124, %v2126
  %v2136 = vsel %vm623, %v2126, %v2128
  %v2137 = vsel %vm623, %v2128, %v2130
  %v2146 = vsel %vm237, %v2137, %v2116
  %2148 = vst [vmem:[#allocation2 + $0x118] sm:$0xf] %v2131
  %2149 = vst [vmem:[#allocation2 + $0x120] sm:$0xf] %v2132
  %2150 = vst [vmem:[#allocation2 + $0x128] sm:$0xf] %v2133
  %2151 = vst [vmem:[#allocation2 + $0x130] sm:$0xf] %v2134
  %2152 = vst [vmem:[#allocation2 + $0x138] sm:$0xf] %v2135
  %2153 = vst [vmem:[#allocation2 + $0x140] sm:$0xf] %v2136
  %2154 = vst [vmem:[#allocation2 + $0x148] sm:$0xf] %v2146
  %2155 = vrot.lane.b32.xlu0 %v1678, 9
  %v2156 = vpop.permute.xlu0 %2155
  %2157 = vrot.lane.b32.xlu0 %v1679, 9
  %v2158 = vpop.permute.xlu0 %2157
  %2159 = vrot.lane.b32.xlu0 %v1680, 9
  %v2160 = vpop.permute.xlu0 %2159
  %2161 = vrot.lane.b32.xlu0 %v1681, 9
  %v2162 = vpop.permute.xlu0 %2161
  %2163 = vrot.lane.b32.xlu0 %v1682, 9
  %v2164 = vpop.permute.xlu0 %2163
  %2165 = vrot.lane.b32.xlu0 %v1683, 9
  %v2166 = vpop.permute.xlu0 %2165
  %2167 = vrot.lane.b32.xlu0 %v1684, 9
  %v2168 = vpop.permute.xlu0 %2167
  %2169 = vrot.lane.b32.xlu0 %v1685, 9
  %v2170 = vpop.permute.xlu0 %2169
  %v2171 = vsel %vm664, %v2156, %v2158
  %v2172 = vsel %vm664, %v2158, %v2160
  %v2173 = vsel %vm664, %v2160, %v2162
  %v2174 = vsel %vm664, %v2162, %v2164
  %v2175 = vsel %vm664, %v2164, %v2166
  %v2176 = vsel %vm664, %v2166, %v2168
  %v2177 = vsel %vm664, %v2168, %v2170
  %v2180 = vsel %vm293, %v2177, %v2156
  %v2182 = vrot.slane %v2171, 4
  %v2183 = vrot.slane %v2172, 4
  %v2184 = vrot.slane %v2173, 4
  %v2185 = vrot.slane %v2174, 4
  %v2186 = vrot.slane %v2175, 4
  %v2187 = vrot.slane %v2176, 4
  %v2188 = vrot.slane %v2180, 4
  %2196 = vst [vmem:[#allocation2 + $0x118] sm:$0xf0] %v2182
  %2197 = vst [vmem:[#allocation2 + $0x120] sm:$0xf0] %v2183
  %2198 = vst [vmem:[#allocation2 + $0x128] sm:$0xf0] %v2184
  %2199 = vst [vmem:[#allocation2 + $0x130] sm:$0xf0] %v2185
  %2200 = vst [vmem:[#allocation2 + $0x138] sm:$0xf0] %v2186
  %2201 = vst [vmem:[#allocation2 + $0x140] sm:$0xf0] %v2187
  %2202 = vst [vmem:[#allocation2 + $0x148] sm:$0xf0] %v2188
  %2203 = vrot.lane.b32.xlu0 %v1678, 1
  %v2204 = vpop.permute.xlu0 %2203
  %2205 = vrot.lane.b32.xlu0 %v1679, 1
  %v2206 = vpop.permute.xlu0 %2205
  %2207 = vrot.lane.b32.xlu0 %v1680, 1
  %v2208 = vpop.permute.xlu0 %2207
  %2209 = vrot.lane.b32.xlu0 %v1681, 1
  %v2210 = vpop.permute.xlu0 %2209
  %2211 = vrot.lane.b32.xlu0 %v1682, 1
  %v2212 = vpop.permute.xlu0 %2211
  %2213 = vrot.lane.b32.xlu0 %v1683, 1
  %v2214 = vpop.permute.xlu0 %2213
  %2215 = vrot.lane.b32.xlu0 %v1684, 1
  %v2216 = vpop.permute.xlu0 %2215
  %2217 = vrot.lane.b32.xlu0 %v1685, 1
  %v2218 = vpop.permute.xlu0 %2217
  %v2219 = vsel %vm713, %v2204, %v2206
  %v2220 = vsel %vm713, %v2206, %v2208
  %v2221 = vsel %vm713, %v2208, %v2210
  %v2222 = vsel %vm713, %v2210, %v2212
  %v2223 = vsel %vm713, %v2212, %v2214
  %v2224 = vsel %vm713, %v2214, %v2216
  %v2225 = vsel %vm713, %v2216, %v2218
  %2233 = vst [vmem:[#allocation2 + $0x150] sm:$0xf] %v2219
  %2234 = vst [vmem:[#allocation2 + $0x158] sm:$0xf] %v2220
  %2235 = vst [vmem:[#allocation2 + $0x160] sm:$0xf] %v2221
  %2236 = vst [vmem:[#allocation2 + $0x168] sm:$0xf] %v2222
  %2237 = vst [vmem:[#allocation2 + $0x170] sm:$0xf] %v2223
  %2238 = vst [vmem:[#allocation2 + $0x178] sm:$0xf] %v2224
  %2239 = vst [vmem:[#allocation2 + $0x180] sm:$0xf] %v2225
  %v2242 = vsel %vm237, %v1685, %v1678
  %v2244 = vrot.slane %v2242, 4
  %2252 = vst [vmem:[#allocation2 + $0x150] sm:$0xf0] %v1821
  %2253 = vst [vmem:[#allocation2 + $0x158] sm:$0xf0] %v1822
  %2254 = vst [vmem:[#allocation2 + $0x160] sm:$0xf0] %v1823
  %2255 = vst [vmem:[#allocation2 + $0x168] sm:$0xf0] %v1824
  %2256 = vst [vmem:[#allocation2 + $0x170] sm:$0xf0] %v1825
  %2257 = vst [vmem:[#allocation2 + $0x178] sm:$0xf0] %v1826
  %2258 = vst [vmem:[#allocation2 + $0x180] sm:$0xf0] %v2244
  %2259 = vrot.lane.b32.xlu0 %v1679, 127
  %v2260 = vpop.permute.xlu0 %2259
  %2261 = vrot.lane.b32.xlu0 %v1680, 127
  %v2262 = vpop.permute.xlu0 %2261
  %2263 = vrot.lane.b32.xlu0 %v1681, 127
  %v2264 = vpop.permute.xlu0 %2263
  %2265 = vrot.lane.b32.xlu0 %v1682, 127
  %v2266 = vpop.permute.xlu0 %2265
  %2267 = vrot.lane.b32.xlu0 %v1683, 127
  %v2268 = vpop.permute.xlu0 %2267
  %2269 = vrot.lane.b32.xlu0 %v1684, 127
  %v2270 = vpop.permute.xlu0 %2269
  %2271 = vrot.lane.b32.xlu0 %v1685, 127
  %v2272 = vpop.permute.xlu0 %2271
  %v2273 = vsel %vm768, %v2260, %v2262
  %v2274 = vsel %vm768, %v2262, %v2264
  %v2275 = vsel %vm768, %v2264, %v2266
  %v2276 = vsel %vm768, %v2266, %v2268
  %v2277 = vsel %vm768, %v2268, %v2270
  %v2278 = vsel %vm768, %v2270, %v2272
  %2285 = vrot.lane.b32.xlu0 %v1678, 127
  %v2286 = vpop.permute.xlu0 %2285
  %v2287 = vsel %vm768, %v2286, %v2260
  %v2290 = vsel %vm293, %v2272, %v2287
  %2292 = vst [vmem:[#allocation2 + $0x188] sm:$0xf] %v2273
  %2293 = vst [vmem:[#allocation2 + $0x190] sm:$0xf] %v2274
  %2294 = vst [vmem:[#allocation2 + $0x198] sm:$0xf] %v2275
  %2295 = vst [vmem:[#allocation2 + $0x1a0] sm:$0xf] %v2276
  %2296 = vst [vmem:[#allocation2 + $0x1a8] sm:$0xf] %v2277
  %2297 = vst [vmem:[#allocation2 + $0x1b0] sm:$0xf] %v2278
  %2298 = vst [vmem:[#allocation2 + $0x1b8] sm:$0xf] %v2290
  %v2300 = vrot.slane %v1686, 4
  %2301 = vrot.lane.b32.xlu0 %v1821, 119
  %v2302 = vpop.permute.xlu0 %2301
  %2303 = vrot.lane.b32.xlu0 %v1822, 119
  %v2304 = vpop.permute.xlu0 %2303
  %2305 = vrot.lane.b32.xlu0 %v1823, 119
  %v2306 = vpop.permute.xlu0 %2305
  %2307 = vrot.lane.b32.xlu0 %v1824, 119
  %v2308 = vpop.permute.xlu0 %2307
  %2309 = vrot.lane.b32.xlu0 %v1825, 119
  %v2310 = vpop.permute.xlu0 %2309
  %2311 = vrot.lane.b32.xlu0 %v1826, 119
  %v2312 = vpop.permute.xlu0 %2311
  %2313 = vrot.lane.b32.xlu0 %v1827, 119
  %v2314 = vpop.permute.xlu0 %2313
  %2315 = vrot.lane.b32.xlu0 %v2300, 119
  %v2316 = vpop.permute.xlu0 %2315
  %v2317 = vsel %vm813, %v2302, %v2304
  %v2318 = vsel %vm813, %v2304, %v2306
  %v2319 = vsel %vm813, %v2306, %v2308
  %v2320 = vsel %vm813, %v2308, %v2310
  %v2321 = vsel %vm813, %v2310, %v2312
  %v2322 = vsel %vm813, %v2312, %v2314
  %v2323 = vsel %vm813, %v2314, %v2316
  %2331 = vst [vmem:[#allocation2 + $0x188] sm:$0xf0] %v2317
  %2332 = vst [vmem:[#allocation2 + $0x190] sm:$0xf0] %v2318
  %2333 = vst [vmem:[#allocation2 + $0x198] sm:$0xf0] %v2319
  %2334 = vst [vmem:[#allocation2 + $0x1a0] sm:$0xf0] %v2320
  %2335 = vst [vmem:[#allocation2 + $0x1a8] sm:$0xf0] %v2321
  %2336 = vst [vmem:[#allocation2 + $0x1b0] sm:$0xf0] %v2322
  %2337 = vst [vmem:[#allocation2 + $0x1b8] sm:$0xf0] %v2323
  %2338 = vrot.lane.b32.xlu0 %v1679, 118
  %v2339 = vpop.permute.xlu0 %2338
  %2340 = vrot.lane.b32.xlu0 %v1680, 118
  %v2341 = vpop.permute.xlu0 %2340
  %2342 = vrot.lane.b32.xlu0 %v1681, 118
  %v2343 = vpop.permute.xlu0 %2342
  %2344 = vrot.lane.b32.xlu0 %v1682, 118
  %v2345 = vpop.permute.xlu0 %2344
  %2346 = vrot.lane.b32.xlu0 %v1683, 118
  %v2347 = vpop.permute.xlu0 %2346
  %2348 = vrot.lane.b32.xlu0 %v1684, 118
  %v2349 = vpop.permute.xlu0 %2348
  %2350 = vrot.lane.b32.xlu0 %v1685, 118
  %v2351 = vpop.permute.xlu0 %2350
  %2352 = vrot.lane.b32.xlu0 %v1686, 118
  %v2353 = vpop.permute.xlu0 %2352
  %v2354 = vsel %vm851, %v2339, %v2341
  %v2355 = vsel %vm851, %v2341, %v2343
  %v2356 = vsel %vm851, %v2343, %v2345
  %v2357 = vsel %vm851, %v2345, %v2347
  %v2358 = vsel %vm851, %v2347, %v2349
  %v2359 = vsel %vm851, %v2349, %v2351
  %v2360 = vsel %vm851, %v2351, %v2353
  %v2369 = vsel %vm237, %v2360, %v2339
  %2371 = vst [vmem:[#allocation2 + $0x1c0] sm:$0xf] %v2354
  %2372 = vst [vmem:[#allocation2 + $0x1c8] sm:$0xf] %v2355
  %2373 = vst [vmem:[#allocation2 + $0x1d0] sm:$0xf] %v2356
  %2374 = vst [vmem:[#allocation2 + $0x1d8] sm:$0xf] %v2357
  %2375 = vst [vmem:[#allocation2 + $0x1e0] sm:$0xf] %v2358
  %2376 = vst [vmem:[#allocation2 + $0x1e8] sm:$0xf] %v2359
  %2377 = vst [vmem:[#allocation2 + $0x1f0] sm:$0xf] %v2369
  %2378 = vrot.lane.b32.xlu0 %v1679, 117
  %v2379 = vpop.permute.xlu0 %2378
  %2380 = vrot.lane.b32.xlu0 %v1680, 117
  %v2381 = vpop.permute.xlu0 %2380
  %2382 = vrot.lane.b32.xlu0 %v1681, 117
  %v2383 = vpop.permute.xlu0 %2382
  %2384 = vrot.lane.b32.xlu0 %v1682, 117
  %v2385 = vpop.permute.xlu0 %2384
  %2386 = vrot.lane.b32.xlu0 %v1683, 117
  %v2387 = vpop.permute.xlu0 %2386
  %2388 = vrot.lane.b32.xlu0 %v1684, 117
  %v2389 = vpop.permute.xlu0 %2388
  %2390 = vrot.lane.b32.xlu0 %v1685, 117
  %v2391 = vpop.permute.xlu0 %2390
  %2392 = vrot.lane.b32.xlu0 %v1686, 117
  %v2393 = vpop.permute.xlu0 %2392
  %v2394 = vsel %vm892, %v2379, %v2381
  %v2395 = vsel %vm892, %v2381, %v2383
  %v2396 = vsel %vm892, %v2383, %v2385
  %v2397 = vsel %vm892, %v2385, %v2387
  %v2398 = vsel %vm892, %v2387, %v2389
  %v2399 = vsel %vm892, %v2389, %v2391
  %v2400 = vsel %vm892, %v2391, %v2393
  %v2403 = vsel %vm293, %v2400, %v2379
  %v2405 = vrot.slane %v2394, 4
  %v2406 = vrot.slane %v2395, 4
  %v2407 = vrot.slane %v2396, 4
  %v2408 = vrot.slane %v2397, 4
  %v2409 = vrot.slane %v2398, 4
  %v2410 = vrot.slane %v2399, 4
  %v2411 = vrot.slane %v2403, 4
  %2419 = vst [vmem:[#allocation2 + $0x1c0] sm:$0xf0] %v2405
  %2420 = vst [vmem:[#allocation2 + $0x1c8] sm:$0xf0] %v2406
  %2421 = vst [vmem:[#allocation2 + $0x1d0] sm:$0xf0] %v2407
  %2422 = vst [vmem:[#allocation2 + $0x1d8] sm:$0xf0] %v2408
  %2423 = vst [vmem:[#allocation2 + $0x1e0] sm:$0xf0] %v2409
  %2424 = vst [vmem:[#allocation2 + $0x1e8] sm:$0xf0] %v2410
  %2425 = vst [vmem:[#allocation2 + $0x1f0] sm:$0xf0] %v2411
  %2426 = vrot.lane.b32.xlu0 %v1679, 39
  %v2427 = vpop.permute.xlu0 %2426
  %2428 = vrot.lane.b32.xlu0 %v1680, 39
  %v2429 = vpop.permute.xlu0 %2428
  %2430 = vrot.lane.b32.xlu0 %v1681, 39
  %v2431 = vpop.permute.xlu0 %2430
  %2432 = vrot.lane.b32.xlu0 %v1682, 39
  %v2433 = vpop.permute.xlu0 %2432
  %2434 = vrot.lane.b32.xlu0 %v1683, 39
  %v2435 = vpop.permute.xlu0 %2434
  %2436 = vrot.lane.b32.xlu0 %v1684, 39
  %v2437 = vpop.permute.xlu0 %2436
  %2438 = vrot.lane.b32.xlu0 %v1685, 39
  %v2439 = vpop.permute.xlu0 %2438
  %2440 = vrot.lane.b32.xlu0 %v1686, 39
  %v2441 = vpop.permute.xlu0 %2440
  %v2442 = vsel %vm941, %v2427, %v2429
  %v2443 = vsel %vm941, %v2429, %v2431
  %v2444 = vsel %vm941, %v2431, %v2433
  %v2445 = vsel %vm941, %v2433, %v2435
  %v2446 = vsel %vm941, %v2435, %v2437
  %v2447 = vsel %vm941, %v2437, %v2439
  %v2448 = vsel %vm941, %v2439, %v2441
  %2456 = vst [vmem:[#allocation2 + $0x1f8] sm:$0xf] %v2442
  %2457 = vst [vmem:[#allocation2 + $0x200] sm:$0xf] %v2443
  %2458 = vst [vmem:[#allocation2 + $0x208] sm:$0xf] %v2444
  %2459 = vst [vmem:[#allocation2 + $0x210] sm:$0xf] %v2445
  %2460 = vst [vmem:[#allocation2 + $0x218] sm:$0xf] %v2446
  %2461 = vst [vmem:[#allocation2 + $0x220] sm:$0xf] %v2447
  %2462 = vst [vmem:[#allocation2 + $0x228] sm:$0xf] %v2448
  %2463 = vrot.lane.b32.xlu0 %v1679, 38
  %v2464 = vpop.permute.xlu0 %2463
  %2465 = vrot.lane.b32.xlu0 %v1680, 38
  %v2466 = vpop.permute.xlu0 %2465
  %2467 = vrot.lane.b32.xlu0 %v1681, 38
  %v2468 = vpop.permute.xlu0 %2467
  %2469 = vrot.lane.b32.xlu0 %v1682, 38
  %v2470 = vpop.permute.xlu0 %2469
  %2471 = vrot.lane.b32.xlu0 %v1683, 38
  %v2472 = vpop.permute.xlu0 %2471
  %2473 = vrot.lane.b32.xlu0 %v1684, 38
  %v2474 = vpop.permute.xlu0 %2473
  %2475 = vrot.lane.b32.xlu0 %v1685, 38
  %v2476 = vpop.permute.xlu0 %2475
  %2477 = vrot.lane.b32.xlu0 %v1686, 38
  %v2478 = vpop.permute.xlu0 %2477
  %v2479 = vsel %vm979, %v2464, %v2466
  %v2480 = vsel %vm979, %v2466, %v2468
  %v2481 = vsel %vm979, %v2468, %v2470
  %v2482 = vsel %vm979, %v2470, %v2472
  %v2483 = vsel %vm979, %v2472, %v2474
  %v2484 = vsel %vm979, %v2474, %v2476
  %v2485 = vsel %vm979, %v2476, %v2478
  %v2488 = vsel %vm237, %v2485, %v2464
  %v2490 = vrot.slane %v2479, 4
  %v2491 = vrot.slane %v2480, 4
  %v2492 = vrot.slane %v2481, 4
  %v2493 = vrot.slane %v2482, 4
  %v2494 = vrot.slane %v2483, 4
  %v2495 = vrot.slane %v2484, 4
  %v2496 = vrot.slane %v2488, 4
  %2504 = vst [vmem:[#allocation2 + $0x1f8] sm:$0xf0] %v2490
  %2505 = vst [vmem:[#allocation2 + $0x200] sm:$0xf0] %v2491
  %2506 = vst [vmem:[#allocation2 + $0x208] sm:$0xf0] %v2492
  %2507 = vst [vmem:[#allocation2 + $0x210] sm:$0xf0] %v2493
  %2508 = vst [vmem:[#allocation2 + $0x218] sm:$0xf0] %v2494
  %2509 = vst [vmem:[#allocation2 + $0x220] sm:$0xf0] %v2495
  %2510 = vst [vmem:[#allocation2 + $0x228] sm:$0xf0] %v2496
  %2511 = vrot.lane.b32.xlu0 %v1679, 37
  %v2512 = vpop.permute.xlu0 %2511
  %2513 = vrot.lane.b32.xlu0 %v1680, 37
  %v2514 = vpop.permute.xlu0 %2513
  %2515 = vrot.lane.b32.xlu0 %v1681, 37
  %v2516 = vpop.permute.xlu0 %2515
  %2517 = vrot.lane.b32.xlu0 %v1682, 37
  %v2518 = vpop.permute.xlu0 %2517
  %2519 = vrot.lane.b32.xlu0 %v1683, 37
  %v2520 = vpop.permute.xlu0 %2519
  %2521 = vrot.lane.b32.xlu0 %v1684, 37
  %v2522 = vpop.permute.xlu0 %2521
  %2523 = vrot.lane.b32.xlu0 %v1685, 37
  %v2524 = vpop.permute.xlu0 %2523
  %2525 = vrot.lane.b32.xlu0 %v1686, 37
  %v2526 = vpop.permute.xlu0 %2525
  %v2527 = vsel %vm1028, %v2512, %v2514
  %v2528 = vsel %vm1028, %v2514, %v2516
  %v2529 = vsel %vm1028, %v2516, %v2518
  %v2530 = vsel %vm1028, %v2518, %v2520
  %v2531 = vsel %vm1028, %v2520, %v2522
  %v2532 = vsel %vm1028, %v2522, %v2524
  %v2533 = vsel %vm1028, %v2524, %v2526
  %v2542 = vsel %vm293, %v2533, %v2512
  %2544 = vst [vmem:[#allocation2 + $0x230] sm:$0xf] %v2527
  %2545 = vst [vmem:[#allocation2 + $0x238] sm:$0xf] %v2528
  %2546 = vst [vmem:[#allocation2 + $0x240] sm:$0xf] %v2529
  %2547 = vst [vmem:[#allocation2 + $0x248] sm:$0xf] %v2530
  %2548 = vst [vmem:[#allocation2 + $0x250] sm:$0xf] %v2531
  %2549 = vst [vmem:[#allocation2 + $0x258] sm:$0xf] %v2532
  %2550 = vst [vmem:[#allocation2 + $0x260] sm:$0xf] %v2542
  %2551 = vrot.lane.b32.xlu0 %v1821, 29
  %v2552 = vpop.permute.xlu0 %2551
  %2553 = vrot.lane.b32.xlu0 %v1822, 29
  %v2554 = vpop.permute.xlu0 %2553
  %2555 = vrot.lane.b32.xlu0 %v1823, 29
  %v2556 = vpop.permute.xlu0 %2555
  %2557 = vrot.lane.b32.xlu0 %v1824, 29
  %v2558 = vpop.permute.xlu0 %2557
  %2559 = vrot.lane.b32.xlu0 %v1825, 29
  %v2560 = vpop.permute.xlu0 %2559
  %2561 = vrot.lane.b32.xlu0 %v1826, 29
  %v2562 = vpop.permute.xlu0 %2561
  %2563 = vrot.lane.b32.xlu0 %v1827, 29
  %v2564 = vpop.permute.xlu0 %2563
  %2565 = vrot.lane.b32.xlu0 %v2300, 29
  %v2566 = vpop.permute.xlu0 %2565
  %v2567 = vsel %vm1069, %v2552, %v2554
  %v2568 = vsel %vm1069, %v2554, %v2556
  %v2569 = vsel %vm1069, %v2556, %v2558
  %v2570 = vsel %vm1069, %v2558, %v2560
  %v2571 = vsel %vm1069, %v2560, %v2562
  %v2572 = vsel %vm1069, %v2562, %v2564
  %v2573 = vsel %vm1069, %v2564, %v2566
  %2581 = vst [vmem:[#allocation2 + $0x230] sm:$0xf0] %v2567
  %2582 = vst [vmem:[#allocation2 + $0x238] sm:$0xf0] %v2568
  %2583 = vst [vmem:[#allocation2 + $0x240] sm:$0xf0] %v2569
  %2584 = vst [vmem:[#allocation2 + $0x248] sm:$0xf0] %v2570
  %2585 = vst [vmem:[#allocation2 + $0x250] sm:$0xf0] %v2571
  %2586 = vst [vmem:[#allocation2 + $0x258] sm:$0xf0] %v2572
  %2587 = vst [vmem:[#allocation2 + $0x260] sm:$0xf0] %v2573
  %2588 = vrot.lane.b32.xlu0 %v1679, 28
  %v2589 = vpop.permute.xlu0 %2588
  %2590 = vrot.lane.b32.xlu0 %v1680, 28
  %v2591 = vpop.permute.xlu0 %2590
  %2592 = vrot.lane.b32.xlu0 %v1681, 28
  %v2593 = vpop.permute.xlu0 %2592
  %2594 = vrot.lane.b32.xlu0 %v1682, 28
  %v2595 = vpop.permute.xlu0 %2594
  %2596 = vrot.lane.b32.xlu0 %v1683, 28
  %v2597 = vpop.permute.xlu0 %2596
  %2598 = vrot.lane.b32.xlu0 %v1684, 28
  %v2599 = vpop.permute.xlu0 %2598
  %2600 = vrot.lane.b32.xlu0 %v1685, 28
  %v2601 = vpop.permute.xlu0 %2600
  %2602 = vrot.lane.b32.xlu0 %v1686, 28
  %v2603 = vpop.permute.xlu0 %2602
  %v2604 = vsel %vm1107, %v2589, %v2591
  %v2605 = vsel %vm1107, %v2591, %v2593
  %v2606 = vsel %vm1107, %v2593, %v2595
  %v2607 = vsel %vm1107, %v2595, %v2597
  %v2608 = vsel %vm1107, %v2597, %v2599
  %v2609 = vsel %vm1107, %v2599, %v2601
  %v2610 = vsel %vm1107, %v2601, %v2603
  %v2619 = vsel %vm237, %v2610, %v2589
  %2621 = vst [vmem:[#allocation2 + $0x268] sm:$0xf] %v2604
  %2622 = vst [vmem:[#allocation2 + $0x270] sm:$0xf] %v2605
  %2623 = vst [vmem:[#allocation2 + $0x278] sm:$0xf] %v2606
  %2624 = vst [vmem:[#allocation2 + $0x280] sm:$0xf] %v2607
  %2625 = vst [vmem:[#allocation2 + $0x288] sm:$0xf] %v2608
  %2626 = vst [vmem:[#allocation2 + $0x290] sm:$0xf] %v2609
  %2627 = vst [vmem:[#allocation2 + $0x298] sm:$0xf] %v2619
  %2628 = vrot.lane.b32.xlu0 %v1679, 27
  %v2629 = vpop.permute.xlu0 %2628
  %2630 = vrot.lane.b32.xlu0 %v1680, 27
  %v2631 = vpop.permute.xlu0 %2630
  %2632 = vrot.lane.b32.xlu0 %v1681, 27
  %v2633 = vpop.permute.xlu0 %2632
  %2634 = vrot.lane.b32.xlu0 %v1682, 27
  %v2635 = vpop.permute.xlu0 %2634
  %2636 = vrot.lane.b32.xlu0 %v1683, 27
  %v2637 = vpop.permute.xlu0 %2636
  %2638 = vrot.lane.b32.xlu0 %v1684, 27
  %v2639 = vpop.permute.xlu0 %2638
  %2640 = vrot.lane.b32.xlu0 %v1685, 27
  %v2641 = vpop.permute.xlu0 %2640
  %2642 = vrot.lane.b32.xlu0 %v1686, 27
  %v2643 = vpop.permute.xlu0 %2642
  %v2644 = vsel %vm1148, %v2629, %v2631
  %v2645 = vsel %vm1148, %v2631, %v2633
  %v2646 = vsel %vm1148, %v2633, %v2635
  %v2647 = vsel %vm1148, %v2635, %v2637
  %v2648 = vsel %vm1148, %v2637, %v2639
  %v2649 = vsel %vm1148, %v2639, %v2641
  %v2650 = vsel %vm1148, %v2641, %v2643
  %v2653 = vsel %vm293, %v2650, %v2629
  %v2655 = vrot.slane %v2644, 4
  %v2656 = vrot.slane %v2645, 4
  %v2657 = vrot.slane %v2646, 4
  %v2658 = vrot.slane %v2647, 4
  %v2659 = vrot.slane %v2648, 4
  %v2660 = vrot.slane %v2649, 4
  %v2661 = vrot.slane %v2653, 4
  %2669 = vst [vmem:[#allocation2 + $0x268] sm:$0xf0] %v2655
  %2670 = vst [vmem:[#allocation2 + $0x270] sm:$0xf0] %v2656
  %2671 = vst [vmem:[#allocation2 + $0x278] sm:$0xf0] %v2657
  %2672 = vst [vmem:[#allocation2 + $0x280] sm:$0xf0] %v2658
  %2673 = vst [vmem:[#allocation2 + $0x288] sm:$0xf0] %v2659
  %2674 = vst [vmem:[#allocation2 + $0x290] sm:$0xf0] %v2660
  %2675 = vst [vmem:[#allocation2 + $0x298] sm:$0xf0] %v2661
  %2676 = vrot.lane.b32.xlu0 %v1679, 19
  %v2677 = vpop.permute.xlu0 %2676
  %2678 = vrot.lane.b32.xlu0 %v1680, 19
  %v2679 = vpop.permute.xlu0 %2678
  %2680 = vrot.lane.b32.xlu0 %v1681, 19
  %v2681 = vpop.permute.xlu0 %2680
  %2682 = vrot.lane.b32.xlu0 %v1682, 19
  %v2683 = vpop.permute.xlu0 %2682
  %2684 = vrot.lane.b32.xlu0 %v1683, 19
  %v2685 = vpop.permute.xlu0 %2684
  %2686 = vrot.lane.b32.xlu0 %v1684, 19
  %v2687 = vpop.permute.xlu0 %2686
  %2688 = vrot.lane.b32.xlu0 %v1685, 19
  %v2689 = vpop.permute.xlu0 %2688
  %2690 = vrot.lane.b32.xlu0 %v1686, 19
  %v2691 = vpop.permute.xlu0 %2690
  %v2692 = vsel %vm1197, %v2677, %v2679
  %v2693 = vsel %vm1197, %v2679, %v2681
  %v2694 = vsel %vm1197, %v2681, %v2683
  %v2695 = vsel %vm1197, %v2683, %v2685
  %v2696 = vsel %vm1197, %v2685, %v2687
  %v2697 = vsel %vm1197, %v2687, %v2689
  %v2698 = vsel %vm1197, %v2689, %v2691
  %2706 = vst [vmem:[#allocation2 + $0x2a0] sm:$0xf] %v2692
  %2707 = vst [vmem:[#allocation2 + $0x2a8] sm:$0xf] %v2693
  %2708 = vst [vmem:[#allocation2 + $0x2b0] sm:$0xf] %v2694
  %2709 = vst [vmem:[#allocation2 + $0x2b8] sm:$0xf] %v2695
  %2710 = vst [vmem:[#allocation2 + $0x2c0] sm:$0xf] %v2696
  %2711 = vst [vmem:[#allocation2 + $0x2c8] sm:$0xf] %v2697
  %2712 = vst [vmem:[#allocation2 + $0x2d0] sm:$0xf] %v2698
  %2713 = vrot.lane.b32.xlu0 %v1679, 18
  %v2714 = vpop.permute.xlu0 %2713
  %2715 = vrot.lane.b32.xlu0 %v1680, 18
  %v2716 = vpop.permute.xlu0 %2715
  %2717 = vrot.lane.b32.xlu0 %v1681, 18
  %v2718 = vpop.permute.xlu0 %2717
  %2719 = vrot.lane.b32.xlu0 %v1682, 18
  %v2720 = vpop.permute.xlu0 %2719
  %2721 = vrot.lane.b32.xlu0 %v1683, 18
  %v2722 = vpop.permute.xlu0 %2721
  %2723 = vrot.lane.b32.xlu0 %v1684, 18
  %v2724 = vpop.permute.xlu0 %2723
  %2725 = vrot.lane.b32.xlu0 %v1685, 18
  %v2726 = vpop.permute.xlu0 %2725
  %2727 = vrot.lane.b32.xlu0 %v1686, 18
  %v2728 = vpop.permute.xlu0 %2727
  %v2729 = vsel %vm1235, %v2714, %v2716
  %v2730 = vsel %vm1235, %v2716, %v2718
  %v2731 = vsel %vm1235, %v2718, %v2720
  %v2732 = vsel %vm1235, %v2720, %v2722
  %v2733 = vsel %vm1235, %v2722, %v2724
  %v2734 = vsel %vm1235, %v2724, %v2726
  %v2735 = vsel %vm1235, %v2726, %v2728
  %v2738 = vsel %vm237, %v2735, %v2714
  %v2740 = vrot.slane %v2729, 4
  %v2741 = vrot.slane %v2730, 4
  %v2742 = vrot.slane %v2731, 4
  %v2743 = vrot.slane %v2732, 4
  %v2744 = vrot.slane %v2733, 4
  %v2745 = vrot.slane %v2734, 4
  %v2746 = vrot.slane %v2738, 4
  %2754 = vst [vmem:[#allocation2 + $0x2a0] sm:$0xf0] %v2740
  %2755 = vst [vmem:[#allocation2 + $0x2a8] sm:$0xf0] %v2741
  %2756 = vst [vmem:[#allocation2 + $0x2b0] sm:$0xf0] %v2742
  %2757 = vst [vmem:[#allocation2 + $0x2b8] sm:$0xf0] %v2743
  %2758 = vst [vmem:[#allocation2 + $0x2c0] sm:$0xf0] %v2744
  %2759 = vst [vmem:[#allocation2 + $0x2c8] sm:$0xf0] %v2745
  %2760 = vst [vmem:[#allocation2 + $0x2d0] sm:$0xf0] %v2746
  %2761 = vrot.lane.b32.xlu0 %v1679, 17
  %v2762 = vpop.permute.xlu0 %2761
  %2763 = vrot.lane.b32.xlu0 %v1680, 17
  %v2764 = vpop.permute.xlu0 %2763
  %2765 = vrot.lane.b32.xlu0 %v1681, 17
  %v2766 = vpop.permute.xlu0 %2765
  %2767 = vrot.lane.b32.xlu0 %v1682, 17
  %v2768 = vpop.permute.xlu0 %2767
  %2769 = vrot.lane.b32.xlu0 %v1683, 17
  %v2770 = vpop.permute.xlu0 %2769
  %2771 = vrot.lane.b32.xlu0 %v1684, 17
  %v2772 = vpop.permute.xlu0 %2771
  %2773 = vrot.lane.b32.xlu0 %v1685, 17
  %v2774 = vpop.permute.xlu0 %2773
  %2775 = vrot.lane.b32.xlu0 %v1686, 17
  %v2776 = vpop.permute.xlu0 %2775
  %v2777 = vsel %vm1284, %v2762, %v2764
  %v2778 = vsel %vm1284, %v2764, %v2766
  %v2779 = vsel %vm1284, %v2766, %v2768
  %v2780 = vsel %vm1284, %v2768, %v2770
  %v2781 = vsel %vm1284, %v2770, %v2772
  %v2782 = vsel %vm1284, %v2772, %v2774
  %v2783 = vsel %vm1284, %v2774, %v2776
  %v2792 = vsel %vm293, %v2783, %v2762
  %2794 = vst [vmem:[#allocation2 + $0x2d8] sm:$0xf] %v2777
  %2795 = vst [vmem:[#allocation2 + $0x2e0] sm:$0xf] %v2778
  %2796 = vst [vmem:[#allocation2 + $0x2e8] sm:$0xf] %v2779
  %2797 = vst [vmem:[#allocation2 + $0x2f0] sm:$0xf] %v2780
  %2798 = vst [vmem:[#allocation2 + $0x2f8] sm:$0xf] %v2781
  %2799 = vst [vmem:[#allocation2 + $0x300] sm:$0xf] %v2782
  %2800 = vst [vmem:[#allocation2 + $0x308] sm:$0xf] %v2792
  %v2801 = vld [vmem:[%s4] sm:$0xff]
  %v2802 = vld [vmem:[#allocation2] sm:$0xff]
  %v2803 = vld [vmem:[#allocation2 + $0x8] sm:$0xff]
  %v2804 = vld [vmem:[#allocation2 + $0x10] sm:$0xff]
  %v2805 = vld [vmem:[#allocation2 + $0x18] sm:$0xff]
  %v2806 = vld [vmem:[#allocation2 + $0x20] sm:$0xff]
  %v2807 = vld [vmem:[#allocation2 + $0x28] sm:$0xff]
  %v2808 = vld [vmem:[#allocation2 + $0x30] sm:$0xff]
  %v2809 = vld [vmem:[#allocation2 + $0x38] sm:$0xff]
  %v2810 = vld [vmem:[#allocation2 + $0x40] sm:$0xff]
  %v2811 = vld [vmem:[#allocation2 + $0x48] sm:$0xff]
  %v2812 = vld [vmem:[#allocation2 + $0x50] sm:$0xff]
  %v2813 = vld [vmem:[#allocation2 + $0x58] sm:$0xff]
  %v2814 = vld [vmem:[#allocation2 + $0x60] sm:$0xff]
  %v2815 = vld [vmem:[#allocation2 + $0x68] sm:$0xff]
  %v2816 = vld [vmem:[#allocation2 + $0x70] sm:$0xff]
  %v2817 = vld [vmem:[#allocation2 + $0x78] sm:$0xff]
  %v2818 = vld [vmem:[#allocation2 + $0x80] sm:$0xff]
  %v2819 = vld [vmem:[#allocation2 + $0x88] sm:$0xff]
  %v2820 = vld [vmem:[#allocation2 + $0x90] sm:$0xff]
  %v2821 = vld [vmem:[#allocation2 + $0x98] sm:$0xff]
  %v2822 = vld [vmem:[#allocation2 + $0xa0] sm:$0xff]
  %v2823 = vld [vmem:[#allocation2 + $0xa8] sm:$0xff]
  %v2824 = vld [vmem:[#allocation2 + $0xb0] sm:$0xff]
  %v2825 = vld [vmem:[#allocation2 + $0xb8] sm:$0xff]
  %v2826 = vld [vmem:[#allocation2 + $0xc0] sm:$0xff]
  %v2827 = vld [vmem:[#allocation2 + $0xc8] sm:$0xff]
  %v2828 = vld [vmem:[#allocation2 + $0xd0] sm:$0xff]
  %v2829 = vld [vmem:[#allocation2 + $0xd8] sm:$0xff]
  %v2830 = vld [vmem:[#allocation2 + $0xe0] sm:$0xff]
  %v2831 = vld [vmem:[#allocation2 + $0xe8] sm:$0xff]
  %v2832 = vld [vmem:[#allocation2 + $0xf0] sm:$0xff]
  %v2833 = vld [vmem:[#allocation2 + $0xf8] sm:$0xff]
  %v2834 = vld [vmem:[#allocation2 + $0x100] sm:$0xff]
  %v2835 = vld [vmem:[#allocation2 + $0x108] sm:$0xff]
  %v2836 = vld [vmem:[#allocation2 + $0x110] sm:$0xff]
  %v2837 = vld [vmem:[#allocation2 + $0x118] sm:$0xff]
  %v2838 = vld [vmem:[#allocation2 + $0x120] sm:$0xff]
  %v2839 = vld [vmem:[#allocation2 + $0x128] sm:$0xff]
  %v2840 = vld [vmem:[#allocation2 + $0x130] sm:$0xff]
  %v2841 = vld [vmem:[#allocation2 + $0x138] sm:$0xff]
  %v2842 = vld [vmem:[#allocation2 + $0x140] sm:$0xff]
  %v2843 = vld [vmem:[#allocation2 + $0x148] sm:$0xff]
  %v2844 = vld [vmem:[#allocation2 + $0x150] sm:$0xff]
  %v2845 = vld [vmem:[#allocation2 + $0x158] sm:$0xff]
  %v2846 = vld [vmem:[#allocation2 + $0x160] sm:$0xff]
  %v2847 = vld [vmem:[#allocation2 + $0x168] sm:$0xff]
  %v2848 = vld [vmem:[#allocation2 + $0x170] sm:$0xff]
  %v2849 = vld [vmem:[#allocation2 + $0x178] sm:$0xff]
  %v2850 = vld [vmem:[#allocation2 + $0x180] sm:$0xff]
  %v2851 = vld [vmem:[#allocation2 + $0x188] sm:$0xff]
  %v2852 = vld [vmem:[#allocation2 + $0x190] sm:$0xff]
  %v2853 = vld [vmem:[#allocation2 + $0x198] sm:$0xff]
  %v2854 = vld [vmem:[#allocation2 + $0x1a0] sm:$0xff]
  %v2855 = vld [vmem:[#allocation2 + $0x1a8] sm:$0xff]
  %v2856 = vld [vmem:[#allocation2 + $0x1b0] sm:$0xff]
  %v2857 = vld [vmem:[#allocation2 + $0x1b8] sm:$0xff]
  %v2858 = vld [vmem:[#allocation2 + $0x1c0] sm:$0xff]
  %v2859 = vld [vmem:[#allocation2 + $0x1c8] sm:$0xff]
  %v2860 = vld [vmem:[#allocation2 + $0x1d0] sm:$0xff]
  %v2861 = vld [vmem:[#allocation2 + $0x1d8] sm:$0xff]
  %v2862 = vld [vmem:[#allocation2 + $0x1e0] sm:$0xff]
  %v2863 = vld [vmem:[#allocation2 + $0x1e8] sm:$0xff]
  %v2864 = vld [vmem:[#allocation2 + $0x1f0] sm:$0xff]
  %v2865 = vld [vmem:[#allocation2 + $0x1f8] sm:$0xff]
  %v2866 = vld [vmem:[#allocation2 + $0x200] sm:$0xff]
  %v2867 = vld [vmem:[#allocation2 + $0x208] sm:$0xff]
  %v2868 = vld [vmem:[#allocation2 + $0x210] sm:$0xff]
  %v2869 = vld [vmem:[#allocation2 + $0x218] sm:$0xff]
  %v2870 = vld [vmem:[#allocation2 + $0x220] sm:$0xff]
  %v2871 = vld [vmem:[#allocation2 + $0x228] sm:$0xff]
  %v2872 = vld [vmem:[#allocation2 + $0x230] sm:$0xff]
  %v2873 = vld [vmem:[#allocation2 + $0x238] sm:$0xff]
  %v2874 = vld [vmem:[#allocation2 + $0x240] sm:$0xff]
  %v2875 = vld [vmem:[#allocation2 + $0x248] sm:$0xff]
  %v2876 = vld [vmem:[#allocation2 + $0x250] sm:$0xff]
  %v2877 = vld [vmem:[#allocation2 + $0x258] sm:$0xff]
  %v2878 = vld [vmem:[#allocation2 + $0x260] sm:$0xff]
  %v2879 = vld [vmem:[#allocation2 + $0x268] sm:$0xff]
  %v2880 = vld [vmem:[#allocation2 + $0x270] sm:$0xff]
  %v2881 = vld [vmem:[#allocation2 + $0x278] sm:$0xff]
  %v2882 = vld [vmem:[#allocation2 + $0x280] sm:$0xff]
  %v2883 = vld [vmem:[#allocation2 + $0x288] sm:$0xff]
  %v2884 = vld [vmem:[#allocation2 + $0x290] sm:$0xff]
  %v2885 = vld [vmem:[#allocation2 + $0x298] sm:$0xff]
  %v2886 = vld [vmem:[#allocation2 + $0x2a0] sm:$0xff]
  %v2887 = vld [vmem:[#allocation2 + $0x2a8] sm:$0xff]
  %v2888 = vld [vmem:[#allocation2 + $0x2b0] sm:$0xff]
  %v2889 = vld [vmem:[#allocation2 + $0x2b8] sm:$0xff]
  %v2890 = vld [vmem:[#allocation2 + $0x2c0] sm:$0xff]
  %v2891 = vld [vmem:[#allocation2 + $0x2c8] sm:$0xff]
  %v2892 = vld [vmem:[#allocation2 + $0x2d0] sm:$0xff]
  %v2893 = vld [vmem:[#allocation2 + $0x2d8] sm:$0xff]
  %v2894 = vld [vmem:[#allocation2 + $0x2e0] sm:$0xff]
  %v2895 = vld [vmem:[#allocation2 + $0x2e8] sm:$0xff]
  %v2896 = vld [vmem:[#allocation2 + $0x2f0] sm:$0xff]
  %v2897 = vld [vmem:[#allocation2 + $0x2f8] sm:$0xff]
  %v2898 = vld [vmem:[#allocation2 + $0x300] sm:$0xff]
  %v2899 = vld [vmem:[#allocation2 + $0x308] sm:$0xff]
  %v2900 = vld [vmem:[#allocation2 + $0x310] sm:$0xff]
  %v2901 = vld [vmem:[#allocation2 + $0x318] sm:$0xff]
  %v2902 = vld [vmem:[#allocation2 + $0x320] sm:$0xff]
  %v2903 = vld [vmem:[#allocation2 + $0x328] sm:$0xff]
  %v2904 = vld [vmem:[#allocation2 + $0x330] sm:$0xff]
  %v2905 = vld [vmem:[#allocation2 + $0x338] sm:$0xff]
  %v2906 = vld [vmem:[#allocation2 + $0x340] sm:$0xff]
  %v2907 = vld [vmem:[#allocation2 + $0x348] sm:$0xff]
  %v2908 = vld [vmem:[#allocation2 + $0x350] sm:$0xff]
  %v2909 = vld [vmem:[#allocation2 + $0x358] sm:$0xff]
  %v2910 = vld [vmem:[#allocation2 + $0x360] sm:$0xff]
  %v2911 = vld [vmem:[#allocation2 + $0x368] sm:$0xff]
  %v2912 = vld [vmem:[#allocation2 + $0x370] sm:$0xff]
  %v2913 = vld [vmem:[#allocation2 + $0x378] sm:$0xff]
  %s2914 = scalar_lea.vmem %s5, 72
  %v2915 = vld [vmem:[%s2914 + $0x8] sm:$0xff]
  %v2916 = vld [vmem:[%s2914 + $0x10] sm:$0xff]
  %v2917 = vld [vmem:[%s2914 + $0x18] sm:$0xff]
  %v2918 = vld [vmem:[%s2914 + $0x20] sm:$0xff]
  %v2919 = vld [vmem:[%s2914 + $0x28] sm:$0xff]
  %v2920 = vld [vmem:[%s2914 + $0x30] sm:$0xff]
  %v2921 = vld [vmem:[%s2914 + $0x38] sm:$0xff]
  %v2923 = vunpack.c.l.b16 %v2801
  %v2924 = vunpack.c.h.b16 %v2801
  %v2925 = vpack.c.b16 %v2923, %v2923
  %v2926 = vpack.c.b16 %v2924, %v2924
  %2929 = vmatprep.subr.bf16.mxu0 %v2803
  %2930 = vmatpush1.bf16.msra.mxu0 %v2802
  %2931 = vmatprep.subr.bf16.mxu0 %v2810
  %2932 = vmatpush1.bf16.msra.mxu0 %v2809
  %2933 = vmatprep.subr.bf16.mxu0 %v2817
  %2934 = vmatpush1.bf16.msra.mxu0 %v2816
  %2935 = vmatprep.subr.bf16.mxu0 %v2824
  %2936 = vmatpush1.bf16.msra.mxu0 %v2823
  %2937 = vmatprep.subr.bf16.mxu0 %v2831
  %2938 = vmatpush1.bf16.msra.mxu0 %v2830
  %2939 = vmatprep.subr.bf16.mxu0 %v2838
  %2940 = vmatpush1.bf16.msra.mxu0 %v2837
  %2941 = vmatprep.subr.bf16.mxu0 %v2845
  %2942 = vmatpush1.bf16.msra.mxu0 %v2844
  %2943 = vmatprep.subr.bf16.mxu0 %v2852
  %2944 = vmatpush1.bf16.msra.mxu0 %v2851
  %2945 = vmatprep.subr.bf16.mxu0 %v2859
  %2946 = vmatpush1.bf16.msra.mxu0 %v2858
  %2947 = vmatprep.subr.bf16.mxu0 %v2866
  %2948 = vmatpush1.bf16.msra.mxu0 %v2865
  %2949 = vmatprep.subr.bf16.mxu0 %v2873
  %2950 = vmatpush1.bf16.msra.mxu0 %v2872
  %2951 = vmatprep.subr.bf16.mxu0 %v2880
  %2952 = vmatpush1.bf16.msra.mxu0 %v2879
  %2953 = vmatprep.subr.bf16.mxu0 %v2887
  %2954 = vmatpush1.bf16.msra.mxu0 %v2886
  %2955 = vmatprep.subr.bf16.mxu0 %v2894
  %2956 = vmatpush1.bf16.msra.mxu0 %v2893
  %2957 = vmatprep.subr.bf16.mxu0 %v2901
  %2958 = vmatpush1.bf16.msra.mxu0 %v2900
  %2959 = vmatprep.subr.bf16.mxu0 %v2908
  %2960 = vmatpush1.bf16.msra.mxu0 %v2907
  %2961 = vmatprep.mubr.bf16.mxu0 %v2926
  %2962 = vmatmul.mubr.bf16.gmra.mrb[0].mxu0 %v2925
  %v2963 = vpop.f32.mrb[0].mxu0
  %v2964 = vadd.f32 %v2915, %v2963
  %v2965 = vpop.f32.mrb[0].mxu0
  %v2966 = vadd.f32 %v2916, %v2965
  %v2967 = vpop.f32.mrb[0].mxu0
  %v2968 = vpop.f32.mrb[0].mxu0
  %2969 = vdwg.mxu0
  %2970 = vmatprep.subr.bf16.mxu0 %v2805
  %2971 = vmatpush1.bf16.msra.mxu0 %v2804
  %2972 = vmatprep.subr.bf16.mxu0 %v2812
  %2973 = vmatpush1.bf16.msra.mxu0 %v2811
  %2974 = vmatprep.subr.bf16.mxu0 %v2819
  %2975 = vmatpush1.bf16.msra.mxu0 %v2818
  %2976 = vmatprep.subr.bf16.mxu0 %v2826
  %2977 = vmatpush1.bf16.msra.mxu0 %v2825
  %2978 = vmatprep.subr.bf16.mxu0 %v2833
  %2979 = vmatpush1.bf16.msra.mxu0 %v2832
  %2980 = vmatprep.subr.bf16.mxu0 %v2840
  %2981 = vmatpush1.bf16.msra.mxu0 %v2839
  %2982 = vmatprep.subr.bf16.mxu0 %v2847
  %2983 = vmatpush1.bf16.msra.mxu0 %v2846
  %2984 = vmatprep.subr.bf16.mxu0 %v2854
  %2985 = vmatpush1.bf16.msra.mxu0 %v2853
  %2986 = vmatprep.subr.bf16.mxu0 %v2861
  %2987 = vmatpush1.bf16.msra.mxu0 %v2860
  %2988 = vmatprep.subr.bf16.mxu0 %v2868
  %2989 = vmatpush1.bf16.msra.mxu0 %v2867
  %2990 = vmatprep.subr.bf16.mxu0 %v2875
  %2991 = vmatpush1.bf16.msra.mxu0 %v2874
  %2992 = vmatprep.subr.bf16.mxu0 %v2882
  %2993 = vmatpush1.bf16.msra.mxu0 %v2881
  %2994 = vmatprep.subr.bf16.mxu0 %v2889
  %2995 = vmatpush1.bf16.msra.mxu0 %v2888
  %2996 = vmatprep.subr.bf16.mxu0 %v2896
  %2997 = vmatpush1.bf16.msra.mxu0 %v2895
  %2998 = vmatprep.subr.bf16.mxu0 %v2903
  %2999 = vmatpush1.bf16.msra.mxu0 %v2902
  %3000 = vmatprep.subr.bf16.mxu0 %v2910
  %3001 = vmatpush1.bf16.msra.mxu0 %v2909
  %3002 = vmatprep.mubr.bf16.mxu0 %v2926
  %3003 = vmatmul.mubr.bf16.gmra.mrb[0].mxu0 %v2925
  %v3004 = vpop.f32.mrb[0].mxu0
  %v3005 = vadd.f32 %v2917, %v3004
  %v3006 = vpop.f32.mrb[0].mxu0
  %v3007 = vadd.f32 %v2918, %v3006
  %v3008 = vpop.f32.mrb[0].mxu0
  %v3009 = vpop.f32.mrb[0].mxu0
  %3010 = vdwg.mxu0
  %3011 = vmatprep.subr.bf16.mxu0 %v2807
  %3012 = vmatpush1.bf16.msra.mxu0 %v2806
  %3013 = vmatprep.subr.bf16.mxu0 %v2814
  %3014 = vmatpush1.bf16.msra.mxu0 %v2813
  %3015 = vmatprep.subr.bf16.mxu0 %v2821
  %3016 = vmatpush1.bf16.msra.mxu0 %v2820
  %3017 = vmatprep.subr.bf16.mxu0 %v2828
  %3018 = vmatpush1.bf16.msra.mxu0 %v2827
  %3019 = vmatprep.subr.bf16.mxu0 %v2835
  %3020 = vmatpush1.bf16.msra.mxu0 %v2834
  %3021 = vmatprep.subr.bf16.mxu0 %v2842
  %3022 = vmatpush1.bf16.msra.mxu0 %v2841
  %3023 = vmatprep.subr.bf16.mxu0 %v2849
  %3024 = vmatpush1.bf16.msra.mxu0 %v2848
  %3025 = vmatprep.subr.bf16.mxu0 %v2856
  %3026 = vmatpush1.bf16.msra.mxu0 %v2855
  %3027 = vmatprep.subr.bf16.mxu0 %v2863
  %3028 = vmatpush1.bf16.msra.mxu0 %v2862
  %3029 = vmatprep.subr.bf16.mxu0 %v2870
  %3030 = vmatpush1.bf16.msra.mxu0 %v2869
  %3031 = vmatprep.subr.bf16.mxu0 %v2877
  %3032 = vmatpush1.bf16.msra.mxu0 %v2876
  %3033 = vmatprep.subr.bf16.mxu0 %v2884
  %3034 = vmatpush1.bf16.msra.mxu0 %v2883
  %3035 = vmatprep.subr.bf16.mxu0 %v2891
  %3036 = vmatpush1.bf16.msra.mxu0 %v2890
  %3037 = vmatprep.subr.bf16.mxu0 %v2898
  %3038 = vmatpush1.bf16.msra.mxu0 %v2897
  %3039 = vmatprep.subr.bf16.mxu0 %v2905
  %3040 = vmatpush1.bf16.msra.mxu0 %v2904
  %3041 = vmatprep.subr.bf16.mxu0 %v2912
  %3042 = vmatpush1.bf16.msra.mxu0 %v2911
  %3043 = vmatprep.mubr.bf16.mxu0 %v2926
  %3044 = vmatmul.mubr.bf16.gmra.mrb[0].mxu0 %v2925
  %v3045 = vpop.f32.mrb[0].mxu0
  %v3046 = vadd.f32 %v2919, %v3045
  %v3047 = vpop.f32.mrb[0].mxu0
  %v3048 = vadd.f32 %v2920, %v3047
  %v3049 = vpop.f32.mrb[0].mxu0
  %v3050 = vpop.f32.mrb[0].mxu0
  %3051 = vdwg.mxu0
  %3052 = vmatprep.subr.bf16.mxu0 0
  %3053 = vmatpush1.bf16.msra.mxu0 %v2808
  %3054 = vmatprep.subr.bf16.mxu0 0
  %3055 = vmatpush1.bf16.msra.mxu0 %v2815
  %3056 = vmatprep.subr.bf16.mxu0 0
  %3057 = vmatpush1.bf16.msra.mxu0 %v2822
  %3058 = vmatprep.subr.bf16.mxu0 0
  %3059 = vmatpush1.bf16.msra.mxu0 %v2829
  %3060 = vmatprep.subr.bf16.mxu0 0
  %3061 = vmatpush1.bf16.msra.mxu0 %v2836
  %3062 = vmatprep.subr.bf16.mxu0 0
  %3063 = vmatpush1.bf16.msra.mxu0 %v2843
  %3064 = vmatprep.subr.bf16.mxu0 0
  %3065 = vmatpush1.bf16.msra.mxu0 %v2850
  %3066 = vmatprep.subr.bf16.mxu0 0
  %3067 = vmatpush1.bf16.msra.mxu0 %v2857
  %3068 = vmatprep.subr.bf16.mxu0 0
  %3069 = vmatpush1.bf16.msra.mxu0 %v2864
  %3070 = vmatprep.subr.bf16.mxu0 0
  %3071 = vmatpush1.bf16.msra.mxu0 %v2871
  %3072 = vmatprep.subr.bf16.mxu0 0
  %3073 = vmatpush1.bf16.msra.mxu0 %v2878
  %3074 = vmatprep.subr.bf16.mxu0 0
  %3075 = vmatpush1.bf16.msra.mxu0 %v2885
  %3076 = vmatprep.subr.bf16.mxu0 0
  %3077 = vmatpush1.bf16.msra.mxu0 %v2892
  %3078 = vmatprep.subr.bf16.mxu0 0
  %3079 = vmatpush1.bf16.msra.mxu0 %v2899
  %3080 = vmatprep.subr.bf16.mxu0 0
  %3081 = vmatpush1.bf16.msra.mxu0 %v2906
  %3082 = vmatprep.subr.bf16.mxu0 0
  %3083 = vmatpush1.bf16.msra.mxu0 %v2913
  %3084 = vmatprep.mubr.bf16.mxu0 %v2926
  %3085 = vmatmul.mubr.bf16.gmra.mrb[0].mxu0 %v2925
  %v3086 = vpop.f32.mrb[0].mxu0
  %v3087 = vadd.f32 %v2921, %v3086
  %v3088 = vpop.f32.mrb[0].mxu0
  %v3089 = vpop.f32.mrb[0].mxu0
  %v3090 = vpop.f32.mrb[0].mxu0
  %3091 = vdwg.mxu0
  %v3092 = vmax.f32 %v2964, 0.0
  %v3093 = vmax.f32 %v2966, 0.0
  %v3094 = vmax.f32 %v3005, 0.0
  %v3095 = vmax.f32 %v3007, 0.0
  %v3096 = vmax.f32 %v3046, 0.0
  %v3097 = vmax.f32 %v3048, 0.0
  %v3098 = vmax.f32 %v3087, 0.0
  %s3099 = scalar_lea.vmem %s6, 72
  %3100 = vst [vmem:[%s3099 + $0x8] sm:$0xff] %v3092
  %3101 = vst [vmem:[%s3099 + $0x10] sm:$0xff] %v3093
  %3102 = vst [vmem:[%s3099 + $0x18] sm:$0xff] %v3094
  %3103 = vst [vmem:[%s3099 + $0x20] sm:$0xff] %v3095
  %3104 = vst [vmem:[%s3099 + $0x28] sm:$0xff] %v3096
  %3105 = vst [vmem:[%s3099 + $0x30] sm:$0xff] %v3097
  %3106 = vst [vmem:[%s3099 + $0x38] sm:$0xff] %v3098
  %3107 = vst [vmem:[%s3099] sm:$0xff] 0.0
  %3108 = vst [vmem:[%s3099 + $0x40] sm:$0xff] 0.0
  // Predicated region
  $region26: #{new_block_forward.3} parent=0 // pred_check
    _
  $region27: #{new_block_forward.3} parent=0 // pred_check_branch
    %3110 = sbr.rel (0) target = $region29
  $region28: #{new_block_forward.3} parent=0 // pred_region
    _
  $region29: #{new_block_forward.3} parent=0 // pred_fallthru
    _
  // Predicated region
  $region30: #{new_block_forward.3} parent=0 // pred_check
    _
  $region31: #{new_block_forward.3} parent=0 // pred_check_branch
    %3112 = sbr.rel (0) target = $region33
  $region32: #{new_block_forward.3} parent=0 // pred_region
    _
  $region33: #{new_block_forward.3} parent=0 // pred_fallthru
    _

// kernel: new_block_forward.2
$region0: #{new_block_forward.2}
  #allocation0 [shape = 'u32[]', space=smem, size = 0x4, offset = 0x4, fixed_abs, tag = 'smem constant byte address 0x4 - core index']
  #allocation1 [shape = 'u32[144,128]{1,0:T(1,128)}', space=vmem, size = 0x12000, scoped, tag = 'internal scratch']
  #allocation2 [shape = 'bf16[256,896]{1,0:T(16,128)(2,1)}', space=vmem, size = 0x70000, scoped, tag = 'scratch operand']
  %s0 = inlined_call_operand.vmem [shape: f32[2,8,1152], index: 0, kind: input, shape index: {}]
  %s1 = inlined_call_operand.vmem [shape: f32[8,1], index: 1, kind: input, shape index: {}]
  %s2 = inlined_call_operand.vmem [shape: f32[8,1], index: 2, kind: input, shape index: {}]
  %s3 = inlined_call_operand.vmem [shape: f32[1,1152], index: 3, kind: input, shape index: {}]
  %s4 = inlined_call_operand.vmem [shape: bf16[8,256], index: 4, kind: input, shape index: {}]
  %s5 = inlined_call_operand.vmem [shape: bf16[2,8,1152], index: 5, kind: output, shape index: {0}]
  %s6 = inlined_call_operand.vmem [shape: f32[1,8,128], index: 6, kind: output, shape index: {1}]
  %7 = xla_tuple %s5, %s6
  %s8 = sld [smem:[#allocation0]]
  $region38: #{new_block_forward.2} parent=0
    _
  %s10 = ssub.s32 1, %s8
  %s11 = scalar_select 0, %s10, %s8
  // Predicated region
  $region2: #{new_block_forward.2} parent=0 // pred_check
    _
  $region3: #{new_block_forward.2} parent=0 // pred_check_branch
    %13 = sbr.rel (0) target = $region5
  $region4: #{new_block_forward.2} parent=0 // pred_region
    _
  $region5: #{new_block_forward.2} parent=0 // pred_fallthru
    _
  // Predicated region
  $region6: #{new_block_forward.2} parent=0 // pred_check
    _
  $region7: #{new_block_forward.2} parent=0 // pred_check_branch
    %15 = sbr.rel (0) target = $region9
  $region8: #{new_block_forward.2} parent=0 // pred_region
    _
  $region9: #{new_block_forward.2} parent=0 // pred_fallthru
    _
  // Predicated region
  $region10: #{new_block_forward.2} parent=0 // pred_check
    _
  $region11: #{new_block_forward.2} parent=0 // pred_check_branch
    %17 = sbr.rel (0) target = $region13
  $region12: #{new_block_forward.2} parent=0 // pred_region
    _
  $region13: #{new_block_forward.2} parent=0 // pred_fallthru
    _
  // Predicated region
  $region14: #{new_block_forward.2} parent=0 // pred_check
    _
  $region15: #{new_block_forward.2} parent=0 // pred_check_branch
    %19 = sbr.rel (0) target = $region17
  $region16: #{new_block_forward.2} parent=0 // pred_region
    _
  $region17: #{new_block_forward.2} parent=0 // pred_fallthru
    _
  // Predicated region
  $region18: #{new_block_forward.2} parent=0 // pred_check
    _
  $region19: #{new_block_forward.2} parent=0 // pred_check_branch
    %21 = sbr.rel (0) target = $region21
  $region20: #{new_block_forward.2} parent=0 // pred_region
    _
  $region21: #{new_block_forward.2} parent=0 // pred_fallthru
    _
  %v23 = vld [vmem:[%s3] sm:$0xff]
  %v24 = vld [vmem:[%s3 + $0x8] sm:$0x1]
  %vm25 = vcmp.ne.f32.partialorder %v23, 0.0
  %vm26 = vcmp.ne.f32.partialorder %v24, 0.0
  %27 = vst [vmem:[#allocation2 + $0x2d8] sm:$0xf0] 0
  %28 = vst [vmem:[#allocation2 + $0x2e0] sm:$0xf0] 0
  %29 = vst [vmem:[#allocation2 + $0x2e8] sm:$0xf0] 0
  %30 = vst [vmem:[#allocation2 + $0x2f0] sm:$0xf0] 0
  %31 = vst [vmem:[#allocation2 + $0x2f8] sm:$0xf0] 0
  %32 = vst [vmem:[#allocation2 + $0x300] sm:$0xf0] 0
  %33 = vst [vmem:[#allocation2 + $0x308] sm:$0xf0] 0
  %34 = vst [vmem:[#allocation2 + $0x310] sm:$0xff] 0
  %35 = vst [vmem:[#allocation2 + $0x318] sm:$0xff] 0
  %36 = vst [vmem:[#allocation2 + $0x320] sm:$0xff] 0
  %37 = vst [vmem:[#allocation2 + $0x328] sm:$0xff] 0
  %38 = vst [vmem:[#allocation2 + $0x330] sm:$0xff] 0
  %39 = vst [vmem:[#allocation2 + $0x338] sm:$0xff] 0
  %40 = vst [vmem:[#allocation2 + $0x340] sm:$0xff] 0
  %41 = vst [vmem:[#allocation2 + $0x348] sm:$0xff] 0
  %42 = vst [vmem:[#allocation2 + $0x350] sm:$0xff] 0
  %43 = vst [vmem:[#allocation2 + $0x358] sm:$0xff] 0
  %44 = vst [vmem:[#allocation2 + $0x360] sm:$0xff] 0
  %45 = vst [vmem:[#allocation2 + $0x368] sm:$0xff] 0
  %46 = vst [vmem:[#allocation2 + $0x370] sm:$0xff] 0
  %47 = vst [vmem:[#allocation2 + $0x378] sm:$0xff] 0
  %v49 = vrot.slane %v23, 1
  %vm51 = vcmp.ne.f32.partialorder %v49, 0.0
  %v52 = vld [vmem:[%s0] sm:$0xff]
  %v53 = vld [vmem:[%s0 + $0x8] sm:$0xff]
  %v54 = vld [vmem:[%s0 + $0x10] sm:$0xff]
  %v55 = vld [vmem:[%s0 + $0x18] sm:$0xff]
  %v56 = vld [vmem:[%s0 + $0x20] sm:$0xff]
  %v57 = vld [vmem:[%s0 + $0x28] sm:$0xff]
  %v58 = vld [vmem:[%s0 + $0x30] sm:$0xff]
  %v59 = vld [vmem:[%s0 + $0x38] sm:$0xff]
  %v60 = vld [vmem:[%s0 + $0x40] sm:$0xff]
  %v61 = vld [vmem:[%s1] sm:$0xff]
  %63 = vset.pattern.permute.xlu0 0
  %64 = vperm.xlu0 %63, %v61
  %v65 = vpop.permute.xlu0 %64
  %v67 = vmul.f32 %v52, %v65
  %v68 = vmul.f32 %v53, %v65
  %v69 = vmul.f32 %v54, %v65
  %v70 = vmul.f32 %v55, %v65
  %v71 = vmul.f32 %v56, %v65
  %v72 = vmul.f32 %v57, %v65
  %v73 = vmul.f32 %v58, %v65
  %v74 = vmul.f32 %v59, %v65
  %v75 = vmul.f32 %v60, %v65
  %v76 = vld [vmem:[%s2] sm:$0xff]
  %78 = vset.pattern.permute.xlu0 0
  %79 = vperm.xlu0 %78, %v76
  %v80 = vpop.permute.xlu0 %79
  %v82 = vadd.f32 %v67, %v80
  %v83 = vadd.f32 %v68, %v80
  %v84 = vadd.f32 %v69, %v80
  %v85 = vadd.f32 %v70, %v80
  %v86 = vadd.f32 %v71, %v80
  %v87 = vadd.f32 %v72, %v80
  %v88 = vadd.f32 %v73, %v80
  %v89 = vadd.f32 %v74, %v80
  %v90 = vadd.f32 %v75, %v80
  %v91 = vmax.f32 %v82, 0.0
  %v92 = vmax.f32 %v83, 0.0
  %v93 = vmax.f32 %v84, 0.0
  %v94 = vmax.f32 %v85, 0.0
  %v95 = vmax.f32 %v86, 0.0
  %v96 = vmax.f32 %v87, 0.0
  %v97 = vmax.f32 %v88, 0.0
  %v98 = vmax.f32 %v89, 0.0
  %v99 = vmax.f32 %v90, 0.0
  %v100 = vsel %vm25, 1, 0
  %v101 = vsel %vm26, 1, 0
  %v102 = vlaneseq
  %v103 = vshrl.u32 %v102, 7
  %v104 = vsub.s32 0, %v103
  %v105 = vrot.slane %v100, %v104
  %v106 = vlaneseq
  %v107 = vshrl.u32 %v106, 7
  %v108 = vsub.s32 1, %v107
  %v109 = vrot.slane %v100, %v108
  %v110 = vlaneseq
  %v111 = vshrl.u32 %v110, 7
  %v112 = vsub.s32 2, %v111
  %v113 = vrot.slane %v100, %v112
  %v114 = vlaneseq
  %v115 = vshrl.u32 %v114, 7
  %v116 = vsub.s32 3, %v115
  %v117 = vrot.slane %v100, %v116
  %v118 = vlaneseq
  %v119 = vshrl.u32 %v118, 7
  %v120 = vsub.s32 4, %v119
  %v121 = vrot.slane %v100, %v120
  %v122 = vlaneseq
  %v123 = vshrl.u32 %v122, 7
  %v124 = vsub.s32 5, %v123
  %v125 = vrot.slane %v100, %v124
  %v126 = vlaneseq
  %v127 = vshrl.u32 %v126, 7
  %v128 = vsub.s32 6, %v127
  %v129 = vrot.slane %v100, %v128
  %v130 = vlaneseq
  %v131 = vshrl.u32 %v130, 7
  %v132 = vsub.s32 7, %v131
  %v133 = vrot.slane %v100, %v132
  %v134 = vlaneseq
  %v135 = vshrl.u32 %v134, 7
  %v136 = vsub.s32 0, %v135
  %v137 = vrot.slane %v101, %v136
  %vm138 = vcmp.eq.s32.totalorder %v105, 1
  %vm139 = vcmp.eq.s32.totalorder %v109, 1
  %vm140 = vcmp.eq.s32.totalorder %v113, 1
  %vm141 = vcmp.eq.s32.totalorder %v117, 1
  %vm142 = vcmp.eq.s32.totalorder %v121, 1
  %vm143 = vcmp.eq.s32.totalorder %v125, 1
  %vm144 = vcmp.eq.s32.totalorder %v129, 1
  %vm145 = vcmp.eq.s32.totalorder %v133, 1
  %vm146 = vcmp.eq.s32.totalorder %v137, 1
  %v147 = vsel %vm138, %v91, 0.0
  %v148 = vsel %vm139, %v92, 0.0
  %v149 = vsel %vm140, %v93, 0.0
  %v150 = vsel %vm141, %v94, 0.0
  %v151 = vsel %vm142, %v95, 0.0
  %v152 = vsel %vm143, %v96, 0.0
  %v153 = vsel %vm144, %v97, 0.0
  %v154 = vsel %vm145, %v98, 0.0
  %v155 = vsel %vm146, %v99, 0.0
  %v156 = vpack.c.bf16 %v147, %v147
  %v157 = vpack.c.bf16 %v148, %v148
  %v158 = vpack.c.bf16 %v149, %v149
  %v159 = vpack.c.bf16 %v150, %v150
  %v160 = vpack.c.bf16 %v151, %v151
  %v161 = vpack.c.bf16 %v152, %v152
  %v162 = vpack.c.bf16 %v153, %v153
  %v163 = vpack.c.bf16 %v154, %v154
  %v164 = vpack.c.bf16 %v155, %v155
  %173 = vrot.lane.b32.xlu0 %v156, 111
  %v174 = vpop.permute.xlu0 %173
  %175 = vrot.lane.b32.xlu0 %v157, 111
  %v176 = vpop.permute.xlu0 %175
  %177 = vrot.lane.b32.xlu0 %v158, 111
  %v178 = vpop.permute.xlu0 %177
  %179 = vrot.lane.b32.xlu0 %v159, 111
  %v180 = vpop.permute.xlu0 %179
  %181 = vrot.lane.b32.xlu0 %v160, 111
  %v182 = vpop.permute.xlu0 %181
  %183 = vrot.lane.b32.xlu0 %v161, 111
  %v184 = vpop.permute.xlu0 %183
  %185 = vrot.lane.b32.xlu0 %v162, 111
  %v186 = vpop.permute.xlu0 %185
  %187 = vrot.lane.b32.xlu0 %v163, 111
  %v188 = vpop.permute.xlu0 %187
  %vm189 = vcmask 908288
  %v190 = vsel %vm189, %v174, %v176
  %v191 = vsel %vm189, %v176, %v178
  %v192 = vsel %vm189, %v178, %v180
  %v193 = vsel %vm189, %v180, %v182
  %v194 = vsel %vm189, %v182, %v184
  %v195 = vsel %vm189, %v184, %v186
  %v196 = vsel %vm189, %v186, %v188
  %204 = vst [vmem:[#allocation2] sm:$0xf] %v190
  %205 = vst [vmem:[#allocation2 + $0x8] sm:$0xf] %v191
  %206 = vst [vmem:[#allocation2 + $0x10] sm:$0xf] %v192
  %207 = vst [vmem:[#allocation2 + $0x18] sm:$0xf] %v193
  %208 = vst [vmem:[#allocation2 + $0x20] sm:$0xf] %v194
  %209 = vst [vmem:[#allocation2 + $0x28] sm:$0xf] %v195
  %210 = vst [vmem:[#allocation2 + $0x30] sm:$0xf] %v196
  %211 = vrot.lane.b32.xlu0 %v156, 110
  %v212 = vpop.permute.xlu0 %211
  %213 = vrot.lane.b32.xlu0 %v157, 110
  %v214 = vpop.permute.xlu0 %213
  %215 = vrot.lane.b32.xlu0 %v158, 110
  %v216 = vpop.permute.xlu0 %215
  %217 = vrot.lane.b32.xlu0 %v159, 110
  %v218 = vpop.permute.xlu0 %217
  %219 = vrot.lane.b32.xlu0 %v160, 110
  %v220 = vpop.permute.xlu0 %219
  %221 = vrot.lane.b32.xlu0 %v161, 110
  %v222 = vpop.permute.xlu0 %221
  %223 = vrot.lane.b32.xlu0 %v162, 110
  %v224 = vpop.permute.xlu0 %223
  %225 = vrot.lane.b32.xlu0 %v163, 110
  %v226 = vpop.permute.xlu0 %225
  %vm227 = vcmask 900096
  %v228 = vsel %vm227, %v212, %v214
  %v229 = vsel %vm227, %v214, %v216
  %v230 = vsel %vm227, %v216, %v218
  %v231 = vsel %vm227, %v218, %v220
  %v232 = vsel %vm227, %v220, %v222
  %v233 = vsel %vm227, %v222, %v224
  %v234 = vsel %vm227, %v224, %v226
  %vm235 = vcmask 1039360
  %v238 = vsel %vm235, %v234, %v212
  %v240 = vrot.slane %v228, 4
  %v241 = vrot.slane %v229, 4
  %v242 = vrot.slane %v230, 4
  %v243 = vrot.slane %v231, 4
  %v244 = vrot.slane %v232, 4
  %v245 = vrot.slane %v233, 4
  %v246 = vrot.slane %v238, 4
  %254 = vst [vmem:[#allocation2] sm:$0xf0] %v240
  %255 = vst [vmem:[#allocation2 + $0x8] sm:$0xf0] %v241
  %256 = vst [vmem:[#allocation2 + $0x10] sm:$0xf0] %v242
  %257 = vst [vmem:[#allocation2 + $0x18] sm:$0xf0] %v243
  %258 = vst [vmem:[#allocation2 + $0x20] sm:$0xf0] %v244
  %259 = vst [vmem:[#allocation2 + $0x28] sm:$0xf0] %v245
  %260 = vst [vmem:[#allocation2 + $0x30] sm:$0xf0] %v246
  %261 = vrot.lane.b32.xlu0 %v156, 109
  %v262 = vpop.permute.xlu0 %261
  %263 = vrot.lane.b32.xlu0 %v157, 109
  %v264 = vpop.permute.xlu0 %263
  %265 = vrot.lane.b32.xlu0 %v158, 109
  %v266 = vpop.permute.xlu0 %265
  %267 = vrot.lane.b32.xlu0 %v159, 109
  %v268 = vpop.permute.xlu0 %267
  %269 = vrot.lane.b32.xlu0 %v160, 109
  %v270 = vpop.permute.xlu0 %269
  %271 = vrot.lane.b32.xlu0 %v161, 109
  %v272 = vpop.permute.xlu0 %271
  %273 = vrot.lane.b32.xlu0 %v162, 109
  %v274 = vpop.permute.xlu0 %273
  %275 = vrot.lane.b32.xlu0 %v163, 109
  %v276 = vpop.permute.xlu0 %275
  %vm277 = vcmask 891904
  %v278 = vsel %vm277, %v262, %v264
  %v279 = vsel %vm277, %v264, %v266
  %v280 = vsel %vm277, %v266, %v268
  %v281 = vsel %vm277, %v268, %v270
  %v282 = vsel %vm277, %v270, %v272
  %v283 = vsel %vm277, %v272, %v274
  %v284 = vsel %vm277, %v274, %v276
  %vm291 = vcmask 1031168
  %v294 = vsel %vm291, %v284, %v262
  %296 = vst [vmem:[#allocation2 + $0x38] sm:$0xf] %v278
  %297 = vst [vmem:[#allocation2 + $0x40] sm:$0xf] %v279
  %298 = vst [vmem:[#allocation2 + $0x48] sm:$0xf] %v280
  %299 = vst [vmem:[#allocation2 + $0x50] sm:$0xf] %v281
  %300 = vst [vmem:[#allocation2 + $0x58] sm:$0xf] %v282
  %301 = vst [vmem:[#allocation2 + $0x60] sm:$0xf] %v283
  %302 = vst [vmem:[#allocation2 + $0x68] sm:$0xf] %v294
  %v303 = vrot.slane %v156, 4
  %v304 = vrot.slane %v157, 4
  %v305 = vrot.slane %v158, 4
  %v306 = vrot.slane %v159, 4
  %v307 = vrot.slane %v160, 4
  %v308 = vrot.slane %v161, 4
  %v309 = vrot.slane %v162, 4
  %v310 = vrot.slane %v163, 4
  %311 = vrot.lane.b32.xlu0 %v303, 101
  %v312 = vpop.permute.xlu0 %311
  %313 = vrot.lane.b32.xlu0 %v304, 101
  %v314 = vpop.permute.xlu0 %313
  %315 = vrot.lane.b32.xlu0 %v305, 101
  %v316 = vpop.permute.xlu0 %315
  %317 = vrot.lane.b32.xlu0 %v306, 101
  %v318 = vpop.permute.xlu0 %317
  %319 = vrot.lane.b32.xlu0 %v307, 101
  %v320 = vpop.permute.xlu0 %319
  %321 = vrot.lane.b32.xlu0 %v308, 101
  %v322 = vpop.permute.xlu0 %321
  %323 = vrot.lane.b32.xlu0 %v309, 101
  %v324 = vpop.permute.xlu0 %323
  %325 = vrot.lane.b32.xlu0 %v310, 101
  %v326 = vpop.permute.xlu0 %325
  %vm327 = vcmask 826368
  %v328 = vsel %vm327, %v312, %v314
  %v329 = vsel %vm327, %v314, %v316
  %v330 = vsel %vm327, %v316, %v318
  %v331 = vsel %vm327, %v318, %v320
  %v332 = vsel %vm327, %v320, %v322
  %v333 = vsel %vm327, %v322, %v324
  %v334 = vsel %vm327, %v324, %v326
  %342 = vst [vmem:[#allocation2 + $0x38] sm:$0xf0] %v328
  %343 = vst [vmem:[#allocation2 + $0x40] sm:$0xf0] %v329
  %344 = vst [vmem:[#allocation2 + $0x48] sm:$0xf0] %v330
  %345 = vst [vmem:[#allocation2 + $0x50] sm:$0xf0] %v331
  %346 = vst [vmem:[#allocation2 + $0x58] sm:$0xf0] %v332
  %347 = vst [vmem:[#allocation2 + $0x60] sm:$0xf0] %v333
  %348 = vst [vmem:[#allocation2 + $0x68] sm:$0xf0] %v334
  %349 = vrot.lane.b32.xlu0 %v156, 100
  %v350 = vpop.permute.xlu0 %349
  %351 = vrot.lane.b32.xlu0 %v157, 100
  %v352 = vpop.permute.xlu0 %351
  %353 = vrot.lane.b32.xlu0 %v158, 100
  %v354 = vpop.permute.xlu0 %353
  %355 = vrot.lane.b32.xlu0 %v159, 100
  %v356 = vpop.permute.xlu0 %355
  %357 = vrot.lane.b32.xlu0 %v160, 100
  %v358 = vpop.permute.xlu0 %357
  %359 = vrot.lane.b32.xlu0 %v161, 100
  %v360 = vpop.permute.xlu0 %359
  %361 = vrot.lane.b32.xlu0 %v162, 100
  %v362 = vpop.permute.xlu0 %361
  %363 = vrot.lane.b32.xlu0 %v163, 100
  %v364 = vpop.permute.xlu0 %363
  %vm365 = vcmask 818176
  %v366 = vsel %vm365, %v350, %v352
  %v367 = vsel %vm365, %v352, %v354
  %v368 = vsel %vm365, %v354, %v356
  %v369 = vsel %vm365, %v356, %v358
  %v370 = vsel %vm365, %v358, %v360
  %v371 = vsel %vm365, %v360, %v362
  %v372 = vsel %vm365, %v362, %v364
  %v381 = vsel %vm235, %v372, %v350
  %383 = vst [vmem:[#allocation2 + $0x70] sm:$0xf] %v366
  %384 = vst [vmem:[#allocation2 + $0x78] sm:$0xf] %v367
  %385 = vst [vmem:[#allocation2 + $0x80] sm:$0xf] %v368
  %386 = vst [vmem:[#allocation2 + $0x88] sm:$0xf] %v369
  %387 = vst [vmem:[#allocation2 + $0x90] sm:$0xf] %v370
  %388 = vst [vmem:[#allocation2 + $0x98] sm:$0xf] %v371
  %389 = vst [vmem:[#allocation2 + $0xa0] sm:$0xf] %v381
  %390 = vrot.lane.b32.xlu0 %v156, 99
  %v391 = vpop.permute.xlu0 %390
  %392 = vrot.lane.b32.xlu0 %v157, 99
  %v393 = vpop.permute.xlu0 %392
  %394 = vrot.lane.b32.xlu0 %v158, 99
  %v395 = vpop.permute.xlu0 %394
  %396 = vrot.lane.b32.xlu0 %v159, 99
  %v397 = vpop.permute.xlu0 %396
  %398 = vrot.lane.b32.xlu0 %v160, 99
  %v399 = vpop.permute.xlu0 %398
  %400 = vrot.lane.b32.xlu0 %v161, 99
  %v401 = vpop.permute.xlu0 %400
  %402 = vrot.lane.b32.xlu0 %v162, 99
  %v403 = vpop.permute.xlu0 %402
  %404 = vrot.lane.b32.xlu0 %v163, 99
  %v405 = vpop.permute.xlu0 %404
  %vm406 = vcmask 809984
  %v407 = vsel %vm406, %v391, %v393
  %v408 = vsel %vm406, %v393, %v395
  %v409 = vsel %vm406, %v395, %v397
  %v410 = vsel %vm406, %v397, %v399
  %v411 = vsel %vm406, %v399, %v401
  %v412 = vsel %vm406, %v401, %v403
  %v413 = vsel %vm406, %v403, %v405
  %v416 = vsel %vm291, %v413, %v391
  %v418 = vrot.slane %v407, 4
  %v419 = vrot.slane %v408, 4
  %v420 = vrot.slane %v409, 4
  %v421 = vrot.slane %v410, 4
  %v422 = vrot.slane %v411, 4
  %v423 = vrot.slane %v412, 4
  %v424 = vrot.slane %v416, 4
  %432 = vst [vmem:[#allocation2 + $0x70] sm:$0xf0] %v418
  %433 = vst [vmem:[#allocation2 + $0x78] sm:$0xf0] %v419
  %434 = vst [vmem:[#allocation2 + $0x80] sm:$0xf0] %v420
  %435 = vst [vmem:[#allocation2 + $0x88] sm:$0xf0] %v421
  %436 = vst [vmem:[#allocation2 + $0x90] sm:$0xf0] %v422
  %437 = vst [vmem:[#allocation2 + $0x98] sm:$0xf0] %v423
  %438 = vst [vmem:[#allocation2 + $0xa0] sm:$0xf0] %v424
  %439 = vrot.lane.b32.xlu0 %v156, 91
  %v440 = vpop.permute.xlu0 %439
  %441 = vrot.lane.b32.xlu0 %v157, 91
  %v442 = vpop.permute.xlu0 %441
  %443 = vrot.lane.b32.xlu0 %v158, 91
  %v444 = vpop.permute.xlu0 %443
  %445 = vrot.lane.b32.xlu0 %v159, 91
  %v446 = vpop.permute.xlu0 %445
  %447 = vrot.lane.b32.xlu0 %v160, 91
  %v448 = vpop.permute.xlu0 %447
  %449 = vrot.lane.b32.xlu0 %v161, 91
  %v450 = vpop.permute.xlu0 %449
  %451 = vrot.lane.b32.xlu0 %v162, 91
  %v452 = vpop.permute.xlu0 %451
  %453 = vrot.lane.b32.xlu0 %v163, 91
  %v454 = vpop.permute.xlu0 %453
  %vm455 = vcmask 744448
  %v456 = vsel %vm455, %v440, %v442
  %v457 = vsel %vm455, %v442, %v444
  %v458 = vsel %vm455, %v444, %v446
  %v459 = vsel %vm455, %v446, %v448
  %v460 = vsel %vm455, %v448, %v450
  %v461 = vsel %vm455, %v450, %v452
  %v462 = vsel %vm455, %v452, %v454
  %470 = vst [vmem:[#allocation2 + $0xa8] sm:$0xf] %v456
  %471 = vst [vmem:[#allocation2 + $0xb0] sm:$0xf] %v457
  %472 = vst [vmem:[#allocation2 + $0xb8] sm:$0xf] %v458
  %473 = vst [vmem:[#allocation2 + $0xc0] sm:$0xf] %v459
  %474 = vst [vmem:[#allocation2 + $0xc8] sm:$0xf] %v460
  %475 = vst [vmem:[#allocation2 + $0xd0] sm:$0xf] %v461
  %476 = vst [vmem:[#allocation2 + $0xd8] sm:$0xf] %v462
  %477 = vrot.lane.b32.xlu0 %v156, 90
  %v478 = vpop.permute.xlu0 %477
  %479 = vrot.lane.b32.xlu0 %v157, 90
  %v480 = vpop.permute.xlu0 %479
  %481 = vrot.lane.b32.xlu0 %v158, 90
  %v482 = vpop.permute.xlu0 %481
  %483 = vrot.lane.b32.xlu0 %v159, 90
  %v484 = vpop.permute.xlu0 %483
  %485 = vrot.lane.b32.xlu0 %v160, 90
  %v486 = vpop.permute.xlu0 %485
  %487 = vrot.lane.b32.xlu0 %v161, 90
  %v488 = vpop.permute.xlu0 %487
  %489 = vrot.lane.b32.xlu0 %v162, 90
  %v490 = vpop.permute.xlu0 %489
  %491 = vrot.lane.b32.xlu0 %v163, 90
  %v492 = vpop.permute.xlu0 %491
  %vm493 = vcmask 736256
  %v494 = vsel %vm493, %v478, %v480
  %v495 = vsel %vm493, %v480, %v482
  %v496 = vsel %vm493, %v482, %v484
  %v497 = vsel %vm493, %v484, %v486
  %v498 = vsel %vm493, %v486, %v488
  %v499 = vsel %vm493, %v488, %v490
  %v500 = vsel %vm493, %v490, %v492
  %v503 = vsel %vm235, %v500, %v478
  %v505 = vrot.slane %v494, 4
  %v506 = vrot.slane %v495, 4
  %v507 = vrot.slane %v496, 4
  %v508 = vrot.slane %v497, 4
  %v509 = vrot.slane %v498, 4
  %v510 = vrot.slane %v499, 4
  %v511 = vrot.slane %v503, 4
  %519 = vst [vmem:[#allocation2 + $0xa8] sm:$0xf0] %v505
  %520 = vst [vmem:[#allocation2 + $0xb0] sm:$0xf0] %v506
  %521 = vst [vmem:[#allocation2 + $0xb8] sm:$0xf0] %v507
  %522 = vst [vmem:[#allocation2 + $0xc0] sm:$0xf0] %v508
  %523 = vst [vmem:[#allocation2 + $0xc8] sm:$0xf0] %v509
  %524 = vst [vmem:[#allocation2 + $0xd0] sm:$0xf0] %v510
  %525 = vst [vmem:[#allocation2 + $0xd8] sm:$0xf0] %v511
  %526 = vrot.lane.b32.xlu0 %v156, 89
  %v527 = vpop.permute.xlu0 %526
  %528 = vrot.lane.b32.xlu0 %v157, 89
  %v529 = vpop.permute.xlu0 %528
  %530 = vrot.lane.b32.xlu0 %v158, 89
  %v531 = vpop.permute.xlu0 %530
  %532 = vrot.lane.b32.xlu0 %v159, 89
  %v533 = vpop.permute.xlu0 %532
  %534 = vrot.lane.b32.xlu0 %v160, 89
  %v535 = vpop.permute.xlu0 %534
  %536 = vrot.lane.b32.xlu0 %v161, 89
  %v537 = vpop.permute.xlu0 %536
  %538 = vrot.lane.b32.xlu0 %v162, 89
  %v539 = vpop.permute.xlu0 %538
  %540 = vrot.lane.b32.xlu0 %v163, 89
  %v541 = vpop.permute.xlu0 %540
  %vm542 = vcmask 728064
  %v543 = vsel %vm542, %v527, %v529
  %v544 = vsel %vm542, %v529, %v531
  %v545 = vsel %vm542, %v531, %v533
  %v546 = vsel %vm542, %v533, %v535
  %v547 = vsel %vm542, %v535, %v537
  %v548 = vsel %vm542, %v537, %v539
  %v549 = vsel %vm542, %v539, %v541
  %v558 = vsel %vm291, %v549, %v527
  %560 = vst [vmem:[#allocation2 + $0xe0] sm:$0xf] %v543
  %561 = vst [vmem:[#allocation2 + $0xe8] sm:$0xf] %v544
  %562 = vst [vmem:[#allocation2 + $0xf0] sm:$0xf] %v545
  %563 = vst [vmem:[#allocation2 + $0xf8] sm:$0xf] %v546
  %564 = vst [vmem:[#allocation2 + $0x100] sm:$0xf] %v547
  %565 = vst [vmem:[#allocation2 + $0x108] sm:$0xf] %v548
  %566 = vst [vmem:[#allocation2 + $0x110] sm:$0xf] %v558
  %567 = vrot.lane.b32.xlu0 %v303, 11
  %v568 = vpop.permute.xlu0 %567
  %569 = vrot.lane.b32.xlu0 %v304, 11
  %v570 = vpop.permute.xlu0 %569
  %571 = vrot.lane.b32.xlu0 %v305, 11
  %v572 = vpop.permute.xlu0 %571
  %573 = vrot.lane.b32.xlu0 %v306, 11
  %v574 = vpop.permute.xlu0 %573
  %575 = vrot.lane.b32.xlu0 %v307, 11
  %v576 = vpop.permute.xlu0 %575
  %577 = vrot.lane.b32.xlu0 %v308, 11
  %v578 = vpop.permute.xlu0 %577
  %579 = vrot.lane.b32.xlu0 %v309, 11
  %v580 = vpop.permute.xlu0 %579
  %581 = vrot.lane.b32.xlu0 %v310, 11
  %v582 = vpop.permute.xlu0 %581
  %vm583 = vcmask 89088
  %v584 = vsel %vm583, %v568, %v570
  %v585 = vsel %vm583, %v570, %v572
  %v586 = vsel %vm583, %v572, %v574
  %v587 = vsel %vm583, %v574, %v576
  %v588 = vsel %vm583, %v576, %v578
  %v589 = vsel %vm583, %v578, %v580
  %v590 = vsel %vm583, %v580, %v582
  %598 = vst [vmem:[#allocation2 + $0xe0] sm:$0xf0] %v584
  %599 = vst [vmem:[#allocation2 + $0xe8] sm:$0xf0] %v585
  %600 = vst [vmem:[#allocation2 + $0xf0] sm:$0xf0] %v586
  %601 = vst [vmem:[#allocation2 + $0xf8] sm:$0xf0] %v587
  %602 = vst [vmem:[#allocation2 + $0x100] sm:$0xf0] %v588
  %603 = vst [vmem:[#allocation2 + $0x108] sm:$0xf0] %v589
  %604 = vst [vmem:[#allocation2 + $0x110] sm:$0xf0] %v590
  %605 = vrot.lane.b32.xlu0 %v156, 10
  %v606 = vpop.permute.xlu0 %605
  %607 = vrot.lane.b32.xlu0 %v157, 10
  %v608 = vpop.permute.xlu0 %607
  %609 = vrot.lane.b32.xlu0 %v158, 10
  %v610 = vpop.permute.xlu0 %609
  %611 = vrot.lane.b32.xlu0 %v159, 10
  %v612 = vpop.permute.xlu0 %611
  %613 = vrot.lane.b32.xlu0 %v160, 10
  %v614 = vpop.permute.xlu0 %613
  %615 = vrot.lane.b32.xlu0 %v161, 10
  %v616 = vpop.permute.xlu0 %615
  %617 = vrot.lane.b32.xlu0 %v162, 10
  %v618 = vpop.permute.xlu0 %617
  %619 = vrot.lane.b32.xlu0 %v163, 10
  %v620 = vpop.permute.xlu0 %619
  %vm621 = vcmask 80896
  %v622 = vsel %vm621, %v606, %v608
  %v623 = vsel %vm621, %v608, %v610
  %v624 = vsel %vm621, %v610, %v612
  %v625 = vsel %vm621, %v612, %v614
  %v626 = vsel %vm621, %v614, %v616
  %v627 = vsel %vm621, %v616, %v618
  %v628 = vsel %vm621, %v618, %v620
  %v637 = vsel %vm235, %v628, %v606
  %639 = vst [vmem:[#allocation2 + $0x118] sm:$0xf] %v622
  %640 = vst [vmem:[#allocation2 + $0x120] sm:$0xf] %v623
  %641 = vst [vmem:[#allocation2 + $0x128] sm:$0xf] %v624
  %642 = vst [vmem:[#allocation2 + $0x130] sm:$0xf] %v625
  %643 = vst [vmem:[#allocation2 + $0x138] sm:$0xf] %v626
  %644 = vst [vmem:[#allocation2 + $0x140] sm:$0xf] %v627
  %645 = vst [vmem:[#allocation2 + $0x148] sm:$0xf] %v637
  %646 = vrot.lane.b32.xlu0 %v156, 9
  %v647 = vpop.permute.xlu0 %646
  %648 = vrot.lane.b32.xlu0 %v157, 9
  %v649 = vpop.permute.xlu0 %648
  %650 = vrot.lane.b32.xlu0 %v158, 9
  %v651 = vpop.permute.xlu0 %650
  %652 = vrot.lane.b32.xlu0 %v159, 9
  %v653 = vpop.permute.xlu0 %652
  %654 = vrot.lane.b32.xlu0 %v160, 9
  %v655 = vpop.permute.xlu0 %654
  %656 = vrot.lane.b32.xlu0 %v161, 9
  %v657 = vpop.permute.xlu0 %656
  %658 = vrot.lane.b32.xlu0 %v162, 9
  %v659 = vpop.permute.xlu0 %658
  %660 = vrot.lane.b32.xlu0 %v163, 9
  %v661 = vpop.permute.xlu0 %660
  %vm662 = vcmask 72704
  %v663 = vsel %vm662, %v647, %v649
  %v664 = vsel %vm662, %v649, %v651
  %v665 = vsel %vm662, %v651, %v653
  %v666 = vsel %vm662, %v653, %v655
  %v667 = vsel %vm662, %v655, %v657
  %v668 = vsel %vm662, %v657, %v659
  %v669 = vsel %vm662, %v659, %v661
  %v672 = vsel %vm291, %v669, %v647
  %v674 = vrot.slane %v663, 4
  %v675 = vrot.slane %v664, 4
  %v676 = vrot.slane %v665, 4
  %v677 = vrot.slane %v666, 4
  %v678 = vrot.slane %v667, 4
  %v679 = vrot.slane %v668, 4
  %v680 = vrot.slane %v672, 4
  %688 = vst [vmem:[#allocation2 + $0x118] sm:$0xf0] %v674
  %689 = vst [vmem:[#allocation2 + $0x120] sm:$0xf0] %v675
  %690 = vst [vmem:[#allocation2 + $0x128] sm:$0xf0] %v676
  %691 = vst [vmem:[#allocation2 + $0x130] sm:$0xf0] %v677
  %692 = vst [vmem:[#allocation2 + $0x138] sm:$0xf0] %v678
  %693 = vst [vmem:[#allocation2 + $0x140] sm:$0xf0] %v679
  %694 = vst [vmem:[#allocation2 + $0x148] sm:$0xf0] %v680
  %695 = vrot.lane.b32.xlu0 %v156, 1
  %v696 = vpop.permute.xlu0 %695
  %697 = vrot.lane.b32.xlu0 %v157, 1
  %v698 = vpop.permute.xlu0 %697
  %699 = vrot.lane.b32.xlu0 %v158, 1
  %v700 = vpop.permute.xlu0 %699
  %701 = vrot.lane.b32.xlu0 %v159, 1
  %v702 = vpop.permute.xlu0 %701
  %703 = vrot.lane.b32.xlu0 %v160, 1
  %v704 = vpop.permute.xlu0 %703
  %705 = vrot.lane.b32.xlu0 %v161, 1
  %v706 = vpop.permute.xlu0 %705
  %707 = vrot.lane.b32.xlu0 %v162, 1
  %v708 = vpop.permute.xlu0 %707
  %709 = vrot.lane.b32.xlu0 %v163, 1
  %v710 = vpop.permute.xlu0 %709
  %vm711 = vcmask 7168
  %v712 = vsel %vm711, %v696, %v698
  %v713 = vsel %vm711, %v698, %v700
  %v714 = vsel %vm711, %v700, %v702
  %v715 = vsel %vm711, %v702, %v704
  %v716 = vsel %vm711, %v704, %v706
  %v717 = vsel %vm711, %v706, %v708
  %v718 = vsel %vm711, %v708, %v710
  %726 = vst [vmem:[#allocation2 + $0x150] sm:$0xf] %v712
  %727 = vst [vmem:[#allocation2 + $0x158] sm:$0xf] %v713
  %728 = vst [vmem:[#allocation2 + $0x160] sm:$0xf] %v714
  %729 = vst [vmem:[#allocation2 + $0x168] sm:$0xf] %v715
  %730 = vst [vmem:[#allocation2 + $0x170] sm:$0xf] %v716
  %731 = vst [vmem:[#allocation2 + $0x178] sm:$0xf] %v717
  %732 = vst [vmem:[#allocation2 + $0x180] sm:$0xf] %v718
  %v735 = vsel %vm235, %v163, %v156
  %v737 = vrot.slane %v735, 4
  %745 = vst [vmem:[#allocation2 + $0x150] sm:$0xf0] %v304
  %746 = vst [vmem:[#allocation2 + $0x158] sm:$0xf0] %v305
  %747 = vst [vmem:[#allocation2 + $0x160] sm:$0xf0] %v306
  %748 = vst [vmem:[#allocation2 + $0x168] sm:$0xf0] %v307
  %749 = vst [vmem:[#allocation2 + $0x170] sm:$0xf0] %v308
  %750 = vst [vmem:[#allocation2 + $0x178] sm:$0xf0] %v309
  %751 = vst [vmem:[#allocation2 + $0x180] sm:$0xf0] %v737
  %752 = vrot.lane.b32.xlu0 %v157, 127
  %v753 = vpop.permute.xlu0 %752
  %754 = vrot.lane.b32.xlu0 %v158, 127
  %v755 = vpop.permute.xlu0 %754
  %756 = vrot.lane.b32.xlu0 %v159, 127
  %v757 = vpop.permute.xlu0 %756
  %758 = vrot.lane.b32.xlu0 %v160, 127
  %v759 = vpop.permute.xlu0 %758
  %760 = vrot.lane.b32.xlu0 %v161, 127
  %v761 = vpop.permute.xlu0 %760
  %762 = vrot.lane.b32.xlu0 %v162, 127
  %v763 = vpop.permute.xlu0 %762
  %764 = vrot.lane.b32.xlu0 %v163, 127
  %v765 = vpop.permute.xlu0 %764
  %vm766 = vcmask 1039360
  %v767 = vsel %vm766, %v753, %v755
  %v768 = vsel %vm766, %v755, %v757
  %v769 = vsel %vm766, %v757, %v759
  %v770 = vsel %vm766, %v759, %v761
  %v771 = vsel %vm766, %v761, %v763
  %v772 = vsel %vm766, %v763, %v765
  %779 = vrot.lane.b32.xlu0 %v156, 127
  %v780 = vpop.permute.xlu0 %779
  %v781 = vsel %vm766, %v780, %v753
  %v784 = vsel %vm291, %v765, %v781
  %786 = vst [vmem:[#allocation2 + $0x188] sm:$0xf] %v767
  %787 = vst [vmem:[#allocation2 + $0x190] sm:$0xf] %v768
  %788 = vst [vmem:[#allocation2 + $0x198] sm:$0xf] %v769
  %789 = vst [vmem:[#allocation2 + $0x1a0] sm:$0xf] %v770
  %790 = vst [vmem:[#allocation2 + $0x1a8] sm:$0xf] %v771
  %791 = vst [vmem:[#allocation2 + $0x1b0] sm:$0xf] %v772
  %792 = vst [vmem:[#allocation2 + $0x1b8] sm:$0xf] %v784
  %v794 = vrot.slane %v164, 4
  %795 = vrot.lane.b32.xlu0 %v304, 119
  %v796 = vpop.permute.xlu0 %795
  %797 = vrot.lane.b32.xlu0 %v305, 119
  %v798 = vpop.permute.xlu0 %797
  %799 = vrot.lane.b32.xlu0 %v306, 119
  %v800 = vpop.permute.xlu0 %799
  %801 = vrot.lane.b32.xlu0 %v307, 119
  %v802 = vpop.permute.xlu0 %801
  %803 = vrot.lane.b32.xlu0 %v308, 119
  %v804 = vpop.permute.xlu0 %803
  %805 = vrot.lane.b32.xlu0 %v309, 119
  %v806 = vpop.permute.xlu0 %805
  %807 = vrot.lane.b32.xlu0 %v310, 119
  %v808 = vpop.permute.xlu0 %807
  %809 = vrot.lane.b32.xlu0 %v794, 119
  %v810 = vpop.permute.xlu0 %809
  %vm811 = vcmask 973824
  %v812 = vsel %vm811, %v796, %v798
  %v813 = vsel %vm811, %v798, %v800
  %v814 = vsel %vm811, %v800, %v802
  %v815 = vsel %vm811, %v802, %v804
  %v816 = vsel %vm811, %v804, %v806
  %v817 = vsel %vm811, %v806, %v808
  %v818 = vsel %vm811, %v808, %v810
  %826 = vst [vmem:[#allocation2 + $0x188] sm:$0xf0] %v812
  %827 = vst [vmem:[#allocation2 + $0x190] sm:$0xf0] %v813
  %828 = vst [vmem:[#allocation2 + $0x198] sm:$0xf0] %v814
  %829 = vst [vmem:[#allocation2 + $0x1a0] sm:$0xf0] %v815
  %830 = vst [vmem:[#allocation2 + $0x1a8] sm:$0xf0] %v816
  %831 = vst [vmem:[#allocation2 + $0x1b0] sm:$0xf0] %v817
  %832 = vst [vmem:[#allocation2 + $0x1b8] sm:$0xf0] %v818
  %833 = vrot.lane.b32.xlu0 %v157, 118
  %v834 = vpop.permute.xlu0 %833
  %835 = vrot.lane.b32.xlu0 %v158, 118
  %v836 = vpop.permute.xlu0 %835
  %837 = vrot.lane.b32.xlu0 %v159, 118
  %v838 = vpop.permute.xlu0 %837
  %839 = vrot.lane.b32.xlu0 %v160, 118
  %v840 = vpop.permute.xlu0 %839
  %841 = vrot.lane.b32.xlu0 %v161, 118
  %v842 = vpop.permute.xlu0 %841
  %843 = vrot.lane.b32.xlu0 %v162, 118
  %v844 = vpop.permute.xlu0 %843
  %845 = vrot.lane.b32.xlu0 %v163, 118
  %v846 = vpop.permute.xlu0 %845
  %847 = vrot.lane.b32.xlu0 %v164, 118
  %v848 = vpop.permute.xlu0 %847
  %vm849 = vcmask 965632
  %v850 = vsel %vm849, %v834, %v836
  %v851 = vsel %vm849, %v836, %v838
  %v852 = vsel %vm849, %v838, %v840
  %v853 = vsel %vm849, %v840, %v842
  %v854 = vsel %vm849, %v842, %v844
  %v855 = vsel %vm849, %v844, %v846
  %v856 = vsel %vm849, %v846, %v848
  %v865 = vsel %vm235, %v856, %v834
  %867 = vst [vmem:[#allocation2 + $0x1c0] sm:$0xf] %v850
  %868 = vst [vmem:[#allocation2 + $0x1c8] sm:$0xf] %v851
  %869 = vst [vmem:[#allocation2 + $0x1d0] sm:$0xf] %v852
  %870 = vst [vmem:[#allocation2 + $0x1d8] sm:$0xf] %v853
  %871 = vst [vmem:[#allocation2 + $0x1e0] sm:$0xf] %v854
  %872 = vst [vmem:[#allocation2 + $0x1e8] sm:$0xf] %v855
  %873 = vst [vmem:[#allocation2 + $0x1f0] sm:$0xf] %v865
  %874 = vrot.lane.b32.xlu0 %v157, 117
  %v875 = vpop.permute.xlu0 %874
  %876 = vrot.lane.b32.xlu0 %v158, 117
  %v877 = vpop.permute.xlu0 %876
  %878 = vrot.lane.b32.xlu0 %v159, 117
  %v879 = vpop.permute.xlu0 %878
  %880 = vrot.lane.b32.xlu0 %v160, 117
  %v881 = vpop.permute.xlu0 %880
  %882 = vrot.lane.b32.xlu0 %v161, 117
  %v883 = vpop.permute.xlu0 %882
  %884 = vrot.lane.b32.xlu0 %v162, 117
  %v885 = vpop.permute.xlu0 %884
  %886 = vrot.lane.b32.xlu0 %v163, 117
  %v887 = vpop.permute.xlu0 %886
  %888 = vrot.lane.b32.xlu0 %v164, 117
  %v889 = vpop.permute.xlu0 %888
  %vm890 = vcmask 957440
  %v891 = vsel %vm890, %v875, %v877
  %v892 = vsel %vm890, %v877, %v879
  %v893 = vsel %vm890, %v879, %v881
  %v894 = vsel %vm890, %v881, %v883
  %v895 = vsel %vm890, %v883, %v885
  %v896 = vsel %vm890, %v885, %v887
  %v897 = vsel %vm890, %v887, %v889
  %v900 = vsel %vm291, %v897, %v875
  %v902 = vrot.slane %v891, 4
  %v903 = vrot.slane %v892, 4
  %v904 = vrot.slane %v893, 4
  %v905 = vrot.slane %v894, 4
  %v906 = vrot.slane %v895, 4
  %v907 = vrot.slane %v896, 4
  %v908 = vrot.slane %v900, 4
  %916 = vst [vmem:[#allocation2 + $0x1c0] sm:$0xf0] %v902
  %917 = vst [vmem:[#allocation2 + $0x1c8] sm:$0xf0] %v903
  %918 = vst [vmem:[#allocation2 + $0x1d0] sm:$0xf0] %v904
  %919 = vst [vmem:[#allocation2 + $0x1d8] sm:$0xf0] %v905
  %920 = vst [vmem:[#allocation2 + $0x1e0] sm:$0xf0] %v906
  %921 = vst [vmem:[#allocation2 + $0x1e8] sm:$0xf0] %v907
  %922 = vst [vmem:[#allocation2 + $0x1f0] sm:$0xf0] %v908
  %923 = vrot.lane.b32.xlu0 %v157, 39
  %v924 = vpop.permute.xlu0 %923
  %925 = vrot.lane.b32.xlu0 %v158, 39
  %v926 = vpop.permute.xlu0 %925
  %927 = vrot.lane.b32.xlu0 %v159, 39
  %v928 = vpop.permute.xlu0 %927
  %929 = vrot.lane.b32.xlu0 %v160, 39
  %v930 = vpop.permute.xlu0 %929
  %931 = vrot.lane.b32.xlu0 %v161, 39
  %v932 = vpop.permute.xlu0 %931
  %933 = vrot.lane.b32.xlu0 %v162, 39
  %v934 = vpop.permute.xlu0 %933
  %935 = vrot.lane.b32.xlu0 %v163, 39
  %v936 = vpop.permute.xlu0 %935
  %937 = vrot.lane.b32.xlu0 %v164, 39
  %v938 = vpop.permute.xlu0 %937
  %vm939 = vcmask 318464
  %v940 = vsel %vm939, %v924, %v926
  %v941 = vsel %vm939, %v926, %v928
  %v942 = vsel %vm939, %v928, %v930
  %v943 = vsel %vm939, %v930, %v932
  %v944 = vsel %vm939, %v932, %v934
  %v945 = vsel %vm939, %v934, %v936
  %v946 = vsel %vm939, %v936, %v938
  %954 = vst [vmem:[#allocation2 + $0x1f8] sm:$0xf] %v940
  %955 = vst [vmem:[#allocation2 + $0x200] sm:$0xf] %v941
  %956 = vst [vmem:[#allocation2 + $0x208] sm:$0xf] %v942
  %957 = vst [vmem:[#allocation2 + $0x210] sm:$0xf] %v943
  %958 = vst [vmem:[#allocation2 + $0x218] sm:$0xf] %v944
  %959 = vst [vmem:[#allocation2 + $0x220] sm:$0xf] %v945
  %960 = vst [vmem:[#allocation2 + $0x228] sm:$0xf] %v946
  %961 = vrot.lane.b32.xlu0 %v157, 38
  %v962 = vpop.permute.xlu0 %961
  %963 = vrot.lane.b32.xlu0 %v158, 38
  %v964 = vpop.permute.xlu0 %963
  %965 = vrot.lane.b32.xlu0 %v159, 38
  %v966 = vpop.permute.xlu0 %965
  %967 = vrot.lane.b32.xlu0 %v160, 38
  %v968 = vpop.permute.xlu0 %967
  %969 = vrot.lane.b32.xlu0 %v161, 38
  %v970 = vpop.permute.xlu0 %969
  %971 = vrot.lane.b32.xlu0 %v162, 38
  %v972 = vpop.permute.xlu0 %971
  %973 = vrot.lane.b32.xlu0 %v163, 38
  %v974 = vpop.permute.xlu0 %973
  %975 = vrot.lane.b32.xlu0 %v164, 38
  %v976 = vpop.permute.xlu0 %975
  %vm977 = vcmask 310272
  %v978 = vsel %vm977, %v962, %v964
  %v979 = vsel %vm977, %v964, %v966
  %v980 = vsel %vm977, %v966, %v968
  %v981 = vsel %vm977, %v968, %v970
  %v982 = vsel %vm977, %v970, %v972
  %v983 = vsel %vm977, %v972, %v974
  %v984 = vsel %vm977, %v974, %v976
  %v987 = vsel %vm235, %v984, %v962
  %v989 = vrot.slane %v978, 4
  %v990 = vrot.slane %v979, 4
  %v991 = vrot.slane %v980, 4
  %v992 = vrot.slane %v981, 4
  %v993 = vrot.slane %v982, 4
  %v994 = vrot.slane %v983, 4
  %v995 = vrot.slane %v987, 4
  %1003 = vst [vmem:[#allocation2 + $0x1f8] sm:$0xf0] %v989
  %1004 = vst [vmem:[#allocation2 + $0x200] sm:$0xf0] %v990
  %1005 = vst [vmem:[#allocation2 + $0x208] sm:$0xf0] %v991
  %1006 = vst [vmem:[#allocation2 + $0x210] sm:$0xf0] %v992
  %1007 = vst [vmem:[#allocation2 + $0x218] sm:$0xf0] %v993
  %1008 = vst [vmem:[#allocation2 + $0x220] sm:$0xf0] %v994
  %1009 = vst [vmem:[#allocation2 + $0x228] sm:$0xf0] %v995
  %1010 = vrot.lane.b32.xlu0 %v157, 37
  %v1011 = vpop.permute.xlu0 %1010
  %1012 = vrot.lane.b32.xlu0 %v158, 37
  %v1013 = vpop.permute.xlu0 %1012
  %1014 = vrot.lane.b32.xlu0 %v159, 37
  %v1015 = vpop.permute.xlu0 %1014
  %1016 = vrot.lane.b32.xlu0 %v160, 37
  %v1017 = vpop.permute.xlu0 %1016
  %1018 = vrot.lane.b32.xlu0 %v161, 37
  %v1019 = vpop.permute.xlu0 %1018
  %1020 = vrot.lane.b32.xlu0 %v162, 37
  %v1021 = vpop.permute.xlu0 %1020
  %1022 = vrot.lane.b32.xlu0 %v163, 37
  %v1023 = vpop.permute.xlu0 %1022
  %1024 = vrot.lane.b32.xlu0 %v164, 37
  %v1025 = vpop.permute.xlu0 %1024
  %vm1026 = vcmask 302080
  %v1027 = vsel %vm1026, %v1011, %v1013
  %v1028 = vsel %vm1026, %v1013, %v1015
  %v1029 = vsel %vm1026, %v1015, %v1017
  %v1030 = vsel %vm1026, %v1017, %v1019
  %v1031 = vsel %vm1026, %v1019, %v1021
  %v1032 = vsel %vm1026, %v1021, %v1023
  %v1033 = vsel %vm1026, %v1023, %v1025
  %v1042 = vsel %vm291, %v1033, %v1011
  %1044 = vst [vmem:[#allocation2 + $0x230] sm:$0xf] %v1027
  %1045 = vst [vmem:[#allocation2 + $0x238] sm:$0xf] %v1028
  %1046 = vst [vmem:[#allocation2 + $0x240] sm:$0xf] %v1029
  %1047 = vst [vmem:[#allocation2 + $0x248] sm:$0xf] %v1030
  %1048 = vst [vmem:[#allocation2 + $0x250] sm:$0xf] %v1031
  %1049 = vst [vmem:[#allocation2 + $0x258] sm:$0xf] %v1032
  %1050 = vst [vmem:[#allocation2 + $0x260] sm:$0xf] %v1042
  %1051 = vrot.lane.b32.xlu0 %v304, 29
  %v1052 = vpop.permute.xlu0 %1051
  %1053 = vrot.lane.b32.xlu0 %v305, 29
  %v1054 = vpop.permute.xlu0 %1053
  %1055 = vrot.lane.b32.xlu0 %v306, 29
  %v1056 = vpop.permute.xlu0 %1055
  %1057 = vrot.lane.b32.xlu0 %v307, 29
  %v1058 = vpop.permute.xlu0 %1057
  %1059 = vrot.lane.b32.xlu0 %v308, 29
  %v1060 = vpop.permute.xlu0 %1059
  %1061 = vrot.lane.b32.xlu0 %v309, 29
  %v1062 = vpop.permute.xlu0 %1061
  %1063 = vrot.lane.b32.xlu0 %v310, 29
  %v1064 = vpop.permute.xlu0 %1063
  %1065 = vrot.lane.b32.xlu0 %v794, 29
  %v1066 = vpop.permute.xlu0 %1065
  %vm1067 = vcmask 236544
  %v1068 = vsel %vm1067, %v1052, %v1054
  %v1069 = vsel %vm1067, %v1054, %v1056
  %v1070 = vsel %vm1067, %v1056, %v1058
  %v1071 = vsel %vm1067, %v1058, %v1060
  %v1072 = vsel %vm1067, %v1060, %v1062
  %v1073 = vsel %vm1067, %v1062, %v1064
  %v1074 = vsel %vm1067, %v1064, %v1066
  %1082 = vst [vmem:[#allocation2 + $0x230] sm:$0xf0] %v1068
  %1083 = vst [vmem:[#allocation2 + $0x238] sm:$0xf0] %v1069
  %1084 = vst [vmem:[#allocation2 + $0x240] sm:$0xf0] %v1070
  %1085 = vst [vmem:[#allocation2 + $0x248] sm:$0xf0] %v1071
  %1086 = vst [vmem:[#allocation2 + $0x250] sm:$0xf0] %v1072
  %1087 = vst [vmem:[#allocation2 + $0x258] sm:$0xf0] %v1073
  %1088 = vst [vmem:[#allocation2 + $0x260] sm:$0xf0] %v1074
  %1089 = vrot.lane.b32.xlu0 %v157, 28
  %v1090 = vpop.permute.xlu0 %1089
  %1091 = vrot.lane.b32.xlu0 %v158, 28
  %v1092 = vpop.permute.xlu0 %1091
  %1093 = vrot.lane.b32.xlu0 %v159, 28
  %v1094 = vpop.permute.xlu0 %1093
  %1095 = vrot.lane.b32.xlu0 %v160, 28
  %v1096 = vpop.permute.xlu0 %1095
  %1097 = vrot.lane.b32.xlu0 %v161, 28
  %v1098 = vpop.permute.xlu0 %1097
  %1099 = vrot.lane.b32.xlu0 %v162, 28
  %v1100 = vpop.permute.xlu0 %1099
  %1101 = vrot.lane.b32.xlu0 %v163, 28
  %v1102 = vpop.permute.xlu0 %1101
  %1103 = vrot.lane.b32.xlu0 %v164, 28
  %v1104 = vpop.permute.xlu0 %1103
  %vm1105 = vcmask 228352
  %v1106 = vsel %vm1105, %v1090, %v1092
  %v1107 = vsel %vm1105, %v1092, %v1094
  %v1108 = vsel %vm1105, %v1094, %v1096
  %v1109 = vsel %vm1105, %v1096, %v1098
  %v1110 = vsel %vm1105, %v1098, %v1100
  %v1111 = vsel %vm1105, %v1100, %v1102
  %v1112 = vsel %vm1105, %v1102, %v1104
  %v1121 = vsel %vm235, %v1112, %v1090
  %1123 = vst [vmem:[#allocation2 + $0x268] sm:$0xf] %v1106
  %1124 = vst [vmem:[#allocation2 + $0x270] sm:$0xf] %v1107
  %1125 = vst [vmem:[#allocation2 + $0x278] sm:$0xf] %v1108
  %1126 = vst [vmem:[#allocation2 + $0x280] sm:$0xf] %v1109
  %1127 = vst [vmem:[#allocation2 + $0x288] sm:$0xf] %v1110
  %1128 = vst [vmem:[#allocation2 + $0x290] sm:$0xf] %v1111
  %1129 = vst [vmem:[#allocation2 + $0x298] sm:$0xf] %v1121
  %1130 = vrot.lane.b32.xlu0 %v157, 27
  %v1131 = vpop.permute.xlu0 %1130
  %1132 = vrot.lane.b32.xlu0 %v158, 27
  %v1133 = vpop.permute.xlu0 %1132
  %1134 = vrot.lane.b32.xlu0 %v159, 27
  %v1135 = vpop.permute.xlu0 %1134
  %1136 = vrot.lane.b32.xlu0 %v160, 27
  %v1137 = vpop.permute.xlu0 %1136
  %1138 = vrot.lane.b32.xlu0 %v161, 27
  %v1139 = vpop.permute.xlu0 %1138
  %1140 = vrot.lane.b32.xlu0 %v162, 27
  %v1141 = vpop.permute.xlu0 %1140
  %1142 = vrot.lane.b32.xlu0 %v163, 27
  %v1143 = vpop.permute.xlu0 %1142
  %1144 = vrot.lane.b32.xlu0 %v164, 27
  %v1145 = vpop.permute.xlu0 %1144
  %vm1146 = vcmask 220160
  %v1147 = vsel %vm1146, %v1131, %v1133
  %v1148 = vsel %vm1146, %v1133, %v1135
  %v1149 = vsel %vm1146, %v1135, %v1137
  %v1150 = vsel %vm1146, %v1137, %v1139
  %v1151 = vsel %vm1146, %v1139, %v1141
  %v1152 = vsel %vm1146, %v1141, %v1143
  %v1153 = vsel %vm1146, %v1143, %v1145
  %v1156 = vsel %vm291, %v1153, %v1131
  %v1158 = vrot.slane %v1147, 4
  %v1159 = vrot.slane %v1148, 4
  %v1160 = vrot.slane %v1149, 4
  %v1161 = vrot.slane %v1150, 4
  %v1162 = vrot.slane %v1151, 4
  %v1163 = vrot.slane %v1152, 4
  %v1164 = vrot.slane %v1156, 4
  %1172 = vst [vmem:[#allocation2 + $0x268] sm:$0xf0] %v1158
  %1173 = vst [vmem:[#allocation2 + $0x270] sm:$0xf0] %v1159
  %1174 = vst [vmem:[#allocation2 + $0x278] sm:$0xf0] %v1160
  %1175 = vst [vmem:[#allocation2 + $0x280] sm:$0xf0] %v1161
  %1176 = vst [vmem:[#allocation2 + $0x288] sm:$0xf0] %v1162
  %1177 = vst [vmem:[#allocation2 + $0x290] sm:$0xf0] %v1163
  %1178 = vst [vmem:[#allocation2 + $0x298] sm:$0xf0] %v1164
  %1179 = vrot.lane.b32.xlu0 %v157, 19
  %v1180 = vpop.permute.xlu0 %1179
  %1181 = vrot.lane.b32.xlu0 %v158, 19
  %v1182 = vpop.permute.xlu0 %1181
  %1183 = vrot.lane.b32.xlu0 %v159, 19
  %v1184 = vpop.permute.xlu0 %1183
  %1185 = vrot.lane.b32.xlu0 %v160, 19
  %v1186 = vpop.permute.xlu0 %1185
  %1187 = vrot.lane.b32.xlu0 %v161, 19
  %v1188 = vpop.permute.xlu0 %1187
  %1189 = vrot.lane.b32.xlu0 %v162, 19
  %v1190 = vpop.permute.xlu0 %1189
  %1191 = vrot.lane.b32.xlu0 %v163, 19
  %v1192 = vpop.permute.xlu0 %1191
  %1193 = vrot.lane.b32.xlu0 %v164, 19
  %v1194 = vpop.permute.xlu0 %1193
  %vm1195 = vcmask 154624
  %v1196 = vsel %vm1195, %v1180, %v1182
  %v1197 = vsel %vm1195, %v1182, %v1184
  %v1198 = vsel %vm1195, %v1184, %v1186
  %v1199 = vsel %vm1195, %v1186, %v1188
  %v1200 = vsel %vm1195, %v1188, %v1190
  %v1201 = vsel %vm1195, %v1190, %v1192
  %v1202 = vsel %vm1195, %v1192, %v1194
  %1210 = vst [vmem:[#allocation2 + $0x2a0] sm:$0xf] %v1196
  %1211 = vst [vmem:[#allocation2 + $0x2a8] sm:$0xf] %v1197
  %1212 = vst [vmem:[#allocation2 + $0x2b0] sm:$0xf] %v1198
  %1213 = vst [vmem:[#allocation2 + $0x2b8] sm:$0xf] %v1199
  %1214 = vst [vmem:[#allocation2 + $0x2c0] sm:$0xf] %v1200
  %1215 = vst [vmem:[#allocation2 + $0x2c8] sm:$0xf] %v1201
  %1216 = vst [vmem:[#allocation2 + $0x2d0] sm:$0xf] %v1202
  %1217 = vrot.lane.b32.xlu0 %v157, 18
  %v1218 = vpop.permute.xlu0 %1217
  %1219 = vrot.lane.b32.xlu0 %v158, 18
  %v1220 = vpop.permute.xlu0 %1219
  %1221 = vrot.lane.b32.xlu0 %v159, 18
  %v1222 = vpop.permute.xlu0 %1221
  %1223 = vrot.lane.b32.xlu0 %v160, 18
  %v1224 = vpop.permute.xlu0 %1223
  %1225 = vrot.lane.b32.xlu0 %v161, 18
  %v1226 = vpop.permute.xlu0 %1225
  %1227 = vrot.lane.b32.xlu0 %v162, 18
  %v1228 = vpop.permute.xlu0 %1227
  %1229 = vrot.lane.b32.xlu0 %v163, 18
  %v1230 = vpop.permute.xlu0 %1229
  %1231 = vrot.lane.b32.xlu0 %v164, 18
  %v1232 = vpop.permute.xlu0 %1231
  %vm1233 = vcmask 146432
  %v1234 = vsel %vm1233, %v1218, %v1220
  %v1235 = vsel %vm1233, %v1220, %v1222
  %v1236 = vsel %vm1233, %v1222, %v1224
  %v1237 = vsel %vm1233, %v1224, %v1226
  %v1238 = vsel %vm1233, %v1226, %v1228
  %v1239 = vsel %vm1233, %v1228, %v1230
  %v1240 = vsel %vm1233, %v1230, %v1232
  %v1243 = vsel %vm235, %v1240, %v1218
  %v1245 = vrot.slane %v1234, 4
  %v1246 = vrot.slane %v1235, 4
  %v1247 = vrot.slane %v1236, 4
  %v1248 = vrot.slane %v1237, 4
  %v1249 = vrot.slane %v1238, 4
  %v1250 = vrot.slane %v1239, 4
  %v1251 = vrot.slane %v1243, 4
  %1259 = vst [vmem:[#allocation2 + $0x2a0] sm:$0xf0] %v1245
  %1260 = vst [vmem:[#allocation2 + $0x2a8] sm:$0xf0] %v1246
  %1261 = vst [vmem:[#allocation2 + $0x2b0] sm:$0xf0] %v1247
  %1262 = vst [vmem:[#allocation2 + $0x2b8] sm:$0xf0] %v1248
  %1263 = vst [vmem:[#allocation2 + $0x2c0] sm:$0xf0] %v1249
  %1264 = vst [vmem:[#allocation2 + $0x2c8] sm:$0xf0] %v1250
  %1265 = vst [vmem:[#allocation2 + $0x2d0] sm:$0xf0] %v1251
  %1266 = vrot.lane.b32.xlu0 %v157, 17
  %v1267 = vpop.permute.xlu0 %1266
  %1268 = vrot.lane.b32.xlu0 %v158, 17
  %v1269 = vpop.permute.xlu0 %1268
  %1270 = vrot.lane.b32.xlu0 %v159, 17
  %v1271 = vpop.permute.xlu0 %1270
  %1272 = vrot.lane.b32.xlu0 %v160, 17
  %v1273 = vpop.permute.xlu0 %1272
  %1274 = vrot.lane.b32.xlu0 %v161, 17
  %v1275 = vpop.permute.xlu0 %1274
  %1276 = vrot.lane.b32.xlu0 %v162, 17
  %v1277 = vpop.permute.xlu0 %1276
  %1278 = vrot.lane.b32.xlu0 %v163, 17
  %v1279 = vpop.permute.xlu0 %1278
  %1280 = vrot.lane.b32.xlu0 %v164, 17
  %v1281 = vpop.permute.xlu0 %1280
  %vm1282 = vcmask 138240
  %v1283 = vsel %vm1282, %v1267, %v1269
  %v1284 = vsel %vm1282, %v1269, %v1271
  %v1285 = vsel %vm1282, %v1271, %v1273
  %v1286 = vsel %vm1282, %v1273, %v1275
  %v1287 = vsel %vm1282, %v1275, %v1277
  %v1288 = vsel %vm1282, %v1277, %v1279
  %v1289 = vsel %vm1282, %v1279, %v1281
  %v1298 = vsel %vm291, %v1289, %v1267
  %1300 = vst [vmem:[#allocation2 + $0x2d8] sm:$0xf] %v1283
  %1301 = vst [vmem:[#allocation2 + $0x2e0] sm:$0xf] %v1284
  %1302 = vst [vmem:[#allocation2 + $0x2e8] sm:$0xf] %v1285
  %1303 = vst [vmem:[#allocation2 + $0x2f0] sm:$0xf] %v1286
  %1304 = vst [vmem:[#allocation2 + $0x2f8] sm:$0xf] %v1287
  %1305 = vst [vmem:[#allocation2 + $0x300] sm:$0xf] %v1288
  %1306 = vst [vmem:[#allocation2 + $0x308] sm:$0xf] %v1298
  %v1307 = vld [vmem:[%s4] sm:$0xff]
  %v1308 = vld [vmem:[#allocation2] sm:$0xff]
  %v1309 = vld [vmem:[#allocation2 + $0x8] sm:$0xff]
  %v1310 = vld [vmem:[#allocation2 + $0x10] sm:$0xff]
  %v1311 = vld [vmem:[#allocation2 + $0x18] sm:$0xff]
  %v1312 = vld [vmem:[#allocation2 + $0x20] sm:$0xff]
  %v1313 = vld [vmem:[#allocation2 + $0x28] sm:$0xff]
  %v1314 = vld [vmem:[#allocation2 + $0x30] sm:$0xff]
  %v1315 = vld [vmem:[#allocation2 + $0x38] sm:$0xff]
  %v1316 = vld [vmem:[#allocation2 + $0x40] sm:$0xff]
  %v1317 = vld [vmem:[#allocation2 + $0x48] sm:$0xff]
  %v1318 = vld [vmem:[#allocation2 + $0x50] sm:$0xff]
  %v1319 = vld [vmem:[#allocation2 + $0x58] sm:$0xff]
  %v1320 = vld [vmem:[#allocation2 + $0x60] sm:$0xff]
  %v1321 = vld [vmem:[#allocation2 + $0x68] sm:$0xff]
  %v1322 = vld [vmem:[#allocation2 + $0x70] sm:$0xff]
  %v1323 = vld [vmem:[#allocation2 + $0x78] sm:$0xff]
  %v1324 = vld [vmem:[#allocation2 + $0x80] sm:$0xff]
  %v1325 = vld [vmem:[#allocation2 + $0x88] sm:$0xff]
  %v1326 = vld [vmem:[#allocation2 + $0x90] sm:$0xff]
  %v1327 = vld [vmem:[#allocation2 + $0x98] sm:$0xff]
  %v1328 = vld [vmem:[#allocation2 + $0xa0] sm:$0xff]
  %v1329 = vld [vmem:[#allocation2 + $0xa8] sm:$0xff]
  %v1330 = vld [vmem:[#allocation2 + $0xb0] sm:$0xff]
  %v1331 = vld [vmem:[#allocation2 + $0xb8] sm:$0xff]
  %v1332 = vld [vmem:[#allocation2 + $0xc0] sm:$0xff]
  %v1333 = vld [vmem:[#allocation2 + $0xc8] sm:$0xff]
  %v1334 = vld [vmem:[#allocation2 + $0xd0] sm:$0xff]
  %v1335 = vld [vmem:[#allocation2 + $0xd8] sm:$0xff]
  %v1336 = vld [vmem:[#allocation2 + $0xe0] sm:$0xff]
  %v1337 = vld [vmem:[#allocation2 + $0xe8] sm:$0xff]
  %v1338 = vld [vmem:[#allocation2 + $0xf0] sm:$0xff]
  %v1339 = vld [vmem:[#allocation2 + $0xf8] sm:$0xff]
  %v1340 = vld [vmem:[#allocation2 + $0x100] sm:$0xff]
  %v1341 = vld [vmem:[#allocation2 + $0x108] sm:$0xff]
  %v1342 = vld [vmem:[#allocation2 + $0x110] sm:$0xff]
  %v1343 = vld [vmem:[#allocation2 + $0x118] sm:$0xff]
  %v1344 = vld [vmem:[#allocation2 + $0x120] sm:$0xff]
  %v1345 = vld [vmem:[#allocation2 + $0x128] sm:$0xff]
  %v1346 = vld [vmem:[#allocation2 + $0x130] sm:$0xff]
  %v1347 = vld [vmem:[#allocation2 + $0x138] sm:$0xff]
  %v1348 = vld [vmem:[#allocation2 + $0x140] sm:$0xff]
  %v1349 = vld [vmem:[#allocation2 + $0x148] sm:$0xff]
  %v1350 = vld [vmem:[#allocation2 + $0x150] sm:$0xff]
  %v1351 = vld [vmem:[#allocation2 + $0x158] sm:$0xff]
  %v1352 = vld [vmem:[#allocation2 + $0x160] sm:$0xff]
  %v1353 = vld [vmem:[#allocation2 + $0x168] sm:$0xff]
  %v1354 = vld [vmem:[#allocation2 + $0x170] sm:$0xff]
  %v1355 = vld [vmem:[#allocation2 + $0x178] sm:$0xff]
  %v1356 = vld [vmem:[#allocation2 + $0x180] sm:$0xff]
  %v1357 = vld [vmem:[#allocation2 + $0x188] sm:$0xff]
  %v1358 = vld [vmem:[#allocation2 + $0x190] sm:$0xff]
  %v1359 = vld [vmem:[#allocation2 + $0x198] sm:$0xff]
  %v1360 = vld [vmem:[#allocation2 + $0x1a0] sm:$0xff]
  %v1361 = vld [vmem:[#allocation2 + $0x1a8] sm:$0xff]
  %v1362 = vld [vmem:[#allocation2 + $0x1b0] sm:$0xff]
  %v1363 = vld [vmem:[#allocation2 + $0x1b8] sm:$0xff]
  %v1364 = vld [vmem:[#allocation2 + $0x1c0] sm:$0xff]
  %v1365 = vld [vmem:[#allocation2 + $0x1c8] sm:$0xff]
  %v1366 = vld [vmem:[#allocation2 + $0x1d0] sm:$0xff]
  %v1367 = vld [vmem:[#allocation2 + $0x1d8] sm:$0xff]
  %v1368 = vld [vmem:[#allocation2 + $0x1e0] sm:$0xff]
  %v1369 = vld [vmem:[#allocation2 + $0x1e8] sm:$0xff]
  %v1370 = vld [vmem:[#allocation2 + $0x1f0] sm:$0xff]
  %v1371 = vld [vmem:[#allocation2 + $0x1f8] sm:$0xff]
  %v1372 = vld [vmem:[#allocation2 + $0x200] sm:$0xff]
  %v1373 = vld [vmem:[#allocation2 + $0x208] sm:$0xff]
  %v1374 = vld [vmem:[#allocation2 + $0x210] sm:$0xff]
  %v1375 = vld [vmem:[#allocation2 + $0x218] sm:$0xff]
  %v1376 = vld [vmem:[#allocation2 + $0x220] sm:$0xff]
  %v1377 = vld [vmem:[#allocation2 + $0x228] sm:$0xff]
  %v1378 = vld [vmem:[#allocation2 + $0x230] sm:$0xff]
  %v1379 = vld [vmem:[#allocation2 + $0x238] sm:$0xff]
  %v1380 = vld [vmem:[#allocation2 + $0x240] sm:$0xff]
  %v1381 = vld [vmem:[#allocation2 + $0x248] sm:$0xff]
  %v1382 = vld [vmem:[#allocation2 + $0x250] sm:$0xff]
  %v1383 = vld [vmem:[#allocation2 + $0x258] sm:$0xff]
  %v1384 = vld [vmem:[#allocation2 + $0x260] sm:$0xff]
  %v1385 = vld [vmem:[#allocation2 + $0x268] sm:$0xff]
  %v1386 = vld [vmem:[#allocation2 + $0x270] sm:$0xff]
  %v1387 = vld [vmem:[#allocation2 + $0x278] sm:$0xff]
  %v1388 = vld [vmem:[#allocation2 + $0x280] sm:$0xff]
  %v1389 = vld [vmem:[#allocation2 + $0x288] sm:$0xff]
  %v1390 = vld [vmem:[#allocation2 + $0x290] sm:$0xff]
  %v1391 = vld [vmem:[#allocation2 + $0x298] sm:$0xff]
  %v1392 = vld [vmem:[#allocation2 + $0x2a0] sm:$0xff]
  %v1393 = vld [vmem:[#allocation2 + $0x2a8] sm:$0xff]
  %v1394 = vld [vmem:[#allocation2 + $0x2b0] sm:$0xff]
  %v1395 = vld [vmem:[#allocation2 + $0x2b8] sm:$0xff]
  %v1396 = vld [vmem:[#allocation2 + $0x2c0] sm:$0xff]
  %v1397 = vld [vmem:[#allocation2 + $0x2c8] sm:$0xff]
  %v1398 = vld [vmem:[#allocation2 + $0x2d0] sm:$0xff]
  %v1399 = vld [vmem:[#allocation2 + $0x2d8] sm:$0xff]
  %v1400 = vld [vmem:[#allocation2 + $0x2e0] sm:$0xff]
  %v1401 = vld [vmem:[#allocation2 + $0x2e8] sm:$0xff]
  %v1402 = vld [vmem:[#allocation2 + $0x2f0] sm:$0xff]
  %v1403 = vld [vmem:[#allocation2 + $0x2f8] sm:$0xff]
  %v1404 = vld [vmem:[#allocation2 + $0x300] sm:$0xff]
  %v1405 = vld [vmem:[#allocation2 + $0x308] sm:$0xff]
  %v1406 = vld [vmem:[#allocation2 + $0x310] sm:$0xff]
  %v1407 = vld [vmem:[#allocation2 + $0x318] sm:$0xff]
  %v1408 = vld [vmem:[#allocation2 + $0x320] sm:$0xff]
  %v1409 = vld [vmem:[#allocation2 + $0x328] sm:$0xff]
  %v1410 = vld [vmem:[#allocation2 + $0x330] sm:$0xff]
  %v1411 = vld [vmem:[#allocation2 + $0x338] sm:$0xff]
  %v1412 = vld [vmem:[#allocation2 + $0x340] sm:$0xff]
  %v1413 = vld [vmem:[#allocation2 + $0x348] sm:$0xff]
  %v1414 = vld [vmem:[#allocation2 + $0x350] sm:$0xff]
  %v1415 = vld [vmem:[#allocation2 + $0x358] sm:$0xff]
  %v1416 = vld [vmem:[#allocation2 + $0x360] sm:$0xff]
  %v1417 = vld [vmem:[#allocation2 + $0x368] sm:$0xff]
  %v1418 = vld [vmem:[#allocation2 + $0x370] sm:$0xff]
  %v1419 = vld [vmem:[#allocation2 + $0x378] sm:$0xff]
  %v1421 = vunpack.c.l.b16 %v1307
  %v1422 = vunpack.c.h.b16 %v1307
  %v1423 = vpack.c.b16 %v1421, %v1421
  %v1424 = vpack.c.b16 %v1422, %v1422
  %1427 = vmatprep.subr.bf16.mxu0 %v1309
  %1428 = vmatpush1.bf16.msra.mxu0 %v1308
  %1429 = vmatprep.subr.bf16.mxu0 %v1316
  %1430 = vmatpush1.bf16.msra.mxu0 %v1315
  %1431 = vmatprep.subr.bf16.mxu0 %v1323
  %1432 = vmatpush1.bf16.msra.mxu0 %v1322
  %1433 = vmatprep.subr.bf16.mxu0 %v1330
  %1434 = vmatpush1.bf16.msra.mxu0 %v1329
  %1435 = vmatprep.subr.bf16.mxu0 %v1337
  %1436 = vmatpush1.bf16.msra.mxu0 %v1336
  %1437 = vmatprep.subr.bf16.mxu0 %v1344
  %1438 = vmatpush1.bf16.msra.mxu0 %v1343
  %1439 = vmatprep.subr.bf16.mxu0 %v1351
  %1440 = vmatpush1.bf16.msra.mxu0 %v1350
  %1441 = vmatprep.subr.bf16.mxu0 %v1358
  %1442 = vmatpush1.bf16.msra.mxu0 %v1357
  %1443 = vmatprep.subr.bf16.mxu0 %v1365
  %1444 = vmatpush1.bf16.msra.mxu0 %v1364
  %1445 = vmatprep.subr.bf16.mxu0 %v1372
  %1446 = vmatpush1.bf16.msra.mxu0 %v1371
  %1447 = vmatprep.subr.bf16.mxu0 %v1379
  %1448 = vmatpush1.bf16.msra.mxu0 %v1378
  %1449 = vmatprep.subr.bf16.mxu0 %v1386
  %1450 = vmatpush1.bf16.msra.mxu0 %v1385
  %1451 = vmatprep.subr.bf16.mxu0 %v1393
  %1452 = vmatpush1.bf16.msra.mxu0 %v1392
  %1453 = vmatprep.subr.bf16.mxu0 %v1400
  %1454 = vmatpush1.bf16.msra.mxu0 %v1399
  %1455 = vmatprep.subr.bf16.mxu0 %v1407
  %1456 = vmatpush1.bf16.msra.mxu0 %v1406
  %1457 = vmatprep.subr.bf16.mxu0 %v1414
  %1458 = vmatpush1.bf16.msra.mxu0 %v1413
  %1459 = vmatprep.mubr.bf16.mxu0 %v1424
  %1460 = vmatmul.mubr.bf16.gmra.mrb[0].mxu0 %v1423
  %v1461 = vpop.f32.mrb[0].mxu0
  %v1462 = vadd.f32 0.0, %v1461
  %v1463 = vpop.f32.mrb[0].mxu0
  %v1464 = vadd.f32 0.0, %v1463
  %v1465 = vpop.f32.mrb[0].mxu0
  %v1466 = vpop.f32.mrb[0].mxu0
  %1467 = vdwg.mxu0
  %1468 = vmatprep.subr.bf16.mxu0 %v1311
  %1469 = vmatpush1.bf16.msra.mxu0 %v1310
  %1470 = vmatprep.subr.bf16.mxu0 %v1318
  %1471 = vmatpush1.bf16.msra.mxu0 %v1317
  %1472 = vmatprep.subr.bf16.mxu0 %v1325
  %1473 = vmatpush1.bf16.msra.mxu0 %v1324
  %1474 = vmatprep.subr.bf16.mxu0 %v1332
  %1475 = vmatpush1.bf16.msra.mxu0 %v1331
  %1476 = vmatprep.subr.bf16.mxu0 %v1339
  %1477 = vmatpush1.bf16.msra.mxu0 %v1338
  %1478 = vmatprep.subr.bf16.mxu0 %v1346
  %1479 = vmatpush1.bf16.msra.mxu0 %v1345
  %1480 = vmatprep.subr.bf16.mxu0 %v1353
  %1481 = vmatpush1.bf16.msra.mxu0 %v1352
  %1482 = vmatprep.subr.bf16.mxu0 %v1360
  %1483 = vmatpush1.bf16.msra.mxu0 %v1359
  %1484 = vmatprep.subr.bf16.mxu0 %v1367
  %1485 = vmatpush1.bf16.msra.mxu0 %v1366
  %1486 = vmatprep.subr.bf16.mxu0 %v1374
  %1487 = vmatpush1.bf16.msra.mxu0 %v1373
  %1488 = vmatprep.subr.bf16.mxu0 %v1381
  %1489 = vmatpush1.bf16.msra.mxu0 %v1380
  %1490 = vmatprep.subr.bf16.mxu0 %v1388
  %1491 = vmatpush1.bf16.msra.mxu0 %v1387
  %1492 = vmatprep.subr.bf16.mxu0 %v1395
  %1493 = vmatpush1.bf16.msra.mxu0 %v1394
  %1494 = vmatprep.subr.bf16.mxu0 %v1402
  %1495 = vmatpush1.bf16.msra.mxu0 %v1401
  %1496 = vmatprep.subr.bf16.mxu0 %v1409
  %1497 = vmatpush1.bf16.msra.mxu0 %v1408
  %1498 = vmatprep.subr.bf16.mxu0 %v1416
  %1499 = vmatpush1.bf16.msra.mxu0 %v1415
  %1500 = vmatprep.mubr.bf16.mxu0 %v1424
  %1501 = vmatmul.mubr.bf16.gmra.mrb[0].mxu0 %v1423
  %v1502 = vpop.f32.mrb[0].mxu0
  %v1503 = vadd.f32 0.0, %v1502
  %v1504 = vpop.f32.mrb[0].mxu0
  %v1505 = vadd.f32 0.0, %v1504
  %v1506 = vpop.f32.mrb[0].mxu0
  %v1507 = vpop.f32.mrb[0].mxu0
  %1508 = vdwg.mxu0
  %1509 = vmatprep.subr.bf16.mxu0 %v1313
  %1510 = vmatpush1.bf16.msra.mxu0 %v1312
  %1511 = vmatprep.subr.bf16.mxu0 %v1320
  %1512 = vmatpush1.bf16.msra.mxu0 %v1319
  %1513 = vmatprep.subr.bf16.mxu0 %v1327
  %1514 = vmatpush1.bf16.msra.mxu0 %v1326
  %1515 = vmatprep.subr.bf16.mxu0 %v1334
  %1516 = vmatpush1.bf16.msra.mxu0 %v1333
  %1517 = vmatprep.subr.bf16.mxu0 %v1341
  %1518 = vmatpush1.bf16.msra.mxu0 %v1340
  %1519 = vmatprep.subr.bf16.mxu0 %v1348
  %1520 = vmatpush1.bf16.msra.mxu0 %v1347
  %1521 = vmatprep.subr.bf16.mxu0 %v1355
  %1522 = vmatpush1.bf16.msra.mxu0 %v1354
  %1523 = vmatprep.subr.bf16.mxu0 %v1362
  %1524 = vmatpush1.bf16.msra.mxu0 %v1361
  %1525 = vmatprep.subr.bf16.mxu0 %v1369
  %1526 = vmatpush1.bf16.msra.mxu0 %v1368
  %1527 = vmatprep.subr.bf16.mxu0 %v1376
  %1528 = vmatpush1.bf16.msra.mxu0 %v1375
  %1529 = vmatprep.subr.bf16.mxu0 %v1383
  %1530 = vmatpush1.bf16.msra.mxu0 %v1382
  %1531 = vmatprep.subr.bf16.mxu0 %v1390
  %1532 = vmatpush1.bf16.msra.mxu0 %v1389
  %1533 = vmatprep.subr.bf16.mxu0 %v1397
  %1534 = vmatpush1.bf16.msra.mxu0 %v1396
  %1535 = vmatprep.subr.bf16.mxu0 %v1404
  %1536 = vmatpush1.bf16.msra.mxu0 %v1403
  %1537 = vmatprep.subr.bf16.mxu0 %v1411
  %1538 = vmatpush1.bf16.msra.mxu0 %v1410
  %1539 = vmatprep.subr.bf16.mxu0 %v1418
  %1540 = vmatpush1.bf16.msra.mxu0 %v1417
  %1541 = vmatprep.mubr.bf16.mxu0 %v1424
  %1542 = vmatmul.mubr.bf16.gmra.mrb[0].mxu0 %v1423
  %v1543 = vpop.f32.mrb[0].mxu0
  %v1544 = vadd.f32 0.0, %v1543
  %v1545 = vpop.f32.mrb[0].mxu0
  %v1546 = vadd.f32 0.0, %v1545
  %v1547 = vpop.f32.mrb[0].mxu0
  %v1548 = vpop.f32.mrb[0].mxu0
  %1549 = vdwg.mxu0
  %1550 = vmatprep.subr.bf16.mxu0 0
  %1551 = vmatpush1.bf16.msra.mxu0 %v1314
  %1552 = vmatprep.subr.bf16.mxu0 0
  %1553 = vmatpush1.bf16.msra.mxu0 %v1321
  %1554 = vmatprep.subr.bf16.mxu0 0
  %1555 = vmatpush1.bf16.msra.mxu0 %v1328
  %1556 = vmatprep.subr.bf16.mxu0 0
  %1557 = vmatpush1.bf16.msra.mxu0 %v1335
  %1558 = vmatprep.subr.bf16.mxu0 0
  %1559 = vmatpush1.bf16.msra.mxu0 %v1342
  %1560 = vmatprep.subr.bf16.mxu0 0
  %1561 = vmatpush1.bf16.msra.mxu0 %v1349
  %1562 = vmatprep.subr.bf16.mxu0 0
  %1563 = vmatpush1.bf16.msra.mxu0 %v1356
  %1564 = vmatprep.subr.bf16.mxu0 0
  %1565 = vmatpush1.bf16.msra.mxu0 %v1363
  %1566 = vmatprep.subr.bf16.mxu0 0
  %1567 = vmatpush1.bf16.msra.mxu0 %v1370
  %1568 = vmatprep.subr.bf16.mxu0 0
  %1569 = vmatpush1.bf16.msra.mxu0 %v1377
  %1570 = vmatprep.subr.bf16.mxu0 0
  %1571 = vmatpush1.bf16.msra.mxu0 %v1384
  %1572 = vmatprep.subr.bf16.mxu0 0
  %1573 = vmatpush1.bf16.msra.mxu0 %v1391
  %1574 = vmatprep.subr.bf16.mxu0 0
  %1575 = vmatpush1.bf16.msra.mxu0 %v1398
  %1576 = vmatprep.subr.bf16.mxu0 0
  %1577 = vmatpush1.bf16.msra.mxu0 %v1405
  %1578 = vmatprep.subr.bf16.mxu0 0
  %1579 = vmatpush1.bf16.msra.mxu0 %v1412
  %1580 = vmatprep.subr.bf16.mxu0 0
  %1581 = vmatpush1.bf16.msra.mxu0 %v1419
  %1582 = vmatprep.mubr.bf16.mxu0 %v1424
  %1583 = vmatmul.mubr.bf16.gmra.mrb[0].mxu0 %v1423
  %v1584 = vpop.f32.mrb[0].mxu0
  %v1585 = vadd.f32 0.0, %v1584
  %v1586 = vpop.f32.mrb[0].mxu0
  %v1587 = vpop.f32.mrb[0].mxu0
  %v1588 = vpop.f32.mrb[0].mxu0
  %1589 = vdwg.mxu0
  %v1590 = vsel %vm51, 1, 0
  %v1591 = vlaneseq
  %v1592 = vshrl.u32 %v1591, 7
  %v1593 = vsub.s32 0, %v1592
  %v1594 = vrot.slane %v1590, %v1593
  %v1595 = vlaneseq
  %v1596 = vshrl.u32 %v1595, 7
  %v1597 = vsub.s32 1, %v1596
  %v1598 = vrot.slane %v1590, %v1597
  %v1599 = vlaneseq
  %v1600 = vshrl.u32 %v1599, 7
  %v1601 = vsub.s32 2, %v1600
  %v1602 = vrot.slane %v1590, %v1601
  %v1603 = vlaneseq
  %v1604 = vshrl.u32 %v1603, 7
  %v1605 = vsub.s32 3, %v1604
  %v1606 = vrot.slane %v1590, %v1605
  %v1607 = vlaneseq
  %v1608 = vshrl.u32 %v1607, 7
  %v1609 = vsub.s32 4, %v1608
  %v1610 = vrot.slane %v1590, %v1609
  %v1611 = vlaneseq
  %v1612 = vshrl.u32 %v1611, 7
  %v1613 = vsub.s32 5, %v1612
  %v1614 = vrot.slane %v1590, %v1613
  %v1615 = vlaneseq
  %v1616 = vshrl.u32 %v1615, 7
  %v1617 = vsub.s32 6, %v1616
  %v1618 = vrot.slane %v1590, %v1617
  %vm1619 = vcmp.eq.s32.totalorder %v1594, 1
  %vm1620 = vcmp.eq.s32.totalorder %v1598, 1
  %vm1621 = vcmp.eq.s32.totalorder %v1602, 1
  %vm1622 = vcmp.eq.s32.totalorder %v1606, 1
  %vm1623 = vcmp.eq.s32.totalorder %v1610, 1
  %vm1624 = vcmp.eq.s32.totalorder %v1614, 1
  %vm1625 = vcmp.eq.s32.totalorder %v1618, 1
  %v1626 = vsel %vm1619, %v1462, 0.0
  %v1627 = vsel %vm1620, %v1464, 0.0
  %v1628 = vsel %vm1621, %v1503, 0.0
  %v1629 = vsel %vm1622, %v1505, 0.0
  %v1630 = vsel %vm1623, %v1544, 0.0
  %v1631 = vsel %vm1624, %v1546, 0.0
  %v1632 = vsel %vm1625, %v1585, 0.0
  %v1633 = vadd.f32 %v1626, %v1627
  %v1634 = vadd.f32 %v1633, %v1628
  %v1635 = vadd.f32 %v1634, %v1629
  %v1636 = vadd.f32 %v1635, %v1630
  %v1637 = vadd.f32 %v1636, %v1631
  %v1638 = vadd.f32 %v1637, %v1632
  %1639 = vadd.xlane.f32.xlu0 %v1638
  %v1640 = vpop.xlane.xlu0 %1639
  %v1641 = vadd.f32 %v1640, 0.0
  %v1642 = vmul.f32 %v1626, %v1462
  %v1643 = vmul.f32 %v1627, %v1464
  %v1644 = vmul.f32 %v1628, %v1503
  %v1645 = vmul.f32 %v1629, %v1505
  %v1646 = vmul.f32 %v1630, %v1544
  %v1647 = vmul.f32 %v1631, %v1546
  %v1648 = vmul.f32 %v1632, %v1585
  %v1649 = vadd.f32 %v1642, %v1643
  %v1650 = vadd.f32 %v1649, %v1644
  %v1651 = vadd.f32 %v1650, %v1645
  %v1652 = vadd.f32 %v1651, %v1646
  %v1653 = vadd.f32 %v1652, %v1647
  %v1654 = vadd.f32 %v1653, %v1648
  %1655 = vadd.xlane.f32.xlu0 %v1654
  %v1656 = vpop.xlane.xlu0 %1655
  %v1657 = vadd.f32 %v1656, 0.0
  %v1658 = vpack.c.bf16 %v1462, %v1462
  %v1659 = vpack.c.bf16 %v1464, %v1464
  %v1660 = vpack.c.bf16 %v1503, %v1503
  %v1661 = vpack.c.bf16 %v1505, %v1505
  %v1662 = vpack.c.bf16 %v1544, %v1544
  %v1663 = vpack.c.bf16 %v1546, %v1546
  %v1664 = vpack.c.bf16 %v1585, %v1585
  %v1672 = vunpack.c.l.b16 %v1658
  %v1673 = vunpack.c.l.b16 %v1659
  %v1674 = vunpack.c.l.b16 %v1660
  %v1675 = vunpack.c.l.b16 %v1661
  %v1676 = vunpack.c.l.b16 %v1662
  %v1677 = vunpack.c.l.b16 %v1663
  %v1678 = vunpack.c.l.b16 %v1664
  %v1679 = vpack.c.b16 %v1673, %v1672
  %v1680 = vpack.c.b16 %v1675, %v1674
  %v1681 = vpack.c.b16 %v1677, %v1676
  %v1682 = vpack.c.b16 %v1678, %v1678
  %1687 = vst [vmem:[%s5 + $0x4] sm:$0xff] %v1679
  %1688 = vst [vmem:[%s5 + $0xc] sm:$0xff] %v1680
  %1689 = vst [vmem:[%s5 + $0x14] sm:$0xff] %v1681
  %1690 = vst [vmem:[%s5 + $0x1c] sm:$0xf] %v1682
  %1691 = vst [vmem:[%s5] sm:$0xf] 0
  %1692 = vst [vmem:[%s5 + $0x20] sm:$0xf] 0
  %s1693 = scalar_lea.vmem %s0, 72
  %v1694 = vld [vmem:[%s1693] sm:$0xff]
  %v1695 = vld [vmem:[%s1693 + $0x8] sm:$0xff]
  %v1696 = vld [vmem:[%s1693 + $0x10] sm:$0xff]
  %v1697 = vld [vmem:[%s1693 + $0x18] sm:$0xff]
  %v1698 = vld [vmem:[%s1693 + $0x20] sm:$0xff]
  %v1699 = vld [vmem:[%s1693 + $0x28] sm:$0xff]
  %v1700 = vld [vmem:[%s1693 + $0x30] sm:$0xff]
  %v1701 = vld [vmem:[%s1693 + $0x38] sm:$0xff]
  %v1702 = vld [vmem:[%s1693 + $0x40] sm:$0xff]
  %v1703 = vld [vmem:[%s1] sm:$0xff]
  %1705 = vset.pattern.permute.xlu0 0
  %1706 = vperm.xlu0 %1705, %v1703
  %v1707 = vpop.permute.xlu0 %1706
  %v1709 = vmul.f32 %v1694, %v1707
  %v1710 = vmul.f32 %v1695, %v1707
  %v1711 = vmul.f32 %v1696, %v1707
  %v1712 = vmul.f32 %v1697, %v1707
  %v1713 = vmul.f32 %v1698, %v1707
  %v1714 = vmul.f32 %v1699, %v1707
  %v1715 = vmul.f32 %v1700, %v1707
  %v1716 = vmul.f32 %v1701, %v1707
  %v1717 = vmul.f32 %v1702, %v1707
  %v1718 = vld [vmem:[%s2] sm:$0xff]
  %1720 = vset.pattern.permute.xlu0 0
  %1721 = vperm.xlu0 %1720, %v1718
  %v1722 = vpop.permute.xlu0 %1721
  %v1724 = vadd.f32 %v1709, %v1722
  %v1725 = vadd.f32 %v1710, %v1722
  %v1726 = vadd.f32 %v1711, %v1722
  %v1727 = vadd.f32 %v1712, %v1722
  %v1728 = vadd.f32 %v1713, %v1722
  %v1729 = vadd.f32 %v1714, %v1722
  %v1730 = vadd.f32 %v1715, %v1722
  %v1731 = vadd.f32 %v1716, %v1722
  %v1732 = vadd.f32 %v1717, %v1722
  %v1733 = vmax.f32 %v1724, 0.0
  %v1734 = vmax.f32 %v1725, 0.0
  %v1735 = vmax.f32 %v1726, 0.0
  %v1736 = vmax.f32 %v1727, 0.0
  %v1737 = vmax.f32 %v1728, 0.0
  %v1738 = vmax.f32 %v1729, 0.0
  %v1739 = vmax.f32 %v1730, 0.0
  %v1740 = vmax.f32 %v1731, 0.0
  %v1741 = vmax.f32 %v1732, 0.0
  %v1742 = vsel %vm138, %v1733, 0.0
  %v1743 = vsel %vm139, %v1734, 0.0
  %v1744 = vsel %vm140, %v1735, 0.0
  %v1745 = vsel %vm141, %v1736, 0.0
  %v1746 = vsel %vm142, %v1737, 0.0
  %v1747 = vsel %vm143, %v1738, 0.0
  %v1748 = vsel %vm144, %v1739, 0.0
  %v1749 = vsel %vm145, %v1740, 0.0
  %v1750 = vsel %vm146, %v1741, 0.0
  %v1751 = vpack.c.bf16 %v1742, %v1742
  %v1752 = vpack.c.bf16 %v1743, %v1743
  %v1753 = vpack.c.bf16 %v1744, %v1744
  %v1754 = vpack.c.bf16 %v1745, %v1745
  %v1755 = vpack.c.bf16 %v1746, %v1746
  %v1756 = vpack.c.bf16 %v1747, %v1747
  %v1757 = vpack.c.bf16 %v1748, %v1748
  %v1758 = vpack.c.bf16 %v1749, %v1749
  %v1759 = vpack.c.bf16 %v1750, %v1750
  %1768 = vrot.lane.b32.xlu0 %v1751, 111
  %v1769 = vpop.permute.xlu0 %1768
  %1770 = vrot.lane.b32.xlu0 %v1752, 111
  %v1771 = vpop.permute.xlu0 %1770
  %1772 = vrot.lane.b32.xlu0 %v1753, 111
  %v1773 = vpop.permute.xlu0 %1772
  %1774 = vrot.lane.b32.xlu0 %v1754, 111
  %v1775 = vpop.permute.xlu0 %1774
  %1776 = vrot.lane.b32.xlu0 %v1755, 111
  %v1777 = vpop.permute.xlu0 %1776
  %1778 = vrot.lane.b32.xlu0 %v1756, 111
  %v1779 = vpop.permute.xlu0 %1778
  %1780 = vrot.lane.b32.xlu0 %v1757, 111
  %v1781 = vpop.permute.xlu0 %1780
  %1782 = vrot.lane.b32.xlu0 %v1758, 111
  %v1783 = vpop.permute.xlu0 %1782
  %v1784 = vsel %vm189, %v1769, %v1771
  %v1785 = vsel %vm189, %v1771, %v1773
  %v1786 = vsel %vm189, %v1773, %v1775
  %v1787 = vsel %vm189, %v1775, %v1777
  %v1788 = vsel %vm189, %v1777, %v1779
  %v1789 = vsel %vm189, %v1779, %v1781
  %v1790 = vsel %vm189, %v1781, %v1783
  %1798 = vst [vmem:[#allocation2] sm:$0xf] %v1784
  %1799 = vst [vmem:[#allocation2 + $0x8] sm:$0xf] %v1785
  %1800 = vst [vmem:[#allocation2 + $0x10] sm:$0xf] %v1786
  %1801 = vst [vmem:[#allocation2 + $0x18] sm:$0xf] %v1787
  %1802 = vst [vmem:[#allocation2 + $0x20] sm:$0xf] %v1788
  %1803 = vst [vmem:[#allocation2 + $0x28] sm:$0xf] %v1789
  %1804 = vst [vmem:[#allocation2 + $0x30] sm:$0xf] %v1790
  %1805 = vrot.lane.b32.xlu0 %v1751, 110
  %v1806 = vpop.permute.xlu0 %1805
  %1807 = vrot.lane.b32.xlu0 %v1752, 110
  %v1808 = vpop.permute.xlu0 %1807
  %1809 = vrot.lane.b32.xlu0 %v1753, 110
  %v1810 = vpop.permute.xlu0 %1809
  %1811 = vrot.lane.b32.xlu0 %v1754, 110
  %v1812 = vpop.permute.xlu0 %1811
  %1813 = vrot.lane.b32.xlu0 %v1755, 110
  %v1814 = vpop.permute.xlu0 %1813
  %1815 = vrot.lane.b32.xlu0 %v1756, 110
  %v1816 = vpop.permute.xlu0 %1815
  %1817 = vrot.lane.b32.xlu0 %v1757, 110
  %v1818 = vpop.permute.xlu0 %1817
  %1819 = vrot.lane.b32.xlu0 %v1758, 110
  %v1820 = vpop.permute.xlu0 %1819
  %v1821 = vsel %vm227, %v1806, %v1808
  %v1822 = vsel %vm227, %v1808, %v1810
  %v1823 = vsel %vm227, %v1810, %v1812
  %v1824 = vsel %vm227, %v1812, %v1814
  %v1825 = vsel %vm227, %v1814, %v1816
  %v1826 = vsel %vm227, %v1816, %v1818
  %v1827 = vsel %vm227, %v1818, %v1820
  %v1830 = vsel %vm235, %v1827, %v1806
  %v1832 = vrot.slane %v1821, 4
  %v1833 = vrot.slane %v1822, 4
  %v1834 = vrot.slane %v1823, 4
  %v1835 = vrot.slane %v1824, 4
  %v1836 = vrot.slane %v1825, 4
  %v1837 = vrot.slane %v1826, 4
  %v1838 = vrot.slane %v1830, 4
  %1846 = vst [vmem:[#allocation2] sm:$0xf0] %v1832
  %1847 = vst [vmem:[#allocation2 + $0x8] sm:$0xf0] %v1833
  %1848 = vst [vmem:[#allocation2 + $0x10] sm:$0xf0] %v1834
  %1849 = vst [vmem:[#allocation2 + $0x18] sm:$0xf0] %v1835
  %1850 = vst [vmem:[#allocation2 + $0x20] sm:$0xf0] %v1836
  %1851 = vst [vmem:[#allocation2 + $0x28] sm:$0xf0] %v1837
  %1852 = vst [vmem:[#allocation2 + $0x30] sm:$0xf0] %v1838
  %1853 = vrot.lane.b32.xlu0 %v1751, 109
  %v1854 = vpop.permute.xlu0 %1853
  %1855 = vrot.lane.b32.xlu0 %v1752, 109
  %v1856 = vpop.permute.xlu0 %1855
  %1857 = vrot.lane.b32.xlu0 %v1753, 109
  %v1858 = vpop.permute.xlu0 %1857
  %1859 = vrot.lane.b32.xlu0 %v1754, 109
  %v1860 = vpop.permute.xlu0 %1859
  %1861 = vrot.lane.b32.xlu0 %v1755, 109
  %v1862 = vpop.permute.xlu0 %1861
  %1863 = vrot.lane.b32.xlu0 %v1756, 109
  %v1864 = vpop.permute.xlu0 %1863
  %1865 = vrot.lane.b32.xlu0 %v1757, 109
  %v1866 = vpop.permute.xlu0 %1865
  %1867 = vrot.lane.b32.xlu0 %v1758, 109
  %v1868 = vpop.permute.xlu0 %1867
  %v1869 = vsel %vm277, %v1854, %v1856
  %v1870 = vsel %vm277, %v1856, %v1858
  %v1871 = vsel %vm277, %v1858, %v1860
  %v1872 = vsel %vm277, %v1860, %v1862
  %v1873 = vsel %vm277, %v1862, %v1864
  %v1874 = vsel %vm277, %v1864, %v1866
  %v1875 = vsel %vm277, %v1866, %v1868
  %v1884 = vsel %vm291, %v1875, %v1854
  %1886 = vst [vmem:[#allocation2 + $0x38] sm:$0xf] %v1869
  %1887 = vst [vmem:[#allocation2 + $0x40] sm:$0xf] %v1870
  %1888 = vst [vmem:[#allocation2 + $0x48] sm:$0xf] %v1871
  %1889 = vst [vmem:[#allocation2 + $0x50] sm:$0xf] %v1872
  %1890 = vst [vmem:[#allocation2 + $0x58] sm:$0xf] %v1873
  %1891 = vst [vmem:[#allocation2 + $0x60] sm:$0xf] %v1874
  %1892 = vst [vmem:[#allocation2 + $0x68] sm:$0xf] %v1884
  %v1893 = vrot.slane %v1751, 4
  %v1894 = vrot.slane %v1752, 4
  %v1895 = vrot.slane %v1753, 4
  %v1896 = vrot.slane %v1754, 4
  %v1897 = vrot.slane %v1755, 4
  %v1898 = vrot.slane %v1756, 4
  %v1899 = vrot.slane %v1757, 4
  %v1900 = vrot.slane %v1758, 4
  %1901 = vrot.lane.b32.xlu0 %v1893, 101
  %v1902 = vpop.permute.xlu0 %1901
  %1903 = vrot.lane.b32.xlu0 %v1894, 101
  %v1904 = vpop.permute.xlu0 %1903
  %1905 = vrot.lane.b32.xlu0 %v1895, 101
  %v1906 = vpop.permute.xlu0 %1905
  %1907 = vrot.lane.b32.xlu0 %v1896, 101
  %v1908 = vpop.permute.xlu0 %1907
  %1909 = vrot.lane.b32.xlu0 %v1897, 101
  %v1910 = vpop.permute.xlu0 %1909
  %1911 = vrot.lane.b32.xlu0 %v1898, 101
  %v1912 = vpop.permute.xlu0 %1911
  %1913 = vrot.lane.b32.xlu0 %v1899, 101
  %v1914 = vpop.permute.xlu0 %1913
  %1915 = vrot.lane.b32.xlu0 %v1900, 101
  %v1916 = vpop.permute.xlu0 %1915
  %v1917 = vsel %vm327, %v1902, %v1904
  %v1918 = vsel %vm327, %v1904, %v1906
  %v1919 = vsel %vm327, %v1906, %v1908
  %v1920 = vsel %vm327, %v1908, %v1910
  %v1921 = vsel %vm327, %v1910, %v1912
  %v1922 = vsel %vm327, %v1912, %v1914
  %v1923 = vsel %vm327, %v1914, %v1916
  %1931 = vst [vmem:[#allocation2 + $0x38] sm:$0xf0] %v1917
  %1932 = vst [vmem:[#allocation2 + $0x40] sm:$0xf0] %v1918
  %1933 = vst [vmem:[#allocation2 + $0x48] sm:$0xf0] %v1919
  %1934 = vst [vmem:[#allocation2 + $0x50] sm:$0xf0] %v1920
  %1935 = vst [vmem:[#allocation2 + $0x58] sm:$0xf0] %v1921
  %1936 = vst [vmem:[#allocation2 + $0x60] sm:$0xf0] %v1922
  %1937 = vst [vmem:[#allocation2 + $0x68] sm:$0xf0] %v1923
  %1938 = vrot.lane.b32.xlu0 %v1751, 100
  %v1939 = vpop.permute.xlu0 %1938
  %1940 = vrot.lane.b32.xlu0 %v1752, 100
  %v1941 = vpop.permute.xlu0 %1940
  %1942 = vrot.lane.b32.xlu0 %v1753, 100
  %v1943 = vpop.permute.xlu0 %1942
  %1944 = vrot.lane.b32.xlu0 %v1754, 100
  %v1945 = vpop.permute.xlu0 %1944
  %1946 = vrot.lane.b32.xlu0 %v1755, 100
  %v1947 = vpop.permute.xlu0 %1946
  %1948 = vrot.lane.b32.xlu0 %v1756, 100
  %v1949 = vpop.permute.xlu0 %1948
  %1950 = vrot.lane.b32.xlu0 %v1757, 100
  %v1951 = vpop.permute.xlu0 %1950
  %1952 = vrot.lane.b32.xlu0 %v1758, 100
  %v1953 = vpop.permute.xlu0 %1952
  %v1954 = vsel %vm365, %v1939, %v1941
  %v1955 = vsel %vm365, %v1941, %v1943
  %v1956 = vsel %vm365, %v1943, %v1945
  %v1957 = vsel %vm365, %v1945, %v1947
  %v1958 = vsel %vm365, %v1947, %v1949
  %v1959 = vsel %vm365, %v1949, %v1951
  %v1960 = vsel %vm365, %v1951, %v1953
  %v1969 = vsel %vm235, %v1960, %v1939
  %1971 = vst [vmem:[#allocation2 + $0x70] sm:$0xf] %v1954
  %1972 = vst [vmem:[#allocation2 + $0x78] sm:$0xf] %v1955
  %1973 = vst [vmem:[#allocation2 + $0x80] sm:$0xf] %v1956
  %1974 = vst [vmem:[#allocation2 + $0x88] sm:$0xf] %v1957
  %1975 = vst [vmem:[#allocation2 + $0x90] sm:$0xf] %v1958
  %1976 = vst [vmem:[#allocation2 + $0x98] sm:$0xf] %v1959
  %1977 = vst [vmem:[#allocation2 + $0xa0] sm:$0xf] %v1969
  %1978 = vrot.lane.b32.xlu0 %v1751, 99
  %v1979 = vpop.permute.xlu0 %1978
  %1980 = vrot.lane.b32.xlu0 %v1752, 99
  %v1981 = vpop.permute.xlu0 %1980
  %1982 = vrot.lane.b32.xlu0 %v1753, 99
  %v1983 = vpop.permute.xlu0 %1982
  %1984 = vrot.lane.b32.xlu0 %v1754, 99
  %v1985 = vpop.permute.xlu0 %1984
  %1986 = vrot.lane.b32.xlu0 %v1755, 99
  %v1987 = vpop.permute.xlu0 %1986
  %1988 = vrot.lane.b32.xlu0 %v1756, 99
  %v1989 = vpop.permute.xlu0 %1988
  %1990 = vrot.lane.b32.xlu0 %v1757, 99
  %v1991 = vpop.permute.xlu0 %1990
  %1992 = vrot.lane.b32.xlu0 %v1758, 99
  %v1993 = vpop.permute.xlu0 %1992
  %v1994 = vsel %vm406, %v1979, %v1981
  %v1995 = vsel %vm406, %v1981, %v1983
  %v1996 = vsel %vm406, %v1983, %v1985
  %v1997 = vsel %vm406, %v1985, %v1987
  %v1998 = vsel %vm406, %v1987, %v1989
  %v1999 = vsel %vm406, %v1989, %v1991
  %v2000 = vsel %vm406, %v1991, %v1993
  %v2003 = vsel %vm291, %v2000, %v1979
  %v2005 = vrot.slane %v1994, 4
  %v2006 = vrot.slane %v1995, 4
  %v2007 = vrot.slane %v1996, 4
  %v2008 = vrot.slane %v1997, 4
  %v2009 = vrot.slane %v1998, 4
  %v2010 = vrot.slane %v1999, 4
  %v2011 = vrot.slane %v2003, 4
  %2019 = vst [vmem:[#allocation2 + $0x70] sm:$0xf0] %v2005
  %2020 = vst [vmem:[#allocation2 + $0x78] sm:$0xf0] %v2006
  %2021 = vst [vmem:[#allocation2 + $0x80] sm:$0xf0] %v2007
  %2022 = vst [vmem:[#allocation2 + $0x88] sm:$0xf0] %v2008
  %2023 = vst [vmem:[#allocation2 + $0x90] sm:$0xf0] %v2009
  %2024 = vst [vmem:[#allocation2 + $0x98] sm:$0xf0] %v2010
  %2025 = vst [vmem:[#allocation2 + $0xa0] sm:$0xf0] %v2011
  %2026 = vrot.lane.b32.xlu0 %v1751, 91
  %v2027 = vpop.permute.xlu0 %2026
  %2028 = vrot.lane.b32.xlu0 %v1752, 91
  %v2029 = vpop.permute.xlu0 %2028
  %2030 = vrot.lane.b32.xlu0 %v1753, 91
  %v2031 = vpop.permute.xlu0 %2030
  %2032 = vrot.lane.b32.xlu0 %v1754, 91
  %v2033 = vpop.permute.xlu0 %2032
  %2034 = vrot.lane.b32.xlu0 %v1755, 91
  %v2035 = vpop.permute.xlu0 %2034
  %2036 = vrot.lane.b32.xlu0 %v1756, 91
  %v2037 = vpop.permute.xlu0 %2036
  %2038 = vrot.lane.b32.xlu0 %v1757, 91
  %v2039 = vpop.permute.xlu0 %2038
  %2040 = vrot.lane.b32.xlu0 %v1758, 91
  %v2041 = vpop.permute.xlu0 %2040
  %v2042 = vsel %vm455, %v2027, %v2029
  %v2043 = vsel %vm455, %v2029, %v2031
  %v2044 = vsel %vm455, %v2031, %v2033
  %v2045 = vsel %vm455, %v2033, %v2035
  %v2046 = vsel %vm455, %v2035, %v2037
  %v2047 = vsel %vm455, %v2037, %v2039
  %v2048 = vsel %vm455, %v2039, %v2041
  %2056 = vst [vmem:[#allocation2 + $0xa8] sm:$0xf] %v2042
  %2057 = vst [vmem:[#allocation2 + $0xb0] sm:$0xf] %v2043
  %2058 = vst [vmem:[#allocation2 + $0xb8] sm:$0xf] %v2044
  %2059 = vst [vmem:[#allocation2 + $0xc0] sm:$0xf] %v2045
  %2060 = vst [vmem:[#allocation2 + $0xc8] sm:$0xf] %v2046
  %2061 = vst [vmem:[#allocation2 + $0xd0] sm:$0xf] %v2047
  %2062 = vst [vmem:[#allocation2 + $0xd8] sm:$0xf] %v2048
  %2063 = vrot.lane.b32.xlu0 %v1751, 90
  %v2064 = vpop.permute.xlu0 %2063
  %2065 = vrot.lane.b32.xlu0 %v1752, 90
  %v2066 = vpop.permute.xlu0 %2065
  %2067 = vrot.lane.b32.xlu0 %v1753, 90
  %v2068 = vpop.permute.xlu0 %2067
  %2069 = vrot.lane.b32.xlu0 %v1754, 90
  %v2070 = vpop.permute.xlu0 %2069
  %2071 = vrot.lane.b32.xlu0 %v1755, 90
  %v2072 = vpop.permute.xlu0 %2071
  %2073 = vrot.lane.b32.xlu0 %v1756, 90
  %v2074 = vpop.permute.xlu0 %2073
  %2075 = vrot.lane.b32.xlu0 %v1757, 90
  %v2076 = vpop.permute.xlu0 %2075
  %2077 = vrot.lane.b32.xlu0 %v1758, 90
  %v2078 = vpop.permute.xlu0 %2077
  %v2079 = vsel %vm493, %v2064, %v2066
  %v2080 = vsel %vm493, %v2066, %v2068
  %v2081 = vsel %vm493, %v2068, %v2070
  %v2082 = vsel %vm493, %v2070, %v2072
  %v2083 = vsel %vm493, %v2072, %v2074
  %v2084 = vsel %vm493, %v2074, %v2076
  %v2085 = vsel %vm493, %v2076, %v2078
  %v2088 = vsel %vm235, %v2085, %v2064
  %v2090 = vrot.slane %v2079, 4
  %v2091 = vrot.slane %v2080, 4
  %v2092 = vrot.slane %v2081, 4
  %v2093 = vrot.slane %v2082, 4
  %v2094 = vrot.slane %v2083, 4
  %v2095 = vrot.slane %v2084, 4
  %v2096 = vrot.slane %v2088, 4
  %2104 = vst [vmem:[#allocation2 + $0xa8] sm:$0xf0] %v2090
  %2105 = vst [vmem:[#allocation2 + $0xb0] sm:$0xf0] %v2091
  %2106 = vst [vmem:[#allocation2 + $0xb8] sm:$0xf0] %v2092
  %2107 = vst [vmem:[#allocation2 + $0xc0] sm:$0xf0] %v2093
  %2108 = vst [vmem:[#allocation2 + $0xc8] sm:$0xf0] %v2094
  %2109 = vst [vmem:[#allocation2 + $0xd0] sm:$0xf0] %v2095
  %2110 = vst [vmem:[#allocation2 + $0xd8] sm:$0xf0] %v2096
  %2111 = vrot.lane.b32.xlu0 %v1751, 89
  %v2112 = vpop.permute.xlu0 %2111
  %2113 = vrot.lane.b32.xlu0 %v1752, 89
  %v2114 = vpop.permute.xlu0 %2113
  %2115 = vrot.lane.b32.xlu0 %v1753, 89
  %v2116 = vpop.permute.xlu0 %2115
  %2117 = vrot.lane.b32.xlu0 %v1754, 89
  %v2118 = vpop.permute.xlu0 %2117
  %2119 = vrot.lane.b32.xlu0 %v1755, 89
  %v2120 = vpop.permute.xlu0 %2119
  %2121 = vrot.lane.b32.xlu0 %v1756, 89
  %v2122 = vpop.permute.xlu0 %2121
  %2123 = vrot.lane.b32.xlu0 %v1757, 89
  %v2124 = vpop.permute.xlu0 %2123
  %2125 = vrot.lane.b32.xlu0 %v1758, 89
  %v2126 = vpop.permute.xlu0 %2125
  %v2127 = vsel %vm542, %v2112, %v2114
  %v2128 = vsel %vm542, %v2114, %v2116
  %v2129 = vsel %vm542, %v2116, %v2118
  %v2130 = vsel %vm542, %v2118, %v2120
  %v2131 = vsel %vm542, %v2120, %v2122
  %v2132 = vsel %vm542, %v2122, %v2124
  %v2133 = vsel %vm542, %v2124, %v2126
  %v2142 = vsel %vm291, %v2133, %v2112
  %2144 = vst [vmem:[#allocation2 + $0xe0] sm:$0xf] %v2127
  %2145 = vst [vmem:[#allocation2 + $0xe8] sm:$0xf] %v2128
  %2146 = vst [vmem:[#allocation2 + $0xf0] sm:$0xf] %v2129
  %2147 = vst [vmem:[#allocation2 + $0xf8] sm:$0xf] %v2130
  %2148 = vst [vmem:[#allocation2 + $0x100] sm:$0xf] %v2131
  %2149 = vst [vmem:[#allocation2 + $0x108] sm:$0xf] %v2132
  %2150 = vst [vmem:[#allocation2 + $0x110] sm:$0xf] %v2142
  %2151 = vrot.lane.b32.xlu0 %v1893, 11
  %v2152 = vpop.permute.xlu0 %2151
  %2153 = vrot.lane.b32.xlu0 %v1894, 11
  %v2154 = vpop.permute.xlu0 %2153
  %2155 = vrot.lane.b32.xlu0 %v1895, 11
  %v2156 = vpop.permute.xlu0 %2155
  %2157 = vrot.lane.b32.xlu0 %v1896, 11
  %v2158 = vpop.permute.xlu0 %2157
  %2159 = vrot.lane.b32.xlu0 %v1897, 11
  %v2160 = vpop.permute.xlu0 %2159
  %2161 = vrot.lane.b32.xlu0 %v1898, 11
  %v2162 = vpop.permute.xlu0 %2161
  %2163 = vrot.lane.b32.xlu0 %v1899, 11
  %v2164 = vpop.permute.xlu0 %2163
  %2165 = vrot.lane.b32.xlu0 %v1900, 11
  %v2166 = vpop.permute.xlu0 %2165
  %v2167 = vsel %vm583, %v2152, %v2154
  %v2168 = vsel %vm583, %v2154, %v2156
  %v2169 = vsel %vm583, %v2156, %v2158
  %v2170 = vsel %vm583, %v2158, %v2160
  %v2171 = vsel %vm583, %v2160, %v2162
  %v2172 = vsel %vm583, %v2162, %v2164
  %v2173 = vsel %vm583, %v2164, %v2166
  %2181 = vst [vmem:[#allocation2 + $0xe0] sm:$0xf0] %v2167
  %2182 = vst [vmem:[#allocation2 + $0xe8] sm:$0xf0] %v2168
  %2183 = vst [vmem:[#allocation2 + $0xf0] sm:$0xf0] %v2169
  %2184 = vst [vmem:[#allocation2 + $0xf8] sm:$0xf0] %v2170
  %2185 = vst [vmem:[#allocation2 + $0x100] sm:$0xf0] %v2171
  %2186 = vst [vmem:[#allocation2 + $0x108] sm:$0xf0] %v2172
  %2187 = vst [vmem:[#allocation2 + $0x110] sm:$0xf0] %v2173
  %2188 = vrot.lane.b32.xlu0 %v1751, 10
  %v2189 = vpop.permute.xlu0 %2188
  %2190 = vrot.lane.b32.xlu0 %v1752, 10
  %v2191 = vpop.permute.xlu0 %2190
  %2192 = vrot.lane.b32.xlu0 %v1753, 10
  %v2193 = vpop.permute.xlu0 %2192
  %2194 = vrot.lane.b32.xlu0 %v1754, 10
  %v2195 = vpop.permute.xlu0 %2194
  %2196 = vrot.lane.b32.xlu0 %v1755, 10
  %v2197 = vpop.permute.xlu0 %2196
  %2198 = vrot.lane.b32.xlu0 %v1756, 10
  %v2199 = vpop.permute.xlu0 %2198
  %2200 = vrot.lane.b32.xlu0 %v1757, 10
  %v2201 = vpop.permute.xlu0 %2200
  %2202 = vrot.lane.b32.xlu0 %v1758, 10
  %v2203 = vpop.permute.xlu0 %2202
  %v2204 = vsel %vm621, %v2189, %v2191
  %v2205 = vsel %vm621, %v2191, %v2193
  %v2206 = vsel %vm621, %v2193, %v2195
  %v2207 = vsel %vm621, %v2195, %v2197
  %v2208 = vsel %vm621, %v2197, %v2199
  %v2209 = vsel %vm621, %v2199, %v2201
  %v2210 = vsel %vm621, %v2201, %v2203
  %v2219 = vsel %vm235, %v2210, %v2189
  %2221 = vst [vmem:[#allocation2 + $0x118] sm:$0xf] %v2204
  %2222 = vst [vmem:[#allocation2 + $0x120] sm:$0xf] %v2205
  %2223 = vst [vmem:[#allocation2 + $0x128] sm:$0xf] %v2206
  %2224 = vst [vmem:[#allocation2 + $0x130] sm:$0xf] %v2207
  %2225 = vst [vmem:[#allocation2 + $0x138] sm:$0xf] %v2208
  %2226 = vst [vmem:[#allocation2 + $0x140] sm:$0xf] %v2209
  %2227 = vst [vmem:[#allocation2 + $0x148] sm:$0xf] %v2219
  %2228 = vrot.lane.b32.xlu0 %v1751, 9
  %v2229 = vpop.permute.xlu0 %2228
  %2230 = vrot.lane.b32.xlu0 %v1752, 9
  %v2231 = vpop.permute.xlu0 %2230
  %2232 = vrot.lane.b32.xlu0 %v1753, 9
  %v2233 = vpop.permute.xlu0 %2232
  %2234 = vrot.lane.b32.xlu0 %v1754, 9
  %v2235 = vpop.permute.xlu0 %2234
  %2236 = vrot.lane.b32.xlu0 %v1755, 9
  %v2237 = vpop.permute.xlu0 %2236
  %2238 = vrot.lane.b32.xlu0 %v1756, 9
  %v2239 = vpop.permute.xlu0 %2238
  %2240 = vrot.lane.b32.xlu0 %v1757, 9
  %v2241 = vpop.permute.xlu0 %2240
  %2242 = vrot.lane.b32.xlu0 %v1758, 9
  %v2243 = vpop.permute.xlu0 %2242
  %v2244 = vsel %vm662, %v2229, %v2231
  %v2245 = vsel %vm662, %v2231, %v2233
  %v2246 = vsel %vm662, %v2233, %v2235
  %v2247 = vsel %vm662, %v2235, %v2237
  %v2248 = vsel %vm662, %v2237, %v2239
  %v2249 = vsel %vm662, %v2239, %v2241
  %v2250 = vsel %vm662, %v2241, %v2243
  %v2253 = vsel %vm291, %v2250, %v2229
  %v2255 = vrot.slane %v2244, 4
  %v2256 = vrot.slane %v2245, 4
  %v2257 = vrot.slane %v2246, 4
  %v2258 = vrot.slane %v2247, 4
  %v2259 = vrot.slane %v2248, 4
  %v2260 = vrot.slane %v2249, 4
  %v2261 = vrot.slane %v2253, 4
  %2269 = vst [vmem:[#allocation2 + $0x118] sm:$0xf0] %v2255
  %2270 = vst [vmem:[#allocation2 + $0x120] sm:$0xf0] %v2256
  %2271 = vst [vmem:[#allocation2 + $0x128] sm:$0xf0] %v2257
  %2272 = vst [vmem:[#allocation2 + $0x130] sm:$0xf0] %v2258
  %2273 = vst [vmem:[#allocation2 + $0x138] sm:$0xf0] %v2259
  %2274 = vst [vmem:[#allocation2 + $0x140] sm:$0xf0] %v2260
  %2275 = vst [vmem:[#allocation2 + $0x148] sm:$0xf0] %v2261
  %2276 = vrot.lane.b32.xlu0 %v1751, 1
  %v2277 = vpop.permute.xlu0 %2276
  %2278 = vrot.lane.b32.xlu0 %v1752, 1
  %v2279 = vpop.permute.xlu0 %2278
  %2280 = vrot.lane.b32.xlu0 %v1753, 1
  %v2281 = vpop.permute.xlu0 %2280
  %2282 = vrot.lane.b32.xlu0 %v1754, 1
  %v2283 = vpop.permute.xlu0 %2282
  %2284 = vrot.lane.b32.xlu0 %v1755, 1
  %v2285 = vpop.permute.xlu0 %2284
  %2286 = vrot.lane.b32.xlu0 %v1756, 1
  %v2287 = vpop.permute.xlu0 %2286
  %2288 = vrot.lane.b32.xlu0 %v1757, 1
  %v2289 = vpop.permute.xlu0 %2288
  %2290 = vrot.lane.b32.xlu0 %v1758, 1
  %v2291 = vpop.permute.xlu0 %2290
  %v2292 = vsel %vm711, %v2277, %v2279
  %v2293 = vsel %vm711, %v2279, %v2281
  %v2294 = vsel %vm711, %v2281, %v2283
  %v2295 = vsel %vm711, %v2283, %v2285
  %v2296 = vsel %vm711, %v2285, %v2287
  %v2297 = vsel %vm711, %v2287, %v2289
  %v2298 = vsel %vm711, %v2289, %v2291
  %2306 = vst [vmem:[#allocation2 + $0x150] sm:$0xf] %v2292
  %2307 = vst [vmem:[#allocation2 + $0x158] sm:$0xf] %v2293
  %2308 = vst [vmem:[#allocation2 + $0x160] sm:$0xf] %v2294
  %2309 = vst [vmem:[#allocation2 + $0x168] sm:$0xf] %v2295
  %2310 = vst [vmem:[#allocation2 + $0x170] sm:$0xf] %v2296
  %2311 = vst [vmem:[#allocation2 + $0x178] sm:$0xf] %v2297
  %2312 = vst [vmem:[#allocation2 + $0x180] sm:$0xf] %v2298
  %v2315 = vsel %vm235, %v1758, %v1751
  %v2317 = vrot.slane %v2315, 4
  %2325 = vst [vmem:[#allocation2 + $0x150] sm:$0xf0] %v1894
  %2326 = vst [vmem:[#allocation2 + $0x158] sm:$0xf0] %v1895
  %2327 = vst [vmem:[#allocation2 + $0x160] sm:$0xf0] %v1896
  %2328 = vst [vmem:[#allocation2 + $0x168] sm:$0xf0] %v1897
  %2329 = vst [vmem:[#allocation2 + $0x170] sm:$0xf0] %v1898
  %2330 = vst [vmem:[#allocation2 + $0x178] sm:$0xf0] %v1899
  %2331 = vst [vmem:[#allocation2 + $0x180] sm:$0xf0] %v2317
  %2332 = vrot.lane.b32.xlu0 %v1752, 127
  %v2333 = vpop.permute.xlu0 %2332
  %2334 = vrot.lane.b32.xlu0 %v1753, 127
  %v2335 = vpop.permute.xlu0 %2334
  %2336 = vrot.lane.b32.xlu0 %v1754, 127
  %v2337 = vpop.permute.xlu0 %2336
  %2338 = vrot.lane.b32.xlu0 %v1755, 127
  %v2339 = vpop.permute.xlu0 %2338
  %2340 = vrot.lane.b32.xlu0 %v1756, 127
  %v2341 = vpop.permute.xlu0 %2340
  %2342 = vrot.lane.b32.xlu0 %v1757, 127
  %v2343 = vpop.permute.xlu0 %2342
  %2344 = vrot.lane.b32.xlu0 %v1758, 127
  %v2345 = vpop.permute.xlu0 %2344
  %v2346 = vsel %vm766, %v2333, %v2335
  %v2347 = vsel %vm766, %v2335, %v2337
  %v2348 = vsel %vm766, %v2337, %v2339
  %v2349 = vsel %vm766, %v2339, %v2341
  %v2350 = vsel %vm766, %v2341, %v2343
  %v2351 = vsel %vm766, %v2343, %v2345
  %2358 = vrot.lane.b32.xlu0 %v1751, 127
  %v2359 = vpop.permute.xlu0 %2358
  %v2360 = vsel %vm766, %v2359, %v2333
  %v2363 = vsel %vm291, %v2345, %v2360
  %2365 = vst [vmem:[#allocation2 + $0x188] sm:$0xf] %v2346
  %2366 = vst [vmem:[#allocation2 + $0x190] sm:$0xf] %v2347
  %2367 = vst [vmem:[#allocation2 + $0x198] sm:$0xf] %v2348
  %2368 = vst [vmem:[#allocation2 + $0x1a0] sm:$0xf] %v2349
  %2369 = vst [vmem:[#allocation2 + $0x1a8] sm:$0xf] %v2350
  %2370 = vst [vmem:[#allocation2 + $0x1b0] sm:$0xf] %v2351
  %2371 = vst [vmem:[#allocation2 + $0x1b8] sm:$0xf] %v2363
  %v2373 = vrot.slane %v1759, 4
  %2374 = vrot.lane.b32.xlu0 %v1894, 119
  %v2375 = vpop.permute.xlu0 %2374
  %2376 = vrot.lane.b32.xlu0 %v1895, 119
  %v2377 = vpop.permute.xlu0 %2376
  %2378 = vrot.lane.b32.xlu0 %v1896, 119
  %v2379 = vpop.permute.xlu0 %2378
  %2380 = vrot.lane.b32.xlu0 %v1897, 119
  %v2381 = vpop.permute.xlu0 %2380
  %2382 = vrot.lane.b32.xlu0 %v1898, 119
  %v2383 = vpop.permute.xlu0 %2382
  %2384 = vrot.lane.b32.xlu0 %v1899, 119
  %v2385 = vpop.permute.xlu0 %2384
  %2386 = vrot.lane.b32.xlu0 %v1900, 119
  %v2387 = vpop.permute.xlu0 %2386
  %2388 = vrot.lane.b32.xlu0 %v2373, 119
  %v2389 = vpop.permute.xlu0 %2388
  %v2390 = vsel %vm811, %v2375, %v2377
  %v2391 = vsel %vm811, %v2377, %v2379
  %v2392 = vsel %vm811, %v2379, %v2381
  %v2393 = vsel %vm811, %v2381, %v2383
  %v2394 = vsel %vm811, %v2383, %v2385
  %v2395 = vsel %vm811, %v2385, %v2387
  %v2396 = vsel %vm811, %v2387, %v2389
  %2404 = vst [vmem:[#allocation2 + $0x188] sm:$0xf0] %v2390
  %2405 = vst [vmem:[#allocation2 + $0x190] sm:$0xf0] %v2391
  %2406 = vst [vmem:[#allocation2 + $0x198] sm:$0xf0] %v2392
  %2407 = vst [vmem:[#allocation2 + $0x1a0] sm:$0xf0] %v2393
  %2408 = vst [vmem:[#allocation2 + $0x1a8] sm:$0xf0] %v2394
  %2409 = vst [vmem:[#allocation2 + $0x1b0] sm:$0xf0] %v2395
  %2410 = vst [vmem:[#allocation2 + $0x1b8] sm:$0xf0] %v2396
  %2411 = vrot.lane.b32.xlu0 %v1752, 118
  %v2412 = vpop.permute.xlu0 %2411
  %2413 = vrot.lane.b32.xlu0 %v1753, 118
  %v2414 = vpop.permute.xlu0 %2413
  %2415 = vrot.lane.b32.xlu0 %v1754, 118
  %v2416 = vpop.permute.xlu0 %2415
  %2417 = vrot.lane.b32.xlu0 %v1755, 118
  %v2418 = vpop.permute.xlu0 %2417
  %2419 = vrot.lane.b32.xlu0 %v1756, 118
  %v2420 = vpop.permute.xlu0 %2419
  %2421 = vrot.lane.b32.xlu0 %v1757, 118
  %v2422 = vpop.permute.xlu0 %2421
  %2423 = vrot.lane.b32.xlu0 %v1758, 118
  %v2424 = vpop.permute.xlu0 %2423
  %2425 = vrot.lane.b32.xlu0 %v1759, 118
  %v2426 = vpop.permute.xlu0 %2425
  %v2427 = vsel %vm849, %v2412, %v2414
  %v2428 = vsel %vm849, %v2414, %v2416
  %v2429 = vsel %vm849, %v2416, %v2418
  %v2430 = vsel %vm849, %v2418, %v2420
  %v2431 = vsel %vm849, %v2420, %v2422
  %v2432 = vsel %vm849, %v2422, %v2424
  %v2433 = vsel %vm849, %v2424, %v2426
  %v2442 = vsel %vm235, %v2433, %v2412
  %2444 = vst [vmem:[#allocation2 + $0x1c0] sm:$0xf] %v2427
  %2445 = vst [vmem:[#allocation2 + $0x1c8] sm:$0xf] %v2428
  %2446 = vst [vmem:[#allocation2 + $0x1d0] sm:$0xf] %v2429
  %2447 = vst [vmem:[#allocation2 + $0x1d8] sm:$0xf] %v2430
  %2448 = vst [vmem:[#allocation2 + $0x1e0] sm:$0xf] %v2431
  %2449 = vst [vmem:[#allocation2 + $0x1e8] sm:$0xf] %v2432
  %2450 = vst [vmem:[#allocation2 + $0x1f0] sm:$0xf] %v2442
  %2451 = vrot.lane.b32.xlu0 %v1752, 117
  %v2452 = vpop.permute.xlu0 %2451
  %2453 = vrot.lane.b32.xlu0 %v1753, 117
  %v2454 = vpop.permute.xlu0 %2453
  %2455 = vrot.lane.b32.xlu0 %v1754, 117
  %v2456 = vpop.permute.xlu0 %2455
  %2457 = vrot.lane.b32.xlu0 %v1755, 117
  %v2458 = vpop.permute.xlu0 %2457
  %2459 = vrot.lane.b32.xlu0 %v1756, 117
  %v2460 = vpop.permute.xlu0 %2459
  %2461 = vrot.lane.b32.xlu0 %v1757, 117
  %v2462 = vpop.permute.xlu0 %2461
  %2463 = vrot.lane.b32.xlu0 %v1758, 117
  %v2464 = vpop.permute.xlu0 %2463
  %2465 = vrot.lane.b32.xlu0 %v1759, 117
  %v2466 = vpop.permute.xlu0 %2465
  %v2467 = vsel %vm890, %v2452, %v2454
  %v2468 = vsel %vm890, %v2454, %v2456
  %v2469 = vsel %vm890, %v2456, %v2458
  %v2470 = vsel %vm890, %v2458, %v2460
  %v2471 = vsel %vm890, %v2460, %v2462
  %v2472 = vsel %vm890, %v2462, %v2464
  %v2473 = vsel %vm890, %v2464, %v2466
  %v2476 = vsel %vm291, %v2473, %v2452
  %v2478 = vrot.slane %v2467, 4
  %v2479 = vrot.slane %v2468, 4
  %v2480 = vrot.slane %v2469, 4
  %v2481 = vrot.slane %v2470, 4
  %v2482 = vrot.slane %v2471, 4
  %v2483 = vrot.slane %v2472, 4
  %v2484 = vrot.slane %v2476, 4
  %2492 = vst [vmem:[#allocation2 + $0x1c0] sm:$0xf0] %v2478
  %2493 = vst [vmem:[#allocation2 + $0x1c8] sm:$0xf0] %v2479
  %2494 = vst [vmem:[#allocation2 + $0x1d0] sm:$0xf0] %v2480
  %2495 = vst [vmem:[#allocation2 + $0x1d8] sm:$0xf0] %v2481
  %2496 = vst [vmem:[#allocation2 + $0x1e0] sm:$0xf0] %v2482
  %2497 = vst [vmem:[#allocation2 + $0x1e8] sm:$0xf0] %v2483
  %2498 = vst [vmem:[#allocation2 + $0x1f0] sm:$0xf0] %v2484
  %2499 = vrot.lane.b32.xlu0 %v1752, 39
  %v2500 = vpop.permute.xlu0 %2499
  %2501 = vrot.lane.b32.xlu0 %v1753, 39
  %v2502 = vpop.permute.xlu0 %2501
  %2503 = vrot.lane.b32.xlu0 %v1754, 39
  %v2504 = vpop.permute.xlu0 %2503
  %2505 = vrot.lane.b32.xlu0 %v1755, 39
  %v2506 = vpop.permute.xlu0 %2505
  %2507 = vrot.lane.b32.xlu0 %v1756, 39
  %v2508 = vpop.permute.xlu0 %2507
  %2509 = vrot.lane.b32.xlu0 %v1757, 39
  %v2510 = vpop.permute.xlu0 %2509
  %2511 = vrot.lane.b32.xlu0 %v1758, 39
  %v2512 = vpop.permute.xlu0 %2511
  %2513 = vrot.lane.b32.xlu0 %v1759, 39
  %v2514 = vpop.permute.xlu0 %2513
  %v2515 = vsel %vm939, %v2500, %v2502
  %v2516 = vsel %vm939, %v2502, %v2504
  %v2517 = vsel %vm939, %v2504, %v2506
  %v2518 = vsel %vm939, %v2506, %v2508
  %v2519 = vsel %vm939, %v2508, %v2510
  %v2520 = vsel %vm939, %v2510, %v2512
  %v2521 = vsel %vm939, %v2512, %v2514
  %2529 = vst [vmem:[#allocation2 + $0x1f8] sm:$0xf] %v2515
  %2530 = vst [vmem:[#allocation2 + $0x200] sm:$0xf] %v2516
  %2531 = vst [vmem:[#allocation2 + $0x208] sm:$0xf] %v2517
  %2532 = vst [vmem:[#allocation2 + $0x210] sm:$0xf] %v2518
  %2533 = vst [vmem:[#allocation2 + $0x218] sm:$0xf] %v2519
  %2534 = vst [vmem:[#allocation2 + $0x220] sm:$0xf] %v2520
  %2535 = vst [vmem:[#allocation2 + $0x228] sm:$0xf] %v2521
  %2536 = vrot.lane.b32.xlu0 %v1752, 38
  %v2537 = vpop.permute.xlu0 %2536
  %2538 = vrot.lane.b32.xlu0 %v1753, 38
  %v2539 = vpop.permute.xlu0 %2538
  %2540 = vrot.lane.b32.xlu0 %v1754, 38
  %v2541 = vpop.permute.xlu0 %2540
  %2542 = vrot.lane.b32.xlu0 %v1755, 38
  %v2543 = vpop.permute.xlu0 %2542
  %2544 = vrot.lane.b32.xlu0 %v1756, 38
  %v2545 = vpop.permute.xlu0 %2544
  %2546 = vrot.lane.b32.xlu0 %v1757, 38
  %v2547 = vpop.permute.xlu0 %2546
  %2548 = vrot.lane.b32.xlu0 %v1758, 38
  %v2549 = vpop.permute.xlu0 %2548
  %2550 = vrot.lane.b32.xlu0 %v1759, 38
  %v2551 = vpop.permute.xlu0 %2550
  %v2552 = vsel %vm977, %v2537, %v2539
  %v2553 = vsel %vm977, %v2539, %v2541
  %v2554 = vsel %vm977, %v2541, %v2543
  %v2555 = vsel %vm977, %v2543, %v2545
  %v2556 = vsel %vm977, %v2545, %v2547
  %v2557 = vsel %vm977, %v2547, %v2549
  %v2558 = vsel %vm977, %v2549, %v2551
  %v2561 = vsel %vm235, %v2558, %v2537
  %v2563 = vrot.slane %v2552, 4
  %v2564 = vrot.slane %v2553, 4
  %v2565 = vrot.slane %v2554, 4
  %v2566 = vrot.slane %v2555, 4
  %v2567 = vrot.slane %v2556, 4
  %v2568 = vrot.slane %v2557, 4
  %v2569 = vrot.slane %v2561, 4
  %2577 = vst [vmem:[#allocation2 + $0x1f8] sm:$0xf0] %v2563
  %2578 = vst [vmem:[#allocation2 + $0x200] sm:$0xf0] %v2564
  %2579 = vst [vmem:[#allocation2 + $0x208] sm:$0xf0] %v2565
  %2580 = vst [vmem:[#allocation2 + $0x210] sm:$0xf0] %v2566
  %2581 = vst [vmem:[#allocation2 + $0x218] sm:$0xf0] %v2567
  %2582 = vst [vmem:[#allocation2 + $0x220] sm:$0xf0] %v2568
  %2583 = vst [vmem:[#allocation2 + $0x228] sm:$0xf0] %v2569
  %2584 = vrot.lane.b32.xlu0 %v1752, 37
  %v2585 = vpop.permute.xlu0 %2584
  %2586 = vrot.lane.b32.xlu0 %v1753, 37
  %v2587 = vpop.permute.xlu0 %2586
  %2588 = vrot.lane.b32.xlu0 %v1754, 37
  %v2589 = vpop.permute.xlu0 %2588
  %2590 = vrot.lane.b32.xlu0 %v1755, 37
  %v2591 = vpop.permute.xlu0 %2590
  %2592 = vrot.lane.b32.xlu0 %v1756, 37
  %v2593 = vpop.permute.xlu0 %2592
  %2594 = vrot.lane.b32.xlu0 %v1757, 37
  %v2595 = vpop.permute.xlu0 %2594
  %2596 = vrot.lane.b32.xlu0 %v1758, 37
  %v2597 = vpop.permute.xlu0 %2596
  %2598 = vrot.lane.b32.xlu0 %v1759, 37
  %v2599 = vpop.permute.xlu0 %2598
  %v2600 = vsel %vm1026, %v2585, %v2587
  %v2601 = vsel %vm1026, %v2587, %v2589
  %v2602 = vsel %vm1026, %v2589, %v2591
  %v2603 = vsel %vm1026, %v2591, %v2593
  %v2604 = vsel %vm1026, %v2593, %v2595
  %v2605 = vsel %vm1026, %v2595, %v2597
  %v2606 = vsel %vm1026, %v2597, %v2599
  %v2615 = vsel %vm291, %v2606, %v2585
  %2617 = vst [vmem:[#allocation2 + $0x230] sm:$0xf] %v2600
  %2618 = vst [vmem:[#allocation2 + $0x238] sm:$0xf] %v2601
  %2619 = vst [vmem:[#allocation2 + $0x240] sm:$0xf] %v2602
  %2620 = vst [vmem:[#allocation2 + $0x248] sm:$0xf] %v2603
  %2621 = vst [vmem:[#allocation2 + $0x250] sm:$0xf] %v2604
  %2622 = vst [vmem:[#allocation2 + $0x258] sm:$0xf] %v2605
  %2623 = vst [vmem:[#allocation2 + $0x260] sm:$0xf] %v2615
  %2624 = vrot.lane.b32.xlu0 %v1894, 29
  %v2625 = vpop.permute.xlu0 %2624
  %2626 = vrot.lane.b32.xlu0 %v1895, 29
  %v2627 = vpop.permute.xlu0 %2626
  %2628 = vrot.lane.b32.xlu0 %v1896, 29
  %v2629 = vpop.permute.xlu0 %2628
  %2630 = vrot.lane.b32.xlu0 %v1897, 29
  %v2631 = vpop.permute.xlu0 %2630
  %2632 = vrot.lane.b32.xlu0 %v1898, 29
  %v2633 = vpop.permute.xlu0 %2632
  %2634 = vrot.lane.b32.xlu0 %v1899, 29
  %v2635 = vpop.permute.xlu0 %2634
  %2636 = vrot.lane.b32.xlu0 %v1900, 29
  %v2637 = vpop.permute.xlu0 %2636
  %2638 = vrot.lane.b32.xlu0 %v2373, 29
  %v2639 = vpop.permute.xlu0 %2638
  %v2640 = vsel %vm1067, %v2625, %v2627
  %v2641 = vsel %vm1067, %v2627, %v2629
  %v2642 = vsel %vm1067, %v2629, %v2631
  %v2643 = vsel %vm1067, %v2631, %v2633
  %v2644 = vsel %vm1067, %v2633, %v2635
  %v2645 = vsel %vm1067, %v2635, %v2637
  %v2646 = vsel %vm1067, %v2637, %v2639
  %2654 = vst [vmem:[#allocation2 + $0x230] sm:$0xf0] %v2640
  %2655 = vst [vmem:[#allocation2 + $0x238] sm:$0xf0] %v2641
  %2656 = vst [vmem:[#allocation2 + $0x240] sm:$0xf0] %v2642
  %2657 = vst [vmem:[#allocation2 + $0x248] sm:$0xf0] %v2643
  %2658 = vst [vmem:[#allocation2 + $0x250] sm:$0xf0] %v2644
  %2659 = vst [vmem:[#allocation2 + $0x258] sm:$0xf0] %v2645
  %2660 = vst [vmem:[#allocation2 + $0x260] sm:$0xf0] %v2646
  %2661 = vrot.lane.b32.xlu0 %v1752, 28
  %v2662 = vpop.permute.xlu0 %2661
  %2663 = vrot.lane.b32.xlu0 %v1753, 28
  %v2664 = vpop.permute.xlu0 %2663
  %2665 = vrot.lane.b32.xlu0 %v1754, 28
  %v2666 = vpop.permute.xlu0 %2665
  %2667 = vrot.lane.b32.xlu0 %v1755, 28
  %v2668 = vpop.permute.xlu0 %2667
  %2669 = vrot.lane.b32.xlu0 %v1756, 28
  %v2670 = vpop.permute.xlu0 %2669
  %2671 = vrot.lane.b32.xlu0 %v1757, 28
  %v2672 = vpop.permute.xlu0 %2671
  %2673 = vrot.lane.b32.xlu0 %v1758, 28
  %v2674 = vpop.permute.xlu0 %2673
  %2675 = vrot.lane.b32.xlu0 %v1759, 28
  %v2676 = vpop.permute.xlu0 %2675
  %v2677 = vsel %vm1105, %v2662, %v2664
  %v2678 = vsel %vm1105, %v2664, %v2666
  %v2679 = vsel %vm1105, %v2666, %v2668
  %v2680 = vsel %vm1105, %v2668, %v2670
  %v2681 = vsel %vm1105, %v2670, %v2672
  %v2682 = vsel %vm1105, %v2672, %v2674
  %v2683 = vsel %vm1105, %v2674, %v2676
  %v2692 = vsel %vm235, %v2683, %v2662
  %2694 = vst [vmem:[#allocation2 + $0x268] sm:$0xf] %v2677
  %2695 = vst [vmem:[#allocation2 + $0x270] sm:$0xf] %v2678
  %2696 = vst [vmem:[#allocation2 + $0x278] sm:$0xf] %v2679
  %2697 = vst [vmem:[#allocation2 + $0x280] sm:$0xf] %v2680
  %2698 = vst [vmem:[#allocation2 + $0x288] sm:$0xf] %v2681
  %2699 = vst [vmem:[#allocation2 + $0x290] sm:$0xf] %v2682
  %2700 = vst [vmem:[#allocation2 + $0x298] sm:$0xf] %v2692
  %2701 = vrot.lane.b32.xlu0 %v1752, 27
  %v2702 = vpop.permute.xlu0 %2701
  %2703 = vrot.lane.b32.xlu0 %v1753, 27
  %v2704 = vpop.permute.xlu0 %2703
  %2705 = vrot.lane.b32.xlu0 %v1754, 27
  %v2706 = vpop.permute.xlu0 %2705
  %2707 = vrot.lane.b32.xlu0 %v1755, 27
  %v2708 = vpop.permute.xlu0 %2707
  %2709 = vrot.lane.b32.xlu0 %v1756, 27
  %v2710 = vpop.permute.xlu0 %2709
  %2711 = vrot.lane.b32.xlu0 %v1757, 27
  %v2712 = vpop.permute.xlu0 %2711
  %2713 = vrot.lane.b32.xlu0 %v1758, 27
  %v2714 = vpop.permute.xlu0 %2713
  %2715 = vrot.lane.b32.xlu0 %v1759, 27
  %v2716 = vpop.permute.xlu0 %2715
  %v2717 = vsel %vm1146, %v2702, %v2704
  %v2718 = vsel %vm1146, %v2704, %v2706
  %v2719 = vsel %vm1146, %v2706, %v2708
  %v2720 = vsel %vm1146, %v2708, %v2710
  %v2721 = vsel %vm1146, %v2710, %v2712
  %v2722 = vsel %vm1146, %v2712, %v2714
  %v2723 = vsel %vm1146, %v2714, %v2716
  %v2726 = vsel %vm291, %v2723, %v2702
  %v2728 = vrot.slane %v2717, 4
  %v2729 = vrot.slane %v2718, 4
  %v2730 = vrot.slane %v2719, 4
  %v2731 = vrot.slane %v2720, 4
  %v2732 = vrot.slane %v2721, 4
  %v2733 = vrot.slane %v2722, 4
  %v2734 = vrot.slane %v2726, 4
  %2742 = vst [vmem:[#allocation2 + $0x268] sm:$0xf0] %v2728
  %2743 = vst [vmem:[#allocation2 + $0x270] sm:$0xf0] %v2729
  %2744 = vst [vmem:[#allocation2 + $0x278] sm:$0xf0] %v2730
  %2745 = vst [vmem:[#allocation2 + $0x280] sm:$0xf0] %v2731
  %2746 = vst [vmem:[#allocation2 + $0x288] sm:$0xf0] %v2732
  %2747 = vst [vmem:[#allocation2 + $0x290] sm:$0xf0] %v2733
  %2748 = vst [vmem:[#allocation2 + $0x298] sm:$0xf0] %v2734
  %2749 = vrot.lane.b32.xlu0 %v1752, 19
  %v2750 = vpop.permute.xlu0 %2749
  %2751 = vrot.lane.b32.xlu0 %v1753, 19
  %v2752 = vpop.permute.xlu0 %2751
  %2753 = vrot.lane.b32.xlu0 %v1754, 19
  %v2754 = vpop.permute.xlu0 %2753
  %2755 = vrot.lane.b32.xlu0 %v1755, 19
  %v2756 = vpop.permute.xlu0 %2755
  %2757 = vrot.lane.b32.xlu0 %v1756, 19
  %v2758 = vpop.permute.xlu0 %2757
  %2759 = vrot.lane.b32.xlu0 %v1757, 19
  %v2760 = vpop.permute.xlu0 %2759
  %2761 = vrot.lane.b32.xlu0 %v1758, 19
  %v2762 = vpop.permute.xlu0 %2761
  %2763 = vrot.lane.b32.xlu0 %v1759, 19
  %v2764 = vpop.permute.xlu0 %2763
  %v2765 = vsel %vm1195, %v2750, %v2752
  %v2766 = vsel %vm1195, %v2752, %v2754
  %v2767 = vsel %vm1195, %v2754, %v2756
  %v2768 = vsel %vm1195, %v2756, %v2758
  %v2769 = vsel %vm1195, %v2758, %v2760
  %v2770 = vsel %vm1195, %v2760, %v2762
  %v2771 = vsel %vm1195, %v2762, %v2764
  %2779 = vst [vmem:[#allocation2 + $0x2a0] sm:$0xf] %v2765
  %2780 = vst [vmem:[#allocation2 + $0x2a8] sm:$0xf] %v2766
  %2781 = vst [vmem:[#allocation2 + $0x2b0] sm:$0xf] %v2767
  %2782 = vst [vmem:[#allocation2 + $0x2b8] sm:$0xf] %v2768
  %2783 = vst [vmem:[#allocation2 + $0x2c0] sm:$0xf] %v2769
  %2784 = vst [vmem:[#allocation2 + $0x2c8] sm:$0xf] %v2770
  %2785 = vst [vmem:[#allocation2 + $0x2d0] sm:$0xf] %v2771
  %2786 = vrot.lane.b32.xlu0 %v1752, 18
  %v2787 = vpop.permute.xlu0 %2786
  %2788 = vrot.lane.b32.xlu0 %v1753, 18
  %v2789 = vpop.permute.xlu0 %2788
  %2790 = vrot.lane.b32.xlu0 %v1754, 18
  %v2791 = vpop.permute.xlu0 %2790
  %2792 = vrot.lane.b32.xlu0 %v1755, 18
  %v2793 = vpop.permute.xlu0 %2792
  %2794 = vrot.lane.b32.xlu0 %v1756, 18
  %v2795 = vpop.permute.xlu0 %2794
  %2796 = vrot.lane.b32.xlu0 %v1757, 18
  %v2797 = vpop.permute.xlu0 %2796
  %2798 = vrot.lane.b32.xlu0 %v1758, 18
  %v2799 = vpop.permute.xlu0 %2798
  %2800 = vrot.lane.b32.xlu0 %v1759, 18
  %v2801 = vpop.permute.xlu0 %2800
  %v2802 = vsel %vm1233, %v2787, %v2789
  %v2803 = vsel %vm1233, %v2789, %v2791
  %v2804 = vsel %vm1233, %v2791, %v2793
  %v2805 = vsel %vm1233, %v2793, %v2795
  %v2806 = vsel %vm1233, %v2795, %v2797
  %v2807 = vsel %vm1233, %v2797, %v2799
  %v2808 = vsel %vm1233, %v2799, %v2801
  %v2811 = vsel %vm235, %v2808, %v2787
  %v2813 = vrot.slane %v2802, 4
  %v2814 = vrot.slane %v2803, 4
  %v2815 = vrot.slane %v2804, 4
  %v2816 = vrot.slane %v2805, 4
  %v2817 = vrot.slane %v2806, 4
  %v2818 = vrot.slane %v2807, 4
  %v2819 = vrot.slane %v2811, 4
  %2827 = vst [vmem:[#allocation2 + $0x2a0] sm:$0xf0] %v2813
  %2828 = vst [vmem:[#allocation2 + $0x2a8] sm:$0xf0] %v2814
  %2829 = vst [vmem:[#allocation2 + $0x2b0] sm:$0xf0] %v2815
  %2830 = vst [vmem:[#allocation2 + $0x2b8] sm:$0xf0] %v2816
  %2831 = vst [vmem:[#allocation2 + $0x2c0] sm:$0xf0] %v2817
  %2832 = vst [vmem:[#allocation2 + $0x2c8] sm:$0xf0] %v2818
  %2833 = vst [vmem:[#allocation2 + $0x2d0] sm:$0xf0] %v2819
  %2834 = vrot.lane.b32.xlu0 %v1752, 17
  %v2835 = vpop.permute.xlu0 %2834
  %2836 = vrot.lane.b32.xlu0 %v1753, 17
  %v2837 = vpop.permute.xlu0 %2836
  %2838 = vrot.lane.b32.xlu0 %v1754, 17
  %v2839 = vpop.permute.xlu0 %2838
  %2840 = vrot.lane.b32.xlu0 %v1755, 17
  %v2841 = vpop.permute.xlu0 %2840
  %2842 = vrot.lane.b32.xlu0 %v1756, 17
  %v2843 = vpop.permute.xlu0 %2842
  %2844 = vrot.lane.b32.xlu0 %v1757, 17
  %v2845 = vpop.permute.xlu0 %2844
  %2846 = vrot.lane.b32.xlu0 %v1758, 17
  %v2847 = vpop.permute.xlu0 %2846
  %2848 = vrot.lane.b32.xlu0 %v1759, 17
  %v2849 = vpop.permute.xlu0 %2848
  %v2850 = vsel %vm1282, %v2835, %v2837
  %v2851 = vsel %vm1282, %v2837, %v2839
  %v2852 = vsel %vm1282, %v2839, %v2841
  %v2853 = vsel %vm1282, %v2841, %v2843
  %v2854 = vsel %vm1282, %v2843, %v2845
  %v2855 = vsel %vm1282, %v2845, %v2847
  %v2856 = vsel %vm1282, %v2847, %v2849
  %v2865 = vsel %vm291, %v2856, %v2835
  %2867 = vst [vmem:[#allocation2 + $0x2d8] sm:$0xf] %v2850
  %2868 = vst [vmem:[#allocation2 + $0x2e0] sm:$0xf] %v2851
  %2869 = vst [vmem:[#allocation2 + $0x2e8] sm:$0xf] %v2852
  %2870 = vst [vmem:[#allocation2 + $0x2f0] sm:$0xf] %v2853
  %2871 = vst [vmem:[#allocation2 + $0x2f8] sm:$0xf] %v2854
  %2872 = vst [vmem:[#allocation2 + $0x300] sm:$0xf] %v2855
  %2873 = vst [vmem:[#allocation2 + $0x308] sm:$0xf] %v2865
  %v2874 = vld [vmem:[%s4] sm:$0xff]
  %v2875 = vld [vmem:[#allocation2] sm:$0xff]
  %v2876 = vld [vmem:[#allocation2 + $0x8] sm:$0xff]
  %v2877 = vld [vmem:[#allocation2 + $0x10] sm:$0xff]
  %v2878 = vld [vmem:[#allocation2 + $0x18] sm:$0xff]
  %v2879 = vld [vmem:[#allocation2 + $0x20] sm:$0xff]
  %v2880 = vld [vmem:[#allocation2 + $0x28] sm:$0xff]
  %v2881 = vld [vmem:[#allocation2 + $0x30] sm:$0xff]
  %v2882 = vld [vmem:[#allocation2 + $0x38] sm:$0xff]
  %v2883 = vld [vmem:[#allocation2 + $0x40] sm:$0xff]
  %v2884 = vld [vmem:[#allocation2 + $0x48] sm:$0xff]
  %v2885 = vld [vmem:[#allocation2 + $0x50] sm:$0xff]
  %v2886 = vld [vmem:[#allocation2 + $0x58] sm:$0xff]
  %v2887 = vld [vmem:[#allocation2 + $0x60] sm:$0xff]
  %v2888 = vld [vmem:[#allocation2 + $0x68] sm:$0xff]
  %v2889 = vld [vmem:[#allocation2 + $0x70] sm:$0xff]
  %v2890 = vld [vmem:[#allocation2 + $0x78] sm:$0xff]
  %v2891 = vld [vmem:[#allocation2 + $0x80] sm:$0xff]
  %v2892 = vld [vmem:[#allocation2 + $0x88] sm:$0xff]
  %v2893 = vld [vmem:[#allocation2 + $0x90] sm:$0xff]
  %v2894 = vld [vmem:[#allocation2 + $0x98] sm:$0xff]
  %v2895 = vld [vmem:[#allocation2 + $0xa0] sm:$0xff]
  %v2896 = vld [vmem:[#allocation2 + $0xa8] sm:$0xff]
  %v2897 = vld [vmem:[#allocation2 + $0xb0] sm:$0xff]
  %v2898 = vld [vmem:[#allocation2 + $0xb8] sm:$0xff]
  %v2899 = vld [vmem:[#allocation2 + $0xc0] sm:$0xff]
  %v2900 = vld [vmem:[#allocation2 + $0xc8] sm:$0xff]
  %v2901 = vld [vmem:[#allocation2 + $0xd0] sm:$0xff]
  %v2902 = vld [vmem:[#allocation2 + $0xd8] sm:$0xff]
  %v2903 = vld [vmem:[#allocation2 + $0xe0] sm:$0xff]
  %v2904 = vld [vmem:[#allocation2 + $0xe8] sm:$0xff]
  %v2905 = vld [vmem:[#allocation2 + $0xf0] sm:$0xff]
  %v2906 = vld [vmem:[#allocation2 + $0xf8] sm:$0xff]
  %v2907 = vld [vmem:[#allocation2 + $0x100] sm:$0xff]
  %v2908 = vld [vmem:[#allocation2 + $0x108] sm:$0xff]
  %v2909 = vld [vmem:[#allocation2 + $0x110] sm:$0xff]
  %v2910 = vld [vmem:[#allocation2 + $0x118] sm:$0xff]
  %v2911 = vld [vmem:[#allocation2 + $0x120] sm:$0xff]
  %v2912 = vld [vmem:[#allocation2 + $0x128] sm:$0xff]
  %v2913 = vld [vmem:[#allocation2 + $0x130] sm:$0xff]
  %v2914 = vld [vmem:[#allocation2 + $0x138] sm:$0xff]
  %v2915 = vld [vmem:[#allocation2 + $0x140] sm:$0xff]
  %v2916 = vld [vmem:[#allocation2 + $0x148] sm:$0xff]
  %v2917 = vld [vmem:[#allocation2 + $0x150] sm:$0xff]
  %v2918 = vld [vmem:[#allocation2 + $0x158] sm:$0xff]
  %v2919 = vld [vmem:[#allocation2 + $0x160] sm:$0xff]
  %v2920 = vld [vmem:[#allocation2 + $0x168] sm:$0xff]
  %v2921 = vld [vmem:[#allocation2 + $0x170] sm:$0xff]
  %v2922 = vld [vmem:[#allocation2 + $0x178] sm:$0xff]
  %v2923 = vld [vmem:[#allocation2 + $0x180] sm:$0xff]
  %v2924 = vld [vmem:[#allocation2 + $0x188] sm:$0xff]
  %v2925 = vld [vmem:[#allocation2 + $0x190] sm:$0xff]
  %v2926 = vld [vmem:[#allocation2 + $0x198] sm:$0xff]
  %v2927 = vld [vmem:[#allocation2 + $0x1a0] sm:$0xff]
  %v2928 = vld [vmem:[#allocation2 + $0x1a8] sm:$0xff]
  %v2929 = vld [vmem:[#allocation2 + $0x1b0] sm:$0xff]
  %v2930 = vld [vmem:[#allocation2 + $0x1b8] sm:$0xff]
  %v2931 = vld [vmem:[#allocation2 + $0x1c0] sm:$0xff]
  %v2932 = vld [vmem:[#allocation2 + $0x1c8] sm:$0xff]
  %v2933 = vld [vmem:[#allocation2 + $0x1d0] sm:$0xff]
  %v2934 = vld [vmem:[#allocation2 + $0x1d8] sm:$0xff]
  %v2935 = vld [vmem:[#allocation2 + $0x1e0] sm:$0xff]
  %v2936 = vld [vmem:[#allocation2 + $0x1e8] sm:$0xff]
  %v2937 = vld [vmem:[#allocation2 + $0x1f0] sm:$0xff]
  %v2938 = vld [vmem:[#allocation2 + $0x1f8] sm:$0xff]
  %v2939 = vld [vmem:[#allocation2 + $0x200] sm:$0xff]
  %v2940 = vld [vmem:[#allocation2 + $0x208] sm:$0xff]
  %v2941 = vld [vmem:[#allocation2 + $0x210] sm:$0xff]
  %v2942 = vld [vmem:[#allocation2 + $0x218] sm:$0xff]
  %v2943 = vld [vmem:[#allocation2 + $0x220] sm:$0xff]
  %v2944 = vld [vmem:[#allocation2 + $0x228] sm:$0xff]
  %v2945 = vld [vmem:[#allocation2 + $0x230] sm:$0xff]
  %v2946 = vld [vmem:[#allocation2 + $0x238] sm:$0xff]
  %v2947 = vld [vmem:[#allocation2 + $0x240] sm:$0xff]
  %v2948 = vld [vmem:[#allocation2 + $0x248] sm:$0xff]
  %v2949 = vld [vmem:[#allocation2 + $0x250] sm:$0xff]
  %v2950 = vld [vmem:[#allocation2 + $0x258] sm:$0xff]
  %v2951 = vld [vmem:[#allocation2 + $0x260] sm:$0xff]
  %v2952 = vld [vmem:[#allocation2 + $0x268] sm:$0xff]
  %v2953 = vld [vmem:[#allocation2 + $0x270] sm:$0xff]
  %v2954 = vld [vmem:[#allocation2 + $0x278] sm:$0xff]
  %v2955 = vld [vmem:[#allocation2 + $0x280] sm:$0xff]
  %v2956 = vld [vmem:[#allocation2 + $0x288] sm:$0xff]
  %v2957 = vld [vmem:[#allocation2 + $0x290] sm:$0xff]
  %v2958 = vld [vmem:[#allocation2 + $0x298] sm:$0xff]
  %v2959 = vld [vmem:[#allocation2 + $0x2a0] sm:$0xff]
  %v2960 = vld [vmem:[#allocation2 + $0x2a8] sm:$0xff]
  %v2961 = vld [vmem:[#allocation2 + $0x2b0] sm:$0xff]
  %v2962 = vld [vmem:[#allocation2 + $0x2b8] sm:$0xff]
  %v2963 = vld [vmem:[#allocation2 + $0x2c0] sm:$0xff]
  %v2964 = vld [vmem:[#allocation2 + $0x2c8] sm:$0xff]
  %v2965 = vld [vmem:[#allocation2 + $0x2d0] sm:$0xff]
  %v2966 = vld [vmem:[#allocation2 + $0x2d8] sm:$0xff]
  %v2967 = vld [vmem:[#allocation2 + $0x2e0] sm:$0xff]
  %v2968 = vld [vmem:[#allocation2 + $0x2e8] sm:$0xff]
  %v2969 = vld [vmem:[#allocation2 + $0x2f0] sm:$0xff]
  %v2970 = vld [vmem:[#allocation2 + $0x2f8] sm:$0xff]
  %v2971 = vld [vmem:[#allocation2 + $0x300] sm:$0xff]
  %v2972 = vld [vmem:[#allocation2 + $0x308] sm:$0xff]
  %v2973 = vld [vmem:[#allocation2 + $0x310] sm:$0xff]
  %v2974 = vld [vmem:[#allocation2 + $0x318] sm:$0xff]
  %v2975 = vld [vmem:[#allocation2 + $0x320] sm:$0xff]
  %v2976 = vld [vmem:[#allocation2 + $0x328] sm:$0xff]
  %v2977 = vld [vmem:[#allocation2 + $0x330] sm:$0xff]
  %v2978 = vld [vmem:[#allocation2 + $0x338] sm:$0xff]
  %v2979 = vld [vmem:[#allocation2 + $0x340] sm:$0xff]
  %v2980 = vld [vmem:[#allocation2 + $0x348] sm:$0xff]
  %v2981 = vld [vmem:[#allocation2 + $0x350] sm:$0xff]
  %v2982 = vld [vmem:[#allocation2 + $0x358] sm:$0xff]
  %v2983 = vld [vmem:[#allocation2 + $0x360] sm:$0xff]
  %v2984 = vld [vmem:[#allocation2 + $0x368] sm:$0xff]
  %v2985 = vld [vmem:[#allocation2 + $0x370] sm:$0xff]
  %v2986 = vld [vmem:[#allocation2 + $0x378] sm:$0xff]
  %v2988 = vunpack.c.l.b16 %v2874
  %v2989 = vunpack.c.h.b16 %v2874
  %v2990 = vpack.c.b16 %v2988, %v2988
  %v2991 = vpack.c.b16 %v2989, %v2989
  %2994 = vmatprep.subr.bf16.mxu0 %v2876
  %2995 = vmatpush1.bf16.msra.mxu0 %v2875
  %2996 = vmatprep.subr.bf16.mxu0 %v2883
  %2997 = vmatpush1.bf16.msra.mxu0 %v2882
  %2998 = vmatprep.subr.bf16.mxu0 %v2890
  %2999 = vmatpush1.bf16.msra.mxu0 %v2889
  %3000 = vmatprep.subr.bf16.mxu0 %v2897
  %3001 = vmatpush1.bf16.msra.mxu0 %v2896
  %3002 = vmatprep.subr.bf16.mxu0 %v2904
  %3003 = vmatpush1.bf16.msra.mxu0 %v2903
  %3004 = vmatprep.subr.bf16.mxu0 %v2911
  %3005 = vmatpush1.bf16.msra.mxu0 %v2910
  %3006 = vmatprep.subr.bf16.mxu0 %v2918
  %3007 = vmatpush1.bf16.msra.mxu0 %v2917
  %3008 = vmatprep.subr.bf16.mxu0 %v2925
  %3009 = vmatpush1.bf16.msra.mxu0 %v2924
  %3010 = vmatprep.subr.bf16.mxu0 %v2932
  %3011 = vmatpush1.bf16.msra.mxu0 %v2931
  %3012 = vmatprep.subr.bf16.mxu0 %v2939
  %3013 = vmatpush1.bf16.msra.mxu0 %v2938
  %3014 = vmatprep.subr.bf16.mxu0 %v2946
  %3015 = vmatpush1.bf16.msra.mxu0 %v2945
  %3016 = vmatprep.subr.bf16.mxu0 %v2953
  %3017 = vmatpush1.bf16.msra.mxu0 %v2952
  %3018 = vmatprep.subr.bf16.mxu0 %v2960
  %3019 = vmatpush1.bf16.msra.mxu0 %v2959
  %3020 = vmatprep.subr.bf16.mxu0 %v2967
  %3021 = vmatpush1.bf16.msra.mxu0 %v2966
  %3022 = vmatprep.subr.bf16.mxu0 %v2974
  %3023 = vmatpush1.bf16.msra.mxu0 %v2973
  %3024 = vmatprep.subr.bf16.mxu0 %v2981
  %3025 = vmatpush1.bf16.msra.mxu0 %v2980
  %3026 = vmatprep.mubr.bf16.mxu0 %v2991
  %3027 = vmatmul.mubr.bf16.gmra.mrb[0].mxu0 %v2990
  %v3028 = vpop.f32.mrb[0].mxu0
  %v3029 = vadd.f32 0.0, %v3028
  %v3030 = vpop.f32.mrb[0].mxu0
  %v3031 = vadd.f32 0.0, %v3030
  %v3032 = vpop.f32.mrb[0].mxu0
  %v3033 = vpop.f32.mrb[0].mxu0
  %3034 = vdwg.mxu0
  %3035 = vmatprep.subr.bf16.mxu0 %v2878
  %3036 = vmatpush1.bf16.msra.mxu0 %v2877
  %3037 = vmatprep.subr.bf16.mxu0 %v2885
  %3038 = vmatpush1.bf16.msra.mxu0 %v2884
  %3039 = vmatprep.subr.bf16.mxu0 %v2892
  %3040 = vmatpush1.bf16.msra.mxu0 %v2891
  %3041 = vmatprep.subr.bf16.mxu0 %v2899
  %3042 = vmatpush1.bf16.msra.mxu0 %v2898
  %3043 = vmatprep.subr.bf16.mxu0 %v2906
  %3044 = vmatpush1.bf16.msra.mxu0 %v2905
  %3045 = vmatprep.subr.bf16.mxu0 %v2913
  %3046 = vmatpush1.bf16.msra.mxu0 %v2912
  %3047 = vmatprep.subr.bf16.mxu0 %v2920
  %3048 = vmatpush1.bf16.msra.mxu0 %v2919
  %3049 = vmatprep.subr.bf16.mxu0 %v2927
  %3050 = vmatpush1.bf16.msra.mxu0 %v2926
  %3051 = vmatprep.subr.bf16.mxu0 %v2934
  %3052 = vmatpush1.bf16.msra.mxu0 %v2933
  %3053 = vmatprep.subr.bf16.mxu0 %v2941
  %3054 = vmatpush1.bf16.msra.mxu0 %v2940
  %3055 = vmatprep.subr.bf16.mxu0 %v2948
  %3056 = vmatpush1.bf16.msra.mxu0 %v2947
  %3057 = vmatprep.subr.bf16.mxu0 %v2955
  %3058 = vmatpush1.bf16.msra.mxu0 %v2954
  %3059 = vmatprep.subr.bf16.mxu0 %v2962
  %3060 = vmatpush1.bf16.msra.mxu0 %v2961
  %3061 = vmatprep.subr.bf16.mxu0 %v2969
  %3062 = vmatpush1.bf16.msra.mxu0 %v2968
  %3063 = vmatprep.subr.bf16.mxu0 %v2976
  %3064 = vmatpush1.bf16.msra.mxu0 %v2975
  %3065 = vmatprep.subr.bf16.mxu0 %v2983
  %3066 = vmatpush1.bf16.msra.mxu0 %v2982
  %3067 = vmatprep.mubr.bf16.mxu0 %v2991
  %3068 = vmatmul.mubr.bf16.gmra.mrb[0].mxu0 %v2990
  %v3069 = vpop.f32.mrb[0].mxu0
  %v3070 = vadd.f32 0.0, %v3069
  %v3071 = vpop.f32.mrb[0].mxu0
  %v3072 = vadd.f32 0.0, %v3071
  %v3073 = vpop.f32.mrb[0].mxu0
  %v3074 = vpop.f32.mrb[0].mxu0
  %3075 = vdwg.mxu0
  %3076 = vmatprep.subr.bf16.mxu0 %v2880
  %3077 = vmatpush1.bf16.msra.mxu0 %v2879
  %3078 = vmatprep.subr.bf16.mxu0 %v2887
  %3079 = vmatpush1.bf16.msra.mxu0 %v2886
  %3080 = vmatprep.subr.bf16.mxu0 %v2894
  %3081 = vmatpush1.bf16.msra.mxu0 %v2893
  %3082 = vmatprep.subr.bf16.mxu0 %v2901
  %3083 = vmatpush1.bf16.msra.mxu0 %v2900
  %3084 = vmatprep.subr.bf16.mxu0 %v2908
  %3085 = vmatpush1.bf16.msra.mxu0 %v2907
  %3086 = vmatprep.subr.bf16.mxu0 %v2915
  %3087 = vmatpush1.bf16.msra.mxu0 %v2914
  %3088 = vmatprep.subr.bf16.mxu0 %v2922
  %3089 = vmatpush1.bf16.msra.mxu0 %v2921
  %3090 = vmatprep.subr.bf16.mxu0 %v2929
  %3091 = vmatpush1.bf16.msra.mxu0 %v2928
  %3092 = vmatprep.subr.bf16.mxu0 %v2936
  %3093 = vmatpush1.bf16.msra.mxu0 %v2935
  %3094 = vmatprep.subr.bf16.mxu0 %v2943
  %3095 = vmatpush1.bf16.msra.mxu0 %v2942
  %3096 = vmatprep.subr.bf16.mxu0 %v2950
  %3097 = vmatpush1.bf16.msra.mxu0 %v2949
  %3098 = vmatprep.subr.bf16.mxu0 %v2957
  %3099 = vmatpush1.bf16.msra.mxu0 %v2956
  %3100 = vmatprep.subr.bf16.mxu0 %v2964
  %3101 = vmatpush1.bf16.msra.mxu0 %v2963
  %3102 = vmatprep.subr.bf16.mxu0 %v2971
  %3103 = vmatpush1.bf16.msra.mxu0 %v2970
  %3104 = vmatprep.subr.bf16.mxu0 %v2978
  %3105 = vmatpush1.bf16.msra.mxu0 %v2977
  %3106 = vmatprep.subr.bf16.mxu0 %v2985
  %3107 = vmatpush1.bf16.msra.mxu0 %v2984
  %3108 = vmatprep.mubr.bf16.mxu0 %v2991
  %3109 = vmatmul.mubr.bf16.gmra.mrb[0].mxu0 %v2990
  %v3110 = vpop.f32.mrb[0].mxu0
  %v3111 = vadd.f32 0.0, %v3110
  %v3112 = vpop.f32.mrb[0].mxu0
  %v3113 = vadd.f32 0.0, %v3112
  %v3114 = vpop.f32.mrb[0].mxu0
  %v3115 = vpop.f32.mrb[0].mxu0
  %3116 = vdwg.mxu0
  %3117 = vmatprep.subr.bf16.mxu0 0
  %3118 = vmatpush1.bf16.msra.mxu0 %v2881
  %3119 = vmatprep.subr.bf16.mxu0 0
  %3120 = vmatpush1.bf16.msra.mxu0 %v2888
  %3121 = vmatprep.subr.bf16.mxu0 0
  %3122 = vmatpush1.bf16.msra.mxu0 %v2895
  %3123 = vmatprep.subr.bf16.mxu0 0
  %3124 = vmatpush1.bf16.msra.mxu0 %v2902
  %3125 = vmatprep.subr.bf16.mxu0 0
  %3126 = vmatpush1.bf16.msra.mxu0 %v2909
  %3127 = vmatprep.subr.bf16.mxu0 0
  %3128 = vmatpush1.bf16.msra.mxu0 %v2916
  %3129 = vmatprep.subr.bf16.mxu0 0
  %3130 = vmatpush1.bf16.msra.mxu0 %v2923
  %3131 = vmatprep.subr.bf16.mxu0 0
  %3132 = vmatpush1.bf16.msra.mxu0 %v2930
  %3133 = vmatprep.subr.bf16.mxu0 0
  %3134 = vmatpush1.bf16.msra.mxu0 %v2937
  %3135 = vmatprep.subr.bf16.mxu0 0
  %3136 = vmatpush1.bf16.msra.mxu0 %v2944
  %3137 = vmatprep.subr.bf16.mxu0 0
  %3138 = vmatpush1.bf16.msra.mxu0 %v2951
  %3139 = vmatprep.subr.bf16.mxu0 0
  %3140 = vmatpush1.bf16.msra.mxu0 %v2958
  %3141 = vmatprep.subr.bf16.mxu0 0
  %3142 = vmatpush1.bf16.msra.mxu0 %v2965
  %3143 = vmatprep.subr.bf16.mxu0 0
  %3144 = vmatpush1.bf16.msra.mxu0 %v2972
  %3145 = vmatprep.subr.bf16.mxu0 0
  %3146 = vmatpush1.bf16.msra.mxu0 %v2979
  %3147 = vmatprep.subr.bf16.mxu0 0
  %3148 = vmatpush1.bf16.msra.mxu0 %v2986
  %3149 = vmatprep.mubr.bf16.mxu0 %v2991
  %3150 = vmatmul.mubr.bf16.gmra.mrb[0].mxu0 %v2990
  %v3151 = vpop.f32.mrb[0].mxu0
  %v3152 = vadd.f32 0.0, %v3151
  %v3153 = vpop.f32.mrb[0].mxu0
  %v3154 = vpop.f32.mrb[0].mxu0
  %v3155 = vpop.f32.mrb[0].mxu0
  %3156 = vdwg.mxu0
  %v3157 = vsel %vm1619, %v3029, 0.0
  %v3158 = vsel %vm1620, %v3031, 0.0
  %v3159 = vsel %vm1621, %v3070, 0.0
  %v3160 = vsel %vm1622, %v3072, 0.0
  %v3161 = vsel %vm1623, %v3111, 0.0
  %v3162 = vsel %vm1624, %v3113, 0.0
  %v3163 = vsel %vm1625, %v3152, 0.0
  %v3164 = vadd.f32 %v3157, %v3158
  %v3165 = vadd.f32 %v3164, %v3159
  %v3166 = vadd.f32 %v3165, %v3160
  %v3167 = vadd.f32 %v3166, %v3161
  %v3168 = vadd.f32 %v3167, %v3162
  %v3169 = vadd.f32 %v3168, %v3163
  %3170 = vadd.xlane.f32.xlu0 %v3169
  %v3171 = vpop.xlane.xlu0 %3170
  %v3172 = vadd.f32 %v1641, %v3171
  %v3173 = vmul.f32 %v3157, %v3029
  %v3174 = vmul.f32 %v3158, %v3031
  %v3175 = vmul.f32 %v3159, %v3070
  %v3176 = vmul.f32 %v3160, %v3072
  %v3177 = vmul.f32 %v3161, %v3111
  %v3178 = vmul.f32 %v3162, %v3113
  %v3179 = vmul.f32 %v3163, %v3152
  %v3180 = vadd.f32 %v3173, %v3174
  %v3181 = vadd.f32 %v3180, %v3175
  %v3182 = vadd.f32 %v3181, %v3176
  %v3183 = vadd.f32 %v3182, %v3177
  %v3184 = vadd.f32 %v3183, %v3178
  %v3185 = vadd.f32 %v3184, %v3179
  %3186 = vadd.xlane.f32.xlu0 %v3185
  %v3187 = vpop.xlane.xlu0 %3186
  %v3188 = vadd.f32 %v1657, %v3187
  %v3189 = vpack.c.bf16 %v3029, %v3029
  %v3190 = vpack.c.bf16 %v3031, %v3031
  %v3191 = vpack.c.bf16 %v3070, %v3070
  %v3192 = vpack.c.bf16 %v3072, %v3072
  %v3193 = vpack.c.bf16 %v3111, %v3111
  %v3194 = vpack.c.bf16 %v3113, %v3113
  %v3195 = vpack.c.bf16 %v3152, %v3152
  %v3203 = vunpack.c.l.b16 %v3189
  %v3204 = vunpack.c.l.b16 %v3190
  %v3205 = vunpack.c.l.b16 %v3191
  %v3206 = vunpack.c.l.b16 %v3192
  %v3207 = vunpack.c.l.b16 %v3193
  %v3208 = vunpack.c.l.b16 %v3194
  %v3209 = vunpack.c.l.b16 %v3195
  %v3210 = vpack.c.b16 %v3204, %v3203
  %v3211 = vpack.c.b16 %v3206, %v3205
  %v3212 = vpack.c.b16 %v3208, %v3207
  %v3213 = vpack.c.b16 %v3209, %v3209
  %s3218 = scalar_lea.vmem %s5, 36
  %3219 = vst [vmem:[%s3218 + $0x4] sm:$0xff] %v3210
  %3220 = vst [vmem:[%s3218 + $0xc] sm:$0xff] %v3211
  %3221 = vst [vmem:[%s3218 + $0x14] sm:$0xff] %v3212
  %3222 = vst [vmem:[%s3218 + $0x1c] sm:$0xf] %v3213
  %3223 = vst [vmem:[%s3218] sm:$0xf] 0
  %3224 = vst [vmem:[%s3218 + $0x20] sm:$0xf] 0
  %vm3225 = vcmask 7168
  %v3226 = vsel %vm3225, %v3172, %v3188
  %vm3227 = vcmask 15360
  %v3228 = vsel %vm3227, %v3226, 0.0
  %3229 = vst [vmem:[%s6] sm:$0xff] %v3228
  // Predicated region
  $region22: #{new_block_forward.2} parent=0 // pred_check
    _
  $region23: #{new_block_forward.2} parent=0 // pred_check_branch
    %3231 = sbr.rel (0) target = $region25
  $region24: #{new_block_forward.2} parent=0 // pred_region
    _
  $region25: #{new_block_forward.2} parent=0 // pred_fallthru
    _
  // Predicated region
  $region26: #{new_block_forward.2} parent=0 // pred_check
    _
  $region27: #{new_block_forward.2} parent=0 // pred_check_branch
    %3233 = sbr.rel (0) target = $region29
  $region28: #{new_block_forward.2} parent=0 // pred_region
    _
  $region29: #{new_block_forward.2} parent=0 // pred_fallthru
    _
  // Predicated region
  $region30: #{new_block_forward.2} parent=0 // pred_check
    _
  $region31: #{new_block_forward.2} parent=0 // pred_check_branch
    %3235 = sbr.rel (0) target = $region33
  $region32: #{new_block_forward.2} parent=0 // pred_region
    _
  $region33: #{new_block_forward.2} parent=0 // pred_fallthru
    _
  // Predicated region
  $region34: #{new_block_forward.2} parent=0 // pred_check
    _
  $region35: #{new_block_forward.2} parent=0 // pred_check_branch
    %3237 = sbr.rel (0) target = $region37
  $region36: #{new_block_forward.2} parent=0 // pred_region
    _
  $region37: #{new_block_forward.2} parent=0 // pred_fallthru
    _

</llo_original>
